<compile_context>
chip_gen: v5e
topology: v5e:2x2
jax: 0.10.0
libtpu: 0.0.40
codegen_flags: <defaults>
</compile_context>

<pallas_src>
import jax
import jax.numpy as jnp
from jax.experimental import pallas as pl
from jax.experimental.pallas import tpu as pltpu

TILE_B = 256  # batch tile: multiple of 128 (maps cleanly to the MXU on v5e/v6e/v7x)


def adversarial_kernel(x_ref, w1_ref, b1_ref, w2_ref, b2_ref, w3_ref, b3_ref,
                       o_ref):
    # Layer 1: Linear(in, 1024) + ReLU.  bf16 operands, f32 MXU accumulate.
    h1 = jnp.dot(x_ref[...], w1_ref[...], preferred_element_type=jnp.float32)
    h1 = jnp.maximum(h1 + b1_ref[...], 0.0)

    # Dropout1: identity (eval mode).

    # Layer 2: Linear(1024, 1024) + ReLU.
    h2 = jnp.dot(h1.astype(jnp.bfloat16), w2_ref[...],
                 preferred_element_type=jnp.float32)
    h2 = jnp.maximum(h2 + b2_ref[...], 0.0)

    # Dropout2: identity (eval mode).

    # Layer 3: Linear(1024, 1) + Sigmoid.
    # N=1 output -> VPU multiply + lane reduction instead of a lane-padded
    # (1024, 1) MXU operand.
    w3 = w3_ref[...].astype(jnp.float32)                       # (1, 1024)
    logits = jnp.sum(h2 * w3, axis=-1, keepdims=True) + b3_ref[0, 0]
    o_ref[...] = jax.nn.sigmoid(logits).astype(o_ref.dtype)


def adversarial_network(x, w1, b1, w2, b2, w3, b3, *, tile_b=TILE_B):
    """Fused forward pass. Weights stay VMEM-resident across the batch grid;
    only the x / out tiles stream per grid step."""
    B, in_feature = x.shape
    hidden = w1.shape[1]

    # bf16 matmul operands (halves the dominant HBM weight traffic, MXU-native).
    xb = x.astype(jnp.bfloat16)
    w1b = w1.astype(jnp.bfloat16)
    w2b = w2.astype(jnp.bfloat16)
    w3b = w3.reshape(1, hidden).astype(jnp.bfloat16)
    b1f = b1.reshape(1, hidden).astype(jnp.float32)
    b2f = b2.reshape(1, hidden).astype(jnp.float32)
    b3f = b3.reshape(1, 1).astype(jnp.float32)

    # Pad the batch up to a multiple of the tile so every block is full-sized.
    n_tiles = pl.cdiv(B, tile_b)
    Bp = n_tiles * tile_b
    if Bp != B:
        xb = jnp.pad(xb, ((0, Bp - B), (0, 0)))

    # Resident operands: constant block index across the grid -> loaded once.
    resident = lambda shape: pl.BlockSpec(shape, lambda i, s=shape: (0,) * len(s))

    out = pl.pallas_call(
        adversarial_kernel,
        out_shape=jax.ShapeDtypeStruct((Bp, 1), jnp.float32),
        grid=(n_tiles,),
        in_specs=[
            pl.BlockSpec((tile_b, in_feature), lambda i: (i, 0)),   # x: batch tiled
            resident(w1b.shape), resident(b1f.shape),
            resident(w2b.shape), resident(b2f.shape),
            resident(w3b.shape),
            pl.BlockSpec(memory_space=pltpu.MemorySpace.SMEM),      # b3 scalar
        ],
        out_specs=pl.BlockSpec((tile_b, 1), lambda i: (i, 0)),
        compiler_params=pltpu.CompilerParams(
            dimension_semantics=("parallel",)),
    )(xb, w1b, b1f, w2b, b2f, w3b, b3f)

    return out[:B]


def init_params(key, in_feature, hidden=1024):
    """Deterministic init matching the PyTorch module:
       W1, W2 ~ N(0, 0.01), W3 ~ N(0, 0.3), biases = 0.
       W1/W2 stored as (in_dim, out_dim); W3 kept in PyTorch (1, hidden) layout."""
    k1, k2, k3 = jax.random.split(key, 3)
    w1 = 0.01 * jax.random.normal(k1, (in_feature, hidden), jnp.float32)
    w2 = 0.01 * jax.random.normal(k2, (hidden, hidden), jnp.float32)
    w3 = 0.30 * jax.random.normal(k3, (1, hidden), jnp.float32)
    b1 = jnp.zeros((1, hidden), jnp.float32)
    b2 = jnp.zeros((1, hidden), jnp.float32)
    b3 = jnp.zeros((1, 1), jnp.float32)
    return w1, b1, w2, b2, w3, b3


if __name__ == "__main__":
    key = jax.random.PRNGKey(0)
    kx, kp = jax.random.split(key)

    batch = 8
    in_feature = 32

    x = jax.random.normal(kx, (batch, in_feature), jnp.float32)
    w1, b1, w2, b2, w3, b3 = init_params(kp, in_feature)

    out = adversarial_network(x, w1, b1, w2, b2, w3, b3)
    out = jax.block_until_ready(out)

    # Reference in plain JAX with the same bf16 matmul operands / f32 accumulate
    # as the kernel (eval-mode dropout = identity).
    xb = x.astype(jnp.bfloat16)
    w1b = w1.astype(jnp.bfloat16)
    w2b = w2.astype(jnp.bfloat16)
    w3b = w3.reshape(1, -1).astype(jnp.bfloat16)
    h1 = jnp.maximum(
        jnp.dot(xb, w1b, preferred_element_type=jnp.float32) + b1, 0.0)
    h2 = jnp.maximum(
        jnp.dot(h1.astype(jnp.bfloat16), w2b,
                preferred_element_type=jnp.float32) + b2, 0.0)
    logits = jnp.sum(h2 * w3b.astype(jnp.float32), axis=-1,
                     keepdims=True) + b3.reshape(1, 1)
    ref = jax.nn.sigmoid(logits)

    assert out.shape == (batch, 1)
    assert jnp.allclose(out, ref, atol=2e-3, rtol=2e-3), \
        float(jnp.max(jnp.abs(out - ref)))

    print("KERNEL_OK")
</pallas_src>

<mosaic_0001>
module attributes {stable_mosaic.version = 11 : i64} {
  func.func @adversarial_kernel(%arg0: i32, %arg1: memref<256x32xbf16, #tpu.memory_space<vmem>>, %arg2: memref<32x1024xbf16, #tpu.memory_space<vmem>>, %arg3: memref<1x1024xf32, #tpu.memory_space<vmem>>, %arg4: memref<1024x1024xbf16, #tpu.memory_space<vmem>>, %arg5: memref<1x1024xf32, #tpu.memory_space<vmem>>, %arg6: memref<1x1024xbf16, #tpu.memory_space<vmem>>, %arg7: memref<1x1xf32, #tpu.memory_space<smem>>, %arg8: memref<256x1xf32, #tpu.memory_space<vmem>>) attributes {dimension_semantics = [#tpu.dimension_semantics<parallel>], iteration_bounds = array<i64: 1>, scalar_prefetch = 0 : i64, scratch_operands = 0 : i64, tpu.core_type = #tpu.core_type<tc>, window_params = [{transform_indices = @transform_0, window_bounds = array<i64: 256, 32>}, {pipeline_mode = #tpu.pipeline_mode<synchronous>, transform_indices = @transform_1, window_bounds = array<i64: 32, 1024>}, {pipeline_mode = #tpu.pipeline_mode<synchronous>, transform_indices = @transform_2, window_bounds = array<i64: 1, 1024>}, {pipeline_mode = #tpu.pipeline_mode<synchronous>, transform_indices = @transform_3, window_bounds = array<i64: 1024, 1024>}, {pipeline_mode = #tpu.pipeline_mode<synchronous>, transform_indices = @transform_4, window_bounds = array<i64: 1, 1024>}, {pipeline_mode = #tpu.pipeline_mode<synchronous>, transform_indices = @transform_5, window_bounds = array<i64: 1, 1024>}, {transform_indices = @transform_6, window_bounds = array<i64: 1, 1>}, {transform_indices = @transform_7, window_bounds = array<i64: 256, 1>}]} {
    %c0 = arith.constant 0 : index
    %c0_0 = arith.constant 0 : index
    %0 = vector.load %arg1[%c0, %c0_0] : memref<256x32xbf16, #tpu.memory_space<vmem>>, vector<256x32xbf16>
    %c0_1 = arith.constant 0 : index
    %c0_2 = arith.constant 0 : index
    %1 = vector.load %arg2[%c0_1, %c0_2] : memref<32x1024xbf16, #tpu.memory_space<vmem>>, vector<32x1024xbf16>
    %cst = arith.constant dense<0.000000e+00> : vector<256x1024xf32>
    %2 = tpu.matmul %0, %1, %cst {dimension_numbers = #tpu.dot_dimension_numbers<[1], [0], [0], [1], [0, 0, 1, 1], [], []>} : vector<256x32xbf16>, vector<32x1024xbf16>, vector<256x1024xf32> -> vector<256x1024xf32>
    %c0_3 = arith.constant 0 : index
    %c0_4 = arith.constant 0 : index
    %3 = vector.load %arg3[%c0_3, %c0_4] : memref<1x1024xf32, #tpu.memory_space<vmem>>, vector<1x1024xf32>
    %4 = vector.broadcast %3 : vector<1x1024xf32> to vector<256x1024xf32>
    %5 = arith.addf %2, %4 : vector<256x1024xf32>
    %cst_5 = arith.constant 0.000000e+00 : f32
    %6 = vector.broadcast %cst_5 : f32 to vector<256x1024xf32>
    %7 = arith.maximumf %5, %6 : vector<256x1024xf32>
    %8 = arith.truncf %7 : vector<256x1024xf32> to vector<256x1024xbf16>
    %c0_6 = arith.constant 0 : index
    %c0_7 = arith.constant 0 : index
    %9 = vector.load %arg4[%c0_6, %c0_7] : memref<1024x1024xbf16, #tpu.memory_space<vmem>>, vector<1024x1024xbf16>
    %cst_8 = arith.constant dense<0.000000e+00> : vector<256x1024xf32>
    %10 = tpu.matmul %8, %9, %cst_8 {dimension_numbers = #tpu.dot_dimension_numbers<[1], [0], [0], [1], [0, 0, 1, 1], [], []>} : vector<256x1024xbf16>, vector<1024x1024xbf16>, vector<256x1024xf32> -> vector<256x1024xf32>
    %c0_9 = arith.constant 0 : index
    %c0_10 = arith.constant 0 : index
    %11 = vector.load %arg5[%c0_9, %c0_10] : memref<1x1024xf32, #tpu.memory_space<vmem>>, vector<1x1024xf32>
    %12 = vector.broadcast %11 : vector<1x1024xf32> to vector<256x1024xf32>
    %13 = arith.addf %10, %12 : vector<256x1024xf32>
    %cst_11 = arith.constant 0.000000e+00 : f32
    %14 = vector.broadcast %cst_11 : f32 to vector<256x1024xf32>
    %15 = arith.maximumf %13, %14 : vector<256x1024xf32>
    %c0_12 = arith.constant 0 : index
    %c0_13 = arith.constant 0 : index
    %16 = vector.load %arg6[%c0_12, %c0_13] : memref<1x1024xbf16, #tpu.memory_space<vmem>>, vector<1x1024xbf16>
    %17 = arith.extf %16 : vector<1x1024xbf16> to vector<1x1024xf32>
    %18 = vector.broadcast %17 : vector<1x1024xf32> to vector<256x1024xf32>
    %19 = arith.mulf %15, %18 : vector<256x1024xf32>
    %cst_14 = arith.constant dense<0.000000e+00> : vector<256xf32>
    %20 = vector.multi_reduction <add>, %19, %cst_14 [1] : vector<256x1024xf32> to vector<256xf32>
    %21 = vector.shape_cast %20 : vector<256xf32> to vector<256x1xf32>
    %c0_15 = arith.constant 0 : index
    %c0_16 = arith.constant 0 : index
    %22 = memref.load %arg7[%c0_15, %c0_16] : memref<1x1xf32, #tpu.memory_space<smem>>
    %23 = vector.broadcast %22 : f32 to vector<256x1xf32>
    %24 = arith.addf %21, %23 : vector<256x1xf32>
    %25 = arith.negf %24 : vector<256x1xf32>
    %26 = math.exp %25 : vector<256x1xf32>
    %cst_17 = arith.constant 1.000000e+00 : f32
    %27 = vector.broadcast %cst_17 : f32 to vector<256x1xf32>
    %28 = arith.addf %27, %26 : vector<256x1xf32>
    %29 = arith.divf %27, %28 : vector<256x1xf32>
    %c0_18 = arith.constant 0 : index
    %c0_19 = arith.constant 0 : index
    %30 = vector.load %arg8[%c0_18, %c0_19] : memref<256x1xf32, #tpu.memory_space<vmem>>, vector<256x1xf32>
    tpu.vector_store %arg8[%c0_18, %c0_19], %29 {strides = array<i32>} : memref<256x1xf32, #tpu.memory_space<vmem>>, vector<256x1xf32>,
    return
  }
  func.func @transform_0(%arg0: i32) -> (i32, i32) {
    %c0_i32 = arith.constant 0 : i32
    %c0_i32_0 = arith.constant 0 : i32
    return %arg0, %c0_i32 : i32, i32
  }
  func.func @transform_1(%arg0: i32) -> (i32, i32) {
    %c0_i32 = arith.constant 0 : i32
    %c0_i32_0 = arith.constant 0 : i32
    %c0_i32_1 = arith.constant 0 : i32
    return %c0_i32, %c0_i32_0 : i32, i32
  }
  func.func @transform_2(%arg0: i32) -> (i32, i32) {
    %c0_i32 = arith.constant 0 : i32
    %c0_i32_0 = arith.constant 0 : i32
    %c0_i32_1 = arith.constant 0 : i32
    return %c0_i32, %c0_i32_0 : i32, i32
  }
  func.func @transform_3(%arg0: i32) -> (i32, i32) {
    %c0_i32 = arith.constant 0 : i32
    %c0_i32_0 = arith.constant 0 : i32
    %c0_i32_1 = arith.constant 0 : i32
    return %c0_i32, %c0_i32_0 : i32, i32
  }
  func.func @transform_4(%arg0: i32) -> (i32, i32) {
    %c0_i32 = arith.constant 0 : i32
    %c0_i32_0 = arith.constant 0 : i32
    %c0_i32_1 = arith.constant 0 : i32
    return %c0_i32, %c0_i32_0 : i32, i32
  }
  func.func @transform_5(%arg0: i32) -> (i32, i32) {
    %c0_i32 = arith.constant 0 : i32
    %c0_i32_0 = arith.constant 0 : i32
    %c0_i32_1 = arith.constant 0 : i32
    return %c0_i32, %c0_i32_0 : i32, i32
  }
  func.func @transform_6(%arg0: i32) -> (i32, i32) {
    %c0_i32 = arith.constant 0 : i32
    %c0_i32_0 = arith.constant 0 : i32
    %c0_i32_1 = arith.constant 0 : i32
    return %c0_i32, %c0_i32_0 : i32, i32
  }
  func.func @transform_7(%arg0: i32) -> (i32, i32) {
    %c0_i32 = arith.constant 0 : i32
    %c0_i32_0 = arith.constant 0 : i32
    return %arg0, %c0_i32 : i32, i32
  }
}

</mosaic_0001>

<llo_original>
// kernel: tpu_custom_call.1
$region0: #{tpu_custom_call.1}
  #allocation0 [shape = 'u32[]', space=smem, size = 0x4, offset = 0x4, fixed_abs, tag = 'smem constant byte address 0x4 - core index']
  #allocation1 [shape = 'u32[72,128]{1,0:T(1,128)}', space=vmem, size = 0x9000, scoped, tag = 'internal scratch']
  #allocation2 [shape = 'f32[1,1]{1,0:T(1,128)S(6)}', space=smem, size = 0x200, scoped, tag = 'scoped memory for tpu_custom_call.1']
  %s0 = inlined_call_operand.vmem [shape: bf16[256,32], index: 0, kind: input, shape index: {}]
  %s1 = inlined_call_operand.hbm [shape: bf16[32,1024], index: 1, kind: input, shape index: {}]
  %s2 = inlined_call_operand.hbm [shape: f32[1,1024], index: 2, kind: input, shape index: {}]
  %s3 = inlined_call_operand.hbm [shape: bf16[1024,1024], index: 3, kind: input, shape index: {}]
  %s4 = inlined_call_operand.hbm [shape: f32[1,1024], index: 4, kind: input, shape index: {}]
  %s5 = inlined_call_operand.hbm [shape: bf16[1,1024], index: 5, kind: input, shape index: {}]
  %s6 = inlined_call_operand.<no memory space> [shape: f32[1,1], index: 6, kind: input, shape index: {}]
  %s7 = inlined_call_operand.vmem [shape: f32[256,1], index: 7, kind: output, shape index: {}]
  %s8 = sld [smem:[#allocation0]]
  $region58: #{tpu_custom_call.1} parent=0
    _
  %s10 = ssub.s32 1, %s8
  %s11 = scalar_select 0, %s10, %s8
  %12 = sst [smem:[#allocation2]] %s6
  $region1: #{tpu_custom_call.1} parent=0
    #allocation3 [shape = 'u8[65536]{0}', space=vmem, size = 0x10000, scoped, tag = 'input window, operand 1, single buffered']
    #allocation4 [shape = 's32[1]{0}', space=sflag, size = 0x4, scoped, tag = 'scoped memory for tpu_custom_call.1']
    #allocation5 [shape = 'u8[4096]{0}', space=vmem, size = 0x1000, scoped, tag = 'input window, operand 2, single buffered']
    #allocation6 [shape = 's32[1]{0}', space=sflag, size = 0x4, scoped, tag = 'scoped memory for tpu_custom_call.1']
    #allocation7 [shape = 'u8[2097152]{0}', space=vmem, size = 0x200000, scoped, tag = 'input window, operand 3, single buffered']
    #allocation8 [shape = 'u8[4096]{0}', space=vmem, size = 0x1000, scoped, tag = 'input window, operand 4, single buffered']
    #allocation9 [shape = 's32[1]{0}', space=sflag, size = 0x4, scoped, tag = 'scoped memory for tpu_custom_call.1']
    #allocation10 [shape = 'u8[4096]{0}', space=vmem, size = 0x1000, scoped, tag = 'input window, operand 5, single buffered']
    %13 = vsyncpa [#allocation4], 0
    %14 = vsyncpa [#allocation6], 0
    %15 = vsyncpa [#allocation9], 0
    // Predicated region
    $region2: #{tpu_custom_call.1} parent=1 // pred_check
      _
    $region3: #{tpu_custom_call.1} parent=1 // pred_check_branch
      %17 = sbr.rel (0) target = $region5
    $region4: #{tpu_custom_call.1} parent=1 // pred_region
      _
    $region5: #{tpu_custom_call.1} parent=1 // pred_fallthru
      _
    // Predicated region
    $region6: #{tpu_custom_call.1} parent=1 // pred_check
      _
    $region7: #{tpu_custom_call.1} parent=1 // pred_check_branch
      %19 = sbr.rel (0) target = $region9
    $region8: #{tpu_custom_call.1} parent=1 // pred_region
      %21 = vsyncadd [#allocation4], 0
      %s22 = sshll.u32 %s1, 4
      %s23 = int_to_ptr.hbm [resolvable:$true] %s22
      %s24 = sshll.u32 [#allocation3], 4
      %s25 = int_to_ptr.vmem [resolvable:$true] %s24
      %30 = dma.hbm_to_vmem [thread:$0]  %s23, 2048, %s25, [#allocation4], 512, 512, 32
    $region9: #{tpu_custom_call.1} parent=1 // pred_fallthru
      _
    // Predicated region
    $region10: #{tpu_custom_call.1} parent=1 // pred_check
      _
    $region11: #{tpu_custom_call.1} parent=1 // pred_check_branch
      %32 = sbr.rel (0) target = $region13
    $region12: #{tpu_custom_call.1} parent=1 // pred_region
      %34 = vsyncadd [#allocation6], 0
      %s36 = sshll.u32 %s2, 4
      %s37 = int_to_ptr.hbm [resolvable:$true] %s36
      %s38 = sshll.u32 [#allocation5], 4
      %s39 = int_to_ptr.vmem [resolvable:$true] %s38
      %41 = dma.hbm_to_vmem [thread:$0]  %s37, 128, %s39, [#allocation6]
    $region13: #{tpu_custom_call.1} parent=1 // pred_fallthru
      _
    // Predicated region
    $region14: #{tpu_custom_call.1} parent=1 // pred_check
      _
    $region15: #{tpu_custom_call.1} parent=1 // pred_check_branch
      %43 = sbr.rel (0) target = $region17
    $region16: #{tpu_custom_call.1} parent=1 // pred_region
      %45 = vsyncadd [#allocation6], 0
      %s46 = sshll.u32 %s3, 4
      %s47 = int_to_ptr.hbm [resolvable:$true] %s46
      %s48 = sshll.u32 [#allocation7], 4
      %s49 = int_to_ptr.vmem [resolvable:$true] %s48
      %54 = dma.hbm_to_vmem [thread:$0]  %s47, 65536, %s49, [#allocation6], 512, 512, 32
    $region17: #{tpu_custom_call.1} parent=1 // pred_fallthru
      _
    // Predicated region
    $region18: #{tpu_custom_call.1} parent=1 // pred_check
      _
    $region19: #{tpu_custom_call.1} parent=1 // pred_check_branch
      %56 = sbr.rel (0) target = $region21
    $region20: #{tpu_custom_call.1} parent=1 // pred_region
      %58 = vsyncadd [#allocation9], 0
      %s60 = sshll.u32 %s4, 4
      %s61 = int_to_ptr.hbm [resolvable:$true] %s60
      %s62 = sshll.u32 [#allocation8], 4
      %s63 = int_to_ptr.vmem [resolvable:$true] %s62
      %65 = dma.hbm_to_vmem [thread:$0]  %s61, 128, %s63, [#allocation9]
    $region21: #{tpu_custom_call.1} parent=1 // pred_fallthru
      _
    // Predicated region
    $region22: #{tpu_custom_call.1} parent=1 // pred_check
      _
    $region23: #{tpu_custom_call.1} parent=1 // pred_check_branch
      %67 = sbr.rel (0) target = $region25
    $region24: #{tpu_custom_call.1} parent=1 // pred_region
      %69 = vsyncadd [#allocation9], 0
      %s71 = sshll.u32 %s5, 4
      %s72 = int_to_ptr.hbm [resolvable:$true] %s71
      %s73 = sshll.u32 [#allocation10], 4
      %s74 = int_to_ptr.vmem [resolvable:$true] %s73
      %76 = dma.hbm_to_vmem [thread:$0]  %s72, 128, %s74, [#allocation9]
    $region25: #{tpu_custom_call.1} parent=1 // pred_fallthru
      _
    // Predicated region
    $region26: #{tpu_custom_call.1} parent=1 // pred_check
      _
    $region27: #{tpu_custom_call.1} parent=1 // pred_check_branch
      %78 = sbr.rel (0) target = $region29
    $region28: #{tpu_custom_call.1} parent=1 // pred_region
      _
    $region29: #{tpu_custom_call.1} parent=1 // pred_fallthru
      _
    // Predicated region
    $region30: #{tpu_custom_call.1} parent=1 // pred_check
      _
    $region31: #{tpu_custom_call.1} parent=1 // pred_check_branch
      %80 = sbr.rel (0) target = $region33
    $region32: #{tpu_custom_call.1} parent=1 // pred_region
      %82 = dma.done [#allocation4], 2048
    $region33: #{tpu_custom_call.1} parent=1 // pred_fallthru
      _
    // Predicated region
    $region34: #{tpu_custom_call.1} parent=1 // pred_check
      _
    $region35: #{tpu_custom_call.1} parent=1 // pred_check_branch
      %84 = sbr.rel (0) target = $region37
    $region36: #{tpu_custom_call.1} parent=1 // pred_region
      %86 = dma.done [#allocation6], 128
    $region37: #{tpu_custom_call.1} parent=1 // pred_fallthru
      _
    // Predicated region
    $region38: #{tpu_custom_call.1} parent=1 // pred_check
      _
    $region39: #{tpu_custom_call.1} parent=1 // pred_check_branch
      %88 = sbr.rel (0) target = $region41
    $region40: #{tpu_custom_call.1} parent=1 // pred_region
      %90 = dma.done [#allocation6], 65536
    $region41: #{tpu_custom_call.1} parent=1 // pred_fallthru
      _
    // Predicated region
    $region42: #{tpu_custom_call.1} parent=1 // pred_check
      _
    $region43: #{tpu_custom_call.1} parent=1 // pred_check_branch
      %92 = sbr.rel (0) target = $region45
    $region44: #{tpu_custom_call.1} parent=1 // pred_region
      %94 = dma.done [#allocation9], 128
    $region45: #{tpu_custom_call.1} parent=1 // pred_fallthru
      _
    // Predicated region
    $region46: #{tpu_custom_call.1} parent=1 // pred_check
      _
    $region47: #{tpu_custom_call.1} parent=1 // pred_check_branch
      %96 = sbr.rel (0) target = $region49
    $region48: #{tpu_custom_call.1} parent=1 // pred_region
      %98 = dma.done [#allocation9], 128
    $region49: #{tpu_custom_call.1} parent=1 // pred_fallthru
      _
    %v100 = vld [vmem:[%s0] sm:$0xf]
    %v101 = vld [vmem:[%s0 + $0x4] sm:$0xf]
    %v102 = vld [vmem:[%s0 + $0x8] sm:$0xf]
    %v103 = vld [vmem:[%s0 + $0xc] sm:$0xf]
    %v104 = vld [vmem:[%s0 + $0x10] sm:$0xf]
    %v105 = vld [vmem:[%s0 + $0x14] sm:$0xf]
    %v106 = vld [vmem:[%s0 + $0x18] sm:$0xf]
    %v107 = vld [vmem:[%s0 + $0x1c] sm:$0xf]
    %v108 = vld [vmem:[%s0 + $0x20] sm:$0xf]
    %v109 = vld [vmem:[%s0 + $0x24] sm:$0xf]
    %v110 = vld [vmem:[%s0 + $0x28] sm:$0xf]
    %v111 = vld [vmem:[%s0 + $0x2c] sm:$0xf]
    %v112 = vld [vmem:[%s0 + $0x30] sm:$0xf]
    %v113 = vld [vmem:[%s0 + $0x34] sm:$0xf]
    %v114 = vld [vmem:[%s0 + $0x38] sm:$0xf]
    %v115 = vld [vmem:[%s0 + $0x3c] sm:$0xf]
    %v116 = vld [vmem:[%s0 + $0x40] sm:$0xf]
    %v117 = vld [vmem:[%s0 + $0x44] sm:$0xf]
    %v118 = vld [vmem:[%s0 + $0x48] sm:$0xf]
    %v119 = vld [vmem:[%s0 + $0x4c] sm:$0xf]
    %v120 = vld [vmem:[%s0 + $0x50] sm:$0xf]
    %v121 = vld [vmem:[%s0 + $0x54] sm:$0xf]
    %v122 = vld [vmem:[%s0 + $0x58] sm:$0xf]
    %v123 = vld [vmem:[%s0 + $0x5c] sm:$0xf]
    %v124 = vld [vmem:[%s0 + $0x60] sm:$0xf]
    %v125 = vld [vmem:[%s0 + $0x64] sm:$0xf]
    %v126 = vld [vmem:[%s0 + $0x68] sm:$0xf]
    %v127 = vld [vmem:[%s0 + $0x6c] sm:$0xf]
    %v128 = vld [vmem:[%s0 + $0x70] sm:$0xf]
    %v129 = vld [vmem:[%s0 + $0x74] sm:$0xf]
    %v130 = vld [vmem:[%s0 + $0x78] sm:$0xf]
    %v131 = vld [vmem:[%s0 + $0x7c] sm:$0xf]
    %v132 = vld [vmem:[#allocation3] sm:$0xff]
    %v133 = vld [vmem:[#allocation3 + $0x8] sm:$0xff]
    %v134 = vld [vmem:[#allocation3 + $0x10] sm:$0xff]
    %v135 = vld [vmem:[#allocation3 + $0x18] sm:$0xff]
    %v136 = vld [vmem:[#allocation3 + $0x20] sm:$0xff]
    %v137 = vld [vmem:[#allocation3 + $0x28] sm:$0xff]
    %v138 = vld [vmem:[#allocation3 + $0x30] sm:$0xff]
    %v139 = vld [vmem:[#allocation3 + $0x38] sm:$0xff]
    %v140 = vld [vmem:[#allocation3 + $0x40] sm:$0xff]
    %v141 = vld [vmem:[#allocation3 + $0x48] sm:$0xff]
    %v142 = vld [vmem:[#allocation3 + $0x50] sm:$0xff]
    %v143 = vld [vmem:[#allocation3 + $0x58] sm:$0xff]
    %v144 = vld [vmem:[#allocation3 + $0x60] sm:$0xff]
    %v145 = vld [vmem:[#allocation3 + $0x68] sm:$0xff]
    %v146 = vld [vmem:[#allocation3 + $0x70] sm:$0xff]
    %v147 = vld [vmem:[#allocation3 + $0x78] sm:$0xff]
    %v148 = vld [vmem:[#allocation5] sm:$0xff]
    %v150 = vperm.slane %v148, 0
    %v151 = vperm.slane %v148, 1
    %v152 = vperm.slane %v148, 2
    %v153 = vperm.slane %v148, 3
    %v154 = vperm.slane %v148, 4
    %v155 = vperm.slane %v148, 5
    %v156 = vperm.slane %v148, 6
    %v157 = vperm.slane %v148, 7
    %v198 = vunpack.c.l.b16 %v100
    %v199 = vunpack.c.l.b16 %v101
    %v200 = vunpack.c.l.b16 %v102
    %v201 = vunpack.c.l.b16 %v103
    %v202 = vunpack.c.l.b16 %v104
    %v203 = vunpack.c.l.b16 %v105
    %v204 = vunpack.c.l.b16 %v106
    %v205 = vunpack.c.l.b16 %v107
    %v206 = vunpack.c.l.b16 %v108
    %v207 = vunpack.c.l.b16 %v109
    %v208 = vunpack.c.l.b16 %v110
    %v209 = vunpack.c.l.b16 %v111
    %v210 = vunpack.c.l.b16 %v112
    %v211 = vunpack.c.l.b16 %v113
    %v212 = vunpack.c.l.b16 %v114
    %v213 = vunpack.c.l.b16 %v115
    %v214 = vunpack.c.l.b16 %v116
    %v215 = vunpack.c.l.b16 %v117
    %v216 = vunpack.c.l.b16 %v118
    %v217 = vunpack.c.l.b16 %v119
    %v218 = vunpack.c.l.b16 %v120
    %v219 = vunpack.c.l.b16 %v121
    %v220 = vunpack.c.l.b16 %v122
    %v221 = vunpack.c.l.b16 %v123
    %v222 = vunpack.c.l.b16 %v124
    %v223 = vunpack.c.l.b16 %v125
    %v224 = vunpack.c.l.b16 %v126
    %v225 = vunpack.c.l.b16 %v127
    %v226 = vunpack.c.l.b16 %v128
    %v227 = vunpack.c.l.b16 %v129
    %v228 = vunpack.c.l.b16 %v130
    %v229 = vunpack.c.l.b16 %v131
    %v230 = vpack.c.b16 %v199, %v198
    %v231 = vpack.c.b16 %v201, %v200
    %v232 = vpack.c.b16 %v203, %v202
    %v233 = vpack.c.b16 %v205, %v204
    %v234 = vpack.c.b16 %v207, %v206
    %v235 = vpack.c.b16 %v209, %v208
    %v236 = vpack.c.b16 %v211, %v210
    %v237 = vpack.c.b16 %v213, %v212
    %v238 = vpack.c.b16 %v215, %v214
    %v239 = vpack.c.b16 %v217, %v216
    %v240 = vpack.c.b16 %v219, %v218
    %v241 = vpack.c.b16 %v221, %v220
    %v242 = vpack.c.b16 %v223, %v222
    %v243 = vpack.c.b16 %v225, %v224
    %v244 = vpack.c.b16 %v227, %v226
    %v245 = vpack.c.b16 %v229, %v228
    %v262 = vunpack.c.l.b16 %v132
    %v263 = vunpack.c.h.b16 %v132
    %v264 = vunpack.c.l.b16 %v133
    %v265 = vunpack.c.h.b16 %v133
    %v266 = vunpack.c.l.b16 %v134
    %v267 = vunpack.c.h.b16 %v134
    %v268 = vunpack.c.l.b16 %v135
    %v269 = vunpack.c.h.b16 %v135
    %v270 = vunpack.c.l.b16 %v136
    %v271 = vunpack.c.h.b16 %v136
    %v272 = vunpack.c.l.b16 %v137
    %v273 = vunpack.c.h.b16 %v137
    %v274 = vunpack.c.l.b16 %v138
    %v275 = vunpack.c.h.b16 %v138
    %v276 = vunpack.c.l.b16 %v139
    %v277 = vunpack.c.h.b16 %v139
    %v278 = vunpack.c.l.b16 %v140
    %v279 = vunpack.c.h.b16 %v140
    %v280 = vunpack.c.l.b16 %v141
    %v281 = vunpack.c.h.b16 %v141
    %v282 = vunpack.c.l.b16 %v142
    %v283 = vunpack.c.h.b16 %v142
    %v284 = vunpack.c.l.b16 %v143
    %v285 = vunpack.c.h.b16 %v143
    %v286 = vunpack.c.l.b16 %v144
    %v287 = vunpack.c.h.b16 %v144
    %v288 = vunpack.c.l.b16 %v145
    %v289 = vunpack.c.h.b16 %v145
    %v290 = vunpack.c.l.b16 %v146
    %v291 = vunpack.c.h.b16 %v146
    %v292 = vunpack.c.l.b16 %v147
    %v293 = vunpack.c.h.b16 %v147
    %v294 = vpack.c.b16 %v270, %v262
    %v295 = vpack.c.b16 %v271, %v263
    %v296 = vpack.c.b16 %v272, %v264
    %v297 = vpack.c.b16 %v273, %v265
    %v298 = vpack.c.b16 %v274, %v266
    %v299 = vpack.c.b16 %v275, %v267
    %v300 = vpack.c.b16 %v276, %v268
    %v301 = vpack.c.b16 %v277, %v269
    %v302 = vpack.c.b16 %v286, %v278
    %v303 = vpack.c.b16 %v287, %v279
    %v304 = vpack.c.b16 %v288, %v280
    %v305 = vpack.c.b16 %v289, %v281
    %v306 = vpack.c.b16 %v290, %v282
    %v307 = vpack.c.b16 %v291, %v283
    %v308 = vpack.c.b16 %v292, %v284
    %v309 = vpack.c.b16 %v293, %v285
    %vm326 = vcmask 261120
    %v328 = vsel %vm326, %v230, 0
    %v331 = vsel %vm326, %v231, 0
    %v334 = vsel %vm326, %v232, 0
    %v337 = vsel %vm326, %v233, 0
    %v340 = vsel %vm326, %v234, 0
    %v343 = vsel %vm326, %v235, 0
    %v346 = vsel %vm326, %v236, 0
    %v349 = vsel %vm326, %v237, 0
    %v352 = vsel %vm326, %v238, 0
    %v355 = vsel %vm326, %v239, 0
    %v358 = vsel %vm326, %v240, 0
    %v361 = vsel %vm326, %v241, 0
    %v364 = vsel %vm326, %v242, 0
    %v367 = vsel %vm326, %v243, 0
    %v370 = vsel %vm326, %v244, 0
    %v373 = vsel %vm326, %v245, 0
    %375 = vmatpush.bf16.msra.mxu0 0
    %376 = vmatpush.bf16.msra.mxu0 0
    %377 = vmatpush.bf16.msra.mxu0 0
    %378 = vmatpush.bf16.msra.mxu0 0
    %379 = vmatpush.bf16.msra.mxu0 0
    %380 = vmatpush.bf16.msra.mxu0 0
    %381 = vmatpush.bf16.msra.mxu0 %v302
    %382 = vmatpush.bf16.msra.mxu0 %v294
    %383 = vmatmul.bf16.gmra.mxu0 %v328
    %v384 = vpop.f32.mrf.mxu0
    %v385 = vadd.f32 %v150, %v384
    %v386 = vpop.f32.mrf.mxu0
    %v387 = vadd.f32 %v150, %v386
    %388 = vmatmul.bf16.gmra.mxu0 %v331
    %v389 = vpop.f32.mrf.mxu0
    %v390 = vadd.f32 %v150, %v389
    %v391 = vpop.f32.mrf.mxu0
    %v392 = vadd.f32 %v150, %v391
    %393 = vmatmul.bf16.gmra.mxu0 %v334
    %v394 = vpop.f32.mrf.mxu0
    %v395 = vadd.f32 %v150, %v394
    %v396 = vpop.f32.mrf.mxu0
    %v397 = vadd.f32 %v150, %v396
    %398 = vmatmul.bf16.gmra.mxu0 %v337
    %v399 = vpop.f32.mrf.mxu0
    %v400 = vadd.f32 %v150, %v399
    %v401 = vpop.f32.mrf.mxu0
    %v402 = vadd.f32 %v150, %v401
    %403 = vmatmul.bf16.gmra.mxu0 %v340
    %v404 = vpop.f32.mrf.mxu0
    %v405 = vadd.f32 %v150, %v404
    %v406 = vpop.f32.mrf.mxu0
    %v407 = vadd.f32 %v150, %v406
    %408 = vmatmul.bf16.gmra.mxu0 %v343
    %v409 = vpop.f32.mrf.mxu0
    %v410 = vadd.f32 %v150, %v409
    %v411 = vpop.f32.mrf.mxu0
    %v412 = vadd.f32 %v150, %v411
    %413 = vmatmul.bf16.gmra.mxu0 %v346
    %v414 = vpop.f32.mrf.mxu0
    %v415 = vadd.f32 %v150, %v414
    %v416 = vpop.f32.mrf.mxu0
    %v417 = vadd.f32 %v150, %v416
    %418 = vmatmul.bf16.gmra.mxu0 %v349
    %v419 = vpop.f32.mrf.mxu0
    %v420 = vadd.f32 %v150, %v419
    %v421 = vpop.f32.mrf.mxu0
    %v422 = vadd.f32 %v150, %v421
    %423 = vmatmul.bf16.gmra.mxu0 %v352
    %v424 = vpop.f32.mrf.mxu0
    %v425 = vadd.f32 %v150, %v424
    %v426 = vpop.f32.mrf.mxu0
    %v427 = vadd.f32 %v150, %v426
    %428 = vmatmul.bf16.gmra.mxu0 %v355
    %v429 = vpop.f32.mrf.mxu0
    %v430 = vadd.f32 %v150, %v429
    %v431 = vpop.f32.mrf.mxu0
    %v432 = vadd.f32 %v150, %v431
    %433 = vmatmul.bf16.gmra.mxu0 %v358
    %v434 = vpop.f32.mrf.mxu0
    %v435 = vadd.f32 %v150, %v434
    %v436 = vpop.f32.mrf.mxu0
    %v437 = vadd.f32 %v150, %v436
    %438 = vmatmul.bf16.gmra.mxu0 %v361
    %v439 = vpop.f32.mrf.mxu0
    %v440 = vadd.f32 %v150, %v439
    %v441 = vpop.f32.mrf.mxu0
    %v442 = vadd.f32 %v150, %v441
    %443 = vmatmul.bf16.gmra.mxu0 %v364
    %v444 = vpop.f32.mrf.mxu0
    %v445 = vadd.f32 %v150, %v444
    %v446 = vpop.f32.mrf.mxu0
    %v447 = vadd.f32 %v150, %v446
    %448 = vmatmul.bf16.gmra.mxu0 %v367
    %v449 = vpop.f32.mrf.mxu0
    %v450 = vadd.f32 %v150, %v449
    %v451 = vpop.f32.mrf.mxu0
    %v452 = vadd.f32 %v150, %v451
    %453 = vmatmul.bf16.gmra.mxu0 %v370
    %v454 = vpop.f32.mrf.mxu0
    %v455 = vadd.f32 %v150, %v454
    %v456 = vpop.f32.mrf.mxu0
    %v457 = vadd.f32 %v150, %v456
    %458 = vmatmul.bf16.gmra.mxu0 %v373
    %v459 = vpop.f32.mrf.mxu0
    %v460 = vadd.f32 %v150, %v459
    %v461 = vpop.f32.mrf.mxu0
    %v462 = vadd.f32 %v150, %v461
    %463 = vdwg.mxu0
    %464 = vmatpush.bf16.msra.mxu0 0
    %465 = vmatpush.bf16.msra.mxu0 0
    %466 = vmatpush.bf16.msra.mxu0 0
    %467 = vmatpush.bf16.msra.mxu0 0
    %468 = vmatpush.bf16.msra.mxu0 0
    %469 = vmatpush.bf16.msra.mxu0 0
    %470 = vmatpush.bf16.msra.mxu0 %v303
    %471 = vmatpush.bf16.msra.mxu0 %v295
    %472 = vmatmul.bf16.gmra.mxu0 %v328
    %v473 = vpop.f32.mrf.mxu0
    %v474 = vadd.f32 %v151, %v473
    %v475 = vpop.f32.mrf.mxu0
    %v476 = vadd.f32 %v151, %v475
    %477 = vmatmul.bf16.gmra.mxu0 %v331
    %v478 = vpop.f32.mrf.mxu0
    %v479 = vadd.f32 %v151, %v478
    %v480 = vpop.f32.mrf.mxu0
    %v481 = vadd.f32 %v151, %v480
    %482 = vmatmul.bf16.gmra.mxu0 %v334
    %v483 = vpop.f32.mrf.mxu0
    %v484 = vadd.f32 %v151, %v483
    %v485 = vpop.f32.mrf.mxu0
    %v486 = vadd.f32 %v151, %v485
    %487 = vmatmul.bf16.gmra.mxu0 %v337
    %v488 = vpop.f32.mrf.mxu0
    %v489 = vadd.f32 %v151, %v488
    %v490 = vpop.f32.mrf.mxu0
    %v491 = vadd.f32 %v151, %v490
    %492 = vmatmul.bf16.gmra.mxu0 %v340
    %v493 = vpop.f32.mrf.mxu0
    %v494 = vadd.f32 %v151, %v493
    %v495 = vpop.f32.mrf.mxu0
    %v496 = vadd.f32 %v151, %v495
    %497 = vmatmul.bf16.gmra.mxu0 %v343
    %v498 = vpop.f32.mrf.mxu0
    %v499 = vadd.f32 %v151, %v498
    %v500 = vpop.f32.mrf.mxu0
    %v501 = vadd.f32 %v151, %v500
    %502 = vmatmul.bf16.gmra.mxu0 %v346
    %v503 = vpop.f32.mrf.mxu0
    %v504 = vadd.f32 %v151, %v503
    %v505 = vpop.f32.mrf.mxu0
    %v506 = vadd.f32 %v151, %v505
    %507 = vmatmul.bf16.gmra.mxu0 %v349
    %v508 = vpop.f32.mrf.mxu0
    %v509 = vadd.f32 %v151, %v508
    %v510 = vpop.f32.mrf.mxu0
    %v511 = vadd.f32 %v151, %v510
    %512 = vmatmul.bf16.gmra.mxu0 %v352
    %v513 = vpop.f32.mrf.mxu0
    %v514 = vadd.f32 %v151, %v513
    %v515 = vpop.f32.mrf.mxu0
    %v516 = vadd.f32 %v151, %v515
    %517 = vmatmul.bf16.gmra.mxu0 %v355
    %v518 = vpop.f32.mrf.mxu0
    %v519 = vadd.f32 %v151, %v518
    %v520 = vpop.f32.mrf.mxu0
    %v521 = vadd.f32 %v151, %v520
    %522 = vmatmul.bf16.gmra.mxu0 %v358
    %v523 = vpop.f32.mrf.mxu0
    %v524 = vadd.f32 %v151, %v523
    %v525 = vpop.f32.mrf.mxu0
    %v526 = vadd.f32 %v151, %v525
    %527 = vmatmul.bf16.gmra.mxu0 %v361
    %v528 = vpop.f32.mrf.mxu0
    %v529 = vadd.f32 %v151, %v528
    %v530 = vpop.f32.mrf.mxu0
    %v531 = vadd.f32 %v151, %v530
    %532 = vmatmul.bf16.gmra.mxu0 %v364
    %v533 = vpop.f32.mrf.mxu0
    %v534 = vadd.f32 %v151, %v533
    %v535 = vpop.f32.mrf.mxu0
    %v536 = vadd.f32 %v151, %v535
    %537 = vmatmul.bf16.gmra.mxu0 %v367
    %v538 = vpop.f32.mrf.mxu0
    %v539 = vadd.f32 %v151, %v538
    %v540 = vpop.f32.mrf.mxu0
    %v541 = vadd.f32 %v151, %v540
    %542 = vmatmul.bf16.gmra.mxu0 %v370
    %v543 = vpop.f32.mrf.mxu0
    %v544 = vadd.f32 %v151, %v543
    %v545 = vpop.f32.mrf.mxu0
    %v546 = vadd.f32 %v151, %v545
    %547 = vmatmul.bf16.gmra.mxu0 %v373
    %v548 = vpop.f32.mrf.mxu0
    %v549 = vadd.f32 %v151, %v548
    %v550 = vpop.f32.mrf.mxu0
    %v551 = vadd.f32 %v151, %v550
    %552 = vdwg.mxu0
    %553 = vmatpush.bf16.msra.mxu0 0
    %554 = vmatpush.bf16.msra.mxu0 0
    %555 = vmatpush.bf16.msra.mxu0 0
    %556 = vmatpush.bf16.msra.mxu0 0
    %557 = vmatpush.bf16.msra.mxu0 0
    %558 = vmatpush.bf16.msra.mxu0 0
    %559 = vmatpush.bf16.msra.mxu0 %v304
    %560 = vmatpush.bf16.msra.mxu0 %v296
    %561 = vmatmul.bf16.gmra.mxu0 %v328
    %v562 = vpop.f32.mrf.mxu0
    %v563 = vadd.f32 %v152, %v562
    %v564 = vpop.f32.mrf.mxu0
    %v565 = vadd.f32 %v152, %v564
    %566 = vmatmul.bf16.gmra.mxu0 %v331
    %v567 = vpop.f32.mrf.mxu0
    %v568 = vadd.f32 %v152, %v567
    %v569 = vpop.f32.mrf.mxu0
    %v570 = vadd.f32 %v152, %v569
    %571 = vmatmul.bf16.gmra.mxu0 %v334
    %v572 = vpop.f32.mrf.mxu0
    %v573 = vadd.f32 %v152, %v572
    %v574 = vpop.f32.mrf.mxu0
    %v575 = vadd.f32 %v152, %v574
    %576 = vmatmul.bf16.gmra.mxu0 %v337
    %v577 = vpop.f32.mrf.mxu0
    %v578 = vadd.f32 %v152, %v577
    %v579 = vpop.f32.mrf.mxu0
    %v580 = vadd.f32 %v152, %v579
    %581 = vmatmul.bf16.gmra.mxu0 %v340
    %v582 = vpop.f32.mrf.mxu0
    %v583 = vadd.f32 %v152, %v582
    %v584 = vpop.f32.mrf.mxu0
    %v585 = vadd.f32 %v152, %v584
    %586 = vmatmul.bf16.gmra.mxu0 %v343
    %v587 = vpop.f32.mrf.mxu0
    %v588 = vadd.f32 %v152, %v587
    %v589 = vpop.f32.mrf.mxu0
    %v590 = vadd.f32 %v152, %v589
    %591 = vmatmul.bf16.gmra.mxu0 %v346
    %v592 = vpop.f32.mrf.mxu0
    %v593 = vadd.f32 %v152, %v592
    %v594 = vpop.f32.mrf.mxu0
    %v595 = vadd.f32 %v152, %v594
    %596 = vmatmul.bf16.gmra.mxu0 %v349
    %v597 = vpop.f32.mrf.mxu0
    %v598 = vadd.f32 %v152, %v597
    %v599 = vpop.f32.mrf.mxu0
    %v600 = vadd.f32 %v152, %v599
    %601 = vmatmul.bf16.gmra.mxu0 %v352
    %v602 = vpop.f32.mrf.mxu0
    %v603 = vadd.f32 %v152, %v602
    %v604 = vpop.f32.mrf.mxu0
    %v605 = vadd.f32 %v152, %v604
    %606 = vmatmul.bf16.gmra.mxu0 %v355
    %v607 = vpop.f32.mrf.mxu0
    %v608 = vadd.f32 %v152, %v607
    %v609 = vpop.f32.mrf.mxu0
    %v610 = vadd.f32 %v152, %v609
    %611 = vmatmul.bf16.gmra.mxu0 %v358
    %v612 = vpop.f32.mrf.mxu0
    %v613 = vadd.f32 %v152, %v612
    %v614 = vpop.f32.mrf.mxu0
    %v615 = vadd.f32 %v152, %v614
    %616 = vmatmul.bf16.gmra.mxu0 %v361
    %v617 = vpop.f32.mrf.mxu0
    %v618 = vadd.f32 %v152, %v617
    %v619 = vpop.f32.mrf.mxu0
    %v620 = vadd.f32 %v152, %v619
    %621 = vmatmul.bf16.gmra.mxu0 %v364
    %v622 = vpop.f32.mrf.mxu0
    %v623 = vadd.f32 %v152, %v622
    %v624 = vpop.f32.mrf.mxu0
    %v625 = vadd.f32 %v152, %v624
    %626 = vmatmul.bf16.gmra.mxu0 %v367
    %v627 = vpop.f32.mrf.mxu0
    %v628 = vadd.f32 %v152, %v627
    %v629 = vpop.f32.mrf.mxu0
    %v630 = vadd.f32 %v152, %v629
    %631 = vmatmul.bf16.gmra.mxu0 %v370
    %v632 = vpop.f32.mrf.mxu0
    %v633 = vadd.f32 %v152, %v632
    %v634 = vpop.f32.mrf.mxu0
    %v635 = vadd.f32 %v152, %v634
    %636 = vmatmul.bf16.gmra.mxu0 %v373
    %v637 = vpop.f32.mrf.mxu0
    %v638 = vadd.f32 %v152, %v637
    %v639 = vpop.f32.mrf.mxu0
    %v640 = vadd.f32 %v152, %v639
    %641 = vdwg.mxu0
    %642 = vmatpush.bf16.msra.mxu0 0
    %643 = vmatpush.bf16.msra.mxu0 0
    %644 = vmatpush.bf16.msra.mxu0 0
    %645 = vmatpush.bf16.msra.mxu0 0
    %646 = vmatpush.bf16.msra.mxu0 0
    %647 = vmatpush.bf16.msra.mxu0 0
    %648 = vmatpush.bf16.msra.mxu0 %v305
    %649 = vmatpush.bf16.msra.mxu0 %v297
    %650 = vmatmul.bf16.gmra.mxu0 %v328
    %v651 = vpop.f32.mrf.mxu0
    %v652 = vadd.f32 %v153, %v651
    %v653 = vpop.f32.mrf.mxu0
    %v654 = vadd.f32 %v153, %v653
    %655 = vmatmul.bf16.gmra.mxu0 %v331
    %v656 = vpop.f32.mrf.mxu0
    %v657 = vadd.f32 %v153, %v656
    %v658 = vpop.f32.mrf.mxu0
    %v659 = vadd.f32 %v153, %v658
    %660 = vmatmul.bf16.gmra.mxu0 %v334
    %v661 = vpop.f32.mrf.mxu0
    %v662 = vadd.f32 %v153, %v661
    %v663 = vpop.f32.mrf.mxu0
    %v664 = vadd.f32 %v153, %v663
    %665 = vmatmul.bf16.gmra.mxu0 %v337
    %v666 = vpop.f32.mrf.mxu0
    %v667 = vadd.f32 %v153, %v666
    %v668 = vpop.f32.mrf.mxu0
    %v669 = vadd.f32 %v153, %v668
    %670 = vmatmul.bf16.gmra.mxu0 %v340
    %v671 = vpop.f32.mrf.mxu0
    %v672 = vadd.f32 %v153, %v671
    %v673 = vpop.f32.mrf.mxu0
    %v674 = vadd.f32 %v153, %v673
    %675 = vmatmul.bf16.gmra.mxu0 %v343
    %v676 = vpop.f32.mrf.mxu0
    %v677 = vadd.f32 %v153, %v676
    %v678 = vpop.f32.mrf.mxu0
    %v679 = vadd.f32 %v153, %v678
    %680 = vmatmul.bf16.gmra.mxu0 %v346
    %v681 = vpop.f32.mrf.mxu0
    %v682 = vadd.f32 %v153, %v681
    %v683 = vpop.f32.mrf.mxu0
    %v684 = vadd.f32 %v153, %v683
    %685 = vmatmul.bf16.gmra.mxu0 %v349
    %v686 = vpop.f32.mrf.mxu0
    %v687 = vadd.f32 %v153, %v686
    %v688 = vpop.f32.mrf.mxu0
    %v689 = vadd.f32 %v153, %v688
    %690 = vmatmul.bf16.gmra.mxu0 %v352
    %v691 = vpop.f32.mrf.mxu0
    %v692 = vadd.f32 %v153, %v691
    %v693 = vpop.f32.mrf.mxu0
    %v694 = vadd.f32 %v153, %v693
    %695 = vmatmul.bf16.gmra.mxu0 %v355
    %v696 = vpop.f32.mrf.mxu0
    %v697 = vadd.f32 %v153, %v696
    %v698 = vpop.f32.mrf.mxu0
    %v699 = vadd.f32 %v153, %v698
    %700 = vmatmul.bf16.gmra.mxu0 %v358
    %v701 = vpop.f32.mrf.mxu0
    %v702 = vadd.f32 %v153, %v701
    %v703 = vpop.f32.mrf.mxu0
    %v704 = vadd.f32 %v153, %v703
    %705 = vmatmul.bf16.gmra.mxu0 %v361
    %v706 = vpop.f32.mrf.mxu0
    %v707 = vadd.f32 %v153, %v706
    %v708 = vpop.f32.mrf.mxu0
    %v709 = vadd.f32 %v153, %v708
    %710 = vmatmul.bf16.gmra.mxu0 %v364
    %v711 = vpop.f32.mrf.mxu0
    %v712 = vadd.f32 %v153, %v711
    %v713 = vpop.f32.mrf.mxu0
    %v714 = vadd.f32 %v153, %v713
    %715 = vmatmul.bf16.gmra.mxu0 %v367
    %v716 = vpop.f32.mrf.mxu0
    %v717 = vadd.f32 %v153, %v716
    %v718 = vpop.f32.mrf.mxu0
    %v719 = vadd.f32 %v153, %v718
    %720 = vmatmul.bf16.gmra.mxu0 %v370
    %v721 = vpop.f32.mrf.mxu0
    %v722 = vadd.f32 %v153, %v721
    %v723 = vpop.f32.mrf.mxu0
    %v724 = vadd.f32 %v153, %v723
    %725 = vmatmul.bf16.gmra.mxu0 %v373
    %v726 = vpop.f32.mrf.mxu0
    %v727 = vadd.f32 %v153, %v726
    %v728 = vpop.f32.mrf.mxu0
    %v729 = vadd.f32 %v153, %v728
    %730 = vdwg.mxu0
    %731 = vmatpush.bf16.msra.mxu0 0
    %732 = vmatpush.bf16.msra.mxu0 0
    %733 = vmatpush.bf16.msra.mxu0 0
    %734 = vmatpush.bf16.msra.mxu0 0
    %735 = vmatpush.bf16.msra.mxu0 0
    %736 = vmatpush.bf16.msra.mxu0 0
    %737 = vmatpush.bf16.msra.mxu0 %v306
    %738 = vmatpush.bf16.msra.mxu0 %v298
    %739 = vmatmul.bf16.gmra.mxu0 %v328
    %v740 = vpop.f32.mrf.mxu0
    %v741 = vadd.f32 %v154, %v740
    %v742 = vpop.f32.mrf.mxu0
    %v743 = vadd.f32 %v154, %v742
    %744 = vmatmul.bf16.gmra.mxu0 %v331
    %v745 = vpop.f32.mrf.mxu0
    %v746 = vadd.f32 %v154, %v745
    %v747 = vpop.f32.mrf.mxu0
    %v748 = vadd.f32 %v154, %v747
    %749 = vmatmul.bf16.gmra.mxu0 %v334
    %v750 = vpop.f32.mrf.mxu0
    %v751 = vadd.f32 %v154, %v750
    %v752 = vpop.f32.mrf.mxu0
    %v753 = vadd.f32 %v154, %v752
    %754 = vmatmul.bf16.gmra.mxu0 %v337
    %v755 = vpop.f32.mrf.mxu0
    %v756 = vadd.f32 %v154, %v755
    %v757 = vpop.f32.mrf.mxu0
    %v758 = vadd.f32 %v154, %v757
    %759 = vmatmul.bf16.gmra.mxu0 %v340
    %v760 = vpop.f32.mrf.mxu0
    %v761 = vadd.f32 %v154, %v760
    %v762 = vpop.f32.mrf.mxu0
    %v763 = vadd.f32 %v154, %v762
    %764 = vmatmul.bf16.gmra.mxu0 %v343
    %v765 = vpop.f32.mrf.mxu0
    %v766 = vadd.f32 %v154, %v765
    %v767 = vpop.f32.mrf.mxu0
    %v768 = vadd.f32 %v154, %v767
    %769 = vmatmul.bf16.gmra.mxu0 %v346
    %v770 = vpop.f32.mrf.mxu0
    %v771 = vadd.f32 %v154, %v770
    %v772 = vpop.f32.mrf.mxu0
    %v773 = vadd.f32 %v154, %v772
    %774 = vmatmul.bf16.gmra.mxu0 %v349
    %v775 = vpop.f32.mrf.mxu0
    %v776 = vadd.f32 %v154, %v775
    %v777 = vpop.f32.mrf.mxu0
    %v778 = vadd.f32 %v154, %v777
    %779 = vmatmul.bf16.gmra.mxu0 %v352
    %v780 = vpop.f32.mrf.mxu0
    %v781 = vadd.f32 %v154, %v780
    %v782 = vpop.f32.mrf.mxu0
    %v783 = vadd.f32 %v154, %v782
    %784 = vmatmul.bf16.gmra.mxu0 %v355
    %v785 = vpop.f32.mrf.mxu0
    %v786 = vadd.f32 %v154, %v785
    %v787 = vpop.f32.mrf.mxu0
    %v788 = vadd.f32 %v154, %v787
    %789 = vmatmul.bf16.gmra.mxu0 %v358
    %v790 = vpop.f32.mrf.mxu0
    %v791 = vadd.f32 %v154, %v790
    %v792 = vpop.f32.mrf.mxu0
    %v793 = vadd.f32 %v154, %v792
    %794 = vmatmul.bf16.gmra.mxu0 %v361
    %v795 = vpop.f32.mrf.mxu0
    %v796 = vadd.f32 %v154, %v795
    %v797 = vpop.f32.mrf.mxu0
    %v798 = vadd.f32 %v154, %v797
    %799 = vmatmul.bf16.gmra.mxu0 %v364
    %v800 = vpop.f32.mrf.mxu0
    %v801 = vadd.f32 %v154, %v800
    %v802 = vpop.f32.mrf.mxu0
    %v803 = vadd.f32 %v154, %v802
    %804 = vmatmul.bf16.gmra.mxu0 %v367
    %v805 = vpop.f32.mrf.mxu0
    %v806 = vadd.f32 %v154, %v805
    %v807 = vpop.f32.mrf.mxu0
    %v808 = vadd.f32 %v154, %v807
    %809 = vmatmul.bf16.gmra.mxu0 %v370
    %v810 = vpop.f32.mrf.mxu0
    %v811 = vadd.f32 %v154, %v810
    %v812 = vpop.f32.mrf.mxu0
    %v813 = vadd.f32 %v154, %v812
    %814 = vmatmul.bf16.gmra.mxu0 %v373
    %v815 = vpop.f32.mrf.mxu0
    %v816 = vadd.f32 %v154, %v815
    %v817 = vpop.f32.mrf.mxu0
    %v818 = vadd.f32 %v154, %v817
    %819 = vdwg.mxu0
    %820 = vmatpush.bf16.msra.mxu0 0
    %821 = vmatpush.bf16.msra.mxu0 0
    %822 = vmatpush.bf16.msra.mxu0 0
    %823 = vmatpush.bf16.msra.mxu0 0
    %824 = vmatpush.bf16.msra.mxu0 0
    %825 = vmatpush.bf16.msra.mxu0 0
    %826 = vmatpush.bf16.msra.mxu0 %v307
    %827 = vmatpush.bf16.msra.mxu0 %v299
    %828 = vmatmul.bf16.gmra.mxu0 %v328
    %v829 = vpop.f32.mrf.mxu0
    %v830 = vadd.f32 %v155, %v829
    %v831 = vpop.f32.mrf.mxu0
    %v832 = vadd.f32 %v155, %v831
    %833 = vmatmul.bf16.gmra.mxu0 %v331
    %v834 = vpop.f32.mrf.mxu0
    %v835 = vadd.f32 %v155, %v834
    %v836 = vpop.f32.mrf.mxu0
    %v837 = vadd.f32 %v155, %v836
    %838 = vmatmul.bf16.gmra.mxu0 %v334
    %v839 = vpop.f32.mrf.mxu0
    %v840 = vadd.f32 %v155, %v839
    %v841 = vpop.f32.mrf.mxu0
    %v842 = vadd.f32 %v155, %v841
    %843 = vmatmul.bf16.gmra.mxu0 %v337
    %v844 = vpop.f32.mrf.mxu0
    %v845 = vadd.f32 %v155, %v844
    %v846 = vpop.f32.mrf.mxu0
    %v847 = vadd.f32 %v155, %v846
    %848 = vmatmul.bf16.gmra.mxu0 %v340
    %v849 = vpop.f32.mrf.mxu0
    %v850 = vadd.f32 %v155, %v849
    %v851 = vpop.f32.mrf.mxu0
    %v852 = vadd.f32 %v155, %v851
    %853 = vmatmul.bf16.gmra.mxu0 %v343
    %v854 = vpop.f32.mrf.mxu0
    %v855 = vadd.f32 %v155, %v854
    %v856 = vpop.f32.mrf.mxu0
    %v857 = vadd.f32 %v155, %v856
    %858 = vmatmul.bf16.gmra.mxu0 %v346
    %v859 = vpop.f32.mrf.mxu0
    %v860 = vadd.f32 %v155, %v859
    %v861 = vpop.f32.mrf.mxu0
    %v862 = vadd.f32 %v155, %v861
    %863 = vmatmul.bf16.gmra.mxu0 %v349
    %v864 = vpop.f32.mrf.mxu0
    %v865 = vadd.f32 %v155, %v864
    %v866 = vpop.f32.mrf.mxu0
    %v867 = vadd.f32 %v155, %v866
    %868 = vmatmul.bf16.gmra.mxu0 %v352
    %v869 = vpop.f32.mrf.mxu0
    %v870 = vadd.f32 %v155, %v869
    %v871 = vpop.f32.mrf.mxu0
    %v872 = vadd.f32 %v155, %v871
    %873 = vmatmul.bf16.gmra.mxu0 %v355
    %v874 = vpop.f32.mrf.mxu0
    %v875 = vadd.f32 %v155, %v874
    %v876 = vpop.f32.mrf.mxu0
    %v877 = vadd.f32 %v155, %v876
    %878 = vmatmul.bf16.gmra.mxu0 %v358
    %v879 = vpop.f32.mrf.mxu0
    %v880 = vadd.f32 %v155, %v879
    %v881 = vpop.f32.mrf.mxu0
    %v882 = vadd.f32 %v155, %v881
    %883 = vmatmul.bf16.gmra.mxu0 %v361
    %v884 = vpop.f32.mrf.mxu0
    %v885 = vadd.f32 %v155, %v884
    %v886 = vpop.f32.mrf.mxu0
    %v887 = vadd.f32 %v155, %v886
    %888 = vmatmul.bf16.gmra.mxu0 %v364
    %v889 = vpop.f32.mrf.mxu0
    %v890 = vadd.f32 %v155, %v889
    %v891 = vpop.f32.mrf.mxu0
    %v892 = vadd.f32 %v155, %v891
    %893 = vmatmul.bf16.gmra.mxu0 %v367
    %v894 = vpop.f32.mrf.mxu0
    %v895 = vadd.f32 %v155, %v894
    %v896 = vpop.f32.mrf.mxu0
    %v897 = vadd.f32 %v155, %v896
    %898 = vmatmul.bf16.gmra.mxu0 %v370
    %v899 = vpop.f32.mrf.mxu0
    %v900 = vadd.f32 %v155, %v899
    %v901 = vpop.f32.mrf.mxu0
    %v902 = vadd.f32 %v155, %v901
    %903 = vmatmul.bf16.gmra.mxu0 %v373
    %v904 = vpop.f32.mrf.mxu0
    %v905 = vadd.f32 %v155, %v904
    %v906 = vpop.f32.mrf.mxu0
    %v907 = vadd.f32 %v155, %v906
    %908 = vdwg.mxu0
    %909 = vmatpush.bf16.msra.mxu0 0
    %910 = vmatpush.bf16.msra.mxu0 0
    %911 = vmatpush.bf16.msra.mxu0 0
    %912 = vmatpush.bf16.msra.mxu0 0
    %913 = vmatpush.bf16.msra.mxu0 0
    %914 = vmatpush.bf16.msra.mxu0 0
    %915 = vmatpush.bf16.msra.mxu0 %v308
    %916 = vmatpush.bf16.msra.mxu0 %v300
    %917 = vmatmul.bf16.gmra.mxu0 %v328
    %v918 = vpop.f32.mrf.mxu0
    %v919 = vadd.f32 %v156, %v918
    %v920 = vpop.f32.mrf.mxu0
    %v921 = vadd.f32 %v156, %v920
    %922 = vmatmul.bf16.gmra.mxu0 %v331
    %v923 = vpop.f32.mrf.mxu0
    %v924 = vadd.f32 %v156, %v923
    %v925 = vpop.f32.mrf.mxu0
    %v926 = vadd.f32 %v156, %v925
    %927 = vmatmul.bf16.gmra.mxu0 %v334
    %v928 = vpop.f32.mrf.mxu0
    %v929 = vadd.f32 %v156, %v928
    %v930 = vpop.f32.mrf.mxu0
    %v931 = vadd.f32 %v156, %v930
    %932 = vmatmul.bf16.gmra.mxu0 %v337
    %v933 = vpop.f32.mrf.mxu0
    %v934 = vadd.f32 %v156, %v933
    %v935 = vpop.f32.mrf.mxu0
    %v936 = vadd.f32 %v156, %v935
    %937 = vmatmul.bf16.gmra.mxu0 %v340
    %v938 = vpop.f32.mrf.mxu0
    %v939 = vadd.f32 %v156, %v938
    %v940 = vpop.f32.mrf.mxu0
    %v941 = vadd.f32 %v156, %v940
    %942 = vmatmul.bf16.gmra.mxu0 %v343
    %v943 = vpop.f32.mrf.mxu0
    %v944 = vadd.f32 %v156, %v943
    %v945 = vpop.f32.mrf.mxu0
    %v946 = vadd.f32 %v156, %v945
    %947 = vmatmul.bf16.gmra.mxu0 %v346
    %v948 = vpop.f32.mrf.mxu0
    %v949 = vadd.f32 %v156, %v948
    %v950 = vpop.f32.mrf.mxu0
    %v951 = vadd.f32 %v156, %v950
    %952 = vmatmul.bf16.gmra.mxu0 %v349
    %v953 = vpop.f32.mrf.mxu0
    %v954 = vadd.f32 %v156, %v953
    %v955 = vpop.f32.mrf.mxu0
    %v956 = vadd.f32 %v156, %v955
    %957 = vmatmul.bf16.gmra.mxu0 %v352
    %v958 = vpop.f32.mrf.mxu0
    %v959 = vadd.f32 %v156, %v958
    %v960 = vpop.f32.mrf.mxu0
    %v961 = vadd.f32 %v156, %v960
    %962 = vmatmul.bf16.gmra.mxu0 %v355
    %v963 = vpop.f32.mrf.mxu0
    %v964 = vadd.f32 %v156, %v963
    %v965 = vpop.f32.mrf.mxu0
    %v966 = vadd.f32 %v156, %v965
    %967 = vmatmul.bf16.gmra.mxu0 %v358
    %v968 = vpop.f32.mrf.mxu0
    %v969 = vadd.f32 %v156, %v968
    %v970 = vpop.f32.mrf.mxu0
    %v971 = vadd.f32 %v156, %v970
    %972 = vmatmul.bf16.gmra.mxu0 %v361
    %v973 = vpop.f32.mrf.mxu0
    %v974 = vadd.f32 %v156, %v973
    %v975 = vpop.f32.mrf.mxu0
    %v976 = vadd.f32 %v156, %v975
    %977 = vmatmul.bf16.gmra.mxu0 %v364
    %v978 = vpop.f32.mrf.mxu0
    %v979 = vadd.f32 %v156, %v978
    %v980 = vpop.f32.mrf.mxu0
    %v981 = vadd.f32 %v156, %v980
    %982 = vmatmul.bf16.gmra.mxu0 %v367
    %v983 = vpop.f32.mrf.mxu0
    %v984 = vadd.f32 %v156, %v983
    %v985 = vpop.f32.mrf.mxu0
    %v986 = vadd.f32 %v156, %v985
    %987 = vmatmul.bf16.gmra.mxu0 %v370
    %v988 = vpop.f32.mrf.mxu0
    %v989 = vadd.f32 %v156, %v988
    %v990 = vpop.f32.mrf.mxu0
    %v991 = vadd.f32 %v156, %v990
    %992 = vmatmul.bf16.gmra.mxu0 %v373
    %v993 = vpop.f32.mrf.mxu0
    %v994 = vadd.f32 %v156, %v993
    %v995 = vpop.f32.mrf.mxu0
    %v996 = vadd.f32 %v156, %v995
    %997 = vdwg.mxu0
    %998 = vmatpush.bf16.msra.mxu0 0
    %999 = vmatpush.bf16.msra.mxu0 0
    %1000 = vmatpush.bf16.msra.mxu0 0
    %1001 = vmatpush.bf16.msra.mxu0 0
    %1002 = vmatpush.bf16.msra.mxu0 0
    %1003 = vmatpush.bf16.msra.mxu0 0
    %1004 = vmatpush.bf16.msra.mxu0 %v309
    %1005 = vmatpush.bf16.msra.mxu0 %v301
    %1006 = vmatmul.bf16.gmra.mxu0 %v328
    %v1007 = vpop.f32.mrf.mxu0
    %v1008 = vadd.f32 %v157, %v1007
    %v1009 = vpop.f32.mrf.mxu0
    %v1010 = vadd.f32 %v157, %v1009
    %1011 = vmatmul.bf16.gmra.mxu0 %v331
    %v1012 = vpop.f32.mrf.mxu0
    %v1013 = vadd.f32 %v157, %v1012
    %v1014 = vpop.f32.mrf.mxu0
    %v1015 = vadd.f32 %v157, %v1014
    %1016 = vmatmul.bf16.gmra.mxu0 %v334
    %v1017 = vpop.f32.mrf.mxu0
    %v1018 = vadd.f32 %v157, %v1017
    %v1019 = vpop.f32.mrf.mxu0
    %v1020 = vadd.f32 %v157, %v1019
    %1021 = vmatmul.bf16.gmra.mxu0 %v337
    %v1022 = vpop.f32.mrf.mxu0
    %v1023 = vadd.f32 %v157, %v1022
    %v1024 = vpop.f32.mrf.mxu0
    %v1025 = vadd.f32 %v157, %v1024
    %1026 = vmatmul.bf16.gmra.mxu0 %v340
    %v1027 = vpop.f32.mrf.mxu0
    %v1028 = vadd.f32 %v157, %v1027
    %v1029 = vpop.f32.mrf.mxu0
    %v1030 = vadd.f32 %v157, %v1029
    %1031 = vmatmul.bf16.gmra.mxu0 %v343
    %v1032 = vpop.f32.mrf.mxu0
    %v1033 = vadd.f32 %v157, %v1032
    %v1034 = vpop.f32.mrf.mxu0
    %v1035 = vadd.f32 %v157, %v1034
    %1036 = vmatmul.bf16.gmra.mxu0 %v346
    %v1037 = vpop.f32.mrf.mxu0
    %v1038 = vadd.f32 %v157, %v1037
    %v1039 = vpop.f32.mrf.mxu0
    %v1040 = vadd.f32 %v157, %v1039
    %1041 = vmatmul.bf16.gmra.mxu0 %v349
    %v1042 = vpop.f32.mrf.mxu0
    %v1043 = vadd.f32 %v157, %v1042
    %v1044 = vpop.f32.mrf.mxu0
    %v1045 = vadd.f32 %v157, %v1044
    %1046 = vmatmul.bf16.gmra.mxu0 %v352
    %v1047 = vpop.f32.mrf.mxu0
    %v1048 = vadd.f32 %v157, %v1047
    %v1049 = vpop.f32.mrf.mxu0
    %v1050 = vadd.f32 %v157, %v1049
    %1051 = vmatmul.bf16.gmra.mxu0 %v355
    %v1052 = vpop.f32.mrf.mxu0
    %v1053 = vadd.f32 %v157, %v1052
    %v1054 = vpop.f32.mrf.mxu0
    %v1055 = vadd.f32 %v157, %v1054
    %1056 = vmatmul.bf16.gmra.mxu0 %v358
    %v1057 = vpop.f32.mrf.mxu0
    %v1058 = vadd.f32 %v157, %v1057
    %v1059 = vpop.f32.mrf.mxu0
    %v1060 = vadd.f32 %v157, %v1059
    %1061 = vmatmul.bf16.gmra.mxu0 %v361
    %v1062 = vpop.f32.mrf.mxu0
    %v1063 = vadd.f32 %v157, %v1062
    %v1064 = vpop.f32.mrf.mxu0
    %v1065 = vadd.f32 %v157, %v1064
    %1066 = vmatmul.bf16.gmra.mxu0 %v364
    %v1067 = vpop.f32.mrf.mxu0
    %v1068 = vadd.f32 %v157, %v1067
    %v1069 = vpop.f32.mrf.mxu0
    %v1070 = vadd.f32 %v157, %v1069
    %1071 = vmatmul.bf16.gmra.mxu0 %v367
    %v1072 = vpop.f32.mrf.mxu0
    %v1073 = vadd.f32 %v157, %v1072
    %v1074 = vpop.f32.mrf.mxu0
    %v1075 = vadd.f32 %v157, %v1074
    %1076 = vmatmul.bf16.gmra.mxu0 %v370
    %v1077 = vpop.f32.mrf.mxu0
    %v1078 = vadd.f32 %v157, %v1077
    %v1079 = vpop.f32.mrf.mxu0
    %v1080 = vadd.f32 %v157, %v1079
    %1081 = vmatmul.bf16.gmra.mxu0 %v373
    %v1082 = vpop.f32.mrf.mxu0
    %v1083 = vadd.f32 %v157, %v1082
    %v1084 = vpop.f32.mrf.mxu0
    %v1085 = vadd.f32 %v157, %v1084
    %1086 = vdwg.mxu0
    %v1087 = vmax.f32 %v385, 0.0
    %v1088 = vmax.f32 %v474, 0.0
    %v1089 = vmax.f32 %v563, 0.0
    %v1090 = vmax.f32 %v652, 0.0
    %v1091 = vmax.f32 %v741, 0.0
    %v1092 = vmax.f32 %v830, 0.0
    %v1093 = vmax.f32 %v919, 0.0
    %v1094 = vmax.f32 %v1008, 0.0
    %v1095 = vmax.f32 %v387, 0.0
    %v1096 = vmax.f32 %v476, 0.0
    %v1097 = vmax.f32 %v565, 0.0
    %v1098 = vmax.f32 %v654, 0.0
    %v1099 = vmax.f32 %v743, 0.0
    %v1100 = vmax.f32 %v832, 0.0
    %v1101 = vmax.f32 %v921, 0.0
    %v1102 = vmax.f32 %v1010, 0.0
    %v1103 = vmax.f32 %v390, 0.0
    %v1104 = vmax.f32 %v479, 0.0
    %v1105 = vmax.f32 %v568, 0.0
    %v1106 = vmax.f32 %v657, 0.0
    %v1107 = vmax.f32 %v746, 0.0
    %v1108 = vmax.f32 %v835, 0.0
    %v1109 = vmax.f32 %v924, 0.0
    %v1110 = vmax.f32 %v1013, 0.0
    %v1111 = vmax.f32 %v392, 0.0
    %v1112 = vmax.f32 %v481, 0.0
    %v1113 = vmax.f32 %v570, 0.0
    %v1114 = vmax.f32 %v659, 0.0
    %v1115 = vmax.f32 %v748, 0.0
    %v1116 = vmax.f32 %v837, 0.0
    %v1117 = vmax.f32 %v926, 0.0
    %v1118 = vmax.f32 %v1015, 0.0
    %v1119 = vmax.f32 %v395, 0.0
    %v1120 = vmax.f32 %v484, 0.0
    %v1121 = vmax.f32 %v573, 0.0
    %v1122 = vmax.f32 %v662, 0.0
    %v1123 = vmax.f32 %v751, 0.0
    %v1124 = vmax.f32 %v840, 0.0
    %v1125 = vmax.f32 %v929, 0.0
    %v1126 = vmax.f32 %v1018, 0.0
    %v1127 = vmax.f32 %v397, 0.0
    %v1128 = vmax.f32 %v486, 0.0
    %v1129 = vmax.f32 %v575, 0.0
    %v1130 = vmax.f32 %v664, 0.0
    %v1131 = vmax.f32 %v753, 0.0
    %v1132 = vmax.f32 %v842, 0.0
    %v1133 = vmax.f32 %v931, 0.0
    %v1134 = vmax.f32 %v1020, 0.0
    %v1135 = vmax.f32 %v400, 0.0
    %v1136 = vmax.f32 %v489, 0.0
    %v1137 = vmax.f32 %v578, 0.0
    %v1138 = vmax.f32 %v667, 0.0
    %v1139 = vmax.f32 %v756, 0.0
    %v1140 = vmax.f32 %v845, 0.0
    %v1141 = vmax.f32 %v934, 0.0
    %v1142 = vmax.f32 %v1023, 0.0
    %v1143 = vmax.f32 %v402, 0.0
    %v1144 = vmax.f32 %v491, 0.0
    %v1145 = vmax.f32 %v580, 0.0
    %v1146 = vmax.f32 %v669, 0.0
    %v1147 = vmax.f32 %v758, 0.0
    %v1148 = vmax.f32 %v847, 0.0
    %v1149 = vmax.f32 %v936, 0.0
    %v1150 = vmax.f32 %v1025, 0.0
    %v1151 = vmax.f32 %v405, 0.0
    %v1152 = vmax.f32 %v494, 0.0
    %v1153 = vmax.f32 %v583, 0.0
    %v1154 = vmax.f32 %v672, 0.0
    %v1155 = vmax.f32 %v761, 0.0
    %v1156 = vmax.f32 %v850, 0.0
    %v1157 = vmax.f32 %v939, 0.0
    %v1158 = vmax.f32 %v1028, 0.0
    %v1159 = vmax.f32 %v407, 0.0
    %v1160 = vmax.f32 %v496, 0.0
    %v1161 = vmax.f32 %v585, 0.0
    %v1162 = vmax.f32 %v674, 0.0
    %v1163 = vmax.f32 %v763, 0.0
    %v1164 = vmax.f32 %v852, 0.0
    %v1165 = vmax.f32 %v941, 0.0
    %v1166 = vmax.f32 %v1030, 0.0
    %v1167 = vmax.f32 %v410, 0.0
    %v1168 = vmax.f32 %v499, 0.0
    %v1169 = vmax.f32 %v588, 0.0
    %v1170 = vmax.f32 %v677, 0.0
    %v1171 = vmax.f32 %v766, 0.0
    %v1172 = vmax.f32 %v855, 0.0
    %v1173 = vmax.f32 %v944, 0.0
    %v1174 = vmax.f32 %v1033, 0.0
    %v1175 = vmax.f32 %v412, 0.0
    %v1176 = vmax.f32 %v501, 0.0
    %v1177 = vmax.f32 %v590, 0.0
    %v1178 = vmax.f32 %v679, 0.0
    %v1179 = vmax.f32 %v768, 0.0
    %v1180 = vmax.f32 %v857, 0.0
    %v1181 = vmax.f32 %v946, 0.0
    %v1182 = vmax.f32 %v1035, 0.0
    %v1183 = vmax.f32 %v415, 0.0
    %v1184 = vmax.f32 %v504, 0.0
    %v1185 = vmax.f32 %v593, 0.0
    %v1186 = vmax.f32 %v682, 0.0
    %v1187 = vmax.f32 %v771, 0.0
    %v1188 = vmax.f32 %v860, 0.0
    %v1189 = vmax.f32 %v949, 0.0
    %v1190 = vmax.f32 %v1038, 0.0
    %v1191 = vmax.f32 %v417, 0.0
    %v1192 = vmax.f32 %v506, 0.0
    %v1193 = vmax.f32 %v595, 0.0
    %v1194 = vmax.f32 %v684, 0.0
    %v1195 = vmax.f32 %v773, 0.0
    %v1196 = vmax.f32 %v862, 0.0
    %v1197 = vmax.f32 %v951, 0.0
    %v1198 = vmax.f32 %v1040, 0.0
    %v1199 = vmax.f32 %v420, 0.0
    %v1200 = vmax.f32 %v509, 0.0
    %v1201 = vmax.f32 %v598, 0.0
    %v1202 = vmax.f32 %v687, 0.0
    %v1203 = vmax.f32 %v776, 0.0
    %v1204 = vmax.f32 %v865, 0.0
    %v1205 = vmax.f32 %v954, 0.0
    %v1206 = vmax.f32 %v1043, 0.0
    %v1207 = vmax.f32 %v422, 0.0
    %v1208 = vmax.f32 %v511, 0.0
    %v1209 = vmax.f32 %v600, 0.0
    %v1210 = vmax.f32 %v689, 0.0
    %v1211 = vmax.f32 %v778, 0.0
    %v1212 = vmax.f32 %v867, 0.0
    %v1213 = vmax.f32 %v956, 0.0
    %v1214 = vmax.f32 %v1045, 0.0
    %v1215 = vmax.f32 %v425, 0.0
    %v1216 = vmax.f32 %v514, 0.0
    %v1217 = vmax.f32 %v603, 0.0
    %v1218 = vmax.f32 %v692, 0.0
    %v1219 = vmax.f32 %v781, 0.0
    %v1220 = vmax.f32 %v870, 0.0
    %v1221 = vmax.f32 %v959, 0.0
    %v1222 = vmax.f32 %v1048, 0.0
    %v1223 = vmax.f32 %v427, 0.0
    %v1224 = vmax.f32 %v516, 0.0
    %v1225 = vmax.f32 %v605, 0.0
    %v1226 = vmax.f32 %v694, 0.0
    %v1227 = vmax.f32 %v783, 0.0
    %v1228 = vmax.f32 %v872, 0.0
    %v1229 = vmax.f32 %v961, 0.0
    %v1230 = vmax.f32 %v1050, 0.0
    %v1231 = vmax.f32 %v430, 0.0
    %v1232 = vmax.f32 %v519, 0.0
    %v1233 = vmax.f32 %v608, 0.0
    %v1234 = vmax.f32 %v697, 0.0
    %v1235 = vmax.f32 %v786, 0.0
    %v1236 = vmax.f32 %v875, 0.0
    %v1237 = vmax.f32 %v964, 0.0
    %v1238 = vmax.f32 %v1053, 0.0
    %v1239 = vmax.f32 %v432, 0.0
    %v1240 = vmax.f32 %v521, 0.0
    %v1241 = vmax.f32 %v610, 0.0
    %v1242 = vmax.f32 %v699, 0.0
    %v1243 = vmax.f32 %v788, 0.0
    %v1244 = vmax.f32 %v877, 0.0
    %v1245 = vmax.f32 %v966, 0.0
    %v1246 = vmax.f32 %v1055, 0.0
    %v1247 = vmax.f32 %v435, 0.0
    %v1248 = vmax.f32 %v524, 0.0
    %v1249 = vmax.f32 %v613, 0.0
    %v1250 = vmax.f32 %v702, 0.0
    %v1251 = vmax.f32 %v791, 0.0
    %v1252 = vmax.f32 %v880, 0.0
    %v1253 = vmax.f32 %v969, 0.0
    %v1254 = vmax.f32 %v1058, 0.0
    %v1255 = vmax.f32 %v437, 0.0
    %v1256 = vmax.f32 %v526, 0.0
    %v1257 = vmax.f32 %v615, 0.0
    %v1258 = vmax.f32 %v704, 0.0
    %v1259 = vmax.f32 %v793, 0.0
    %v1260 = vmax.f32 %v882, 0.0
    %v1261 = vmax.f32 %v971, 0.0
    %v1262 = vmax.f32 %v1060, 0.0
    %v1263 = vmax.f32 %v440, 0.0
    %v1264 = vmax.f32 %v529, 0.0
    %v1265 = vmax.f32 %v618, 0.0
    %v1266 = vmax.f32 %v707, 0.0
    %v1267 = vmax.f32 %v796, 0.0
    %v1268 = vmax.f32 %v885, 0.0
    %v1269 = vmax.f32 %v974, 0.0
    %v1270 = vmax.f32 %v1063, 0.0
    %v1271 = vmax.f32 %v442, 0.0
    %v1272 = vmax.f32 %v531, 0.0
    %v1273 = vmax.f32 %v620, 0.0
    %v1274 = vmax.f32 %v709, 0.0
    %v1275 = vmax.f32 %v798, 0.0
    %v1276 = vmax.f32 %v887, 0.0
    %v1277 = vmax.f32 %v976, 0.0
    %v1278 = vmax.f32 %v1065, 0.0
    %v1279 = vmax.f32 %v445, 0.0
    %v1280 = vmax.f32 %v534, 0.0
    %v1281 = vmax.f32 %v623, 0.0
    %v1282 = vmax.f32 %v712, 0.0
    %v1283 = vmax.f32 %v801, 0.0
    %v1284 = vmax.f32 %v890, 0.0
    %v1285 = vmax.f32 %v979, 0.0
    %v1286 = vmax.f32 %v1068, 0.0
    %v1287 = vmax.f32 %v447, 0.0
    %v1288 = vmax.f32 %v536, 0.0
    %v1289 = vmax.f32 %v625, 0.0
    %v1290 = vmax.f32 %v714, 0.0
    %v1291 = vmax.f32 %v803, 0.0
    %v1292 = vmax.f32 %v892, 0.0
    %v1293 = vmax.f32 %v981, 0.0
    %v1294 = vmax.f32 %v1070, 0.0
    %v1295 = vmax.f32 %v450, 0.0
    %v1296 = vmax.f32 %v539, 0.0
    %v1297 = vmax.f32 %v628, 0.0
    %v1298 = vmax.f32 %v717, 0.0
    %v1299 = vmax.f32 %v806, 0.0
    %v1300 = vmax.f32 %v895, 0.0
    %v1301 = vmax.f32 %v984, 0.0
    %v1302 = vmax.f32 %v1073, 0.0
    %v1303 = vmax.f32 %v452, 0.0
    %v1304 = vmax.f32 %v541, 0.0
    %v1305 = vmax.f32 %v630, 0.0
    %v1306 = vmax.f32 %v719, 0.0
    %v1307 = vmax.f32 %v808, 0.0
    %v1308 = vmax.f32 %v897, 0.0
    %v1309 = vmax.f32 %v986, 0.0
    %v1310 = vmax.f32 %v1075, 0.0
    %v1311 = vmax.f32 %v455, 0.0
    %v1312 = vmax.f32 %v544, 0.0
    %v1313 = vmax.f32 %v633, 0.0
    %v1314 = vmax.f32 %v722, 0.0
    %v1315 = vmax.f32 %v811, 0.0
    %v1316 = vmax.f32 %v900, 0.0
    %v1317 = vmax.f32 %v989, 0.0
    %v1318 = vmax.f32 %v1078, 0.0
    %v1319 = vmax.f32 %v457, 0.0
    %v1320 = vmax.f32 %v546, 0.0
    %v1321 = vmax.f32 %v635, 0.0
    %v1322 = vmax.f32 %v724, 0.0
    %v1323 = vmax.f32 %v813, 0.0
    %v1324 = vmax.f32 %v902, 0.0
    %v1325 = vmax.f32 %v991, 0.0
    %v1326 = vmax.f32 %v1080, 0.0
    %v1327 = vmax.f32 %v460, 0.0
    %v1328 = vmax.f32 %v549, 0.0
    %v1329 = vmax.f32 %v638, 0.0
    %v1330 = vmax.f32 %v727, 0.0
    %v1331 = vmax.f32 %v816, 0.0
    %v1332 = vmax.f32 %v905, 0.0
    %v1333 = vmax.f32 %v994, 0.0
    %v1334 = vmax.f32 %v1083, 0.0
    %v1335 = vmax.f32 %v462, 0.0
    %v1336 = vmax.f32 %v551, 0.0
    %v1337 = vmax.f32 %v640, 0.0
    %v1338 = vmax.f32 %v729, 0.0
    %v1339 = vmax.f32 %v818, 0.0
    %v1340 = vmax.f32 %v907, 0.0
    %v1341 = vmax.f32 %v996, 0.0
    %v1342 = vmax.f32 %v1085, 0.0
    %v1343 = vpack.c.bf16 %v1095, %v1087
    %v1344 = vpack.c.bf16 %v1096, %v1088
    %v1345 = vpack.c.bf16 %v1097, %v1089
    %v1346 = vpack.c.bf16 %v1098, %v1090
    %v1347 = vpack.c.bf16 %v1099, %v1091
    %v1348 = vpack.c.bf16 %v1100, %v1092
    %v1349 = vpack.c.bf16 %v1101, %v1093
    %v1350 = vpack.c.bf16 %v1102, %v1094
    %v1351 = vpack.c.bf16 %v1111, %v1103
    %v1352 = vpack.c.bf16 %v1112, %v1104
    %v1353 = vpack.c.bf16 %v1113, %v1105
    %v1354 = vpack.c.bf16 %v1114, %v1106
    %v1355 = vpack.c.bf16 %v1115, %v1107
    %v1356 = vpack.c.bf16 %v1116, %v1108
    %v1357 = vpack.c.bf16 %v1117, %v1109
    %v1358 = vpack.c.bf16 %v1118, %v1110
    %v1359 = vpack.c.bf16 %v1127, %v1119
    %v1360 = vpack.c.bf16 %v1128, %v1120
    %v1361 = vpack.c.bf16 %v1129, %v1121
    %v1362 = vpack.c.bf16 %v1130, %v1122
    %v1363 = vpack.c.bf16 %v1131, %v1123
    %v1364 = vpack.c.bf16 %v1132, %v1124
    %v1365 = vpack.c.bf16 %v1133, %v1125
    %v1366 = vpack.c.bf16 %v1134, %v1126
    %v1367 = vpack.c.bf16 %v1143, %v1135
    %v1368 = vpack.c.bf16 %v1144, %v1136
    %v1369 = vpack.c.bf16 %v1145, %v1137
    %v1370 = vpack.c.bf16 %v1146, %v1138
    %v1371 = vpack.c.bf16 %v1147, %v1139
    %v1372 = vpack.c.bf16 %v1148, %v1140
    %v1373 = vpack.c.bf16 %v1149, %v1141
    %v1374 = vpack.c.bf16 %v1150, %v1142
    %v1375 = vpack.c.bf16 %v1159, %v1151
    %v1376 = vpack.c.bf16 %v1160, %v1152
    %v1377 = vpack.c.bf16 %v1161, %v1153
    %v1378 = vpack.c.bf16 %v1162, %v1154
    %v1379 = vpack.c.bf16 %v1163, %v1155
    %v1380 = vpack.c.bf16 %v1164, %v1156
    %v1381 = vpack.c.bf16 %v1165, %v1157
    %v1382 = vpack.c.bf16 %v1166, %v1158
    %v1383 = vpack.c.bf16 %v1175, %v1167
    %v1384 = vpack.c.bf16 %v1176, %v1168
    %v1385 = vpack.c.bf16 %v1177, %v1169
    %v1386 = vpack.c.bf16 %v1178, %v1170
    %v1387 = vpack.c.bf16 %v1179, %v1171
    %v1388 = vpack.c.bf16 %v1180, %v1172
    %v1389 = vpack.c.bf16 %v1181, %v1173
    %v1390 = vpack.c.bf16 %v1182, %v1174
    %v1391 = vpack.c.bf16 %v1191, %v1183
    %v1392 = vpack.c.bf16 %v1192, %v1184
    %v1393 = vpack.c.bf16 %v1193, %v1185
    %v1394 = vpack.c.bf16 %v1194, %v1186
    %v1395 = vpack.c.bf16 %v1195, %v1187
    %v1396 = vpack.c.bf16 %v1196, %v1188
    %v1397 = vpack.c.bf16 %v1197, %v1189
    %v1398 = vpack.c.bf16 %v1198, %v1190
    %v1399 = vpack.c.bf16 %v1207, %v1199
    %v1400 = vpack.c.bf16 %v1208, %v1200
    %v1401 = vpack.c.bf16 %v1209, %v1201
    %v1402 = vpack.c.bf16 %v1210, %v1202
    %v1403 = vpack.c.bf16 %v1211, %v1203
    %v1404 = vpack.c.bf16 %v1212, %v1204
    %v1405 = vpack.c.bf16 %v1213, %v1205
    %v1406 = vpack.c.bf16 %v1214, %v1206
    %v1407 = vpack.c.bf16 %v1223, %v1215
    %v1408 = vpack.c.bf16 %v1224, %v1216
    %v1409 = vpack.c.bf16 %v1225, %v1217
    %v1410 = vpack.c.bf16 %v1226, %v1218
    %v1411 = vpack.c.bf16 %v1227, %v1219
    %v1412 = vpack.c.bf16 %v1228, %v1220
    %v1413 = vpack.c.bf16 %v1229, %v1221
    %v1414 = vpack.c.bf16 %v1230, %v1222
    %v1415 = vpack.c.bf16 %v1239, %v1231
    %v1416 = vpack.c.bf16 %v1240, %v1232
    %v1417 = vpack.c.bf16 %v1241, %v1233
    %v1418 = vpack.c.bf16 %v1242, %v1234
    %v1419 = vpack.c.bf16 %v1243, %v1235
    %v1420 = vpack.c.bf16 %v1244, %v1236
    %v1421 = vpack.c.bf16 %v1245, %v1237
    %v1422 = vpack.c.bf16 %v1246, %v1238
    %v1423 = vpack.c.bf16 %v1255, %v1247
    %v1424 = vpack.c.bf16 %v1256, %v1248
    %v1425 = vpack.c.bf16 %v1257, %v1249
    %v1426 = vpack.c.bf16 %v1258, %v1250
    %v1427 = vpack.c.bf16 %v1259, %v1251
    %v1428 = vpack.c.bf16 %v1260, %v1252
    %v1429 = vpack.c.bf16 %v1261, %v1253
    %v1430 = vpack.c.bf16 %v1262, %v1254
    %v1431 = vpack.c.bf16 %v1271, %v1263
    %v1432 = vpack.c.bf16 %v1272, %v1264
    %v1433 = vpack.c.bf16 %v1273, %v1265
    %v1434 = vpack.c.bf16 %v1274, %v1266
    %v1435 = vpack.c.bf16 %v1275, %v1267
    %v1436 = vpack.c.bf16 %v1276, %v1268
    %v1437 = vpack.c.bf16 %v1277, %v1269
    %v1438 = vpack.c.bf16 %v1278, %v1270
    %v1439 = vpack.c.bf16 %v1287, %v1279
    %v1440 = vpack.c.bf16 %v1288, %v1280
    %v1441 = vpack.c.bf16 %v1289, %v1281
    %v1442 = vpack.c.bf16 %v1290, %v1282
    %v1443 = vpack.c.bf16 %v1291, %v1283
    %v1444 = vpack.c.bf16 %v1292, %v1284
    %v1445 = vpack.c.bf16 %v1293, %v1285
    %v1446 = vpack.c.bf16 %v1294, %v1286
    %v1447 = vpack.c.bf16 %v1303, %v1295
    %v1448 = vpack.c.bf16 %v1304, %v1296
    %v1449 = vpack.c.bf16 %v1305, %v1297
    %v1450 = vpack.c.bf16 %v1306, %v1298
    %v1451 = vpack.c.bf16 %v1307, %v1299
    %v1452 = vpack.c.bf16 %v1308, %v1300
    %v1453 = vpack.c.bf16 %v1309, %v1301
    %v1454 = vpack.c.bf16 %v1310, %v1302
    %v1455 = vpack.c.bf16 %v1319, %v1311
    %v1456 = vpack.c.bf16 %v1320, %v1312
    %v1457 = vpack.c.bf16 %v1321, %v1313
    %v1458 = vpack.c.bf16 %v1322, %v1314
    %v1459 = vpack.c.bf16 %v1323, %v1315
    %v1460 = vpack.c.bf16 %v1324, %v1316
    %v1461 = vpack.c.bf16 %v1325, %v1317
    %v1462 = vpack.c.bf16 %v1326, %v1318
    %v1463 = vpack.c.bf16 %v1335, %v1327
    %v1464 = vpack.c.bf16 %v1336, %v1328
    %v1465 = vpack.c.bf16 %v1337, %v1329
    %v1466 = vpack.c.bf16 %v1338, %v1330
    %v1467 = vpack.c.bf16 %v1339, %v1331
    %v1468 = vpack.c.bf16 %v1340, %v1332
    %v1469 = vpack.c.bf16 %v1341, %v1333
    %v1470 = vpack.c.bf16 %v1342, %v1334
    %v1471 = vld [vmem:[#allocation7] sm:$0xff]
    %v1472 = vld [vmem:[#allocation7 + $0x8] sm:$0xff]
    %v1473 = vld [vmem:[#allocation7 + $0x10] sm:$0xff]
    %v1474 = vld [vmem:[#allocation7 + $0x18] sm:$0xff]
    %v1475 = vld [vmem:[#allocation7 + $0x20] sm:$0xff]
    %v1476 = vld [vmem:[#allocation7 + $0x28] sm:$0xff]
    %v1477 = vld [vmem:[#allocation7 + $0x30] sm:$0xff]
    %v1478 = vld [vmem:[#allocation7 + $0x38] sm:$0xff]
    %v1479 = vld [vmem:[#allocation7 + $0x40] sm:$0xff]
    %v1480 = vld [vmem:[#allocation7 + $0x48] sm:$0xff]
    %v1481 = vld [vmem:[#allocation7 + $0x50] sm:$0xff]
    %v1482 = vld [vmem:[#allocation7 + $0x58] sm:$0xff]
    %v1483 = vld [vmem:[#allocation7 + $0x60] sm:$0xff]
    %v1484 = vld [vmem:[#allocation7 + $0x68] sm:$0xff]
    %v1485 = vld [vmem:[#allocation7 + $0x70] sm:$0xff]
    %v1486 = vld [vmem:[#allocation7 + $0x78] sm:$0xff]
    %v1487 = vld [vmem:[#allocation7 + $0x80] sm:$0xff]
    %v1488 = vld [vmem:[#allocation7 + $0x88] sm:$0xff]
    %v1489 = vld [vmem:[#allocation7 + $0x90] sm:$0xff]
    %v1490 = vld [vmem:[#allocation7 + $0x98] sm:$0xff]
    %v1491 = vld [vmem:[#allocation7 + $0xa0] sm:$0xff]
    %v1492 = vld [vmem:[#allocation7 + $0xa8] sm:$0xff]
    %v1493 = vld [vmem:[#allocation7 + $0xb0] sm:$0xff]
    %v1494 = vld [vmem:[#allocation7 + $0xb8] sm:$0xff]
    %v1495 = vld [vmem:[#allocation7 + $0xc0] sm:$0xff]
    %v1496 = vld [vmem:[#allocation7 + $0xc8] sm:$0xff]
    %v1497 = vld [vmem:[#allocation7 + $0xd0] sm:$0xff]
    %v1498 = vld [vmem:[#allocation7 + $0xd8] sm:$0xff]
    %v1499 = vld [vmem:[#allocation7 + $0xe0] sm:$0xff]
    %v1500 = vld [vmem:[#allocation7 + $0xe8] sm:$0xff]
    %v1501 = vld [vmem:[#allocation7 + $0xf0] sm:$0xff]
    %v1502 = vld [vmem:[#allocation7 + $0xf8] sm:$0xff]
    %v1503 = vld [vmem:[#allocation7 + $0x100] sm:$0xff]
    %v1504 = vld [vmem:[#allocation7 + $0x108] sm:$0xff]
    %v1505 = vld [vmem:[#allocation7 + $0x110] sm:$0xff]
    %v1506 = vld [vmem:[#allocation7 + $0x118] sm:$0xff]
    %v1507 = vld [vmem:[#allocation7 + $0x120] sm:$0xff]
    %v1508 = vld [vmem:[#allocation7 + $0x128] sm:$0xff]
    %v1509 = vld [vmem:[#allocation7 + $0x130] sm:$0xff]
    %v1510 = vld [vmem:[#allocation7 + $0x138] sm:$0xff]
    %v1511 = vld [vmem:[#allocation7 + $0x140] sm:$0xff]
    %v1512 = vld [vmem:[#allocation7 + $0x148] sm:$0xff]
    %v1513 = vld [vmem:[#allocation7 + $0x150] sm:$0xff]
    %v1514 = vld [vmem:[#allocation7 + $0x158] sm:$0xff]
    %v1515 = vld [vmem:[#allocation7 + $0x160] sm:$0xff]
    %v1516 = vld [vmem:[#allocation7 + $0x168] sm:$0xff]
    %v1517 = vld [vmem:[#allocation7 + $0x170] sm:$0xff]
    %v1518 = vld [vmem:[#allocation7 + $0x178] sm:$0xff]
    %v1519 = vld [vmem:[#allocation7 + $0x180] sm:$0xff]
    %v1520 = vld [vmem:[#allocation7 + $0x188] sm:$0xff]
    %v1521 = vld [vmem:[#allocation7 + $0x190] sm:$0xff]
    %v1522 = vld [vmem:[#allocation7 + $0x198] sm:$0xff]
    %v1523 = vld [vmem:[#allocation7 + $0x1a0] sm:$0xff]
    %v1524 = vld [vmem:[#allocation7 + $0x1a8] sm:$0xff]
    %v1525 = vld [vmem:[#allocation7 + $0x1b0] sm:$0xff]
    %v1526 = vld [vmem:[#allocation7 + $0x1b8] sm:$0xff]
    %v1527 = vld [vmem:[#allocation7 + $0x1c0] sm:$0xff]
    %v1528 = vld [vmem:[#allocation7 + $0x1c8] sm:$0xff]
    %v1529 = vld [vmem:[#allocation7 + $0x1d0] sm:$0xff]
    %v1530 = vld [vmem:[#allocation7 + $0x1d8] sm:$0xff]
    %v1531 = vld [vmem:[#allocation7 + $0x1e0] sm:$0xff]
    %v1532 = vld [vmem:[#allocation7 + $0x1e8] sm:$0xff]
    %v1533 = vld [vmem:[#allocation7 + $0x1f0] sm:$0xff]
    %v1534 = vld [vmem:[#allocation7 + $0x1f8] sm:$0xff]
    %v1535 = vld [vmem:[#allocation7 + $0x200] sm:$0xff]
    %v1536 = vld [vmem:[#allocation7 + $0x208] sm:$0xff]
    %v1537 = vld [vmem:[#allocation7 + $0x210] sm:$0xff]
    %v1538 = vld [vmem:[#allocation7 + $0x218] sm:$0xff]
    %v1539 = vld [vmem:[#allocation7 + $0x220] sm:$0xff]
    %v1540 = vld [vmem:[#allocation7 + $0x228] sm:$0xff]
    %v1541 = vld [vmem:[#allocation7 + $0x230] sm:$0xff]
    %v1542 = vld [vmem:[#allocation7 + $0x238] sm:$0xff]
    %v1543 = vld [vmem:[#allocation7 + $0x240] sm:$0xff]
    %v1544 = vld [vmem:[#allocation7 + $0x248] sm:$0xff]
    %v1545 = vld [vmem:[#allocation7 + $0x250] sm:$0xff]
    %v1546 = vld [vmem:[#allocation7 + $0x258] sm:$0xff]
    %v1547 = vld [vmem:[#allocation7 + $0x260] sm:$0xff]
    %v1548 = vld [vmem:[#allocation7 + $0x268] sm:$0xff]
    %v1549 = vld [vmem:[#allocation7 + $0x270] sm:$0xff]
    %v1550 = vld [vmem:[#allocation7 + $0x278] sm:$0xff]
    %v1551 = vld [vmem:[#allocation7 + $0x280] sm:$0xff]
    %v1552 = vld [vmem:[#allocation7 + $0x288] sm:$0xff]
    %v1553 = vld [vmem:[#allocation7 + $0x290] sm:$0xff]
    %v1554 = vld [vmem:[#allocation7 + $0x298] sm:$0xff]
    %v1555 = vld [vmem:[#allocation7 + $0x2a0] sm:$0xff]
    %v1556 = vld [vmem:[#allocation7 + $0x2a8] sm:$0xff]
    %v1557 = vld [vmem:[#allocation7 + $0x2b0] sm:$0xff]
    %v1558 = vld [vmem:[#allocation7 + $0x2b8] sm:$0xff]
    %v1559 = vld [vmem:[#allocation7 + $0x2c0] sm:$0xff]
    %v1560 = vld [vmem:[#allocation7 + $0x2c8] sm:$0xff]
    %v1561 = vld [vmem:[#allocation7 + $0x2d0] sm:$0xff]
    %v1562 = vld [vmem:[#allocation7 + $0x2d8] sm:$0xff]
    %v1563 = vld [vmem:[#allocation7 + $0x2e0] sm:$0xff]
    %v1564 = vld [vmem:[#allocation7 + $0x2e8] sm:$0xff]
    %v1565 = vld [vmem:[#allocation7 + $0x2f0] sm:$0xff]
    %v1566 = vld [vmem:[#allocation7 + $0x2f8] sm:$0xff]
    %v1567 = vld [vmem:[#allocation7 + $0x300] sm:$0xff]
    %v1568 = vld [vmem:[#allocation7 + $0x308] sm:$0xff]
    %v1569 = vld [vmem:[#allocation7 + $0x310] sm:$0xff]
    %v1570 = vld [vmem:[#allocation7 + $0x318] sm:$0xff]
    %v1571 = vld [vmem:[#allocation7 + $0x320] sm:$0xff]
    %v1572 = vld [vmem:[#allocation7 + $0x328] sm:$0xff]
    %v1573 = vld [vmem:[#allocation7 + $0x330] sm:$0xff]
    %v1574 = vld [vmem:[#allocation7 + $0x338] sm:$0xff]
    %v1575 = vld [vmem:[#allocation7 + $0x340] sm:$0xff]
    %v1576 = vld [vmem:[#allocation7 + $0x348] sm:$0xff]
    %v1577 = vld [vmem:[#allocation7 + $0x350] sm:$0xff]
    %v1578 = vld [vmem:[#allocation7 + $0x358] sm:$0xff]
    %v1579 = vld [vmem:[#allocation7 + $0x360] sm:$0xff]
    %v1580 = vld [vmem:[#allocation7 + $0x368] sm:$0xff]
    %v1581 = vld [vmem:[#allocation7 + $0x370] sm:$0xff]
    %v1582 = vld [vmem:[#allocation7 + $0x378] sm:$0xff]
    %v1583 = vld [vmem:[#allocation7 + $0x380] sm:$0xff]
    %v1584 = vld [vmem:[#allocation7 + $0x388] sm:$0xff]
    %v1585 = vld [vmem:[#allocation7 + $0x390] sm:$0xff]
    %v1586 = vld [vmem:[#allocation7 + $0x398] sm:$0xff]
    %v1587 = vld [vmem:[#allocation7 + $0x3a0] sm:$0xff]
    %v1588 = vld [vmem:[#allocation7 + $0x3a8] sm:$0xff]
    %v1589 = vld [vmem:[#allocation7 + $0x3b0] sm:$0xff]
    %v1590 = vld [vmem:[#allocation7 + $0x3b8] sm:$0xff]
    %v1591 = vld [vmem:[#allocation7 + $0x3c0] sm:$0xff]
    %v1592 = vld [vmem:[#allocation7 + $0x3c8] sm:$0xff]
    %v1593 = vld [vmem:[#allocation7 + $0x3d0] sm:$0xff]
    %v1594 = vld [vmem:[#allocation7 + $0x3d8] sm:$0xff]
    %v1595 = vld [vmem:[#allocation7 + $0x3e0] sm:$0xff]
    %v1596 = vld [vmem:[#allocation7 + $0x3e8] sm:$0xff]
    %v1597 = vld [vmem:[#allocation7 + $0x3f0] sm:$0xff]
    %v1598 = vld [vmem:[#allocation7 + $0x3f8] sm:$0xff]
    %v1599 = vld [vmem:[#allocation7 + $0x400] sm:$0xff]
    %v1600 = vld [vmem:[#allocation7 + $0x408] sm:$0xff]
    %v1601 = vld [vmem:[#allocation7 + $0x410] sm:$0xff]
    %v1602 = vld [vmem:[#allocation7 + $0x418] sm:$0xff]
    %v1603 = vld [vmem:[#allocation7 + $0x420] sm:$0xff]
    %v1604 = vld [vmem:[#allocation7 + $0x428] sm:$0xff]
    %v1605 = vld [vmem:[#allocation7 + $0x430] sm:$0xff]
    %v1606 = vld [vmem:[#allocation7 + $0x438] sm:$0xff]
    %v1607 = vld [vmem:[#allocation7 + $0x440] sm:$0xff]
    %v1608 = vld [vmem:[#allocation7 + $0x448] sm:$0xff]
    %v1609 = vld [vmem:[#allocation7 + $0x450] sm:$0xff]
    %v1610 = vld [vmem:[#allocation7 + $0x458] sm:$0xff]
    %v1611 = vld [vmem:[#allocation7 + $0x460] sm:$0xff]
    %v1612 = vld [vmem:[#allocation7 + $0x468] sm:$0xff]
    %v1613 = vld [vmem:[#allocation7 + $0x470] sm:$0xff]
    %v1614 = vld [vmem:[#allocation7 + $0x478] sm:$0xff]
    %v1615 = vld [vmem:[#allocation7 + $0x480] sm:$0xff]
    %v1616 = vld [vmem:[#allocation7 + $0x488] sm:$0xff]
    %v1617 = vld [vmem:[#allocation7 + $0x490] sm:$0xff]
    %v1618 = vld [vmem:[#allocation7 + $0x498] sm:$0xff]
    %v1619 = vld [vmem:[#allocation7 + $0x4a0] sm:$0xff]
    %v1620 = vld [vmem:[#allocation7 + $0x4a8] sm:$0xff]
    %v1621 = vld [vmem:[#allocation7 + $0x4b0] sm:$0xff]
    %v1622 = vld [vmem:[#allocation7 + $0x4b8] sm:$0xff]
    %v1623 = vld [vmem:[#allocation7 + $0x4c0] sm:$0xff]
    %v1624 = vld [vmem:[#allocation7 + $0x4c8] sm:$0xff]
    %v1625 = vld [vmem:[#allocation7 + $0x4d0] sm:$0xff]
    %v1626 = vld [vmem:[#allocation7 + $0x4d8] sm:$0xff]
    %v1627 = vld [vmem:[#allocation7 + $0x4e0] sm:$0xff]
    %v1628 = vld [vmem:[#allocation7 + $0x4e8] sm:$0xff]
    %v1629 = vld [vmem:[#allocation7 + $0x4f0] sm:$0xff]
    %v1630 = vld [vmem:[#allocation7 + $0x4f8] sm:$0xff]
    %v1631 = vld [vmem:[#allocation7 + $0x500] sm:$0xff]
    %v1632 = vld [vmem:[#allocation7 + $0x508] sm:$0xff]
    %v1633 = vld [vmem:[#allocation7 + $0x510] sm:$0xff]
    %v1634 = vld [vmem:[#allocation7 + $0x518] sm:$0xff]
    %v1635 = vld [vmem:[#allocation7 + $0x520] sm:$0xff]
    %v1636 = vld [vmem:[#allocation7 + $0x528] sm:$0xff]
    %v1637 = vld [vmem:[#allocation7 + $0x530] sm:$0xff]
    %v1638 = vld [vmem:[#allocation7 + $0x538] sm:$0xff]
    %v1639 = vld [vmem:[#allocation7 + $0x540] sm:$0xff]
    %v1640 = vld [vmem:[#allocation7 + $0x548] sm:$0xff]
    %v1641 = vld [vmem:[#allocation7 + $0x550] sm:$0xff]
    %v1642 = vld [vmem:[#allocation7 + $0x558] sm:$0xff]
    %v1643 = vld [vmem:[#allocation7 + $0x560] sm:$0xff]
    %v1644 = vld [vmem:[#allocation7 + $0x568] sm:$0xff]
    %v1645 = vld [vmem:[#allocation7 + $0x570] sm:$0xff]
    %v1646 = vld [vmem:[#allocation7 + $0x578] sm:$0xff]
    %v1647 = vld [vmem:[#allocation7 + $0x580] sm:$0xff]
    %v1648 = vld [vmem:[#allocation7 + $0x588] sm:$0xff]
    %v1649 = vld [vmem:[#allocation7 + $0x590] sm:$0xff]
    %v1650 = vld [vmem:[#allocation7 + $0x598] sm:$0xff]
    %v1651 = vld [vmem:[#allocation7 + $0x5a0] sm:$0xff]
    %v1652 = vld [vmem:[#allocation7 + $0x5a8] sm:$0xff]
    %v1653 = vld [vmem:[#allocation7 + $0x5b0] sm:$0xff]
    %v1654 = vld [vmem:[#allocation7 + $0x5b8] sm:$0xff]
    %v1655 = vld [vmem:[#allocation7 + $0x5c0] sm:$0xff]
    %v1656 = vld [vmem:[#allocation7 + $0x5c8] sm:$0xff]
    %v1657 = vld [vmem:[#allocation7 + $0x5d0] sm:$0xff]
    %v1658 = vld [vmem:[#allocation7 + $0x5d8] sm:$0xff]
    %v1659 = vld [vmem:[#allocation7 + $0x5e0] sm:$0xff]
    %v1660 = vld [vmem:[#allocation7 + $0x5e8] sm:$0xff]
    %v1661 = vld [vmem:[#allocation7 + $0x5f0] sm:$0xff]
    %v1662 = vld [vmem:[#allocation7 + $0x5f8] sm:$0xff]
    %v1663 = vld [vmem:[#allocation7 + $0x600] sm:$0xff]
    %v1664 = vld [vmem:[#allocation7 + $0x608] sm:$0xff]
    %v1665 = vld [vmem:[#allocation7 + $0x610] sm:$0xff]
    %v1666 = vld [vmem:[#allocation7 + $0x618] sm:$0xff]
    %v1667 = vld [vmem:[#allocation7 + $0x620] sm:$0xff]
    %v1668 = vld [vmem:[#allocation7 + $0x628] sm:$0xff]
    %v1669 = vld [vmem:[#allocation7 + $0x630] sm:$0xff]
    %v1670 = vld [vmem:[#allocation7 + $0x638] sm:$0xff]
    %v1671 = vld [vmem:[#allocation7 + $0x640] sm:$0xff]
    %v1672 = vld [vmem:[#allocation7 + $0x648] sm:$0xff]
    %v1673 = vld [vmem:[#allocation7 + $0x650] sm:$0xff]
    %v1674 = vld [vmem:[#allocation7 + $0x658] sm:$0xff]
    %v1675 = vld [vmem:[#allocation7 + $0x660] sm:$0xff]
    %v1676 = vld [vmem:[#allocation7 + $0x668] sm:$0xff]
    %v1677 = vld [vmem:[#allocation7 + $0x670] sm:$0xff]
    %v1678 = vld [vmem:[#allocation7 + $0x678] sm:$0xff]
    %v1679 = vld [vmem:[#allocation7 + $0x680] sm:$0xff]
    %v1680 = vld [vmem:[#allocation7 + $0x688] sm:$0xff]
    %v1681 = vld [vmem:[#allocation7 + $0x690] sm:$0xff]
    %v1682 = vld [vmem:[#allocation7 + $0x698] sm:$0xff]
    %v1683 = vld [vmem:[#allocation7 + $0x6a0] sm:$0xff]
    %v1684 = vld [vmem:[#allocation7 + $0x6a8] sm:$0xff]
    %v1685 = vld [vmem:[#allocation7 + $0x6b0] sm:$0xff]
    %v1686 = vld [vmem:[#allocation7 + $0x6b8] sm:$0xff]
    %v1687 = vld [vmem:[#allocation7 + $0x6c0] sm:$0xff]
    %v1688 = vld [vmem:[#allocation7 + $0x6c8] sm:$0xff]
    %v1689 = vld [vmem:[#allocation7 + $0x6d0] sm:$0xff]
    %v1690 = vld [vmem:[#allocation7 + $0x6d8] sm:$0xff]
    %v1691 = vld [vmem:[#allocation7 + $0x6e0] sm:$0xff]
    %v1692 = vld [vmem:[#allocation7 + $0x6e8] sm:$0xff]
    %v1693 = vld [vmem:[#allocation7 + $0x6f0] sm:$0xff]
    %v1694 = vld [vmem:[#allocation7 + $0x6f8] sm:$0xff]
    %v1695 = vld [vmem:[#allocation7 + $0x700] sm:$0xff]
    %v1696 = vld [vmem:[#allocation7 + $0x708] sm:$0xff]
    %v1697 = vld [vmem:[#allocation7 + $0x710] sm:$0xff]
    %v1698 = vld [vmem:[#allocation7 + $0x718] sm:$0xff]
    %v1699 = vld [vmem:[#allocation7 + $0x720] sm:$0xff]
    %v1700 = vld [vmem:[#allocation7 + $0x728] sm:$0xff]
    %v1701 = vld [vmem:[#allocation7 + $0x730] sm:$0xff]
    %v1702 = vld [vmem:[#allocation7 + $0x738] sm:$0xff]
    %v1703 = vld [vmem:[#allocation7 + $0x740] sm:$0xff]
    %v1704 = vld [vmem:[#allocation7 + $0x748] sm:$0xff]
    %v1705 = vld [vmem:[#allocation7 + $0x750] sm:$0xff]
    %v1706 = vld [vmem:[#allocation7 + $0x758] sm:$0xff]
    %v1707 = vld [vmem:[#allocation7 + $0x760] sm:$0xff]
    %v1708 = vld [vmem:[#allocation7 + $0x768] sm:$0xff]
    %v1709 = vld [vmem:[#allocation7 + $0x770] sm:$0xff]
    %v1710 = vld [vmem:[#allocation7 + $0x778] sm:$0xff]
    %v1711 = vld [vmem:[#allocation7 + $0x780] sm:$0xff]
    %v1712 = vld [vmem:[#allocation7 + $0x788] sm:$0xff]
    %v1713 = vld [vmem:[#allocation7 + $0x790] sm:$0xff]
    %v1714 = vld [vmem:[#allocation7 + $0x798] sm:$0xff]
    %v1715 = vld [vmem:[#allocation7 + $0x7a0] sm:$0xff]
    %v1716 = vld [vmem:[#allocation7 + $0x7a8] sm:$0xff]
    %v1717 = vld [vmem:[#allocation7 + $0x7b0] sm:$0xff]
    %v1718 = vld [vmem:[#allocation7 + $0x7b8] sm:$0xff]
    %v1719 = vld [vmem:[#allocation7 + $0x7c0] sm:$0xff]
    %v1720 = vld [vmem:[#allocation7 + $0x7c8] sm:$0xff]
    %v1721 = vld [vmem:[#allocation7 + $0x7d0] sm:$0xff]
    %v1722 = vld [vmem:[#allocation7 + $0x7d8] sm:$0xff]
    %v1723 = vld [vmem:[#allocation7 + $0x7e0] sm:$0xff]
    %v1724 = vld [vmem:[#allocation7 + $0x7e8] sm:$0xff]
    %v1725 = vld [vmem:[#allocation7 + $0x7f0] sm:$0xff]
    %v1726 = vld [vmem:[#allocation7 + $0x7f8] sm:$0xff]
    %v1727 = vld [vmem:[#allocation7 + $0x800] sm:$0xff]
    %v1728 = vld [vmem:[#allocation7 + $0x808] sm:$0xff]
    %v1729 = vld [vmem:[#allocation7 + $0x810] sm:$0xff]
    %v1730 = vld [vmem:[#allocation7 + $0x818] sm:$0xff]
    %v1731 = vld [vmem:[#allocation7 + $0x820] sm:$0xff]
    %v1732 = vld [vmem:[#allocation7 + $0x828] sm:$0xff]
    %v1733 = vld [vmem:[#allocation7 + $0x830] sm:$0xff]
    %v1734 = vld [vmem:[#allocation7 + $0x838] sm:$0xff]
    %v1735 = vld [vmem:[#allocation7 + $0x840] sm:$0xff]
    %v1736 = vld [vmem:[#allocation7 + $0x848] sm:$0xff]
    %v1737 = vld [vmem:[#allocation7 + $0x850] sm:$0xff]
    %v1738 = vld [vmem:[#allocation7 + $0x858] sm:$0xff]
    %v1739 = vld [vmem:[#allocation7 + $0x860] sm:$0xff]
    %v1740 = vld [vmem:[#allocation7 + $0x868] sm:$0xff]
    %v1741 = vld [vmem:[#allocation7 + $0x870] sm:$0xff]
    %v1742 = vld [vmem:[#allocation7 + $0x878] sm:$0xff]
    %v1743 = vld [vmem:[#allocation7 + $0x880] sm:$0xff]
    %v1744 = vld [vmem:[#allocation7 + $0x888] sm:$0xff]
    %v1745 = vld [vmem:[#allocation7 + $0x890] sm:$0xff]
    %v1746 = vld [vmem:[#allocation7 + $0x898] sm:$0xff]
    %v1747 = vld [vmem:[#allocation7 + $0x8a0] sm:$0xff]
    %v1748 = vld [vmem:[#allocation7 + $0x8a8] sm:$0xff]
    %v1749 = vld [vmem:[#allocation7 + $0x8b0] sm:$0xff]
    %v1750 = vld [vmem:[#allocation7 + $0x8b8] sm:$0xff]
    %v1751 = vld [vmem:[#allocation7 + $0x8c0] sm:$0xff]
    %v1752 = vld [vmem:[#allocation7 + $0x8c8] sm:$0xff]
    %v1753 = vld [vmem:[#allocation7 + $0x8d0] sm:$0xff]
    %v1754 = vld [vmem:[#allocation7 + $0x8d8] sm:$0xff]
    %v1755 = vld [vmem:[#allocation7 + $0x8e0] sm:$0xff]
    %v1756 = vld [vmem:[#allocation7 + $0x8e8] sm:$0xff]
    %v1757 = vld [vmem:[#allocation7 + $0x8f0] sm:$0xff]
    %v1758 = vld [vmem:[#allocation7 + $0x8f8] sm:$0xff]
    %v1759 = vld [vmem:[#allocation7 + $0x900] sm:$0xff]
    %v1760 = vld [vmem:[#allocation7 + $0x908] sm:$0xff]
    %v1761 = vld [vmem:[#allocation7 + $0x910] sm:$0xff]
    %v1762 = vld [vmem:[#allocation7 + $0x918] sm:$0xff]
    %v1763 = vld [vmem:[#allocation7 + $0x920] sm:$0xff]
    %v1764 = vld [vmem:[#allocation7 + $0x928] sm:$0xff]
    %v1765 = vld [vmem:[#allocation7 + $0x930] sm:$0xff]
    %v1766 = vld [vmem:[#allocation7 + $0x938] sm:$0xff]
    %v1767 = vld [vmem:[#allocation7 + $0x940] sm:$0xff]
    %v1768 = vld [vmem:[#allocation7 + $0x948] sm:$0xff]
    %v1769 = vld [vmem:[#allocation7 + $0x950] sm:$0xff]
    %v1770 = vld [vmem:[#allocation7 + $0x958] sm:$0xff]
    %v1771 = vld [vmem:[#allocation7 + $0x960] sm:$0xff]
    %v1772 = vld [vmem:[#allocation7 + $0x968] sm:$0xff]
    %v1773 = vld [vmem:[#allocation7 + $0x970] sm:$0xff]
    %v1774 = vld [vmem:[#allocation7 + $0x978] sm:$0xff]
    %v1775 = vld [vmem:[#allocation7 + $0x980] sm:$0xff]
    %v1776 = vld [vmem:[#allocation7 + $0x988] sm:$0xff]
    %v1777 = vld [vmem:[#allocation7 + $0x990] sm:$0xff]
    %v1778 = vld [vmem:[#allocation7 + $0x998] sm:$0xff]
    %v1779 = vld [vmem:[#allocation7 + $0x9a0] sm:$0xff]
    %v1780 = vld [vmem:[#allocation7 + $0x9a8] sm:$0xff]
    %v1781 = vld [vmem:[#allocation7 + $0x9b0] sm:$0xff]
    %v1782 = vld [vmem:[#allocation7 + $0x9b8] sm:$0xff]
    %v1783 = vld [vmem:[#allocation7 + $0x9c0] sm:$0xff]
    %v1784 = vld [vmem:[#allocation7 + $0x9c8] sm:$0xff]
    %v1785 = vld [vmem:[#allocation7 + $0x9d0] sm:$0xff]
    %v1786 = vld [vmem:[#allocation7 + $0x9d8] sm:$0xff]
    %v1787 = vld [vmem:[#allocation7 + $0x9e0] sm:$0xff]
    %v1788 = vld [vmem:[#allocation7 + $0x9e8] sm:$0xff]
    %v1789 = vld [vmem:[#allocation7 + $0x9f0] sm:$0xff]
    %v1790 = vld [vmem:[#allocation7 + $0x9f8] sm:$0xff]
    %v1791 = vld [vmem:[#allocation7 + $0xa00] sm:$0xff]
    %v1792 = vld [vmem:[#allocation7 + $0xa08] sm:$0xff]
    %v1793 = vld [vmem:[#allocation7 + $0xa10] sm:$0xff]
    %v1794 = vld [vmem:[#allocation7 + $0xa18] sm:$0xff]
    %v1795 = vld [vmem:[#allocation7 + $0xa20] sm:$0xff]
    %v1796 = vld [vmem:[#allocation7 + $0xa28] sm:$0xff]
    %v1797 = vld [vmem:[#allocation7 + $0xa30] sm:$0xff]
    %v1798 = vld [vmem:[#allocation7 + $0xa38] sm:$0xff]
    %v1799 = vld [vmem:[#allocation7 + $0xa40] sm:$0xff]
    %v1800 = vld [vmem:[#allocation7 + $0xa48] sm:$0xff]
    %v1801 = vld [vmem:[#allocation7 + $0xa50] sm:$0xff]
    %v1802 = vld [vmem:[#allocation7 + $0xa58] sm:$0xff]
    %v1803 = vld [vmem:[#allocation7 + $0xa60] sm:$0xff]
    %v1804 = vld [vmem:[#allocation7 + $0xa68] sm:$0xff]
    %v1805 = vld [vmem:[#allocation7 + $0xa70] sm:$0xff]
    %v1806 = vld [vmem:[#allocation7 + $0xa78] sm:$0xff]
    %v1807 = vld [vmem:[#allocation7 + $0xa80] sm:$0xff]
    %v1808 = vld [vmem:[#allocation7 + $0xa88] sm:$0xff]
    %v1809 = vld [vmem:[#allocation7 + $0xa90] sm:$0xff]
    %v1810 = vld [vmem:[#allocation7 + $0xa98] sm:$0xff]
    %v1811 = vld [vmem:[#allocation7 + $0xaa0] sm:$0xff]
    %v1812 = vld [vmem:[#allocation7 + $0xaa8] sm:$0xff]
    %v1813 = vld [vmem:[#allocation7 + $0xab0] sm:$0xff]
    %v1814 = vld [vmem:[#allocation7 + $0xab8] sm:$0xff]
    %v1815 = vld [vmem:[#allocation7 + $0xac0] sm:$0xff]
    %v1816 = vld [vmem:[#allocation7 + $0xac8] sm:$0xff]
    %v1817 = vld [vmem:[#allocation7 + $0xad0] sm:$0xff]
    %v1818 = vld [vmem:[#allocation7 + $0xad8] sm:$0xff]
    %v1819 = vld [vmem:[#allocation7 + $0xae0] sm:$0xff]
    %v1820 = vld [vmem:[#allocation7 + $0xae8] sm:$0xff]
    %v1821 = vld [vmem:[#allocation7 + $0xaf0] sm:$0xff]
    %v1822 = vld [vmem:[#allocation7 + $0xaf8] sm:$0xff]
    %v1823 = vld [vmem:[#allocation7 + $0xb00] sm:$0xff]
    %v1824 = vld [vmem:[#allocation7 + $0xb08] sm:$0xff]
    %v1825 = vld [vmem:[#allocation7 + $0xb10] sm:$0xff]
    %v1826 = vld [vmem:[#allocation7 + $0xb18] sm:$0xff]
    %v1827 = vld [vmem:[#allocation7 + $0xb20] sm:$0xff]
    %v1828 = vld [vmem:[#allocation7 + $0xb28] sm:$0xff]
    %v1829 = vld [vmem:[#allocation7 + $0xb30] sm:$0xff]
    %v1830 = vld [vmem:[#allocation7 + $0xb38] sm:$0xff]
    %v1831 = vld [vmem:[#allocation7 + $0xb40] sm:$0xff]
    %v1832 = vld [vmem:[#allocation7 + $0xb48] sm:$0xff]
    %v1833 = vld [vmem:[#allocation7 + $0xb50] sm:$0xff]
    %v1834 = vld [vmem:[#allocation7 + $0xb58] sm:$0xff]
    %v1835 = vld [vmem:[#allocation7 + $0xb60] sm:$0xff]
    %v1836 = vld [vmem:[#allocation7 + $0xb68] sm:$0xff]
    %v1837 = vld [vmem:[#allocation7 + $0xb70] sm:$0xff]
    %v1838 = vld [vmem:[#allocation7 + $0xb78] sm:$0xff]
    %v1839 = vld [vmem:[#allocation7 + $0xb80] sm:$0xff]
    %v1840 = vld [vmem:[#allocation7 + $0xb88] sm:$0xff]
    %v1841 = vld [vmem:[#allocation7 + $0xb90] sm:$0xff]
    %v1842 = vld [vmem:[#allocation7 + $0xb98] sm:$0xff]
    %v1843 = vld [vmem:[#allocation7 + $0xba0] sm:$0xff]
    %v1844 = vld [vmem:[#allocation7 + $0xba8] sm:$0xff]
    %v1845 = vld [vmem:[#allocation7 + $0xbb0] sm:$0xff]
    %v1846 = vld [vmem:[#allocation7 + $0xbb8] sm:$0xff]
    %v1847 = vld [vmem:[#allocation7 + $0xbc0] sm:$0xff]
    %v1848 = vld [vmem:[#allocation7 + $0xbc8] sm:$0xff]
    %v1849 = vld [vmem:[#allocation7 + $0xbd0] sm:$0xff]
    %v1850 = vld [vmem:[#allocation7 + $0xbd8] sm:$0xff]
    %v1851 = vld [vmem:[#allocation7 + $0xbe0] sm:$0xff]
    %v1852 = vld [vmem:[#allocation7 + $0xbe8] sm:$0xff]
    %v1853 = vld [vmem:[#allocation7 + $0xbf0] sm:$0xff]
    %v1854 = vld [vmem:[#allocation7 + $0xbf8] sm:$0xff]
    %v1855 = vld [vmem:[#allocation7 + $0xc00] sm:$0xff]
    %v1856 = vld [vmem:[#allocation7 + $0xc08] sm:$0xff]
    %v1857 = vld [vmem:[#allocation7 + $0xc10] sm:$0xff]
    %v1858 = vld [vmem:[#allocation7 + $0xc18] sm:$0xff]
    %v1859 = vld [vmem:[#allocation7 + $0xc20] sm:$0xff]
    %v1860 = vld [vmem:[#allocation7 + $0xc28] sm:$0xff]
    %v1861 = vld [vmem:[#allocation7 + $0xc30] sm:$0xff]
    %v1862 = vld [vmem:[#allocation7 + $0xc38] sm:$0xff]
    %v1863 = vld [vmem:[#allocation7 + $0xc40] sm:$0xff]
    %v1864 = vld [vmem:[#allocation7 + $0xc48] sm:$0xff]
    %v1865 = vld [vmem:[#allocation7 + $0xc50] sm:$0xff]
    %v1866 = vld [vmem:[#allocation7 + $0xc58] sm:$0xff]
    %v1867 = vld [vmem:[#allocation7 + $0xc60] sm:$0xff]
    %v1868 = vld [vmem:[#allocation7 + $0xc68] sm:$0xff]
    %v1869 = vld [vmem:[#allocation7 + $0xc70] sm:$0xff]
    %v1870 = vld [vmem:[#allocation7 + $0xc78] sm:$0xff]
    %v1871 = vld [vmem:[#allocation7 + $0xc80] sm:$0xff]
    %v1872 = vld [vmem:[#allocation7 + $0xc88] sm:$0xff]
    %v1873 = vld [vmem:[#allocation7 + $0xc90] sm:$0xff]
    %v1874 = vld [vmem:[#allocation7 + $0xc98] sm:$0xff]
    %v1875 = vld [vmem:[#allocation7 + $0xca0] sm:$0xff]
    %v1876 = vld [vmem:[#allocation7 + $0xca8] sm:$0xff]
    %v1877 = vld [vmem:[#allocation7 + $0xcb0] sm:$0xff]
    %v1878 = vld [vmem:[#allocation7 + $0xcb8] sm:$0xff]
    %v1879 = vld [vmem:[#allocation7 + $0xcc0] sm:$0xff]
    %v1880 = vld [vmem:[#allocation7 + $0xcc8] sm:$0xff]
    %v1881 = vld [vmem:[#allocation7 + $0xcd0] sm:$0xff]
    %v1882 = vld [vmem:[#allocation7 + $0xcd8] sm:$0xff]
    %v1883 = vld [vmem:[#allocation7 + $0xce0] sm:$0xff]
    %v1884 = vld [vmem:[#allocation7 + $0xce8] sm:$0xff]
    %v1885 = vld [vmem:[#allocation7 + $0xcf0] sm:$0xff]
    %v1886 = vld [vmem:[#allocation7 + $0xcf8] sm:$0xff]
    %v1887 = vld [vmem:[#allocation7 + $0xd00] sm:$0xff]
    %v1888 = vld [vmem:[#allocation7 + $0xd08] sm:$0xff]
    %v1889 = vld [vmem:[#allocation7 + $0xd10] sm:$0xff]
    %v1890 = vld [vmem:[#allocation7 + $0xd18] sm:$0xff]
    %v1891 = vld [vmem:[#allocation7 + $0xd20] sm:$0xff]
    %v1892 = vld [vmem:[#allocation7 + $0xd28] sm:$0xff]
    %v1893 = vld [vmem:[#allocation7 + $0xd30] sm:$0xff]
    %v1894 = vld [vmem:[#allocation7 + $0xd38] sm:$0xff]
    %v1895 = vld [vmem:[#allocation7 + $0xd40] sm:$0xff]
    %v1896 = vld [vmem:[#allocation7 + $0xd48] sm:$0xff]
    %v1897 = vld [vmem:[#allocation7 + $0xd50] sm:$0xff]
    %v1898 = vld [vmem:[#allocation7 + $0xd58] sm:$0xff]
    %v1899 = vld [vmem:[#allocation7 + $0xd60] sm:$0xff]
    %v1900 = vld [vmem:[#allocation7 + $0xd68] sm:$0xff]
    %v1901 = vld [vmem:[#allocation7 + $0xd70] sm:$0xff]
    %v1902 = vld [vmem:[#allocation7 + $0xd78] sm:$0xff]
    %v1903 = vld [vmem:[#allocation7 + $0xd80] sm:$0xff]
    %v1904 = vld [vmem:[#allocation7 + $0xd88] sm:$0xff]
    %v1905 = vld [vmem:[#allocation7 + $0xd90] sm:$0xff]
    %v1906 = vld [vmem:[#allocation7 + $0xd98] sm:$0xff]
    %v1907 = vld [vmem:[#allocation7 + $0xda0] sm:$0xff]
    %v1908 = vld [vmem:[#allocation7 + $0xda8] sm:$0xff]
    %v1909 = vld [vmem:[#allocation7 + $0xdb0] sm:$0xff]
    %v1910 = vld [vmem:[#allocation7 + $0xdb8] sm:$0xff]
    %v1911 = vld [vmem:[#allocation7 + $0xdc0] sm:$0xff]
    %v1912 = vld [vmem:[#allocation7 + $0xdc8] sm:$0xff]
    %v1913 = vld [vmem:[#allocation7 + $0xdd0] sm:$0xff]
    %v1914 = vld [vmem:[#allocation7 + $0xdd8] sm:$0xff]
    %v1915 = vld [vmem:[#allocation7 + $0xde0] sm:$0xff]
    %v1916 = vld [vmem:[#allocation7 + $0xde8] sm:$0xff]
    %v1917 = vld [vmem:[#allocation7 + $0xdf0] sm:$0xff]
    %v1918 = vld [vmem:[#allocation7 + $0xdf8] sm:$0xff]
    %v1919 = vld [vmem:[#allocation7 + $0xe00] sm:$0xff]
    %v1920 = vld [vmem:[#allocation7 + $0xe08] sm:$0xff]
    %v1921 = vld [vmem:[#allocation7 + $0xe10] sm:$0xff]
    %v1922 = vld [vmem:[#allocation7 + $0xe18] sm:$0xff]
    %v1923 = vld [vmem:[#allocation7 + $0xe20] sm:$0xff]
    %v1924 = vld [vmem:[#allocation7 + $0xe28] sm:$0xff]
    %v1925 = vld [vmem:[#allocation7 + $0xe30] sm:$0xff]
    %v1926 = vld [vmem:[#allocation7 + $0xe38] sm:$0xff]
    %v1927 = vld [vmem:[#allocation7 + $0xe40] sm:$0xff]
    %v1928 = vld [vmem:[#allocation7 + $0xe48] sm:$0xff]
    %v1929 = vld [vmem:[#allocation7 + $0xe50] sm:$0xff]
    %v1930 = vld [vmem:[#allocation7 + $0xe58] sm:$0xff]
    %v1931 = vld [vmem:[#allocation7 + $0xe60] sm:$0xff]
    %v1932 = vld [vmem:[#allocation7 + $0xe68] sm:$0xff]
    %v1933 = vld [vmem:[#allocation7 + $0xe70] sm:$0xff]
    %v1934 = vld [vmem:[#allocation7 + $0xe78] sm:$0xff]
    %v1935 = vld [vmem:[#allocation7 + $0xe80] sm:$0xff]
    %v1936 = vld [vmem:[#allocation7 + $0xe88] sm:$0xff]
    %v1937 = vld [vmem:[#allocation7 + $0xe90] sm:$0xff]
    %v1938 = vld [vmem:[#allocation7 + $0xe98] sm:$0xff]
    %v1939 = vld [vmem:[#allocation7 + $0xea0] sm:$0xff]
    %v1940 = vld [vmem:[#allocation7 + $0xea8] sm:$0xff]
    %v1941 = vld [vmem:[#allocation7 + $0xeb0] sm:$0xff]
    %v1942 = vld [vmem:[#allocation7 + $0xeb8] sm:$0xff]
    %v1943 = vld [vmem:[#allocation7 + $0xec0] sm:$0xff]
    %v1944 = vld [vmem:[#allocation7 + $0xec8] sm:$0xff]
    %v1945 = vld [vmem:[#allocation7 + $0xed0] sm:$0xff]
    %v1946 = vld [vmem:[#allocation7 + $0xed8] sm:$0xff]
    %v1947 = vld [vmem:[#allocation7 + $0xee0] sm:$0xff]
    %v1948 = vld [vmem:[#allocation7 + $0xee8] sm:$0xff]
    %v1949 = vld [vmem:[#allocation7 + $0xef0] sm:$0xff]
    %v1950 = vld [vmem:[#allocation7 + $0xef8] sm:$0xff]
    %v1951 = vld [vmem:[#allocation7 + $0xf00] sm:$0xff]
    %v1952 = vld [vmem:[#allocation7 + $0xf08] sm:$0xff]
    %v1953 = vld [vmem:[#allocation7 + $0xf10] sm:$0xff]
    %v1954 = vld [vmem:[#allocation7 + $0xf18] sm:$0xff]
    %v1955 = vld [vmem:[#allocation7 + $0xf20] sm:$0xff]
    %v1956 = vld [vmem:[#allocation7 + $0xf28] sm:$0xff]
    %v1957 = vld [vmem:[#allocation7 + $0xf30] sm:$0xff]
    %v1958 = vld [vmem:[#allocation7 + $0xf38] sm:$0xff]
    %v1959 = vld [vmem:[#allocation7 + $0xf40] sm:$0xff]
    %v1960 = vld [vmem:[#allocation7 + $0xf48] sm:$0xff]
    %v1961 = vld [vmem:[#allocation7 + $0xf50] sm:$0xff]
    %v1962 = vld [vmem:[#allocation7 + $0xf58] sm:$0xff]
    %v1963 = vld [vmem:[#allocation7 + $0xf60] sm:$0xff]
    %v1964 = vld [vmem:[#allocation7 + $0xf68] sm:$0xff]
    %v1965 = vld [vmem:[#allocation7 + $0xf70] sm:$0xff]
    %v1966 = vld [vmem:[#allocation7 + $0xf78] sm:$0xff]
    %v1967 = vld [vmem:[#allocation7 + $0xf80] sm:$0xff]
    %v1968 = vld [vmem:[#allocation7 + $0xf88] sm:$0xff]
    %v1969 = vld [vmem:[#allocation7 + $0xf90] sm:$0xff]
    %v1970 = vld [vmem:[#allocation7 + $0xf98] sm:$0xff]
    %v1971 = vld [vmem:[#allocation7 + $0xfa0] sm:$0xff]
    %v1972 = vld [vmem:[#allocation7 + $0xfa8] sm:$0xff]
    %v1973 = vld [vmem:[#allocation7 + $0xfb0] sm:$0xff]
    %v1974 = vld [vmem:[#allocation7 + $0xfb8] sm:$0xff]
    %v1975 = vld [vmem:[#allocation7 + $0xfc0] sm:$0xff]
    %v1976 = vld [vmem:[#allocation7 + $0xfc8] sm:$0xff]
    %v1977 = vld [vmem:[#allocation7 + $0xfd0] sm:$0xff]
    %v1978 = vld [vmem:[#allocation7 + $0xfd8] sm:$0xff]
    %v1979 = vld [vmem:[#allocation7 + $0xfe0] sm:$0xff]
    %v1980 = vld [vmem:[#allocation7 + $0xfe8] sm:$0xff]
    %v1981 = vld [vmem:[#allocation7 + $0xff0] sm:$0xff]
    %v1982 = vld [vmem:[#allocation7 + $0xff8] sm:$0xff]
    %v1983 = vld [vmem:[#allocation8] sm:$0xff]
    %v1985 = vperm.slane %v1983, 0
    %v1986 = vperm.slane %v1983, 1
    %v1987 = vperm.slane %v1983, 2
    %v1988 = vperm.slane %v1983, 3
    %v1989 = vperm.slane %v1983, 4
    %v1990 = vperm.slane %v1983, 5
    %v1991 = vperm.slane %v1983, 6
    %v1992 = vperm.slane %v1983, 7
    %v2513 = vunpack.c.l.b16 %v1471
    %v2514 = vunpack.c.h.b16 %v1471
    %v2515 = vunpack.c.l.b16 %v1472
    %v2516 = vunpack.c.h.b16 %v1472
    %v2517 = vunpack.c.l.b16 %v1473
    %v2518 = vunpack.c.h.b16 %v1473
    %v2519 = vunpack.c.l.b16 %v1474
    %v2520 = vunpack.c.h.b16 %v1474
    %v2521 = vunpack.c.l.b16 %v1475
    %v2522 = vunpack.c.h.b16 %v1475
    %v2523 = vunpack.c.l.b16 %v1476
    %v2524 = vunpack.c.h.b16 %v1476
    %v2525 = vunpack.c.l.b16 %v1477
    %v2526 = vunpack.c.h.b16 %v1477
    %v2527 = vunpack.c.l.b16 %v1478
    %v2528 = vunpack.c.h.b16 %v1478
    %v2529 = vunpack.c.l.b16 %v1479
    %v2530 = vunpack.c.h.b16 %v1479
    %v2531 = vunpack.c.l.b16 %v1480
    %v2532 = vunpack.c.h.b16 %v1480
    %v2533 = vunpack.c.l.b16 %v1481
    %v2534 = vunpack.c.h.b16 %v1481
    %v2535 = vunpack.c.l.b16 %v1482
    %v2536 = vunpack.c.h.b16 %v1482
    %v2537 = vunpack.c.l.b16 %v1483
    %v2538 = vunpack.c.h.b16 %v1483
    %v2539 = vunpack.c.l.b16 %v1484
    %v2540 = vunpack.c.h.b16 %v1484
    %v2541 = vunpack.c.l.b16 %v1485
    %v2542 = vunpack.c.h.b16 %v1485
    %v2543 = vunpack.c.l.b16 %v1486
    %v2544 = vunpack.c.h.b16 %v1486
    %v2545 = vunpack.c.l.b16 %v1487
    %v2546 = vunpack.c.h.b16 %v1487
    %v2547 = vunpack.c.l.b16 %v1488
    %v2548 = vunpack.c.h.b16 %v1488
    %v2549 = vunpack.c.l.b16 %v1489
    %v2550 = vunpack.c.h.b16 %v1489
    %v2551 = vunpack.c.l.b16 %v1490
    %v2552 = vunpack.c.h.b16 %v1490
    %v2553 = vunpack.c.l.b16 %v1491
    %v2554 = vunpack.c.h.b16 %v1491
    %v2555 = vunpack.c.l.b16 %v1492
    %v2556 = vunpack.c.h.b16 %v1492
    %v2557 = vunpack.c.l.b16 %v1493
    %v2558 = vunpack.c.h.b16 %v1493
    %v2559 = vunpack.c.l.b16 %v1494
    %v2560 = vunpack.c.h.b16 %v1494
    %v2561 = vunpack.c.l.b16 %v1495
    %v2562 = vunpack.c.h.b16 %v1495
    %v2563 = vunpack.c.l.b16 %v1496
    %v2564 = vunpack.c.h.b16 %v1496
    %v2565 = vunpack.c.l.b16 %v1497
    %v2566 = vunpack.c.h.b16 %v1497
    %v2567 = vunpack.c.l.b16 %v1498
    %v2568 = vunpack.c.h.b16 %v1498
    %v2569 = vunpack.c.l.b16 %v1499
    %v2570 = vunpack.c.h.b16 %v1499
    %v2571 = vunpack.c.l.b16 %v1500
    %v2572 = vunpack.c.h.b16 %v1500
    %v2573 = vunpack.c.l.b16 %v1501
    %v2574 = vunpack.c.h.b16 %v1501
    %v2575 = vunpack.c.l.b16 %v1502
    %v2576 = vunpack.c.h.b16 %v1502
    %v2577 = vunpack.c.l.b16 %v1503
    %v2578 = vunpack.c.h.b16 %v1503
    %v2579 = vunpack.c.l.b16 %v1504
    %v2580 = vunpack.c.h.b16 %v1504
    %v2581 = vunpack.c.l.b16 %v1505
    %v2582 = vunpack.c.h.b16 %v1505
    %v2583 = vunpack.c.l.b16 %v1506
    %v2584 = vunpack.c.h.b16 %v1506
    %v2585 = vunpack.c.l.b16 %v1507
    %v2586 = vunpack.c.h.b16 %v1507
    %v2587 = vunpack.c.l.b16 %v1508
    %v2588 = vunpack.c.h.b16 %v1508
    %v2589 = vunpack.c.l.b16 %v1509
    %v2590 = vunpack.c.h.b16 %v1509
    %v2591 = vunpack.c.l.b16 %v1510
    %v2592 = vunpack.c.h.b16 %v1510
    %v2593 = vunpack.c.l.b16 %v1511
    %v2594 = vunpack.c.h.b16 %v1511
    %v2595 = vunpack.c.l.b16 %v1512
    %v2596 = vunpack.c.h.b16 %v1512
    %v2597 = vunpack.c.l.b16 %v1513
    %v2598 = vunpack.c.h.b16 %v1513
    %v2599 = vunpack.c.l.b16 %v1514
    %v2600 = vunpack.c.h.b16 %v1514
    %v2601 = vunpack.c.l.b16 %v1515
    %v2602 = vunpack.c.h.b16 %v1515
    %v2603 = vunpack.c.l.b16 %v1516
    %v2604 = vunpack.c.h.b16 %v1516
    %v2605 = vunpack.c.l.b16 %v1517
    %v2606 = vunpack.c.h.b16 %v1517
    %v2607 = vunpack.c.l.b16 %v1518
    %v2608 = vunpack.c.h.b16 %v1518
    %v2609 = vunpack.c.l.b16 %v1519
    %v2610 = vunpack.c.h.b16 %v1519
    %v2611 = vunpack.c.l.b16 %v1520
    %v2612 = vunpack.c.h.b16 %v1520
    %v2613 = vunpack.c.l.b16 %v1521
    %v2614 = vunpack.c.h.b16 %v1521
    %v2615 = vunpack.c.l.b16 %v1522
    %v2616 = vunpack.c.h.b16 %v1522
    %v2617 = vunpack.c.l.b16 %v1523
    %v2618 = vunpack.c.h.b16 %v1523
    %v2619 = vunpack.c.l.b16 %v1524
    %v2620 = vunpack.c.h.b16 %v1524
    %v2621 = vunpack.c.l.b16 %v1525
    %v2622 = vunpack.c.h.b16 %v1525
    %v2623 = vunpack.c.l.b16 %v1526
    %v2624 = vunpack.c.h.b16 %v1526
    %v2625 = vunpack.c.l.b16 %v1527
    %v2626 = vunpack.c.h.b16 %v1527
    %v2627 = vunpack.c.l.b16 %v1528
    %v2628 = vunpack.c.h.b16 %v1528
    %v2629 = vunpack.c.l.b16 %v1529
    %v2630 = vunpack.c.h.b16 %v1529
    %v2631 = vunpack.c.l.b16 %v1530
    %v2632 = vunpack.c.h.b16 %v1530
    %v2633 = vunpack.c.l.b16 %v1531
    %v2634 = vunpack.c.h.b16 %v1531
    %v2635 = vunpack.c.l.b16 %v1532
    %v2636 = vunpack.c.h.b16 %v1532
    %v2637 = vunpack.c.l.b16 %v1533
    %v2638 = vunpack.c.h.b16 %v1533
    %v2639 = vunpack.c.l.b16 %v1534
    %v2640 = vunpack.c.h.b16 %v1534
    %v2641 = vunpack.c.l.b16 %v1535
    %v2642 = vunpack.c.h.b16 %v1535
    %v2643 = vunpack.c.l.b16 %v1536
    %v2644 = vunpack.c.h.b16 %v1536
    %v2645 = vunpack.c.l.b16 %v1537
    %v2646 = vunpack.c.h.b16 %v1537
    %v2647 = vunpack.c.l.b16 %v1538
    %v2648 = vunpack.c.h.b16 %v1538
    %v2649 = vunpack.c.l.b16 %v1539
    %v2650 = vunpack.c.h.b16 %v1539
    %v2651 = vunpack.c.l.b16 %v1540
    %v2652 = vunpack.c.h.b16 %v1540
    %v2653 = vunpack.c.l.b16 %v1541
    %v2654 = vunpack.c.h.b16 %v1541
    %v2655 = vunpack.c.l.b16 %v1542
    %v2656 = vunpack.c.h.b16 %v1542
    %v2657 = vunpack.c.l.b16 %v1543
    %v2658 = vunpack.c.h.b16 %v1543
    %v2659 = vunpack.c.l.b16 %v1544
    %v2660 = vunpack.c.h.b16 %v1544
    %v2661 = vunpack.c.l.b16 %v1545
    %v2662 = vunpack.c.h.b16 %v1545
    %v2663 = vunpack.c.l.b16 %v1546
    %v2664 = vunpack.c.h.b16 %v1546
    %v2665 = vunpack.c.l.b16 %v1547
    %v2666 = vunpack.c.h.b16 %v1547
    %v2667 = vunpack.c.l.b16 %v1548
    %v2668 = vunpack.c.h.b16 %v1548
    %v2669 = vunpack.c.l.b16 %v1549
    %v2670 = vunpack.c.h.b16 %v1549
    %v2671 = vunpack.c.l.b16 %v1550
    %v2672 = vunpack.c.h.b16 %v1550
    %v2673 = vunpack.c.l.b16 %v1551
    %v2674 = vunpack.c.h.b16 %v1551
    %v2675 = vunpack.c.l.b16 %v1552
    %v2676 = vunpack.c.h.b16 %v1552
    %v2677 = vunpack.c.l.b16 %v1553
    %v2678 = vunpack.c.h.b16 %v1553
    %v2679 = vunpack.c.l.b16 %v1554
    %v2680 = vunpack.c.h.b16 %v1554
    %v2681 = vunpack.c.l.b16 %v1555
    %v2682 = vunpack.c.h.b16 %v1555
    %v2683 = vunpack.c.l.b16 %v1556
    %v2684 = vunpack.c.h.b16 %v1556
    %v2685 = vunpack.c.l.b16 %v1557
    %v2686 = vunpack.c.h.b16 %v1557
    %v2687 = vunpack.c.l.b16 %v1558
    %v2688 = vunpack.c.h.b16 %v1558
    %v2689 = vunpack.c.l.b16 %v1559
    %v2690 = vunpack.c.h.b16 %v1559
    %v2691 = vunpack.c.l.b16 %v1560
    %v2692 = vunpack.c.h.b16 %v1560
    %v2693 = vunpack.c.l.b16 %v1561
    %v2694 = vunpack.c.h.b16 %v1561
    %v2695 = vunpack.c.l.b16 %v1562
    %v2696 = vunpack.c.h.b16 %v1562
    %v2697 = vunpack.c.l.b16 %v1563
    %v2698 = vunpack.c.h.b16 %v1563
    %v2699 = vunpack.c.l.b16 %v1564
    %v2700 = vunpack.c.h.b16 %v1564
    %v2701 = vunpack.c.l.b16 %v1565
    %v2702 = vunpack.c.h.b16 %v1565
    %v2703 = vunpack.c.l.b16 %v1566
    %v2704 = vunpack.c.h.b16 %v1566
    %v2705 = vunpack.c.l.b16 %v1567
    %v2706 = vunpack.c.h.b16 %v1567
    %v2707 = vunpack.c.l.b16 %v1568
    %v2708 = vunpack.c.h.b16 %v1568
    %v2709 = vunpack.c.l.b16 %v1569
    %v2710 = vunpack.c.h.b16 %v1569
    %v2711 = vunpack.c.l.b16 %v1570
    %v2712 = vunpack.c.h.b16 %v1570
    %v2713 = vunpack.c.l.b16 %v1571
    %v2714 = vunpack.c.h.b16 %v1571
    %v2715 = vunpack.c.l.b16 %v1572
    %v2716 = vunpack.c.h.b16 %v1572
    %v2717 = vunpack.c.l.b16 %v1573
    %v2718 = vunpack.c.h.b16 %v1573
    %v2719 = vunpack.c.l.b16 %v1574
    %v2720 = vunpack.c.h.b16 %v1574
    %v2721 = vunpack.c.l.b16 %v1575
    %v2722 = vunpack.c.h.b16 %v1575
    %v2723 = vunpack.c.l.b16 %v1576
    %v2724 = vunpack.c.h.b16 %v1576
    %v2725 = vunpack.c.l.b16 %v1577
    %v2726 = vunpack.c.h.b16 %v1577
    %v2727 = vunpack.c.l.b16 %v1578
    %v2728 = vunpack.c.h.b16 %v1578
    %v2729 = vunpack.c.l.b16 %v1579
    %v2730 = vunpack.c.h.b16 %v1579
    %v2731 = vunpack.c.l.b16 %v1580
    %v2732 = vunpack.c.h.b16 %v1580
    %v2733 = vunpack.c.l.b16 %v1581
    %v2734 = vunpack.c.h.b16 %v1581
    %v2735 = vunpack.c.l.b16 %v1582
    %v2736 = vunpack.c.h.b16 %v1582
    %v2737 = vunpack.c.l.b16 %v1583
    %v2738 = vunpack.c.h.b16 %v1583
    %v2739 = vunpack.c.l.b16 %v1584
    %v2740 = vunpack.c.h.b16 %v1584
    %v2741 = vunpack.c.l.b16 %v1585
    %v2742 = vunpack.c.h.b16 %v1585
    %v2743 = vunpack.c.l.b16 %v1586
    %v2744 = vunpack.c.h.b16 %v1586
    %v2745 = vunpack.c.l.b16 %v1587
    %v2746 = vunpack.c.h.b16 %v1587
    %v2747 = vunpack.c.l.b16 %v1588
    %v2748 = vunpack.c.h.b16 %v1588
    %v2749 = vunpack.c.l.b16 %v1589
    %v2750 = vunpack.c.h.b16 %v1589
    %v2751 = vunpack.c.l.b16 %v1590
    %v2752 = vunpack.c.h.b16 %v1590
    %v2753 = vunpack.c.l.b16 %v1591
    %v2754 = vunpack.c.h.b16 %v1591
    %v2755 = vunpack.c.l.b16 %v1592
    %v2756 = vunpack.c.h.b16 %v1592
    %v2757 = vunpack.c.l.b16 %v1593
    %v2758 = vunpack.c.h.b16 %v1593
    %v2759 = vunpack.c.l.b16 %v1594
    %v2760 = vunpack.c.h.b16 %v1594
    %v2761 = vunpack.c.l.b16 %v1595
    %v2762 = vunpack.c.h.b16 %v1595
    %v2763 = vunpack.c.l.b16 %v1596
    %v2764 = vunpack.c.h.b16 %v1596
    %v2765 = vunpack.c.l.b16 %v1597
    %v2766 = vunpack.c.h.b16 %v1597
    %v2767 = vunpack.c.l.b16 %v1598
    %v2768 = vunpack.c.h.b16 %v1598
    %v2769 = vunpack.c.l.b16 %v1599
    %v2770 = vunpack.c.h.b16 %v1599
    %v2771 = vunpack.c.l.b16 %v1600
    %v2772 = vunpack.c.h.b16 %v1600
    %v2773 = vunpack.c.l.b16 %v1601
    %v2774 = vunpack.c.h.b16 %v1601
    %v2775 = vunpack.c.l.b16 %v1602
    %v2776 = vunpack.c.h.b16 %v1602
    %v2777 = vunpack.c.l.b16 %v1603
    %v2778 = vunpack.c.h.b16 %v1603
    %v2779 = vunpack.c.l.b16 %v1604
    %v2780 = vunpack.c.h.b16 %v1604
    %v2781 = vunpack.c.l.b16 %v1605
    %v2782 = vunpack.c.h.b16 %v1605
    %v2783 = vunpack.c.l.b16 %v1606
    %v2784 = vunpack.c.h.b16 %v1606
    %v2785 = vunpack.c.l.b16 %v1607
    %v2786 = vunpack.c.h.b16 %v1607
    %v2787 = vunpack.c.l.b16 %v1608
    %v2788 = vunpack.c.h.b16 %v1608
    %v2789 = vunpack.c.l.b16 %v1609
    %v2790 = vunpack.c.h.b16 %v1609
    %v2791 = vunpack.c.l.b16 %v1610
    %v2792 = vunpack.c.h.b16 %v1610
    %v2793 = vunpack.c.l.b16 %v1611
    %v2794 = vunpack.c.h.b16 %v1611
    %v2795 = vunpack.c.l.b16 %v1612
    %v2796 = vunpack.c.h.b16 %v1612
    %v2797 = vunpack.c.l.b16 %v1613
    %v2798 = vunpack.c.h.b16 %v1613
    %v2799 = vunpack.c.l.b16 %v1614
    %v2800 = vunpack.c.h.b16 %v1614
    %v2801 = vunpack.c.l.b16 %v1615
    %v2802 = vunpack.c.h.b16 %v1615
    %v2803 = vunpack.c.l.b16 %v1616
    %v2804 = vunpack.c.h.b16 %v1616
    %v2805 = vunpack.c.l.b16 %v1617
    %v2806 = vunpack.c.h.b16 %v1617
    %v2807 = vunpack.c.l.b16 %v1618
    %v2808 = vunpack.c.h.b16 %v1618
    %v2809 = vunpack.c.l.b16 %v1619
    %v2810 = vunpack.c.h.b16 %v1619
    %v2811 = vunpack.c.l.b16 %v1620
    %v2812 = vunpack.c.h.b16 %v1620
    %v2813 = vunpack.c.l.b16 %v1621
    %v2814 = vunpack.c.h.b16 %v1621
    %v2815 = vunpack.c.l.b16 %v1622
    %v2816 = vunpack.c.h.b16 %v1622
    %v2817 = vunpack.c.l.b16 %v1623
    %v2818 = vunpack.c.h.b16 %v1623
    %v2819 = vunpack.c.l.b16 %v1624
    %v2820 = vunpack.c.h.b16 %v1624
    %v2821 = vunpack.c.l.b16 %v1625
    %v2822 = vunpack.c.h.b16 %v1625
    %v2823 = vunpack.c.l.b16 %v1626
    %v2824 = vunpack.c.h.b16 %v1626
    %v2825 = vunpack.c.l.b16 %v1627
    %v2826 = vunpack.c.h.b16 %v1627
    %v2827 = vunpack.c.l.b16 %v1628
    %v2828 = vunpack.c.h.b16 %v1628
    %v2829 = vunpack.c.l.b16 %v1629
    %v2830 = vunpack.c.h.b16 %v1629
    %v2831 = vunpack.c.l.b16 %v1630
    %v2832 = vunpack.c.h.b16 %v1630
    %v2833 = vunpack.c.l.b16 %v1631
    %v2834 = vunpack.c.h.b16 %v1631
    %v2835 = vunpack.c.l.b16 %v1632
    %v2836 = vunpack.c.h.b16 %v1632
    %v2837 = vunpack.c.l.b16 %v1633
    %v2838 = vunpack.c.h.b16 %v1633
    %v2839 = vunpack.c.l.b16 %v1634
    %v2840 = vunpack.c.h.b16 %v1634
    %v2841 = vunpack.c.l.b16 %v1635
    %v2842 = vunpack.c.h.b16 %v1635
    %v2843 = vunpack.c.l.b16 %v1636
    %v2844 = vunpack.c.h.b16 %v1636
    %v2845 = vunpack.c.l.b16 %v1637
    %v2846 = vunpack.c.h.b16 %v1637
    %v2847 = vunpack.c.l.b16 %v1638
    %v2848 = vunpack.c.h.b16 %v1638
    %v2849 = vunpack.c.l.b16 %v1639
    %v2850 = vunpack.c.h.b16 %v1639
    %v2851 = vunpack.c.l.b16 %v1640
    %v2852 = vunpack.c.h.b16 %v1640
    %v2853 = vunpack.c.l.b16 %v1641
    %v2854 = vunpack.c.h.b16 %v1641
    %v2855 = vunpack.c.l.b16 %v1642
    %v2856 = vunpack.c.h.b16 %v1642
    %v2857 = vunpack.c.l.b16 %v1643
    %v2858 = vunpack.c.h.b16 %v1643
    %v2859 = vunpack.c.l.b16 %v1644
    %v2860 = vunpack.c.h.b16 %v1644
    %v2861 = vunpack.c.l.b16 %v1645
    %v2862 = vunpack.c.h.b16 %v1645
    %v2863 = vunpack.c.l.b16 %v1646
    %v2864 = vunpack.c.h.b16 %v1646
    %v2865 = vunpack.c.l.b16 %v1647
    %v2866 = vunpack.c.h.b16 %v1647
    %v2867 = vunpack.c.l.b16 %v1648
    %v2868 = vunpack.c.h.b16 %v1648
    %v2869 = vunpack.c.l.b16 %v1649
    %v2870 = vunpack.c.h.b16 %v1649
    %v2871 = vunpack.c.l.b16 %v1650
    %v2872 = vunpack.c.h.b16 %v1650
    %v2873 = vunpack.c.l.b16 %v1651
    %v2874 = vunpack.c.h.b16 %v1651
    %v2875 = vunpack.c.l.b16 %v1652
    %v2876 = vunpack.c.h.b16 %v1652
    %v2877 = vunpack.c.l.b16 %v1653
    %v2878 = vunpack.c.h.b16 %v1653
    %v2879 = vunpack.c.l.b16 %v1654
    %v2880 = vunpack.c.h.b16 %v1654
    %v2881 = vunpack.c.l.b16 %v1655
    %v2882 = vunpack.c.h.b16 %v1655
    %v2883 = vunpack.c.l.b16 %v1656
    %v2884 = vunpack.c.h.b16 %v1656
    %v2885 = vunpack.c.l.b16 %v1657
    %v2886 = vunpack.c.h.b16 %v1657
    %v2887 = vunpack.c.l.b16 %v1658
    %v2888 = vunpack.c.h.b16 %v1658
    %v2889 = vunpack.c.l.b16 %v1659
    %v2890 = vunpack.c.h.b16 %v1659
    %v2891 = vunpack.c.l.b16 %v1660
    %v2892 = vunpack.c.h.b16 %v1660
    %v2893 = vunpack.c.l.b16 %v1661
    %v2894 = vunpack.c.h.b16 %v1661
    %v2895 = vunpack.c.l.b16 %v1662
    %v2896 = vunpack.c.h.b16 %v1662
    %v2897 = vunpack.c.l.b16 %v1663
    %v2898 = vunpack.c.h.b16 %v1663
    %v2899 = vunpack.c.l.b16 %v1664
    %v2900 = vunpack.c.h.b16 %v1664
    %v2901 = vunpack.c.l.b16 %v1665
    %v2902 = vunpack.c.h.b16 %v1665
    %v2903 = vunpack.c.l.b16 %v1666
    %v2904 = vunpack.c.h.b16 %v1666
    %v2905 = vunpack.c.l.b16 %v1667
    %v2906 = vunpack.c.h.b16 %v1667
    %v2907 = vunpack.c.l.b16 %v1668
    %v2908 = vunpack.c.h.b16 %v1668
    %v2909 = vunpack.c.l.b16 %v1669
    %v2910 = vunpack.c.h.b16 %v1669
    %v2911 = vunpack.c.l.b16 %v1670
    %v2912 = vunpack.c.h.b16 %v1670
    %v2913 = vunpack.c.l.b16 %v1671
    %v2914 = vunpack.c.h.b16 %v1671
    %v2915 = vunpack.c.l.b16 %v1672
    %v2916 = vunpack.c.h.b16 %v1672
    %v2917 = vunpack.c.l.b16 %v1673
    %v2918 = vunpack.c.h.b16 %v1673
    %v2919 = vunpack.c.l.b16 %v1674
    %v2920 = vunpack.c.h.b16 %v1674
    %v2921 = vunpack.c.l.b16 %v1675
    %v2922 = vunpack.c.h.b16 %v1675
    %v2923 = vunpack.c.l.b16 %v1676
    %v2924 = vunpack.c.h.b16 %v1676
    %v2925 = vunpack.c.l.b16 %v1677
    %v2926 = vunpack.c.h.b16 %v1677
    %v2927 = vunpack.c.l.b16 %v1678
    %v2928 = vunpack.c.h.b16 %v1678
    %v2929 = vunpack.c.l.b16 %v1679
    %v2930 = vunpack.c.h.b16 %v1679
    %v2931 = vunpack.c.l.b16 %v1680
    %v2932 = vunpack.c.h.b16 %v1680
    %v2933 = vunpack.c.l.b16 %v1681
    %v2934 = vunpack.c.h.b16 %v1681
    %v2935 = vunpack.c.l.b16 %v1682
    %v2936 = vunpack.c.h.b16 %v1682
    %v2937 = vunpack.c.l.b16 %v1683
    %v2938 = vunpack.c.h.b16 %v1683
    %v2939 = vunpack.c.l.b16 %v1684
    %v2940 = vunpack.c.h.b16 %v1684
    %v2941 = vunpack.c.l.b16 %v1685
    %v2942 = vunpack.c.h.b16 %v1685
    %v2943 = vunpack.c.l.b16 %v1686
    %v2944 = vunpack.c.h.b16 %v1686
    %v2945 = vunpack.c.l.b16 %v1687
    %v2946 = vunpack.c.h.b16 %v1687
    %v2947 = vunpack.c.l.b16 %v1688
    %v2948 = vunpack.c.h.b16 %v1688
    %v2949 = vunpack.c.l.b16 %v1689
    %v2950 = vunpack.c.h.b16 %v1689
    %v2951 = vunpack.c.l.b16 %v1690
    %v2952 = vunpack.c.h.b16 %v1690
    %v2953 = vunpack.c.l.b16 %v1691
    %v2954 = vunpack.c.h.b16 %v1691
    %v2955 = vunpack.c.l.b16 %v1692
    %v2956 = vunpack.c.h.b16 %v1692
    %v2957 = vunpack.c.l.b16 %v1693
    %v2958 = vunpack.c.h.b16 %v1693
    %v2959 = vunpack.c.l.b16 %v1694
    %v2960 = vunpack.c.h.b16 %v1694
    %v2961 = vunpack.c.l.b16 %v1695
    %v2962 = vunpack.c.h.b16 %v1695
    %v2963 = vunpack.c.l.b16 %v1696
    %v2964 = vunpack.c.h.b16 %v1696
    %v2965 = vunpack.c.l.b16 %v1697
    %v2966 = vunpack.c.h.b16 %v1697
    %v2967 = vunpack.c.l.b16 %v1698
    %v2968 = vunpack.c.h.b16 %v1698
    %v2969 = vunpack.c.l.b16 %v1699
    %v2970 = vunpack.c.h.b16 %v1699
    %v2971 = vunpack.c.l.b16 %v1700
    %v2972 = vunpack.c.h.b16 %v1700
    %v2973 = vunpack.c.l.b16 %v1701
    %v2974 = vunpack.c.h.b16 %v1701
    %v2975 = vunpack.c.l.b16 %v1702
    %v2976 = vunpack.c.h.b16 %v1702
    %v2977 = vunpack.c.l.b16 %v1703
    %v2978 = vunpack.c.h.b16 %v1703
    %v2979 = vunpack.c.l.b16 %v1704
    %v2980 = vunpack.c.h.b16 %v1704
    %v2981 = vunpack.c.l.b16 %v1705
    %v2982 = vunpack.c.h.b16 %v1705
    %v2983 = vunpack.c.l.b16 %v1706
    %v2984 = vunpack.c.h.b16 %v1706
    %v2985 = vunpack.c.l.b16 %v1707
    %v2986 = vunpack.c.h.b16 %v1707
    %v2987 = vunpack.c.l.b16 %v1708
    %v2988 = vunpack.c.h.b16 %v1708
    %v2989 = vunpack.c.l.b16 %v1709
    %v2990 = vunpack.c.h.b16 %v1709
    %v2991 = vunpack.c.l.b16 %v1710
    %v2992 = vunpack.c.h.b16 %v1710
    %v2993 = vunpack.c.l.b16 %v1711
    %v2994 = vunpack.c.h.b16 %v1711
    %v2995 = vunpack.c.l.b16 %v1712
    %v2996 = vunpack.c.h.b16 %v1712
    %v2997 = vunpack.c.l.b16 %v1713
    %v2998 = vunpack.c.h.b16 %v1713
    %v2999 = vunpack.c.l.b16 %v1714
    %v3000 = vunpack.c.h.b16 %v1714
    %v3001 = vunpack.c.l.b16 %v1715
    %v3002 = vunpack.c.h.b16 %v1715
    %v3003 = vunpack.c.l.b16 %v1716
    %v3004 = vunpack.c.h.b16 %v1716
    %v3005 = vunpack.c.l.b16 %v1717
    %v3006 = vunpack.c.h.b16 %v1717
    %v3007 = vunpack.c.l.b16 %v1718
    %v3008 = vunpack.c.h.b16 %v1718
    %v3009 = vunpack.c.l.b16 %v1719
    %v3010 = vunpack.c.h.b16 %v1719
    %v3011 = vunpack.c.l.b16 %v1720
    %v3012 = vunpack.c.h.b16 %v1720
    %v3013 = vunpack.c.l.b16 %v1721
    %v3014 = vunpack.c.h.b16 %v1721
    %v3015 = vunpack.c.l.b16 %v1722
    %v3016 = vunpack.c.h.b16 %v1722
    %v3017 = vunpack.c.l.b16 %v1723
    %v3018 = vunpack.c.h.b16 %v1723
    %v3019 = vunpack.c.l.b16 %v1724
    %v3020 = vunpack.c.h.b16 %v1724
    %v3021 = vunpack.c.l.b16 %v1725
    %v3022 = vunpack.c.h.b16 %v1725
    %v3023 = vunpack.c.l.b16 %v1726
    %v3024 = vunpack.c.h.b16 %v1726
    %v3025 = vunpack.c.l.b16 %v1727
    %v3026 = vunpack.c.h.b16 %v1727
    %v3027 = vunpack.c.l.b16 %v1728
    %v3028 = vunpack.c.h.b16 %v1728
    %v3029 = vunpack.c.l.b16 %v1729
    %v3030 = vunpack.c.h.b16 %v1729
    %v3031 = vunpack.c.l.b16 %v1730
    %v3032 = vunpack.c.h.b16 %v1730
    %v3033 = vunpack.c.l.b16 %v1731
    %v3034 = vunpack.c.h.b16 %v1731
    %v3035 = vunpack.c.l.b16 %v1732
    %v3036 = vunpack.c.h.b16 %v1732
    %v3037 = vunpack.c.l.b16 %v1733
    %v3038 = vunpack.c.h.b16 %v1733
    %v3039 = vunpack.c.l.b16 %v1734
    %v3040 = vunpack.c.h.b16 %v1734
    %v3041 = vunpack.c.l.b16 %v1735
    %v3042 = vunpack.c.h.b16 %v1735
    %v3043 = vunpack.c.l.b16 %v1736
    %v3044 = vunpack.c.h.b16 %v1736
    %v3045 = vunpack.c.l.b16 %v1737
    %v3046 = vunpack.c.h.b16 %v1737
    %v3047 = vunpack.c.l.b16 %v1738
    %v3048 = vunpack.c.h.b16 %v1738
    %v3049 = vunpack.c.l.b16 %v1739
    %v3050 = vunpack.c.h.b16 %v1739
    %v3051 = vunpack.c.l.b16 %v1740
    %v3052 = vunpack.c.h.b16 %v1740
    %v3053 = vunpack.c.l.b16 %v1741
    %v3054 = vunpack.c.h.b16 %v1741
    %v3055 = vunpack.c.l.b16 %v1742
    %v3056 = vunpack.c.h.b16 %v1742
    %v3057 = vunpack.c.l.b16 %v1743
    %v3058 = vunpack.c.h.b16 %v1743
    %v3059 = vunpack.c.l.b16 %v1744
    %v3060 = vunpack.c.h.b16 %v1744
    %v3061 = vunpack.c.l.b16 %v1745
    %v3062 = vunpack.c.h.b16 %v1745
    %v3063 = vunpack.c.l.b16 %v1746
    %v3064 = vunpack.c.h.b16 %v1746
    %v3065 = vunpack.c.l.b16 %v1747
    %v3066 = vunpack.c.h.b16 %v1747
    %v3067 = vunpack.c.l.b16 %v1748
    %v3068 = vunpack.c.h.b16 %v1748
    %v3069 = vunpack.c.l.b16 %v1749
    %v3070 = vunpack.c.h.b16 %v1749
    %v3071 = vunpack.c.l.b16 %v1750
    %v3072 = vunpack.c.h.b16 %v1750
    %v3073 = vunpack.c.l.b16 %v1751
    %v3074 = vunpack.c.h.b16 %v1751
    %v3075 = vunpack.c.l.b16 %v1752
    %v3076 = vunpack.c.h.b16 %v1752
    %v3077 = vunpack.c.l.b16 %v1753
    %v3078 = vunpack.c.h.b16 %v1753
    %v3079 = vunpack.c.l.b16 %v1754
    %v3080 = vunpack.c.h.b16 %v1754
    %v3081 = vunpack.c.l.b16 %v1755
    %v3082 = vunpack.c.h.b16 %v1755
    %v3083 = vunpack.c.l.b16 %v1756
    %v3084 = vunpack.c.h.b16 %v1756
    %v3085 = vunpack.c.l.b16 %v1757
    %v3086 = vunpack.c.h.b16 %v1757
    %v3087 = vunpack.c.l.b16 %v1758
    %v3088 = vunpack.c.h.b16 %v1758
    %v3089 = vunpack.c.l.b16 %v1759
    %v3090 = vunpack.c.h.b16 %v1759
    %v3091 = vunpack.c.l.b16 %v1760
    %v3092 = vunpack.c.h.b16 %v1760
    %v3093 = vunpack.c.l.b16 %v1761
    %v3094 = vunpack.c.h.b16 %v1761
    %v3095 = vunpack.c.l.b16 %v1762
    %v3096 = vunpack.c.h.b16 %v1762
    %v3097 = vunpack.c.l.b16 %v1763
    %v3098 = vunpack.c.h.b16 %v1763
    %v3099 = vunpack.c.l.b16 %v1764
    %v3100 = vunpack.c.h.b16 %v1764
    %v3101 = vunpack.c.l.b16 %v1765
    %v3102 = vunpack.c.h.b16 %v1765
    %v3103 = vunpack.c.l.b16 %v1766
    %v3104 = vunpack.c.h.b16 %v1766
    %v3105 = vunpack.c.l.b16 %v1767
    %v3106 = vunpack.c.h.b16 %v1767
    %v3107 = vunpack.c.l.b16 %v1768
    %v3108 = vunpack.c.h.b16 %v1768
    %v3109 = vunpack.c.l.b16 %v1769
    %v3110 = vunpack.c.h.b16 %v1769
    %v3111 = vunpack.c.l.b16 %v1770
    %v3112 = vunpack.c.h.b16 %v1770
    %v3113 = vunpack.c.l.b16 %v1771
    %v3114 = vunpack.c.h.b16 %v1771
    %v3115 = vunpack.c.l.b16 %v1772
    %v3116 = vunpack.c.h.b16 %v1772
    %v3117 = vunpack.c.l.b16 %v1773
    %v3118 = vunpack.c.h.b16 %v1773
    %v3119 = vunpack.c.l.b16 %v1774
    %v3120 = vunpack.c.h.b16 %v1774
    %v3121 = vunpack.c.l.b16 %v1775
    %v3122 = vunpack.c.h.b16 %v1775
    %v3123 = vunpack.c.l.b16 %v1776
    %v3124 = vunpack.c.h.b16 %v1776
    %v3125 = vunpack.c.l.b16 %v1777
    %v3126 = vunpack.c.h.b16 %v1777
    %v3127 = vunpack.c.l.b16 %v1778
    %v3128 = vunpack.c.h.b16 %v1778
    %v3129 = vunpack.c.l.b16 %v1779
    %v3130 = vunpack.c.h.b16 %v1779
    %v3131 = vunpack.c.l.b16 %v1780
    %v3132 = vunpack.c.h.b16 %v1780
    %v3133 = vunpack.c.l.b16 %v1781
    %v3134 = vunpack.c.h.b16 %v1781
    %v3135 = vunpack.c.l.b16 %v1782
    %v3136 = vunpack.c.h.b16 %v1782
    %v3137 = vunpack.c.l.b16 %v1783
    %v3138 = vunpack.c.h.b16 %v1783
    %v3139 = vunpack.c.l.b16 %v1784
    %v3140 = vunpack.c.h.b16 %v1784
    %v3141 = vunpack.c.l.b16 %v1785
    %v3142 = vunpack.c.h.b16 %v1785
    %v3143 = vunpack.c.l.b16 %v1786
    %v3144 = vunpack.c.h.b16 %v1786
    %v3145 = vunpack.c.l.b16 %v1787
    %v3146 = vunpack.c.h.b16 %v1787
    %v3147 = vunpack.c.l.b16 %v1788
    %v3148 = vunpack.c.h.b16 %v1788
    %v3149 = vunpack.c.l.b16 %v1789
    %v3150 = vunpack.c.h.b16 %v1789
    %v3151 = vunpack.c.l.b16 %v1790
    %v3152 = vunpack.c.h.b16 %v1790
    %v3153 = vunpack.c.l.b16 %v1791
    %v3154 = vunpack.c.h.b16 %v1791
    %v3155 = vunpack.c.l.b16 %v1792
    %v3156 = vunpack.c.h.b16 %v1792
    %v3157 = vunpack.c.l.b16 %v1793
    %v3158 = vunpack.c.h.b16 %v1793
    %v3159 = vunpack.c.l.b16 %v1794
    %v3160 = vunpack.c.h.b16 %v1794
    %v3161 = vunpack.c.l.b16 %v1795
    %v3162 = vunpack.c.h.b16 %v1795
    %v3163 = vunpack.c.l.b16 %v1796
    %v3164 = vunpack.c.h.b16 %v1796
    %v3165 = vunpack.c.l.b16 %v1797
    %v3166 = vunpack.c.h.b16 %v1797
    %v3167 = vunpack.c.l.b16 %v1798
    %v3168 = vunpack.c.h.b16 %v1798
    %v3169 = vunpack.c.l.b16 %v1799
    %v3170 = vunpack.c.h.b16 %v1799
    %v3171 = vunpack.c.l.b16 %v1800
    %v3172 = vunpack.c.h.b16 %v1800
    %v3173 = vunpack.c.l.b16 %v1801
    %v3174 = vunpack.c.h.b16 %v1801
    %v3175 = vunpack.c.l.b16 %v1802
    %v3176 = vunpack.c.h.b16 %v1802
    %v3177 = vunpack.c.l.b16 %v1803
    %v3178 = vunpack.c.h.b16 %v1803
    %v3179 = vunpack.c.l.b16 %v1804
    %v3180 = vunpack.c.h.b16 %v1804
    %v3181 = vunpack.c.l.b16 %v1805
    %v3182 = vunpack.c.h.b16 %v1805
    %v3183 = vunpack.c.l.b16 %v1806
    %v3184 = vunpack.c.h.b16 %v1806
    %v3185 = vunpack.c.l.b16 %v1807
    %v3186 = vunpack.c.h.b16 %v1807
    %v3187 = vunpack.c.l.b16 %v1808
    %v3188 = vunpack.c.h.b16 %v1808
    %v3189 = vunpack.c.l.b16 %v1809
    %v3190 = vunpack.c.h.b16 %v1809
    %v3191 = vunpack.c.l.b16 %v1810
    %v3192 = vunpack.c.h.b16 %v1810
    %v3193 = vunpack.c.l.b16 %v1811
    %v3194 = vunpack.c.h.b16 %v1811
    %v3195 = vunpack.c.l.b16 %v1812
    %v3196 = vunpack.c.h.b16 %v1812
    %v3197 = vunpack.c.l.b16 %v1813
    %v3198 = vunpack.c.h.b16 %v1813
    %v3199 = vunpack.c.l.b16 %v1814
    %v3200 = vunpack.c.h.b16 %v1814
    %v3201 = vunpack.c.l.b16 %v1815
    %v3202 = vunpack.c.h.b16 %v1815
    %v3203 = vunpack.c.l.b16 %v1816
    %v3204 = vunpack.c.h.b16 %v1816
    %v3205 = vunpack.c.l.b16 %v1817
    %v3206 = vunpack.c.h.b16 %v1817
    %v3207 = vunpack.c.l.b16 %v1818
    %v3208 = vunpack.c.h.b16 %v1818
    %v3209 = vunpack.c.l.b16 %v1819
    %v3210 = vunpack.c.h.b16 %v1819
    %v3211 = vunpack.c.l.b16 %v1820
    %v3212 = vunpack.c.h.b16 %v1820
    %v3213 = vunpack.c.l.b16 %v1821
    %v3214 = vunpack.c.h.b16 %v1821
    %v3215 = vunpack.c.l.b16 %v1822
    %v3216 = vunpack.c.h.b16 %v1822
    %v3217 = vunpack.c.l.b16 %v1823
    %v3218 = vunpack.c.h.b16 %v1823
    %v3219 = vunpack.c.l.b16 %v1824
    %v3220 = vunpack.c.h.b16 %v1824
    %v3221 = vunpack.c.l.b16 %v1825
    %v3222 = vunpack.c.h.b16 %v1825
    %v3223 = vunpack.c.l.b16 %v1826
    %v3224 = vunpack.c.h.b16 %v1826
    %v3225 = vunpack.c.l.b16 %v1827
    %v3226 = vunpack.c.h.b16 %v1827
    %v3227 = vunpack.c.l.b16 %v1828
    %v3228 = vunpack.c.h.b16 %v1828
    %v3229 = vunpack.c.l.b16 %v1829
    %v3230 = vunpack.c.h.b16 %v1829
    %v3231 = vunpack.c.l.b16 %v1830
    %v3232 = vunpack.c.h.b16 %v1830
    %v3233 = vunpack.c.l.b16 %v1831
    %v3234 = vunpack.c.h.b16 %v1831
    %v3235 = vunpack.c.l.b16 %v1832
    %v3236 = vunpack.c.h.b16 %v1832
    %v3237 = vunpack.c.l.b16 %v1833
    %v3238 = vunpack.c.h.b16 %v1833
    %v3239 = vunpack.c.l.b16 %v1834
    %v3240 = vunpack.c.h.b16 %v1834
    %v3241 = vunpack.c.l.b16 %v1835
    %v3242 = vunpack.c.h.b16 %v1835
    %v3243 = vunpack.c.l.b16 %v1836
    %v3244 = vunpack.c.h.b16 %v1836
    %v3245 = vunpack.c.l.b16 %v1837
    %v3246 = vunpack.c.h.b16 %v1837
    %v3247 = vunpack.c.l.b16 %v1838
    %v3248 = vunpack.c.h.b16 %v1838
    %v3249 = vunpack.c.l.b16 %v1839
    %v3250 = vunpack.c.h.b16 %v1839
    %v3251 = vunpack.c.l.b16 %v1840
    %v3252 = vunpack.c.h.b16 %v1840
    %v3253 = vunpack.c.l.b16 %v1841
    %v3254 = vunpack.c.h.b16 %v1841
    %v3255 = vunpack.c.l.b16 %v1842
    %v3256 = vunpack.c.h.b16 %v1842
    %v3257 = vunpack.c.l.b16 %v1843
    %v3258 = vunpack.c.h.b16 %v1843
    %v3259 = vunpack.c.l.b16 %v1844
    %v3260 = vunpack.c.h.b16 %v1844
    %v3261 = vunpack.c.l.b16 %v1845
    %v3262 = vunpack.c.h.b16 %v1845
    %v3263 = vunpack.c.l.b16 %v1846
    %v3264 = vunpack.c.h.b16 %v1846
    %v3265 = vunpack.c.l.b16 %v1847
    %v3266 = vunpack.c.h.b16 %v1847
    %v3267 = vunpack.c.l.b16 %v1848
    %v3268 = vunpack.c.h.b16 %v1848
    %v3269 = vunpack.c.l.b16 %v1849
    %v3270 = vunpack.c.h.b16 %v1849
    %v3271 = vunpack.c.l.b16 %v1850
    %v3272 = vunpack.c.h.b16 %v1850
    %v3273 = vunpack.c.l.b16 %v1851
    %v3274 = vunpack.c.h.b16 %v1851
    %v3275 = vunpack.c.l.b16 %v1852
    %v3276 = vunpack.c.h.b16 %v1852
    %v3277 = vunpack.c.l.b16 %v1853
    %v3278 = vunpack.c.h.b16 %v1853
    %v3279 = vunpack.c.l.b16 %v1854
    %v3280 = vunpack.c.h.b16 %v1854
    %v3281 = vunpack.c.l.b16 %v1855
    %v3282 = vunpack.c.h.b16 %v1855
    %v3283 = vunpack.c.l.b16 %v1856
    %v3284 = vunpack.c.h.b16 %v1856
    %v3285 = vunpack.c.l.b16 %v1857
    %v3286 = vunpack.c.h.b16 %v1857
    %v3287 = vunpack.c.l.b16 %v1858
    %v3288 = vunpack.c.h.b16 %v1858
    %v3289 = vunpack.c.l.b16 %v1859
    %v3290 = vunpack.c.h.b16 %v1859
    %v3291 = vunpack.c.l.b16 %v1860
    %v3292 = vunpack.c.h.b16 %v1860
    %v3293 = vunpack.c.l.b16 %v1861
    %v3294 = vunpack.c.h.b16 %v1861
    %v3295 = vunpack.c.l.b16 %v1862
    %v3296 = vunpack.c.h.b16 %v1862
    %v3297 = vunpack.c.l.b16 %v1863
    %v3298 = vunpack.c.h.b16 %v1863
    %v3299 = vunpack.c.l.b16 %v1864
    %v3300 = vunpack.c.h.b16 %v1864
    %v3301 = vunpack.c.l.b16 %v1865
    %v3302 = vunpack.c.h.b16 %v1865
    %v3303 = vunpack.c.l.b16 %v1866
    %v3304 = vunpack.c.h.b16 %v1866
    %v3305 = vunpack.c.l.b16 %v1867
    %v3306 = vunpack.c.h.b16 %v1867
    %v3307 = vunpack.c.l.b16 %v1868
    %v3308 = vunpack.c.h.b16 %v1868
    %v3309 = vunpack.c.l.b16 %v1869
    %v3310 = vunpack.c.h.b16 %v1869
    %v3311 = vunpack.c.l.b16 %v1870
    %v3312 = vunpack.c.h.b16 %v1870
    %v3313 = vunpack.c.l.b16 %v1871
    %v3314 = vunpack.c.h.b16 %v1871
    %v3315 = vunpack.c.l.b16 %v1872
    %v3316 = vunpack.c.h.b16 %v1872
    %v3317 = vunpack.c.l.b16 %v1873
    %v3318 = vunpack.c.h.b16 %v1873
    %v3319 = vunpack.c.l.b16 %v1874
    %v3320 = vunpack.c.h.b16 %v1874
    %v3321 = vunpack.c.l.b16 %v1875
    %v3322 = vunpack.c.h.b16 %v1875
    %v3323 = vunpack.c.l.b16 %v1876
    %v3324 = vunpack.c.h.b16 %v1876
    %v3325 = vunpack.c.l.b16 %v1877
    %v3326 = vunpack.c.h.b16 %v1877
    %v3327 = vunpack.c.l.b16 %v1878
    %v3328 = vunpack.c.h.b16 %v1878
    %v3329 = vunpack.c.l.b16 %v1879
    %v3330 = vunpack.c.h.b16 %v1879
    %v3331 = vunpack.c.l.b16 %v1880
    %v3332 = vunpack.c.h.b16 %v1880
    %v3333 = vunpack.c.l.b16 %v1881
    %v3334 = vunpack.c.h.b16 %v1881
    %v3335 = vunpack.c.l.b16 %v1882
    %v3336 = vunpack.c.h.b16 %v1882
    %v3337 = vunpack.c.l.b16 %v1883
    %v3338 = vunpack.c.h.b16 %v1883
    %v3339 = vunpack.c.l.b16 %v1884
    %v3340 = vunpack.c.h.b16 %v1884
    %v3341 = vunpack.c.l.b16 %v1885
    %v3342 = vunpack.c.h.b16 %v1885
    %v3343 = vunpack.c.l.b16 %v1886
    %v3344 = vunpack.c.h.b16 %v1886
    %v3345 = vunpack.c.l.b16 %v1887
    %v3346 = vunpack.c.h.b16 %v1887
    %v3347 = vunpack.c.l.b16 %v1888
    %v3348 = vunpack.c.h.b16 %v1888
    %v3349 = vunpack.c.l.b16 %v1889
    %v3350 = vunpack.c.h.b16 %v1889
    %v3351 = vunpack.c.l.b16 %v1890
    %v3352 = vunpack.c.h.b16 %v1890
    %v3353 = vunpack.c.l.b16 %v1891
    %v3354 = vunpack.c.h.b16 %v1891
    %v3355 = vunpack.c.l.b16 %v1892
    %v3356 = vunpack.c.h.b16 %v1892
    %v3357 = vunpack.c.l.b16 %v1893
    %v3358 = vunpack.c.h.b16 %v1893
    %v3359 = vunpack.c.l.b16 %v1894
    %v3360 = vunpack.c.h.b16 %v1894
    %v3361 = vunpack.c.l.b16 %v1895
    %v3362 = vunpack.c.h.b16 %v1895
    %v3363 = vunpack.c.l.b16 %v1896
    %v3364 = vunpack.c.h.b16 %v1896
    %v3365 = vunpack.c.l.b16 %v1897
    %v3366 = vunpack.c.h.b16 %v1897
    %v3367 = vunpack.c.l.b16 %v1898
    %v3368 = vunpack.c.h.b16 %v1898
    %v3369 = vunpack.c.l.b16 %v1899
    %v3370 = vunpack.c.h.b16 %v1899
    %v3371 = vunpack.c.l.b16 %v1900
    %v3372 = vunpack.c.h.b16 %v1900
    %v3373 = vunpack.c.l.b16 %v1901
    %v3374 = vunpack.c.h.b16 %v1901
    %v3375 = vunpack.c.l.b16 %v1902
    %v3376 = vunpack.c.h.b16 %v1902
    %v3377 = vunpack.c.l.b16 %v1903
    %v3378 = vunpack.c.h.b16 %v1903
    %v3379 = vunpack.c.l.b16 %v1904
    %v3380 = vunpack.c.h.b16 %v1904
    %v3381 = vunpack.c.l.b16 %v1905
    %v3382 = vunpack.c.h.b16 %v1905
    %v3383 = vunpack.c.l.b16 %v1906
    %v3384 = vunpack.c.h.b16 %v1906
    %v3385 = vunpack.c.l.b16 %v1907
    %v3386 = vunpack.c.h.b16 %v1907
    %v3387 = vunpack.c.l.b16 %v1908
    %v3388 = vunpack.c.h.b16 %v1908
    %v3389 = vunpack.c.l.b16 %v1909
    %v3390 = vunpack.c.h.b16 %v1909
    %v3391 = vunpack.c.l.b16 %v1910
    %v3392 = vunpack.c.h.b16 %v1910
    %v3393 = vunpack.c.l.b16 %v1911
    %v3394 = vunpack.c.h.b16 %v1911
    %v3395 = vunpack.c.l.b16 %v1912
    %v3396 = vunpack.c.h.b16 %v1912
    %v3397 = vunpack.c.l.b16 %v1913
    %v3398 = vunpack.c.h.b16 %v1913
    %v3399 = vunpack.c.l.b16 %v1914
    %v3400 = vunpack.c.h.b16 %v1914
    %v3401 = vunpack.c.l.b16 %v1915
    %v3402 = vunpack.c.h.b16 %v1915
    %v3403 = vunpack.c.l.b16 %v1916
    %v3404 = vunpack.c.h.b16 %v1916
    %v3405 = vunpack.c.l.b16 %v1917
    %v3406 = vunpack.c.h.b16 %v1917
    %v3407 = vunpack.c.l.b16 %v1918
    %v3408 = vunpack.c.h.b16 %v1918
    %v3409 = vunpack.c.l.b16 %v1919
    %v3410 = vunpack.c.h.b16 %v1919
    %v3411 = vunpack.c.l.b16 %v1920
    %v3412 = vunpack.c.h.b16 %v1920
    %v3413 = vunpack.c.l.b16 %v1921
    %v3414 = vunpack.c.h.b16 %v1921
    %v3415 = vunpack.c.l.b16 %v1922
    %v3416 = vunpack.c.h.b16 %v1922
    %v3417 = vunpack.c.l.b16 %v1923
    %v3418 = vunpack.c.h.b16 %v1923
    %v3419 = vunpack.c.l.b16 %v1924
    %v3420 = vunpack.c.h.b16 %v1924
    %v3421 = vunpack.c.l.b16 %v1925
    %v3422 = vunpack.c.h.b16 %v1925
    %v3423 = vunpack.c.l.b16 %v1926
    %v3424 = vunpack.c.h.b16 %v1926
    %v3425 = vunpack.c.l.b16 %v1927
    %v3426 = vunpack.c.h.b16 %v1927
    %v3427 = vunpack.c.l.b16 %v1928
    %v3428 = vunpack.c.h.b16 %v1928
    %v3429 = vunpack.c.l.b16 %v1929
    %v3430 = vunpack.c.h.b16 %v1929
    %v3431 = vunpack.c.l.b16 %v1930
    %v3432 = vunpack.c.h.b16 %v1930
    %v3433 = vunpack.c.l.b16 %v1931
    %v3434 = vunpack.c.h.b16 %v1931
    %v3435 = vunpack.c.l.b16 %v1932
    %v3436 = vunpack.c.h.b16 %v1932
    %v3437 = vunpack.c.l.b16 %v1933
    %v3438 = vunpack.c.h.b16 %v1933
    %v3439 = vunpack.c.l.b16 %v1934
    %v3440 = vunpack.c.h.b16 %v1934
    %v3441 = vunpack.c.l.b16 %v1935
    %v3442 = vunpack.c.h.b16 %v1935
    %v3443 = vunpack.c.l.b16 %v1936
    %v3444 = vunpack.c.h.b16 %v1936
    %v3445 = vunpack.c.l.b16 %v1937
    %v3446 = vunpack.c.h.b16 %v1937
    %v3447 = vunpack.c.l.b16 %v1938
    %v3448 = vunpack.c.h.b16 %v1938
    %v3449 = vunpack.c.l.b16 %v1939
    %v3450 = vunpack.c.h.b16 %v1939
    %v3451 = vunpack.c.l.b16 %v1940
    %v3452 = vunpack.c.h.b16 %v1940
    %v3453 = vunpack.c.l.b16 %v1941
    %v3454 = vunpack.c.h.b16 %v1941
    %v3455 = vunpack.c.l.b16 %v1942
    %v3456 = vunpack.c.h.b16 %v1942
    %v3457 = vunpack.c.l.b16 %v1943
    %v3458 = vunpack.c.h.b16 %v1943
    %v3459 = vunpack.c.l.b16 %v1944
    %v3460 = vunpack.c.h.b16 %v1944
    %v3461 = vunpack.c.l.b16 %v1945
    %v3462 = vunpack.c.h.b16 %v1945
    %v3463 = vunpack.c.l.b16 %v1946
    %v3464 = vunpack.c.h.b16 %v1946
    %v3465 = vunpack.c.l.b16 %v1947
    %v3466 = vunpack.c.h.b16 %v1947
    %v3467 = vunpack.c.l.b16 %v1948
    %v3468 = vunpack.c.h.b16 %v1948
    %v3469 = vunpack.c.l.b16 %v1949
    %v3470 = vunpack.c.h.b16 %v1949
    %v3471 = vunpack.c.l.b16 %v1950
    %v3472 = vunpack.c.h.b16 %v1950
    %v3473 = vunpack.c.l.b16 %v1951
    %v3474 = vunpack.c.h.b16 %v1951
    %v3475 = vunpack.c.l.b16 %v1952
    %v3476 = vunpack.c.h.b16 %v1952
    %v3477 = vunpack.c.l.b16 %v1953
    %v3478 = vunpack.c.h.b16 %v1953
    %v3479 = vunpack.c.l.b16 %v1954
    %v3480 = vunpack.c.h.b16 %v1954
    %v3481 = vunpack.c.l.b16 %v1955
    %v3482 = vunpack.c.h.b16 %v1955
    %v3483 = vunpack.c.l.b16 %v1956
    %v3484 = vunpack.c.h.b16 %v1956
    %v3485 = vunpack.c.l.b16 %v1957
    %v3486 = vunpack.c.h.b16 %v1957
    %v3487 = vunpack.c.l.b16 %v1958
    %v3488 = vunpack.c.h.b16 %v1958
    %v3489 = vunpack.c.l.b16 %v1959
    %v3490 = vunpack.c.h.b16 %v1959
    %v3491 = vunpack.c.l.b16 %v1960
    %v3492 = vunpack.c.h.b16 %v1960
    %v3493 = vunpack.c.l.b16 %v1961
    %v3494 = vunpack.c.h.b16 %v1961
    %v3495 = vunpack.c.l.b16 %v1962
    %v3496 = vunpack.c.h.b16 %v1962
    %v3497 = vunpack.c.l.b16 %v1963
    %v3498 = vunpack.c.h.b16 %v1963
    %v3499 = vunpack.c.l.b16 %v1964
    %v3500 = vunpack.c.h.b16 %v1964
    %v3501 = vunpack.c.l.b16 %v1965
    %v3502 = vunpack.c.h.b16 %v1965
    %v3503 = vunpack.c.l.b16 %v1966
    %v3504 = vunpack.c.h.b16 %v1966
    %v3505 = vunpack.c.l.b16 %v1967
    %v3506 = vunpack.c.h.b16 %v1967
    %v3507 = vunpack.c.l.b16 %v1968
    %v3508 = vunpack.c.h.b16 %v1968
    %v3509 = vunpack.c.l.b16 %v1969
    %v3510 = vunpack.c.h.b16 %v1969
    %v3511 = vunpack.c.l.b16 %v1970
    %v3512 = vunpack.c.h.b16 %v1970
    %v3513 = vunpack.c.l.b16 %v1971
    %v3514 = vunpack.c.h.b16 %v1971
    %v3515 = vunpack.c.l.b16 %v1972
    %v3516 = vunpack.c.h.b16 %v1972
    %v3517 = vunpack.c.l.b16 %v1973
    %v3518 = vunpack.c.h.b16 %v1973
    %v3519 = vunpack.c.l.b16 %v1974
    %v3520 = vunpack.c.h.b16 %v1974
    %v3521 = vunpack.c.l.b16 %v1975
    %v3522 = vunpack.c.h.b16 %v1975
    %v3523 = vunpack.c.l.b16 %v1976
    %v3524 = vunpack.c.h.b16 %v1976
    %v3525 = vunpack.c.l.b16 %v1977
    %v3526 = vunpack.c.h.b16 %v1977
    %v3527 = vunpack.c.l.b16 %v1978
    %v3528 = vunpack.c.h.b16 %v1978
    %v3529 = vunpack.c.l.b16 %v1979
    %v3530 = vunpack.c.h.b16 %v1979
    %v3531 = vunpack.c.l.b16 %v1980
    %v3532 = vunpack.c.h.b16 %v1980
    %v3533 = vunpack.c.l.b16 %v1981
    %v3534 = vunpack.c.h.b16 %v1981
    %v3535 = vunpack.c.l.b16 %v1982
    %v3536 = vunpack.c.h.b16 %v1982
    %v3537 = vpack.c.b16 %v2521, %v2513
    %v3538 = vpack.c.b16 %v2522, %v2514
    %v3539 = vpack.c.b16 %v2523, %v2515
    %v3540 = vpack.c.b16 %v2524, %v2516
    %v3541 = vpack.c.b16 %v2525, %v2517
    %v3542 = vpack.c.b16 %v2526, %v2518
    %v3543 = vpack.c.b16 %v2527, %v2519
    %v3544 = vpack.c.b16 %v2528, %v2520
    %v3545 = vpack.c.b16 %v2537, %v2529
    %v3546 = vpack.c.b16 %v2538, %v2530
    %v3547 = vpack.c.b16 %v2539, %v2531
    %v3548 = vpack.c.b16 %v2540, %v2532
    %v3549 = vpack.c.b16 %v2541, %v2533
    %v3550 = vpack.c.b16 %v2542, %v2534
    %v3551 = vpack.c.b16 %v2543, %v2535
    %v3552 = vpack.c.b16 %v2544, %v2536
    %v3553 = vpack.c.b16 %v2553, %v2545
    %v3554 = vpack.c.b16 %v2554, %v2546
    %v3555 = vpack.c.b16 %v2555, %v2547
    %v3556 = vpack.c.b16 %v2556, %v2548
    %v3557 = vpack.c.b16 %v2557, %v2549
    %v3558 = vpack.c.b16 %v2558, %v2550
    %v3559 = vpack.c.b16 %v2559, %v2551
    %v3560 = vpack.c.b16 %v2560, %v2552
    %v3561 = vpack.c.b16 %v2569, %v2561
    %v3562 = vpack.c.b16 %v2570, %v2562
    %v3563 = vpack.c.b16 %v2571, %v2563
    %v3564 = vpack.c.b16 %v2572, %v2564
    %v3565 = vpack.c.b16 %v2573, %v2565
    %v3566 = vpack.c.b16 %v2574, %v2566
    %v3567 = vpack.c.b16 %v2575, %v2567
    %v3568 = vpack.c.b16 %v2576, %v2568
    %v3569 = vpack.c.b16 %v2585, %v2577
    %v3570 = vpack.c.b16 %v2586, %v2578
    %v3571 = vpack.c.b16 %v2587, %v2579
    %v3572 = vpack.c.b16 %v2588, %v2580
    %v3573 = vpack.c.b16 %v2589, %v2581
    %v3574 = vpack.c.b16 %v2590, %v2582
    %v3575 = vpack.c.b16 %v2591, %v2583
    %v3576 = vpack.c.b16 %v2592, %v2584
    %v3577 = vpack.c.b16 %v2601, %v2593
    %v3578 = vpack.c.b16 %v2602, %v2594
    %v3579 = vpack.c.b16 %v2603, %v2595
    %v3580 = vpack.c.b16 %v2604, %v2596
    %v3581 = vpack.c.b16 %v2605, %v2597
    %v3582 = vpack.c.b16 %v2606, %v2598
    %v3583 = vpack.c.b16 %v2607, %v2599
    %v3584 = vpack.c.b16 %v2608, %v2600
    %v3585 = vpack.c.b16 %v2617, %v2609
    %v3586 = vpack.c.b16 %v2618, %v2610
    %v3587 = vpack.c.b16 %v2619, %v2611
    %v3588 = vpack.c.b16 %v2620, %v2612
    %v3589 = vpack.c.b16 %v2621, %v2613
    %v3590 = vpack.c.b16 %v2622, %v2614
    %v3591 = vpack.c.b16 %v2623, %v2615
    %v3592 = vpack.c.b16 %v2624, %v2616
    %v3593 = vpack.c.b16 %v2633, %v2625
    %v3594 = vpack.c.b16 %v2634, %v2626
    %v3595 = vpack.c.b16 %v2635, %v2627
    %v3596 = vpack.c.b16 %v2636, %v2628
    %v3597 = vpack.c.b16 %v2637, %v2629
    %v3598 = vpack.c.b16 %v2638, %v2630
    %v3599 = vpack.c.b16 %v2639, %v2631
    %v3600 = vpack.c.b16 %v2640, %v2632
    %v3601 = vpack.c.b16 %v2649, %v2641
    %v3602 = vpack.c.b16 %v2650, %v2642
    %v3603 = vpack.c.b16 %v2651, %v2643
    %v3604 = vpack.c.b16 %v2652, %v2644
    %v3605 = vpack.c.b16 %v2653, %v2645
    %v3606 = vpack.c.b16 %v2654, %v2646
    %v3607 = vpack.c.b16 %v2655, %v2647
    %v3608 = vpack.c.b16 %v2656, %v2648
    %v3609 = vpack.c.b16 %v2665, %v2657
    %v3610 = vpack.c.b16 %v2666, %v2658
    %v3611 = vpack.c.b16 %v2667, %v2659
    %v3612 = vpack.c.b16 %v2668, %v2660
    %v3613 = vpack.c.b16 %v2669, %v2661
    %v3614 = vpack.c.b16 %v2670, %v2662
    %v3615 = vpack.c.b16 %v2671, %v2663
    %v3616 = vpack.c.b16 %v2672, %v2664
    %v3617 = vpack.c.b16 %v2681, %v2673
    %v3618 = vpack.c.b16 %v2682, %v2674
    %v3619 = vpack.c.b16 %v2683, %v2675
    %v3620 = vpack.c.b16 %v2684, %v2676
    %v3621 = vpack.c.b16 %v2685, %v2677
    %v3622 = vpack.c.b16 %v2686, %v2678
    %v3623 = vpack.c.b16 %v2687, %v2679
    %v3624 = vpack.c.b16 %v2688, %v2680
    %v3625 = vpack.c.b16 %v2697, %v2689
    %v3626 = vpack.c.b16 %v2698, %v2690
    %v3627 = vpack.c.b16 %v2699, %v2691
    %v3628 = vpack.c.b16 %v2700, %v2692
    %v3629 = vpack.c.b16 %v2701, %v2693
    %v3630 = vpack.c.b16 %v2702, %v2694
    %v3631 = vpack.c.b16 %v2703, %v2695
    %v3632 = vpack.c.b16 %v2704, %v2696
    %v3633 = vpack.c.b16 %v2713, %v2705
    %v3634 = vpack.c.b16 %v2714, %v2706
    %v3635 = vpack.c.b16 %v2715, %v2707
    %v3636 = vpack.c.b16 %v2716, %v2708
    %v3637 = vpack.c.b16 %v2717, %v2709
    %v3638 = vpack.c.b16 %v2718, %v2710
    %v3639 = vpack.c.b16 %v2719, %v2711
    %v3640 = vpack.c.b16 %v2720, %v2712
    %v3641 = vpack.c.b16 %v2729, %v2721
    %v3642 = vpack.c.b16 %v2730, %v2722
    %v3643 = vpack.c.b16 %v2731, %v2723
    %v3644 = vpack.c.b16 %v2732, %v2724
    %v3645 = vpack.c.b16 %v2733, %v2725
    %v3646 = vpack.c.b16 %v2734, %v2726
    %v3647 = vpack.c.b16 %v2735, %v2727
    %v3648 = vpack.c.b16 %v2736, %v2728
    %v3649 = vpack.c.b16 %v2745, %v2737
    %v3650 = vpack.c.b16 %v2746, %v2738
    %v3651 = vpack.c.b16 %v2747, %v2739
    %v3652 = vpack.c.b16 %v2748, %v2740
    %v3653 = vpack.c.b16 %v2749, %v2741
    %v3654 = vpack.c.b16 %v2750, %v2742
    %v3655 = vpack.c.b16 %v2751, %v2743
    %v3656 = vpack.c.b16 %v2752, %v2744
    %v3657 = vpack.c.b16 %v2761, %v2753
    %v3658 = vpack.c.b16 %v2762, %v2754
    %v3659 = vpack.c.b16 %v2763, %v2755
    %v3660 = vpack.c.b16 %v2764, %v2756
    %v3661 = vpack.c.b16 %v2765, %v2757
    %v3662 = vpack.c.b16 %v2766, %v2758
    %v3663 = vpack.c.b16 %v2767, %v2759
    %v3664 = vpack.c.b16 %v2768, %v2760
    %v3665 = vpack.c.b16 %v2777, %v2769
    %v3666 = vpack.c.b16 %v2778, %v2770
    %v3667 = vpack.c.b16 %v2779, %v2771
    %v3668 = vpack.c.b16 %v2780, %v2772
    %v3669 = vpack.c.b16 %v2781, %v2773
    %v3670 = vpack.c.b16 %v2782, %v2774
    %v3671 = vpack.c.b16 %v2783, %v2775
    %v3672 = vpack.c.b16 %v2784, %v2776
    %v3673 = vpack.c.b16 %v2793, %v2785
    %v3674 = vpack.c.b16 %v2794, %v2786
    %v3675 = vpack.c.b16 %v2795, %v2787
    %v3676 = vpack.c.b16 %v2796, %v2788
    %v3677 = vpack.c.b16 %v2797, %v2789
    %v3678 = vpack.c.b16 %v2798, %v2790
    %v3679 = vpack.c.b16 %v2799, %v2791
    %v3680 = vpack.c.b16 %v2800, %v2792
    %v3681 = vpack.c.b16 %v2809, %v2801
    %v3682 = vpack.c.b16 %v2810, %v2802
    %v3683 = vpack.c.b16 %v2811, %v2803
    %v3684 = vpack.c.b16 %v2812, %v2804
    %v3685 = vpack.c.b16 %v2813, %v2805
    %v3686 = vpack.c.b16 %v2814, %v2806
    %v3687 = vpack.c.b16 %v2815, %v2807
    %v3688 = vpack.c.b16 %v2816, %v2808
    %v3689 = vpack.c.b16 %v2825, %v2817
    %v3690 = vpack.c.b16 %v2826, %v2818
    %v3691 = vpack.c.b16 %v2827, %v2819
    %v3692 = vpack.c.b16 %v2828, %v2820
    %v3693 = vpack.c.b16 %v2829, %v2821
    %v3694 = vpack.c.b16 %v2830, %v2822
    %v3695 = vpack.c.b16 %v2831, %v2823
    %v3696 = vpack.c.b16 %v2832, %v2824
    %v3697 = vpack.c.b16 %v2841, %v2833
    %v3698 = vpack.c.b16 %v2842, %v2834
    %v3699 = vpack.c.b16 %v2843, %v2835
    %v3700 = vpack.c.b16 %v2844, %v2836
    %v3701 = vpack.c.b16 %v2845, %v2837
    %v3702 = vpack.c.b16 %v2846, %v2838
    %v3703 = vpack.c.b16 %v2847, %v2839
    %v3704 = vpack.c.b16 %v2848, %v2840
    %v3705 = vpack.c.b16 %v2857, %v2849
    %v3706 = vpack.c.b16 %v2858, %v2850
    %v3707 = vpack.c.b16 %v2859, %v2851
    %v3708 = vpack.c.b16 %v2860, %v2852
    %v3709 = vpack.c.b16 %v2861, %v2853
    %v3710 = vpack.c.b16 %v2862, %v2854
    %v3711 = vpack.c.b16 %v2863, %v2855
    %v3712 = vpack.c.b16 %v2864, %v2856
    %v3713 = vpack.c.b16 %v2873, %v2865
    %v3714 = vpack.c.b16 %v2874, %v2866
    %v3715 = vpack.c.b16 %v2875, %v2867
    %v3716 = vpack.c.b16 %v2876, %v2868
    %v3717 = vpack.c.b16 %v2877, %v2869
    %v3718 = vpack.c.b16 %v2878, %v2870
    %v3719 = vpack.c.b16 %v2879, %v2871
    %v3720 = vpack.c.b16 %v2880, %v2872
    %v3721 = vpack.c.b16 %v2889, %v2881
    %v3722 = vpack.c.b16 %v2890, %v2882
    %v3723 = vpack.c.b16 %v2891, %v2883
    %v3724 = vpack.c.b16 %v2892, %v2884
    %v3725 = vpack.c.b16 %v2893, %v2885
    %v3726 = vpack.c.b16 %v2894, %v2886
    %v3727 = vpack.c.b16 %v2895, %v2887
    %v3728 = vpack.c.b16 %v2896, %v2888
    %v3729 = vpack.c.b16 %v2905, %v2897
    %v3730 = vpack.c.b16 %v2906, %v2898
    %v3731 = vpack.c.b16 %v2907, %v2899
    %v3732 = vpack.c.b16 %v2908, %v2900
    %v3733 = vpack.c.b16 %v2909, %v2901
    %v3734 = vpack.c.b16 %v2910, %v2902
    %v3735 = vpack.c.b16 %v2911, %v2903
    %v3736 = vpack.c.b16 %v2912, %v2904
    %v3737 = vpack.c.b16 %v2921, %v2913
    %v3738 = vpack.c.b16 %v2922, %v2914
    %v3739 = vpack.c.b16 %v2923, %v2915
    %v3740 = vpack.c.b16 %v2924, %v2916
    %v3741 = vpack.c.b16 %v2925, %v2917
    %v3742 = vpack.c.b16 %v2926, %v2918
    %v3743 = vpack.c.b16 %v2927, %v2919
    %v3744 = vpack.c.b16 %v2928, %v2920
    %v3745 = vpack.c.b16 %v2937, %v2929
    %v3746 = vpack.c.b16 %v2938, %v2930
    %v3747 = vpack.c.b16 %v2939, %v2931
    %v3748 = vpack.c.b16 %v2940, %v2932
    %v3749 = vpack.c.b16 %v2941, %v2933
    %v3750 = vpack.c.b16 %v2942, %v2934
    %v3751 = vpack.c.b16 %v2943, %v2935
    %v3752 = vpack.c.b16 %v2944, %v2936
    %v3753 = vpack.c.b16 %v2953, %v2945
    %v3754 = vpack.c.b16 %v2954, %v2946
    %v3755 = vpack.c.b16 %v2955, %v2947
    %v3756 = vpack.c.b16 %v2956, %v2948
    %v3757 = vpack.c.b16 %v2957, %v2949
    %v3758 = vpack.c.b16 %v2958, %v2950
    %v3759 = vpack.c.b16 %v2959, %v2951
    %v3760 = vpack.c.b16 %v2960, %v2952
    %v3761 = vpack.c.b16 %v2969, %v2961
    %v3762 = vpack.c.b16 %v2970, %v2962
    %v3763 = vpack.c.b16 %v2971, %v2963
    %v3764 = vpack.c.b16 %v2972, %v2964
    %v3765 = vpack.c.b16 %v2973, %v2965
    %v3766 = vpack.c.b16 %v2974, %v2966
    %v3767 = vpack.c.b16 %v2975, %v2967
    %v3768 = vpack.c.b16 %v2976, %v2968
    %v3769 = vpack.c.b16 %v2985, %v2977
    %v3770 = vpack.c.b16 %v2986, %v2978
    %v3771 = vpack.c.b16 %v2987, %v2979
    %v3772 = vpack.c.b16 %v2988, %v2980
    %v3773 = vpack.c.b16 %v2989, %v2981
    %v3774 = vpack.c.b16 %v2990, %v2982
    %v3775 = vpack.c.b16 %v2991, %v2983
    %v3776 = vpack.c.b16 %v2992, %v2984
    %v3777 = vpack.c.b16 %v3001, %v2993
    %v3778 = vpack.c.b16 %v3002, %v2994
    %v3779 = vpack.c.b16 %v3003, %v2995
    %v3780 = vpack.c.b16 %v3004, %v2996
    %v3781 = vpack.c.b16 %v3005, %v2997
    %v3782 = vpack.c.b16 %v3006, %v2998
    %v3783 = vpack.c.b16 %v3007, %v2999
    %v3784 = vpack.c.b16 %v3008, %v3000
    %v3785 = vpack.c.b16 %v3017, %v3009
    %v3786 = vpack.c.b16 %v3018, %v3010
    %v3787 = vpack.c.b16 %v3019, %v3011
    %v3788 = vpack.c.b16 %v3020, %v3012
    %v3789 = vpack.c.b16 %v3021, %v3013
    %v3790 = vpack.c.b16 %v3022, %v3014
    %v3791 = vpack.c.b16 %v3023, %v3015
    %v3792 = vpack.c.b16 %v3024, %v3016
    %v3793 = vpack.c.b16 %v3033, %v3025
    %v3794 = vpack.c.b16 %v3034, %v3026
    %v3795 = vpack.c.b16 %v3035, %v3027
    %v3796 = vpack.c.b16 %v3036, %v3028
    %v3797 = vpack.c.b16 %v3037, %v3029
    %v3798 = vpack.c.b16 %v3038, %v3030
    %v3799 = vpack.c.b16 %v3039, %v3031
    %v3800 = vpack.c.b16 %v3040, %v3032
    %v3801 = vpack.c.b16 %v3049, %v3041
    %v3802 = vpack.c.b16 %v3050, %v3042
    %v3803 = vpack.c.b16 %v3051, %v3043
    %v3804 = vpack.c.b16 %v3052, %v3044
    %v3805 = vpack.c.b16 %v3053, %v3045
    %v3806 = vpack.c.b16 %v3054, %v3046
    %v3807 = vpack.c.b16 %v3055, %v3047
    %v3808 = vpack.c.b16 %v3056, %v3048
    %v3809 = vpack.c.b16 %v3065, %v3057
    %v3810 = vpack.c.b16 %v3066, %v3058
    %v3811 = vpack.c.b16 %v3067, %v3059
    %v3812 = vpack.c.b16 %v3068, %v3060
    %v3813 = vpack.c.b16 %v3069, %v3061
    %v3814 = vpack.c.b16 %v3070, %v3062
    %v3815 = vpack.c.b16 %v3071, %v3063
    %v3816 = vpack.c.b16 %v3072, %v3064
    %v3817 = vpack.c.b16 %v3081, %v3073
    %v3818 = vpack.c.b16 %v3082, %v3074
    %v3819 = vpack.c.b16 %v3083, %v3075
    %v3820 = vpack.c.b16 %v3084, %v3076
    %v3821 = vpack.c.b16 %v3085, %v3077
    %v3822 = vpack.c.b16 %v3086, %v3078
    %v3823 = vpack.c.b16 %v3087, %v3079
    %v3824 = vpack.c.b16 %v3088, %v3080
    %v3825 = vpack.c.b16 %v3097, %v3089
    %v3826 = vpack.c.b16 %v3098, %v3090
    %v3827 = vpack.c.b16 %v3099, %v3091
    %v3828 = vpack.c.b16 %v3100, %v3092
    %v3829 = vpack.c.b16 %v3101, %v3093
    %v3830 = vpack.c.b16 %v3102, %v3094
    %v3831 = vpack.c.b16 %v3103, %v3095
    %v3832 = vpack.c.b16 %v3104, %v3096
    %v3833 = vpack.c.b16 %v3113, %v3105
    %v3834 = vpack.c.b16 %v3114, %v3106
    %v3835 = vpack.c.b16 %v3115, %v3107
    %v3836 = vpack.c.b16 %v3116, %v3108
    %v3837 = vpack.c.b16 %v3117, %v3109
    %v3838 = vpack.c.b16 %v3118, %v3110
    %v3839 = vpack.c.b16 %v3119, %v3111
    %v3840 = vpack.c.b16 %v3120, %v3112
    %v3841 = vpack.c.b16 %v3129, %v3121
    %v3842 = vpack.c.b16 %v3130, %v3122
    %v3843 = vpack.c.b16 %v3131, %v3123
    %v3844 = vpack.c.b16 %v3132, %v3124
    %v3845 = vpack.c.b16 %v3133, %v3125
    %v3846 = vpack.c.b16 %v3134, %v3126
    %v3847 = vpack.c.b16 %v3135, %v3127
    %v3848 = vpack.c.b16 %v3136, %v3128
    %v3849 = vpack.c.b16 %v3145, %v3137
    %v3850 = vpack.c.b16 %v3146, %v3138
    %v3851 = vpack.c.b16 %v3147, %v3139
    %v3852 = vpack.c.b16 %v3148, %v3140
    %v3853 = vpack.c.b16 %v3149, %v3141
    %v3854 = vpack.c.b16 %v3150, %v3142
    %v3855 = vpack.c.b16 %v3151, %v3143
    %v3856 = vpack.c.b16 %v3152, %v3144
    %v3857 = vpack.c.b16 %v3161, %v3153
    %v3858 = vpack.c.b16 %v3162, %v3154
    %v3859 = vpack.c.b16 %v3163, %v3155
    %v3860 = vpack.c.b16 %v3164, %v3156
    %v3861 = vpack.c.b16 %v3165, %v3157
    %v3862 = vpack.c.b16 %v3166, %v3158
    %v3863 = vpack.c.b16 %v3167, %v3159
    %v3864 = vpack.c.b16 %v3168, %v3160
    %v3865 = vpack.c.b16 %v3177, %v3169
    %v3866 = vpack.c.b16 %v3178, %v3170
    %v3867 = vpack.c.b16 %v3179, %v3171
    %v3868 = vpack.c.b16 %v3180, %v3172
    %v3869 = vpack.c.b16 %v3181, %v3173
    %v3870 = vpack.c.b16 %v3182, %v3174
    %v3871 = vpack.c.b16 %v3183, %v3175
    %v3872 = vpack.c.b16 %v3184, %v3176
    %v3873 = vpack.c.b16 %v3193, %v3185
    %v3874 = vpack.c.b16 %v3194, %v3186
    %v3875 = vpack.c.b16 %v3195, %v3187
    %v3876 = vpack.c.b16 %v3196, %v3188
    %v3877 = vpack.c.b16 %v3197, %v3189
    %v3878 = vpack.c.b16 %v3198, %v3190
    %v3879 = vpack.c.b16 %v3199, %v3191
    %v3880 = vpack.c.b16 %v3200, %v3192
    %v3881 = vpack.c.b16 %v3209, %v3201
    %v3882 = vpack.c.b16 %v3210, %v3202
    %v3883 = vpack.c.b16 %v3211, %v3203
    %v3884 = vpack.c.b16 %v3212, %v3204
    %v3885 = vpack.c.b16 %v3213, %v3205
    %v3886 = vpack.c.b16 %v3214, %v3206
    %v3887 = vpack.c.b16 %v3215, %v3207
    %v3888 = vpack.c.b16 %v3216, %v3208
    %v3889 = vpack.c.b16 %v3225, %v3217
    %v3890 = vpack.c.b16 %v3226, %v3218
    %v3891 = vpack.c.b16 %v3227, %v3219
    %v3892 = vpack.c.b16 %v3228, %v3220
    %v3893 = vpack.c.b16 %v3229, %v3221
    %v3894 = vpack.c.b16 %v3230, %v3222
    %v3895 = vpack.c.b16 %v3231, %v3223
    %v3896 = vpack.c.b16 %v3232, %v3224
    %v3897 = vpack.c.b16 %v3241, %v3233
    %v3898 = vpack.c.b16 %v3242, %v3234
    %v3899 = vpack.c.b16 %v3243, %v3235
    %v3900 = vpack.c.b16 %v3244, %v3236
    %v3901 = vpack.c.b16 %v3245, %v3237
    %v3902 = vpack.c.b16 %v3246, %v3238
    %v3903 = vpack.c.b16 %v3247, %v3239
    %v3904 = vpack.c.b16 %v3248, %v3240
    %v3905 = vpack.c.b16 %v3257, %v3249
    %v3906 = vpack.c.b16 %v3258, %v3250
    %v3907 = vpack.c.b16 %v3259, %v3251
    %v3908 = vpack.c.b16 %v3260, %v3252
    %v3909 = vpack.c.b16 %v3261, %v3253
    %v3910 = vpack.c.b16 %v3262, %v3254
    %v3911 = vpack.c.b16 %v3263, %v3255
    %v3912 = vpack.c.b16 %v3264, %v3256
    %v3913 = vpack.c.b16 %v3273, %v3265
    %v3914 = vpack.c.b16 %v3274, %v3266
    %v3915 = vpack.c.b16 %v3275, %v3267
    %v3916 = vpack.c.b16 %v3276, %v3268
    %v3917 = vpack.c.b16 %v3277, %v3269
    %v3918 = vpack.c.b16 %v3278, %v3270
    %v3919 = vpack.c.b16 %v3279, %v3271
    %v3920 = vpack.c.b16 %v3280, %v3272
    %v3921 = vpack.c.b16 %v3289, %v3281
    %v3922 = vpack.c.b16 %v3290, %v3282
    %v3923 = vpack.c.b16 %v3291, %v3283
    %v3924 = vpack.c.b16 %v3292, %v3284
    %v3925 = vpack.c.b16 %v3293, %v3285
    %v3926 = vpack.c.b16 %v3294, %v3286
    %v3927 = vpack.c.b16 %v3295, %v3287
    %v3928 = vpack.c.b16 %v3296, %v3288
    %v3929 = vpack.c.b16 %v3305, %v3297
    %v3930 = vpack.c.b16 %v3306, %v3298
    %v3931 = vpack.c.b16 %v3307, %v3299
    %v3932 = vpack.c.b16 %v3308, %v3300
    %v3933 = vpack.c.b16 %v3309, %v3301
    %v3934 = vpack.c.b16 %v3310, %v3302
    %v3935 = vpack.c.b16 %v3311, %v3303
    %v3936 = vpack.c.b16 %v3312, %v3304
    %v3937 = vpack.c.b16 %v3321, %v3313
    %v3938 = vpack.c.b16 %v3322, %v3314
    %v3939 = vpack.c.b16 %v3323, %v3315
    %v3940 = vpack.c.b16 %v3324, %v3316
    %v3941 = vpack.c.b16 %v3325, %v3317
    %v3942 = vpack.c.b16 %v3326, %v3318
    %v3943 = vpack.c.b16 %v3327, %v3319
    %v3944 = vpack.c.b16 %v3328, %v3320
    %v3945 = vpack.c.b16 %v3337, %v3329
    %v3946 = vpack.c.b16 %v3338, %v3330
    %v3947 = vpack.c.b16 %v3339, %v3331
    %v3948 = vpack.c.b16 %v3340, %v3332
    %v3949 = vpack.c.b16 %v3341, %v3333
    %v3950 = vpack.c.b16 %v3342, %v3334
    %v3951 = vpack.c.b16 %v3343, %v3335
    %v3952 = vpack.c.b16 %v3344, %v3336
    %v3953 = vpack.c.b16 %v3353, %v3345
    %v3954 = vpack.c.b16 %v3354, %v3346
    %v3955 = vpack.c.b16 %v3355, %v3347
    %v3956 = vpack.c.b16 %v3356, %v3348
    %v3957 = vpack.c.b16 %v3357, %v3349
    %v3958 = vpack.c.b16 %v3358, %v3350
    %v3959 = vpack.c.b16 %v3359, %v3351
    %v3960 = vpack.c.b16 %v3360, %v3352
    %v3961 = vpack.c.b16 %v3369, %v3361
    %v3962 = vpack.c.b16 %v3370, %v3362
    %v3963 = vpack.c.b16 %v3371, %v3363
    %v3964 = vpack.c.b16 %v3372, %v3364
    %v3965 = vpack.c.b16 %v3373, %v3365
    %v3966 = vpack.c.b16 %v3374, %v3366
    %v3967 = vpack.c.b16 %v3375, %v3367
    %v3968 = vpack.c.b16 %v3376, %v3368
    %v3969 = vpack.c.b16 %v3385, %v3377
    %v3970 = vpack.c.b16 %v3386, %v3378
    %v3971 = vpack.c.b16 %v3387, %v3379
    %v3972 = vpack.c.b16 %v3388, %v3380
    %v3973 = vpack.c.b16 %v3389, %v3381
    %v3974 = vpack.c.b16 %v3390, %v3382
    %v3975 = vpack.c.b16 %v3391, %v3383
    %v3976 = vpack.c.b16 %v3392, %v3384
    %v3977 = vpack.c.b16 %v3401, %v3393
    %v3978 = vpack.c.b16 %v3402, %v3394
    %v3979 = vpack.c.b16 %v3403, %v3395
    %v3980 = vpack.c.b16 %v3404, %v3396
    %v3981 = vpack.c.b16 %v3405, %v3397
    %v3982 = vpack.c.b16 %v3406, %v3398
    %v3983 = vpack.c.b16 %v3407, %v3399
    %v3984 = vpack.c.b16 %v3408, %v3400
    %v3985 = vpack.c.b16 %v3417, %v3409
    %v3986 = vpack.c.b16 %v3418, %v3410
    %v3987 = vpack.c.b16 %v3419, %v3411
    %v3988 = vpack.c.b16 %v3420, %v3412
    %v3989 = vpack.c.b16 %v3421, %v3413
    %v3990 = vpack.c.b16 %v3422, %v3414
    %v3991 = vpack.c.b16 %v3423, %v3415
    %v3992 = vpack.c.b16 %v3424, %v3416
    %v3993 = vpack.c.b16 %v3433, %v3425
    %v3994 = vpack.c.b16 %v3434, %v3426
    %v3995 = vpack.c.b16 %v3435, %v3427
    %v3996 = vpack.c.b16 %v3436, %v3428
    %v3997 = vpack.c.b16 %v3437, %v3429
    %v3998 = vpack.c.b16 %v3438, %v3430
    %v3999 = vpack.c.b16 %v3439, %v3431
    %v4000 = vpack.c.b16 %v3440, %v3432
    %v4001 = vpack.c.b16 %v3449, %v3441
    %v4002 = vpack.c.b16 %v3450, %v3442
    %v4003 = vpack.c.b16 %v3451, %v3443
    %v4004 = vpack.c.b16 %v3452, %v3444
    %v4005 = vpack.c.b16 %v3453, %v3445
    %v4006 = vpack.c.b16 %v3454, %v3446
    %v4007 = vpack.c.b16 %v3455, %v3447
    %v4008 = vpack.c.b16 %v3456, %v3448
    %v4009 = vpack.c.b16 %v3465, %v3457
    %v4010 = vpack.c.b16 %v3466, %v3458
    %v4011 = vpack.c.b16 %v3467, %v3459
    %v4012 = vpack.c.b16 %v3468, %v3460
    %v4013 = vpack.c.b16 %v3469, %v3461
    %v4014 = vpack.c.b16 %v3470, %v3462
    %v4015 = vpack.c.b16 %v3471, %v3463
    %v4016 = vpack.c.b16 %v3472, %v3464
    %v4017 = vpack.c.b16 %v3481, %v3473
    %v4018 = vpack.c.b16 %v3482, %v3474
    %v4019 = vpack.c.b16 %v3483, %v3475
    %v4020 = vpack.c.b16 %v3484, %v3476
    %v4021 = vpack.c.b16 %v3485, %v3477
    %v4022 = vpack.c.b16 %v3486, %v3478
    %v4023 = vpack.c.b16 %v3487, %v3479
    %v4024 = vpack.c.b16 %v3488, %v3480
    %v4025 = vpack.c.b16 %v3497, %v3489
    %v4026 = vpack.c.b16 %v3498, %v3490
    %v4027 = vpack.c.b16 %v3499, %v3491
    %v4028 = vpack.c.b16 %v3500, %v3492
    %v4029 = vpack.c.b16 %v3501, %v3493
    %v4030 = vpack.c.b16 %v3502, %v3494
    %v4031 = vpack.c.b16 %v3503, %v3495
    %v4032 = vpack.c.b16 %v3504, %v3496
    %v4033 = vpack.c.b16 %v3513, %v3505
    %v4034 = vpack.c.b16 %v3514, %v3506
    %v4035 = vpack.c.b16 %v3515, %v3507
    %v4036 = vpack.c.b16 %v3516, %v3508
    %v4037 = vpack.c.b16 %v3517, %v3509
    %v4038 = vpack.c.b16 %v3518, %v3510
    %v4039 = vpack.c.b16 %v3519, %v3511
    %v4040 = vpack.c.b16 %v3520, %v3512
    %v4041 = vpack.c.b16 %v3529, %v3521
    %v4042 = vpack.c.b16 %v3530, %v3522
    %v4043 = vpack.c.b16 %v3531, %v3523
    %v4044 = vpack.c.b16 %v3532, %v3524
    %v4045 = vpack.c.b16 %v3533, %v3525
    %v4046 = vpack.c.b16 %v3534, %v3526
    %v4047 = vpack.c.b16 %v3535, %v3527
    %v4048 = vpack.c.b16 %v3536, %v3528
    %4561 = vmatpush.bf16.msra.mxu0 %v3593
    %4562 = vmatpush.bf16.msra.mxu0 %v3585
    %4563 = vmatpush.bf16.msra.mxu0 %v3577
    %4564 = vmatpush.bf16.msra.mxu0 %v3569
    %4565 = vmatpush.bf16.msra.mxu0 %v3561
    %4566 = vmatpush.bf16.msra.mxu0 %v3553
    %4567 = vmatpush.bf16.msra.mxu0 %v3545
    %4568 = vmatpush.bf16.msra.mxu0 %v3537
    %4569 = vmatmul.bf16.gmra.mxu0 %v1343
    %v4570 = vpop.f32.mrf.mxu0
    %v4571 = vadd.f32 %v1985, %v4570
    %v4572 = vpop.f32.mrf.mxu0
    %v4573 = vadd.f32 %v1985, %v4572
    %4574 = vmatmul.bf16.gmra.mxu0 %v1351
    %v4575 = vpop.f32.mrf.mxu0
    %v4576 = vadd.f32 %v1985, %v4575
    %v4577 = vpop.f32.mrf.mxu0
    %v4578 = vadd.f32 %v1985, %v4577
    %4579 = vmatmul.bf16.gmra.mxu0 %v1359
    %v4580 = vpop.f32.mrf.mxu0
    %v4581 = vadd.f32 %v1985, %v4580
    %v4582 = vpop.f32.mrf.mxu0
    %v4583 = vadd.f32 %v1985, %v4582
    %4584 = vmatmul.bf16.gmra.mxu0 %v1367
    %v4585 = vpop.f32.mrf.mxu0
    %v4586 = vadd.f32 %v1985, %v4585
    %v4587 = vpop.f32.mrf.mxu0
    %v4588 = vadd.f32 %v1985, %v4587
    %4589 = vmatmul.bf16.gmra.mxu0 %v1375
    %v4590 = vpop.f32.mrf.mxu0
    %v4591 = vadd.f32 %v1985, %v4590
    %v4592 = vpop.f32.mrf.mxu0
    %v4593 = vadd.f32 %v1985, %v4592
    %4594 = vmatmul.bf16.gmra.mxu0 %v1383
    %v4595 = vpop.f32.mrf.mxu0
    %v4596 = vadd.f32 %v1985, %v4595
    %v4597 = vpop.f32.mrf.mxu0
    %v4598 = vadd.f32 %v1985, %v4597
    %4599 = vmatmul.bf16.gmra.mxu0 %v1391
    %v4600 = vpop.f32.mrf.mxu0
    %v4601 = vadd.f32 %v1985, %v4600
    %v4602 = vpop.f32.mrf.mxu0
    %v4603 = vadd.f32 %v1985, %v4602
    %4604 = vmatmul.bf16.gmra.mxu0 %v1399
    %v4605 = vpop.f32.mrf.mxu0
    %v4606 = vadd.f32 %v1985, %v4605
    %v4607 = vpop.f32.mrf.mxu0
    %v4608 = vadd.f32 %v1985, %v4607
    %4609 = vmatmul.bf16.gmra.mxu0 %v1407
    %v4610 = vpop.f32.mrf.mxu0
    %v4611 = vadd.f32 %v1985, %v4610
    %v4612 = vpop.f32.mrf.mxu0
    %v4613 = vadd.f32 %v1985, %v4612
    %4614 = vmatmul.bf16.gmra.mxu0 %v1415
    %v4615 = vpop.f32.mrf.mxu0
    %v4616 = vadd.f32 %v1985, %v4615
    %v4617 = vpop.f32.mrf.mxu0
    %v4618 = vadd.f32 %v1985, %v4617
    %4619 = vmatmul.bf16.gmra.mxu0 %v1423
    %v4620 = vpop.f32.mrf.mxu0
    %v4621 = vadd.f32 %v1985, %v4620
    %v4622 = vpop.f32.mrf.mxu0
    %v4623 = vadd.f32 %v1985, %v4622
    %4624 = vmatmul.bf16.gmra.mxu0 %v1431
    %v4625 = vpop.f32.mrf.mxu0
    %v4626 = vadd.f32 %v1985, %v4625
    %v4627 = vpop.f32.mrf.mxu0
    %v4628 = vadd.f32 %v1985, %v4627
    %4629 = vmatmul.bf16.gmra.mxu0 %v1439
    %v4630 = vpop.f32.mrf.mxu0
    %v4631 = vadd.f32 %v1985, %v4630
    %v4632 = vpop.f32.mrf.mxu0
    %v4633 = vadd.f32 %v1985, %v4632
    %4634 = vmatmul.bf16.gmra.mxu0 %v1447
    %v4635 = vpop.f32.mrf.mxu0
    %v4636 = vadd.f32 %v1985, %v4635
    %v4637 = vpop.f32.mrf.mxu0
    %v4638 = vadd.f32 %v1985, %v4637
    %4639 = vmatmul.bf16.gmra.mxu0 %v1455
    %v4640 = vpop.f32.mrf.mxu0
    %v4641 = vadd.f32 %v1985, %v4640
    %v4642 = vpop.f32.mrf.mxu0
    %v4643 = vadd.f32 %v1985, %v4642
    %4644 = vmatmul.bf16.gmra.mxu0 %v1463
    %v4645 = vpop.f32.mrf.mxu0
    %v4646 = vadd.f32 %v1985, %v4645
    %v4647 = vpop.f32.mrf.mxu0
    %v4648 = vadd.f32 %v1985, %v4647
    %4649 = vdwg.mxu0
    %4650 = vmatpush.bf16.msra.mxu0 %v3657
    %4651 = vmatpush.bf16.msra.mxu0 %v3649
    %4652 = vmatpush.bf16.msra.mxu0 %v3641
    %4653 = vmatpush.bf16.msra.mxu0 %v3633
    %4654 = vmatpush.bf16.msra.mxu0 %v3625
    %4655 = vmatpush.bf16.msra.mxu0 %v3617
    %4656 = vmatpush.bf16.msra.mxu0 %v3609
    %4657 = vmatpush.bf16.msra.mxu0 %v3601
    %4658 = vmatmul.bf16.gmra.mxu0 %v1344
    %v4659 = vpop.f32.mrf.mxu0
    %v4660 = vadd.f32 %v4571, %v4659
    %v4661 = vpop.f32.mrf.mxu0
    %v4662 = vadd.f32 %v4573, %v4661
    %4663 = vmatmul.bf16.gmra.mxu0 %v1352
    %v4664 = vpop.f32.mrf.mxu0
    %v4665 = vadd.f32 %v4576, %v4664
    %v4666 = vpop.f32.mrf.mxu0
    %v4667 = vadd.f32 %v4578, %v4666
    %4668 = vmatmul.bf16.gmra.mxu0 %v1360
    %v4669 = vpop.f32.mrf.mxu0
    %v4670 = vadd.f32 %v4581, %v4669
    %v4671 = vpop.f32.mrf.mxu0
    %v4672 = vadd.f32 %v4583, %v4671
    %4673 = vmatmul.bf16.gmra.mxu0 %v1368
    %v4674 = vpop.f32.mrf.mxu0
    %v4675 = vadd.f32 %v4586, %v4674
    %v4676 = vpop.f32.mrf.mxu0
    %v4677 = vadd.f32 %v4588, %v4676
    %4678 = vmatmul.bf16.gmra.mxu0 %v1376
    %v4679 = vpop.f32.mrf.mxu0
    %v4680 = vadd.f32 %v4591, %v4679
    %v4681 = vpop.f32.mrf.mxu0
    %v4682 = vadd.f32 %v4593, %v4681
    %4683 = vmatmul.bf16.gmra.mxu0 %v1384
    %v4684 = vpop.f32.mrf.mxu0
    %v4685 = vadd.f32 %v4596, %v4684
    %v4686 = vpop.f32.mrf.mxu0
    %v4687 = vadd.f32 %v4598, %v4686
    %4688 = vmatmul.bf16.gmra.mxu0 %v1392
    %v4689 = vpop.f32.mrf.mxu0
    %v4690 = vadd.f32 %v4601, %v4689
    %v4691 = vpop.f32.mrf.mxu0
    %v4692 = vadd.f32 %v4603, %v4691
    %4693 = vmatmul.bf16.gmra.mxu0 %v1400
    %v4694 = vpop.f32.mrf.mxu0
    %v4695 = vadd.f32 %v4606, %v4694
    %v4696 = vpop.f32.mrf.mxu0
    %v4697 = vadd.f32 %v4608, %v4696
    %4698 = vmatmul.bf16.gmra.mxu0 %v1408
    %v4699 = vpop.f32.mrf.mxu0
    %v4700 = vadd.f32 %v4611, %v4699
    %v4701 = vpop.f32.mrf.mxu0
    %v4702 = vadd.f32 %v4613, %v4701
    %4703 = vmatmul.bf16.gmra.mxu0 %v1416
    %v4704 = vpop.f32.mrf.mxu0
    %v4705 = vadd.f32 %v4616, %v4704
    %v4706 = vpop.f32.mrf.mxu0
    %v4707 = vadd.f32 %v4618, %v4706
    %4708 = vmatmul.bf16.gmra.mxu0 %v1424
    %v4709 = vpop.f32.mrf.mxu0
    %v4710 = vadd.f32 %v4621, %v4709
    %v4711 = vpop.f32.mrf.mxu0
    %v4712 = vadd.f32 %v4623, %v4711
    %4713 = vmatmul.bf16.gmra.mxu0 %v1432
    %v4714 = vpop.f32.mrf.mxu0
    %v4715 = vadd.f32 %v4626, %v4714
    %v4716 = vpop.f32.mrf.mxu0
    %v4717 = vadd.f32 %v4628, %v4716
    %4718 = vmatmul.bf16.gmra.mxu0 %v1440
    %v4719 = vpop.f32.mrf.mxu0
    %v4720 = vadd.f32 %v4631, %v4719
    %v4721 = vpop.f32.mrf.mxu0
    %v4722 = vadd.f32 %v4633, %v4721
    %4723 = vmatmul.bf16.gmra.mxu0 %v1448
    %v4724 = vpop.f32.mrf.mxu0
    %v4725 = vadd.f32 %v4636, %v4724
    %v4726 = vpop.f32.mrf.mxu0
    %v4727 = vadd.f32 %v4638, %v4726
    %4728 = vmatmul.bf16.gmra.mxu0 %v1456
    %v4729 = vpop.f32.mrf.mxu0
    %v4730 = vadd.f32 %v4641, %v4729
    %v4731 = vpop.f32.mrf.mxu0
    %v4732 = vadd.f32 %v4643, %v4731
    %4733 = vmatmul.bf16.gmra.mxu0 %v1464
    %v4734 = vpop.f32.mrf.mxu0
    %v4735 = vadd.f32 %v4646, %v4734
    %v4736 = vpop.f32.mrf.mxu0
    %v4737 = vadd.f32 %v4648, %v4736
    %4738 = vdwg.mxu0
    %4739 = vmatpush.bf16.msra.mxu0 %v3721
    %4740 = vmatpush.bf16.msra.mxu0 %v3713
    %4741 = vmatpush.bf16.msra.mxu0 %v3705
    %4742 = vmatpush.bf16.msra.mxu0 %v3697
    %4743 = vmatpush.bf16.msra.mxu0 %v3689
    %4744 = vmatpush.bf16.msra.mxu0 %v3681
    %4745 = vmatpush.bf16.msra.mxu0 %v3673
    %4746 = vmatpush.bf16.msra.mxu0 %v3665
    %4747 = vmatmul.bf16.gmra.mxu0 %v1345
    %v4748 = vpop.f32.mrf.mxu0
    %v4749 = vadd.f32 %v4660, %v4748
    %v4750 = vpop.f32.mrf.mxu0
    %v4751 = vadd.f32 %v4662, %v4750
    %4752 = vmatmul.bf16.gmra.mxu0 %v1353
    %v4753 = vpop.f32.mrf.mxu0
    %v4754 = vadd.f32 %v4665, %v4753
    %v4755 = vpop.f32.mrf.mxu0
    %v4756 = vadd.f32 %v4667, %v4755
    %4757 = vmatmul.bf16.gmra.mxu0 %v1361
    %v4758 = vpop.f32.mrf.mxu0
    %v4759 = vadd.f32 %v4670, %v4758
    %v4760 = vpop.f32.mrf.mxu0
    %v4761 = vadd.f32 %v4672, %v4760
    %4762 = vmatmul.bf16.gmra.mxu0 %v1369
    %v4763 = vpop.f32.mrf.mxu0
    %v4764 = vadd.f32 %v4675, %v4763
    %v4765 = vpop.f32.mrf.mxu0
    %v4766 = vadd.f32 %v4677, %v4765
    %4767 = vmatmul.bf16.gmra.mxu0 %v1377
    %v4768 = vpop.f32.mrf.mxu0
    %v4769 = vadd.f32 %v4680, %v4768
    %v4770 = vpop.f32.mrf.mxu0
    %v4771 = vadd.f32 %v4682, %v4770
    %4772 = vmatmul.bf16.gmra.mxu0 %v1385
    %v4773 = vpop.f32.mrf.mxu0
    %v4774 = vadd.f32 %v4685, %v4773
    %v4775 = vpop.f32.mrf.mxu0
    %v4776 = vadd.f32 %v4687, %v4775
    %4777 = vmatmul.bf16.gmra.mxu0 %v1393
    %v4778 = vpop.f32.mrf.mxu0
    %v4779 = vadd.f32 %v4690, %v4778
    %v4780 = vpop.f32.mrf.mxu0
    %v4781 = vadd.f32 %v4692, %v4780
    %4782 = vmatmul.bf16.gmra.mxu0 %v1401
    %v4783 = vpop.f32.mrf.mxu0
    %v4784 = vadd.f32 %v4695, %v4783
    %v4785 = vpop.f32.mrf.mxu0
    %v4786 = vadd.f32 %v4697, %v4785
    %4787 = vmatmul.bf16.gmra.mxu0 %v1409
    %v4788 = vpop.f32.mrf.mxu0
    %v4789 = vadd.f32 %v4700, %v4788
    %v4790 = vpop.f32.mrf.mxu0
    %v4791 = vadd.f32 %v4702, %v4790
    %4792 = vmatmul.bf16.gmra.mxu0 %v1417
    %v4793 = vpop.f32.mrf.mxu0
    %v4794 = vadd.f32 %v4705, %v4793
    %v4795 = vpop.f32.mrf.mxu0
    %v4796 = vadd.f32 %v4707, %v4795
    %4797 = vmatmul.bf16.gmra.mxu0 %v1425
    %v4798 = vpop.f32.mrf.mxu0
    %v4799 = vadd.f32 %v4710, %v4798
    %v4800 = vpop.f32.mrf.mxu0
    %v4801 = vadd.f32 %v4712, %v4800
    %4802 = vmatmul.bf16.gmra.mxu0 %v1433
    %v4803 = vpop.f32.mrf.mxu0
    %v4804 = vadd.f32 %v4715, %v4803
    %v4805 = vpop.f32.mrf.mxu0
    %v4806 = vadd.f32 %v4717, %v4805
    %4807 = vmatmul.bf16.gmra.mxu0 %v1441
    %v4808 = vpop.f32.mrf.mxu0
    %v4809 = vadd.f32 %v4720, %v4808
    %v4810 = vpop.f32.mrf.mxu0
    %v4811 = vadd.f32 %v4722, %v4810
    %4812 = vmatmul.bf16.gmra.mxu0 %v1449
    %v4813 = vpop.f32.mrf.mxu0
    %v4814 = vadd.f32 %v4725, %v4813
    %v4815 = vpop.f32.mrf.mxu0
    %v4816 = vadd.f32 %v4727, %v4815
    %4817 = vmatmul.bf16.gmra.mxu0 %v1457
    %v4818 = vpop.f32.mrf.mxu0
    %v4819 = vadd.f32 %v4730, %v4818
    %v4820 = vpop.f32.mrf.mxu0
    %v4821 = vadd.f32 %v4732, %v4820
    %4822 = vmatmul.bf16.gmra.mxu0 %v1465
    %v4823 = vpop.f32.mrf.mxu0
    %v4824 = vadd.f32 %v4735, %v4823
    %v4825 = vpop.f32.mrf.mxu0
    %v4826 = vadd.f32 %v4737, %v4825
    %4827 = vdwg.mxu0
    %4828 = vmatpush.bf16.msra.mxu0 %v3785
    %4829 = vmatpush.bf16.msra.mxu0 %v3777
    %4830 = vmatpush.bf16.msra.mxu0 %v3769
    %4831 = vmatpush.bf16.msra.mxu0 %v3761
    %4832 = vmatpush.bf16.msra.mxu0 %v3753
    %4833 = vmatpush.bf16.msra.mxu0 %v3745
    %4834 = vmatpush.bf16.msra.mxu0 %v3737
    %4835 = vmatpush.bf16.msra.mxu0 %v3729
    %4836 = vmatmul.bf16.gmra.mxu0 %v1346
    %v4837 = vpop.f32.mrf.mxu0
    %v4838 = vadd.f32 %v4749, %v4837
    %v4839 = vpop.f32.mrf.mxu0
    %v4840 = vadd.f32 %v4751, %v4839
    %4841 = vmatmul.bf16.gmra.mxu0 %v1354
    %v4842 = vpop.f32.mrf.mxu0
    %v4843 = vadd.f32 %v4754, %v4842
    %v4844 = vpop.f32.mrf.mxu0
    %v4845 = vadd.f32 %v4756, %v4844
    %4846 = vmatmul.bf16.gmra.mxu0 %v1362
    %v4847 = vpop.f32.mrf.mxu0
    %v4848 = vadd.f32 %v4759, %v4847
    %v4849 = vpop.f32.mrf.mxu0
    %v4850 = vadd.f32 %v4761, %v4849
    %4851 = vmatmul.bf16.gmra.mxu0 %v1370
    %v4852 = vpop.f32.mrf.mxu0
    %v4853 = vadd.f32 %v4764, %v4852
    %v4854 = vpop.f32.mrf.mxu0
    %v4855 = vadd.f32 %v4766, %v4854
    %4856 = vmatmul.bf16.gmra.mxu0 %v1378
    %v4857 = vpop.f32.mrf.mxu0
    %v4858 = vadd.f32 %v4769, %v4857
    %v4859 = vpop.f32.mrf.mxu0
    %v4860 = vadd.f32 %v4771, %v4859
    %4861 = vmatmul.bf16.gmra.mxu0 %v1386
    %v4862 = vpop.f32.mrf.mxu0
    %v4863 = vadd.f32 %v4774, %v4862
    %v4864 = vpop.f32.mrf.mxu0
    %v4865 = vadd.f32 %v4776, %v4864
    %4866 = vmatmul.bf16.gmra.mxu0 %v1394
    %v4867 = vpop.f32.mrf.mxu0
    %v4868 = vadd.f32 %v4779, %v4867
    %v4869 = vpop.f32.mrf.mxu0
    %v4870 = vadd.f32 %v4781, %v4869
    %4871 = vmatmul.bf16.gmra.mxu0 %v1402
    %v4872 = vpop.f32.mrf.mxu0
    %v4873 = vadd.f32 %v4784, %v4872
    %v4874 = vpop.f32.mrf.mxu0
    %v4875 = vadd.f32 %v4786, %v4874
    %4876 = vmatmul.bf16.gmra.mxu0 %v1410
    %v4877 = vpop.f32.mrf.mxu0
    %v4878 = vadd.f32 %v4789, %v4877
    %v4879 = vpop.f32.mrf.mxu0
    %v4880 = vadd.f32 %v4791, %v4879
    %4881 = vmatmul.bf16.gmra.mxu0 %v1418
    %v4882 = vpop.f32.mrf.mxu0
    %v4883 = vadd.f32 %v4794, %v4882
    %v4884 = vpop.f32.mrf.mxu0
    %v4885 = vadd.f32 %v4796, %v4884
    %4886 = vmatmul.bf16.gmra.mxu0 %v1426
    %v4887 = vpop.f32.mrf.mxu0
    %v4888 = vadd.f32 %v4799, %v4887
    %v4889 = vpop.f32.mrf.mxu0
    %v4890 = vadd.f32 %v4801, %v4889
    %4891 = vmatmul.bf16.gmra.mxu0 %v1434
    %v4892 = vpop.f32.mrf.mxu0
    %v4893 = vadd.f32 %v4804, %v4892
    %v4894 = vpop.f32.mrf.mxu0
    %v4895 = vadd.f32 %v4806, %v4894
    %4896 = vmatmul.bf16.gmra.mxu0 %v1442
    %v4897 = vpop.f32.mrf.mxu0
    %v4898 = vadd.f32 %v4809, %v4897
    %v4899 = vpop.f32.mrf.mxu0
    %v4900 = vadd.f32 %v4811, %v4899
    %4901 = vmatmul.bf16.gmra.mxu0 %v1450
    %v4902 = vpop.f32.mrf.mxu0
    %v4903 = vadd.f32 %v4814, %v4902
    %v4904 = vpop.f32.mrf.mxu0
    %v4905 = vadd.f32 %v4816, %v4904
    %4906 = vmatmul.bf16.gmra.mxu0 %v1458
    %v4907 = vpop.f32.mrf.mxu0
    %v4908 = vadd.f32 %v4819, %v4907
    %v4909 = vpop.f32.mrf.mxu0
    %v4910 = vadd.f32 %v4821, %v4909
    %4911 = vmatmul.bf16.gmra.mxu0 %v1466
    %v4912 = vpop.f32.mrf.mxu0
    %v4913 = vadd.f32 %v4824, %v4912
    %v4914 = vpop.f32.mrf.mxu0
    %v4915 = vadd.f32 %v4826, %v4914
    %4916 = vdwg.mxu0
    %4917 = vmatpush.bf16.msra.mxu0 %v3849
    %4918 = vmatpush.bf16.msra.mxu0 %v3841
    %4919 = vmatpush.bf16.msra.mxu0 %v3833
    %4920 = vmatpush.bf16.msra.mxu0 %v3825
    %4921 = vmatpush.bf16.msra.mxu0 %v3817
    %4922 = vmatpush.bf16.msra.mxu0 %v3809
    %4923 = vmatpush.bf16.msra.mxu0 %v3801
    %4924 = vmatpush.bf16.msra.mxu0 %v3793
    %4925 = vmatmul.bf16.gmra.mxu0 %v1347
    %v4926 = vpop.f32.mrf.mxu0
    %v4927 = vadd.f32 %v4838, %v4926
    %v4928 = vpop.f32.mrf.mxu0
    %v4929 = vadd.f32 %v4840, %v4928
    %4930 = vmatmul.bf16.gmra.mxu0 %v1355
    %v4931 = vpop.f32.mrf.mxu0
    %v4932 = vadd.f32 %v4843, %v4931
    %v4933 = vpop.f32.mrf.mxu0
    %v4934 = vadd.f32 %v4845, %v4933
    %4935 = vmatmul.bf16.gmra.mxu0 %v1363
    %v4936 = vpop.f32.mrf.mxu0
    %v4937 = vadd.f32 %v4848, %v4936
    %v4938 = vpop.f32.mrf.mxu0
    %v4939 = vadd.f32 %v4850, %v4938
    %4940 = vmatmul.bf16.gmra.mxu0 %v1371
    %v4941 = vpop.f32.mrf.mxu0
    %v4942 = vadd.f32 %v4853, %v4941
    %v4943 = vpop.f32.mrf.mxu0
    %v4944 = vadd.f32 %v4855, %v4943
    %4945 = vmatmul.bf16.gmra.mxu0 %v1379
    %v4946 = vpop.f32.mrf.mxu0
    %v4947 = vadd.f32 %v4858, %v4946
    %v4948 = vpop.f32.mrf.mxu0
    %v4949 = vadd.f32 %v4860, %v4948
    %4950 = vmatmul.bf16.gmra.mxu0 %v1387
    %v4951 = vpop.f32.mrf.mxu0
    %v4952 = vadd.f32 %v4863, %v4951
    %v4953 = vpop.f32.mrf.mxu0
    %v4954 = vadd.f32 %v4865, %v4953
    %4955 = vmatmul.bf16.gmra.mxu0 %v1395
    %v4956 = vpop.f32.mrf.mxu0
    %v4957 = vadd.f32 %v4868, %v4956
    %v4958 = vpop.f32.mrf.mxu0
    %v4959 = vadd.f32 %v4870, %v4958
    %4960 = vmatmul.bf16.gmra.mxu0 %v1403
    %v4961 = vpop.f32.mrf.mxu0
    %v4962 = vadd.f32 %v4873, %v4961
    %v4963 = vpop.f32.mrf.mxu0
    %v4964 = vadd.f32 %v4875, %v4963
    %4965 = vmatmul.bf16.gmra.mxu0 %v1411
    %v4966 = vpop.f32.mrf.mxu0
    %v4967 = vadd.f32 %v4878, %v4966
    %v4968 = vpop.f32.mrf.mxu0
    %v4969 = vadd.f32 %v4880, %v4968
    %4970 = vmatmul.bf16.gmra.mxu0 %v1419
    %v4971 = vpop.f32.mrf.mxu0
    %v4972 = vadd.f32 %v4883, %v4971
    %v4973 = vpop.f32.mrf.mxu0
    %v4974 = vadd.f32 %v4885, %v4973
    %4975 = vmatmul.bf16.gmra.mxu0 %v1427
    %v4976 = vpop.f32.mrf.mxu0
    %v4977 = vadd.f32 %v4888, %v4976
    %v4978 = vpop.f32.mrf.mxu0
    %v4979 = vadd.f32 %v4890, %v4978
    %4980 = vmatmul.bf16.gmra.mxu0 %v1435
    %v4981 = vpop.f32.mrf.mxu0
    %v4982 = vadd.f32 %v4893, %v4981
    %v4983 = vpop.f32.mrf.mxu0
    %v4984 = vadd.f32 %v4895, %v4983
    %4985 = vmatmul.bf16.gmra.mxu0 %v1443
    %v4986 = vpop.f32.mrf.mxu0
    %v4987 = vadd.f32 %v4898, %v4986
    %v4988 = vpop.f32.mrf.mxu0
    %v4989 = vadd.f32 %v4900, %v4988
    %4990 = vmatmul.bf16.gmra.mxu0 %v1451
    %v4991 = vpop.f32.mrf.mxu0
    %v4992 = vadd.f32 %v4903, %v4991
    %v4993 = vpop.f32.mrf.mxu0
    %v4994 = vadd.f32 %v4905, %v4993
    %4995 = vmatmul.bf16.gmra.mxu0 %v1459
    %v4996 = vpop.f32.mrf.mxu0
    %v4997 = vadd.f32 %v4908, %v4996
    %v4998 = vpop.f32.mrf.mxu0
    %v4999 = vadd.f32 %v4910, %v4998
    %5000 = vmatmul.bf16.gmra.mxu0 %v1467
    %v5001 = vpop.f32.mrf.mxu0
    %v5002 = vadd.f32 %v4913, %v5001
    %v5003 = vpop.f32.mrf.mxu0
    %v5004 = vadd.f32 %v4915, %v5003
    %5005 = vdwg.mxu0
    %5006 = vmatpush.bf16.msra.mxu0 %v3913
    %5007 = vmatpush.bf16.msra.mxu0 %v3905
    %5008 = vmatpush.bf16.msra.mxu0 %v3897
    %5009 = vmatpush.bf16.msra.mxu0 %v3889
    %5010 = vmatpush.bf16.msra.mxu0 %v3881
    %5011 = vmatpush.bf16.msra.mxu0 %v3873
    %5012 = vmatpush.bf16.msra.mxu0 %v3865
    %5013 = vmatpush.bf16.msra.mxu0 %v3857
    %5014 = vmatmul.bf16.gmra.mxu0 %v1348
    %v5015 = vpop.f32.mrf.mxu0
    %v5016 = vadd.f32 %v4927, %v5015
    %v5017 = vpop.f32.mrf.mxu0
    %v5018 = vadd.f32 %v4929, %v5017
    %5019 = vmatmul.bf16.gmra.mxu0 %v1356
    %v5020 = vpop.f32.mrf.mxu0
    %v5021 = vadd.f32 %v4932, %v5020
    %v5022 = vpop.f32.mrf.mxu0
    %v5023 = vadd.f32 %v4934, %v5022
    %5024 = vmatmul.bf16.gmra.mxu0 %v1364
    %v5025 = vpop.f32.mrf.mxu0
    %v5026 = vadd.f32 %v4937, %v5025
    %v5027 = vpop.f32.mrf.mxu0
    %v5028 = vadd.f32 %v4939, %v5027
    %5029 = vmatmul.bf16.gmra.mxu0 %v1372
    %v5030 = vpop.f32.mrf.mxu0
    %v5031 = vadd.f32 %v4942, %v5030
    %v5032 = vpop.f32.mrf.mxu0
    %v5033 = vadd.f32 %v4944, %v5032
    %5034 = vmatmul.bf16.gmra.mxu0 %v1380
    %v5035 = vpop.f32.mrf.mxu0
    %v5036 = vadd.f32 %v4947, %v5035
    %v5037 = vpop.f32.mrf.mxu0
    %v5038 = vadd.f32 %v4949, %v5037
    %5039 = vmatmul.bf16.gmra.mxu0 %v1388
    %v5040 = vpop.f32.mrf.mxu0
    %v5041 = vadd.f32 %v4952, %v5040
    %v5042 = vpop.f32.mrf.mxu0
    %v5043 = vadd.f32 %v4954, %v5042
    %5044 = vmatmul.bf16.gmra.mxu0 %v1396
    %v5045 = vpop.f32.mrf.mxu0
    %v5046 = vadd.f32 %v4957, %v5045
    %v5047 = vpop.f32.mrf.mxu0
    %v5048 = vadd.f32 %v4959, %v5047
    %5049 = vmatmul.bf16.gmra.mxu0 %v1404
    %v5050 = vpop.f32.mrf.mxu0
    %v5051 = vadd.f32 %v4962, %v5050
    %v5052 = vpop.f32.mrf.mxu0
    %v5053 = vadd.f32 %v4964, %v5052
    %5054 = vmatmul.bf16.gmra.mxu0 %v1412
    %v5055 = vpop.f32.mrf.mxu0
    %v5056 = vadd.f32 %v4967, %v5055
    %v5057 = vpop.f32.mrf.mxu0
    %v5058 = vadd.f32 %v4969, %v5057
    %5059 = vmatmul.bf16.gmra.mxu0 %v1420
    %v5060 = vpop.f32.mrf.mxu0
    %v5061 = vadd.f32 %v4972, %v5060
    %v5062 = vpop.f32.mrf.mxu0
    %v5063 = vadd.f32 %v4974, %v5062
    %5064 = vmatmul.bf16.gmra.mxu0 %v1428
    %v5065 = vpop.f32.mrf.mxu0
    %v5066 = vadd.f32 %v4977, %v5065
    %v5067 = vpop.f32.mrf.mxu0
    %v5068 = vadd.f32 %v4979, %v5067
    %5069 = vmatmul.bf16.gmra.mxu0 %v1436
    %v5070 = vpop.f32.mrf.mxu0
    %v5071 = vadd.f32 %v4982, %v5070
    %v5072 = vpop.f32.mrf.mxu0
    %v5073 = vadd.f32 %v4984, %v5072
    %5074 = vmatmul.bf16.gmra.mxu0 %v1444
    %v5075 = vpop.f32.mrf.mxu0
    %v5076 = vadd.f32 %v4987, %v5075
    %v5077 = vpop.f32.mrf.mxu0
    %v5078 = vadd.f32 %v4989, %v5077
    %5079 = vmatmul.bf16.gmra.mxu0 %v1452
    %v5080 = vpop.f32.mrf.mxu0
    %v5081 = vadd.f32 %v4992, %v5080
    %v5082 = vpop.f32.mrf.mxu0
    %v5083 = vadd.f32 %v4994, %v5082
    %5084 = vmatmul.bf16.gmra.mxu0 %v1460
    %v5085 = vpop.f32.mrf.mxu0
    %v5086 = vadd.f32 %v4997, %v5085
    %v5087 = vpop.f32.mrf.mxu0
    %v5088 = vadd.f32 %v4999, %v5087
    %5089 = vmatmul.bf16.gmra.mxu0 %v1468
    %v5090 = vpop.f32.mrf.mxu0
    %v5091 = vadd.f32 %v5002, %v5090
    %v5092 = vpop.f32.mrf.mxu0
    %v5093 = vadd.f32 %v5004, %v5092
    %5094 = vdwg.mxu0
    %5095 = vmatpush.bf16.msra.mxu0 %v3977
    %5096 = vmatpush.bf16.msra.mxu0 %v3969
    %5097 = vmatpush.bf16.msra.mxu0 %v3961
    %5098 = vmatpush.bf16.msra.mxu0 %v3953
    %5099 = vmatpush.bf16.msra.mxu0 %v3945
    %5100 = vmatpush.bf16.msra.mxu0 %v3937
    %5101 = vmatpush.bf16.msra.mxu0 %v3929
    %5102 = vmatpush.bf16.msra.mxu0 %v3921
    %5103 = vmatmul.bf16.gmra.mxu0 %v1349
    %v5104 = vpop.f32.mrf.mxu0
    %v5105 = vadd.f32 %v5016, %v5104
    %v5106 = vpop.f32.mrf.mxu0
    %v5107 = vadd.f32 %v5018, %v5106
    %5108 = vmatmul.bf16.gmra.mxu0 %v1357
    %v5109 = vpop.f32.mrf.mxu0
    %v5110 = vadd.f32 %v5021, %v5109
    %v5111 = vpop.f32.mrf.mxu0
    %v5112 = vadd.f32 %v5023, %v5111
    %5113 = vmatmul.bf16.gmra.mxu0 %v1365
    %v5114 = vpop.f32.mrf.mxu0
    %v5115 = vadd.f32 %v5026, %v5114
    %v5116 = vpop.f32.mrf.mxu0
    %v5117 = vadd.f32 %v5028, %v5116
    %5118 = vmatmul.bf16.gmra.mxu0 %v1373
    %v5119 = vpop.f32.mrf.mxu0
    %v5120 = vadd.f32 %v5031, %v5119
    %v5121 = vpop.f32.mrf.mxu0
    %v5122 = vadd.f32 %v5033, %v5121
    %5123 = vmatmul.bf16.gmra.mxu0 %v1381
    %v5124 = vpop.f32.mrf.mxu0
    %v5125 = vadd.f32 %v5036, %v5124
    %v5126 = vpop.f32.mrf.mxu0
    %v5127 = vadd.f32 %v5038, %v5126
    %5128 = vmatmul.bf16.gmra.mxu0 %v1389
    %v5129 = vpop.f32.mrf.mxu0
    %v5130 = vadd.f32 %v5041, %v5129
    %v5131 = vpop.f32.mrf.mxu0
    %v5132 = vadd.f32 %v5043, %v5131
    %5133 = vmatmul.bf16.gmra.mxu0 %v1397
    %v5134 = vpop.f32.mrf.mxu0
    %v5135 = vadd.f32 %v5046, %v5134
    %v5136 = vpop.f32.mrf.mxu0
    %v5137 = vadd.f32 %v5048, %v5136
    %5138 = vmatmul.bf16.gmra.mxu0 %v1405
    %v5139 = vpop.f32.mrf.mxu0
    %v5140 = vadd.f32 %v5051, %v5139
    %v5141 = vpop.f32.mrf.mxu0
    %v5142 = vadd.f32 %v5053, %v5141
    %5143 = vmatmul.bf16.gmra.mxu0 %v1413
    %v5144 = vpop.f32.mrf.mxu0
    %v5145 = vadd.f32 %v5056, %v5144
    %v5146 = vpop.f32.mrf.mxu0
    %v5147 = vadd.f32 %v5058, %v5146
    %5148 = vmatmul.bf16.gmra.mxu0 %v1421
    %v5149 = vpop.f32.mrf.mxu0
    %v5150 = vadd.f32 %v5061, %v5149
    %v5151 = vpop.f32.mrf.mxu0
    %v5152 = vadd.f32 %v5063, %v5151
    %5153 = vmatmul.bf16.gmra.mxu0 %v1429
    %v5154 = vpop.f32.mrf.mxu0
    %v5155 = vadd.f32 %v5066, %v5154
    %v5156 = vpop.f32.mrf.mxu0
    %v5157 = vadd.f32 %v5068, %v5156
    %5158 = vmatmul.bf16.gmra.mxu0 %v1437
    %v5159 = vpop.f32.mrf.mxu0
    %v5160 = vadd.f32 %v5071, %v5159
    %v5161 = vpop.f32.mrf.mxu0
    %v5162 = vadd.f32 %v5073, %v5161
    %5163 = vmatmul.bf16.gmra.mxu0 %v1445
    %v5164 = vpop.f32.mrf.mxu0
    %v5165 = vadd.f32 %v5076, %v5164
    %v5166 = vpop.f32.mrf.mxu0
    %v5167 = vadd.f32 %v5078, %v5166
    %5168 = vmatmul.bf16.gmra.mxu0 %v1453
    %v5169 = vpop.f32.mrf.mxu0
    %v5170 = vadd.f32 %v5081, %v5169
    %v5171 = vpop.f32.mrf.mxu0
    %v5172 = vadd.f32 %v5083, %v5171
    %5173 = vmatmul.bf16.gmra.mxu0 %v1461
    %v5174 = vpop.f32.mrf.mxu0
    %v5175 = vadd.f32 %v5086, %v5174
    %v5176 = vpop.f32.mrf.mxu0
    %v5177 = vadd.f32 %v5088, %v5176
    %5178 = vmatmul.bf16.gmra.mxu0 %v1469
    %v5179 = vpop.f32.mrf.mxu0
    %v5180 = vadd.f32 %v5091, %v5179
    %v5181 = vpop.f32.mrf.mxu0
    %v5182 = vadd.f32 %v5093, %v5181
    %5183 = vdwg.mxu0
    %5184 = vmatpush.bf16.msra.mxu0 %v4041
    %5185 = vmatpush.bf16.msra.mxu0 %v4033
    %5186 = vmatpush.bf16.msra.mxu0 %v4025
    %5187 = vmatpush.bf16.msra.mxu0 %v4017
    %5188 = vmatpush.bf16.msra.mxu0 %v4009
    %5189 = vmatpush.bf16.msra.mxu0 %v4001
    %5190 = vmatpush.bf16.msra.mxu0 %v3993
    %5191 = vmatpush.bf16.msra.mxu0 %v3985
    %5192 = vmatmul.bf16.gmra.mxu0 %v1350
    %v5193 = vpop.f32.mrf.mxu0
    %v5194 = vadd.f32 %v5105, %v5193
    %v5195 = vpop.f32.mrf.mxu0
    %v5196 = vadd.f32 %v5107, %v5195
    %5197 = vmatmul.bf16.gmra.mxu0 %v1358
    %v5198 = vpop.f32.mrf.mxu0
    %v5199 = vadd.f32 %v5110, %v5198
    %v5200 = vpop.f32.mrf.mxu0
    %v5201 = vadd.f32 %v5112, %v5200
    %5202 = vmatmul.bf16.gmra.mxu0 %v1366
    %v5203 = vpop.f32.mrf.mxu0
    %v5204 = vadd.f32 %v5115, %v5203
    %v5205 = vpop.f32.mrf.mxu0
    %v5206 = vadd.f32 %v5117, %v5205
    %5207 = vmatmul.bf16.gmra.mxu0 %v1374
    %v5208 = vpop.f32.mrf.mxu0
    %v5209 = vadd.f32 %v5120, %v5208
    %v5210 = vpop.f32.mrf.mxu0
    %v5211 = vadd.f32 %v5122, %v5210
    %5212 = vmatmul.bf16.gmra.mxu0 %v1382
    %v5213 = vpop.f32.mrf.mxu0
    %v5214 = vadd.f32 %v5125, %v5213
    %v5215 = vpop.f32.mrf.mxu0
    %v5216 = vadd.f32 %v5127, %v5215
    %5217 = vmatmul.bf16.gmra.mxu0 %v1390
    %v5218 = vpop.f32.mrf.mxu0
    %v5219 = vadd.f32 %v5130, %v5218
    %v5220 = vpop.f32.mrf.mxu0
    %v5221 = vadd.f32 %v5132, %v5220
    %5222 = vmatmul.bf16.gmra.mxu0 %v1398
    %v5223 = vpop.f32.mrf.mxu0
    %v5224 = vadd.f32 %v5135, %v5223
    %v5225 = vpop.f32.mrf.mxu0
    %v5226 = vadd.f32 %v5137, %v5225
    %5227 = vmatmul.bf16.gmra.mxu0 %v1406
    %v5228 = vpop.f32.mrf.mxu0
    %v5229 = vadd.f32 %v5140, %v5228
    %v5230 = vpop.f32.mrf.mxu0
    %v5231 = vadd.f32 %v5142, %v5230
    %5232 = vmatmul.bf16.gmra.mxu0 %v1414
    %v5233 = vpop.f32.mrf.mxu0
    %v5234 = vadd.f32 %v5145, %v5233
    %v5235 = vpop.f32.mrf.mxu0
    %v5236 = vadd.f32 %v5147, %v5235
    %5237 = vmatmul.bf16.gmra.mxu0 %v1422
    %v5238 = vpop.f32.mrf.mxu0
    %v5239 = vadd.f32 %v5150, %v5238
    %v5240 = vpop.f32.mrf.mxu0
    %v5241 = vadd.f32 %v5152, %v5240
    %5242 = vmatmul.bf16.gmra.mxu0 %v1430
    %v5243 = vpop.f32.mrf.mxu0
    %v5244 = vadd.f32 %v5155, %v5243
    %v5245 = vpop.f32.mrf.mxu0
    %v5246 = vadd.f32 %v5157, %v5245
    %5247 = vmatmul.bf16.gmra.mxu0 %v1438
    %v5248 = vpop.f32.mrf.mxu0
    %v5249 = vadd.f32 %v5160, %v5248
    %v5250 = vpop.f32.mrf.mxu0
    %v5251 = vadd.f32 %v5162, %v5250
    %5252 = vmatmul.bf16.gmra.mxu0 %v1446
    %v5253 = vpop.f32.mrf.mxu0
    %v5254 = vadd.f32 %v5165, %v5253
    %v5255 = vpop.f32.mrf.mxu0
    %v5256 = vadd.f32 %v5167, %v5255
    %5257 = vmatmul.bf16.gmra.mxu0 %v1454
    %v5258 = vpop.f32.mrf.mxu0
    %v5259 = vadd.f32 %v5170, %v5258
    %v5260 = vpop.f32.mrf.mxu0
    %v5261 = vadd.f32 %v5172, %v5260
    %5262 = vmatmul.bf16.gmra.mxu0 %v1462
    %v5263 = vpop.f32.mrf.mxu0
    %v5264 = vadd.f32 %v5175, %v5263
    %v5265 = vpop.f32.mrf.mxu0
    %v5266 = vadd.f32 %v5177, %v5265
    %5267 = vmatmul.bf16.gmra.mxu0 %v1470
    %v5268 = vpop.f32.mrf.mxu0
    %v5269 = vadd.f32 %v5180, %v5268
    %v5270 = vpop.f32.mrf.mxu0
    %v5271 = vadd.f32 %v5182, %v5270
    %5272 = vdwg.mxu0
    %5273 = vmatpush.bf16.msra.mxu0 %v3594
    %5274 = vmatpush.bf16.msra.mxu0 %v3586
    %5275 = vmatpush.bf16.msra.mxu0 %v3578
    %5276 = vmatpush.bf16.msra.mxu0 %v3570
    %5277 = vmatpush.bf16.msra.mxu0 %v3562
    %5278 = vmatpush.bf16.msra.mxu0 %v3554
    %5279 = vmatpush.bf16.msra.mxu0 %v3546
    %5280 = vmatpush.bf16.msra.mxu0 %v3538
    %5281 = vmatmul.bf16.gmra.mxu0 %v1343
    %v5282 = vpop.f32.mrf.mxu0
    %v5283 = vadd.f32 %v1986, %v5282
    %v5284 = vpop.f32.mrf.mxu0
    %v5285 = vadd.f32 %v1986, %v5284
    %5286 = vmatmul.bf16.gmra.mxu0 %v1351
    %v5287 = vpop.f32.mrf.mxu0
    %v5288 = vadd.f32 %v1986, %v5287
    %v5289 = vpop.f32.mrf.mxu0
    %v5290 = vadd.f32 %v1986, %v5289
    %5291 = vmatmul.bf16.gmra.mxu0 %v1359
    %v5292 = vpop.f32.mrf.mxu0
    %v5293 = vadd.f32 %v1986, %v5292
    %v5294 = vpop.f32.mrf.mxu0
    %v5295 = vadd.f32 %v1986, %v5294
    %5296 = vmatmul.bf16.gmra.mxu0 %v1367
    %v5297 = vpop.f32.mrf.mxu0
    %v5298 = vadd.f32 %v1986, %v5297
    %v5299 = vpop.f32.mrf.mxu0
    %v5300 = vadd.f32 %v1986, %v5299
    %5301 = vmatmul.bf16.gmra.mxu0 %v1375
    %v5302 = vpop.f32.mrf.mxu0
    %v5303 = vadd.f32 %v1986, %v5302
    %v5304 = vpop.f32.mrf.mxu0
    %v5305 = vadd.f32 %v1986, %v5304
    %5306 = vmatmul.bf16.gmra.mxu0 %v1383
    %v5307 = vpop.f32.mrf.mxu0
    %v5308 = vadd.f32 %v1986, %v5307
    %v5309 = vpop.f32.mrf.mxu0
    %v5310 = vadd.f32 %v1986, %v5309
    %5311 = vmatmul.bf16.gmra.mxu0 %v1391
    %v5312 = vpop.f32.mrf.mxu0
    %v5313 = vadd.f32 %v1986, %v5312
    %v5314 = vpop.f32.mrf.mxu0
    %v5315 = vadd.f32 %v1986, %v5314
    %5316 = vmatmul.bf16.gmra.mxu0 %v1399
    %v5317 = vpop.f32.mrf.mxu0
    %v5318 = vadd.f32 %v1986, %v5317
    %v5319 = vpop.f32.mrf.mxu0
    %v5320 = vadd.f32 %v1986, %v5319
    %5321 = vmatmul.bf16.gmra.mxu0 %v1407
    %v5322 = vpop.f32.mrf.mxu0
    %v5323 = vadd.f32 %v1986, %v5322
    %v5324 = vpop.f32.mrf.mxu0
    %v5325 = vadd.f32 %v1986, %v5324
    %5326 = vmatmul.bf16.gmra.mxu0 %v1415
    %v5327 = vpop.f32.mrf.mxu0
    %v5328 = vadd.f32 %v1986, %v5327
    %v5329 = vpop.f32.mrf.mxu0
    %v5330 = vadd.f32 %v1986, %v5329
    %5331 = vmatmul.bf16.gmra.mxu0 %v1423
    %v5332 = vpop.f32.mrf.mxu0
    %v5333 = vadd.f32 %v1986, %v5332
    %v5334 = vpop.f32.mrf.mxu0
    %v5335 = vadd.f32 %v1986, %v5334
    %5336 = vmatmul.bf16.gmra.mxu0 %v1431
    %v5337 = vpop.f32.mrf.mxu0
    %v5338 = vadd.f32 %v1986, %v5337
    %v5339 = vpop.f32.mrf.mxu0
    %v5340 = vadd.f32 %v1986, %v5339
    %5341 = vmatmul.bf16.gmra.mxu0 %v1439
    %v5342 = vpop.f32.mrf.mxu0
    %v5343 = vadd.f32 %v1986, %v5342
    %v5344 = vpop.f32.mrf.mxu0
    %v5345 = vadd.f32 %v1986, %v5344
    %5346 = vmatmul.bf16.gmra.mxu0 %v1447
    %v5347 = vpop.f32.mrf.mxu0
    %v5348 = vadd.f32 %v1986, %v5347
    %v5349 = vpop.f32.mrf.mxu0
    %v5350 = vadd.f32 %v1986, %v5349
    %5351 = vmatmul.bf16.gmra.mxu0 %v1455
    %v5352 = vpop.f32.mrf.mxu0
    %v5353 = vadd.f32 %v1986, %v5352
    %v5354 = vpop.f32.mrf.mxu0
    %v5355 = vadd.f32 %v1986, %v5354
    %5356 = vmatmul.bf16.gmra.mxu0 %v1463
    %v5357 = vpop.f32.mrf.mxu0
    %v5358 = vadd.f32 %v1986, %v5357
    %v5359 = vpop.f32.mrf.mxu0
    %v5360 = vadd.f32 %v1986, %v5359
    %5361 = vdwg.mxu0
    %5362 = vmatpush.bf16.msra.mxu0 %v3658
    %5363 = vmatpush.bf16.msra.mxu0 %v3650
    %5364 = vmatpush.bf16.msra.mxu0 %v3642
    %5365 = vmatpush.bf16.msra.mxu0 %v3634
    %5366 = vmatpush.bf16.msra.mxu0 %v3626
    %5367 = vmatpush.bf16.msra.mxu0 %v3618
    %5368 = vmatpush.bf16.msra.mxu0 %v3610
    %5369 = vmatpush.bf16.msra.mxu0 %v3602
    %5370 = vmatmul.bf16.gmra.mxu0 %v1344
    %v5371 = vpop.f32.mrf.mxu0
    %v5372 = vadd.f32 %v5283, %v5371
    %v5373 = vpop.f32.mrf.mxu0
    %v5374 = vadd.f32 %v5285, %v5373
    %5375 = vmatmul.bf16.gmra.mxu0 %v1352
    %v5376 = vpop.f32.mrf.mxu0
    %v5377 = vadd.f32 %v5288, %v5376
    %v5378 = vpop.f32.mrf.mxu0
    %v5379 = vadd.f32 %v5290, %v5378
    %5380 = vmatmul.bf16.gmra.mxu0 %v1360
    %v5381 = vpop.f32.mrf.mxu0
    %v5382 = vadd.f32 %v5293, %v5381
    %v5383 = vpop.f32.mrf.mxu0
    %v5384 = vadd.f32 %v5295, %v5383
    %5385 = vmatmul.bf16.gmra.mxu0 %v1368
    %v5386 = vpop.f32.mrf.mxu0
    %v5387 = vadd.f32 %v5298, %v5386
    %v5388 = vpop.f32.mrf.mxu0
    %v5389 = vadd.f32 %v5300, %v5388
    %5390 = vmatmul.bf16.gmra.mxu0 %v1376
    %v5391 = vpop.f32.mrf.mxu0
    %v5392 = vadd.f32 %v5303, %v5391
    %v5393 = vpop.f32.mrf.mxu0
    %v5394 = vadd.f32 %v5305, %v5393
    %5395 = vmatmul.bf16.gmra.mxu0 %v1384
    %v5396 = vpop.f32.mrf.mxu0
    %v5397 = vadd.f32 %v5308, %v5396
    %v5398 = vpop.f32.mrf.mxu0
    %v5399 = vadd.f32 %v5310, %v5398
    %5400 = vmatmul.bf16.gmra.mxu0 %v1392
    %v5401 = vpop.f32.mrf.mxu0
    %v5402 = vadd.f32 %v5313, %v5401
    %v5403 = vpop.f32.mrf.mxu0
    %v5404 = vadd.f32 %v5315, %v5403
    %5405 = vmatmul.bf16.gmra.mxu0 %v1400
    %v5406 = vpop.f32.mrf.mxu0
    %v5407 = vadd.f32 %v5318, %v5406
    %v5408 = vpop.f32.mrf.mxu0
    %v5409 = vadd.f32 %v5320, %v5408
    %5410 = vmatmul.bf16.gmra.mxu0 %v1408
    %v5411 = vpop.f32.mrf.mxu0
    %v5412 = vadd.f32 %v5323, %v5411
    %v5413 = vpop.f32.mrf.mxu0
    %v5414 = vadd.f32 %v5325, %v5413
    %5415 = vmatmul.bf16.gmra.mxu0 %v1416
    %v5416 = vpop.f32.mrf.mxu0
    %v5417 = vadd.f32 %v5328, %v5416
    %v5418 = vpop.f32.mrf.mxu0
    %v5419 = vadd.f32 %v5330, %v5418
    %5420 = vmatmul.bf16.gmra.mxu0 %v1424
    %v5421 = vpop.f32.mrf.mxu0
    %v5422 = vadd.f32 %v5333, %v5421
    %v5423 = vpop.f32.mrf.mxu0
    %v5424 = vadd.f32 %v5335, %v5423
    %5425 = vmatmul.bf16.gmra.mxu0 %v1432
    %v5426 = vpop.f32.mrf.mxu0
    %v5427 = vadd.f32 %v5338, %v5426
    %v5428 = vpop.f32.mrf.mxu0
    %v5429 = vadd.f32 %v5340, %v5428
    %5430 = vmatmul.bf16.gmra.mxu0 %v1440
    %v5431 = vpop.f32.mrf.mxu0
    %v5432 = vadd.f32 %v5343, %v5431
    %v5433 = vpop.f32.mrf.mxu0
    %v5434 = vadd.f32 %v5345, %v5433
    %5435 = vmatmul.bf16.gmra.mxu0 %v1448
    %v5436 = vpop.f32.mrf.mxu0
    %v5437 = vadd.f32 %v5348, %v5436
    %v5438 = vpop.f32.mrf.mxu0
    %v5439 = vadd.f32 %v5350, %v5438
    %5440 = vmatmul.bf16.gmra.mxu0 %v1456
    %v5441 = vpop.f32.mrf.mxu0
    %v5442 = vadd.f32 %v5353, %v5441
    %v5443 = vpop.f32.mrf.mxu0
    %v5444 = vadd.f32 %v5355, %v5443
    %5445 = vmatmul.bf16.gmra.mxu0 %v1464
    %v5446 = vpop.f32.mrf.mxu0
    %v5447 = vadd.f32 %v5358, %v5446
    %v5448 = vpop.f32.mrf.mxu0
    %v5449 = vadd.f32 %v5360, %v5448
    %5450 = vdwg.mxu0
    %5451 = vmatpush.bf16.msra.mxu0 %v3722
    %5452 = vmatpush.bf16.msra.mxu0 %v3714
    %5453 = vmatpush.bf16.msra.mxu0 %v3706
    %5454 = vmatpush.bf16.msra.mxu0 %v3698
    %5455 = vmatpush.bf16.msra.mxu0 %v3690
    %5456 = vmatpush.bf16.msra.mxu0 %v3682
    %5457 = vmatpush.bf16.msra.mxu0 %v3674
    %5458 = vmatpush.bf16.msra.mxu0 %v3666
    %5459 = vmatmul.bf16.gmra.mxu0 %v1345
    %v5460 = vpop.f32.mrf.mxu0
    %v5461 = vadd.f32 %v5372, %v5460
    %v5462 = vpop.f32.mrf.mxu0
    %v5463 = vadd.f32 %v5374, %v5462
    %5464 = vmatmul.bf16.gmra.mxu0 %v1353
    %v5465 = vpop.f32.mrf.mxu0
    %v5466 = vadd.f32 %v5377, %v5465
    %v5467 = vpop.f32.mrf.mxu0
    %v5468 = vadd.f32 %v5379, %v5467
    %5469 = vmatmul.bf16.gmra.mxu0 %v1361
    %v5470 = vpop.f32.mrf.mxu0
    %v5471 = vadd.f32 %v5382, %v5470
    %v5472 = vpop.f32.mrf.mxu0
    %v5473 = vadd.f32 %v5384, %v5472
    %5474 = vmatmul.bf16.gmra.mxu0 %v1369
    %v5475 = vpop.f32.mrf.mxu0
    %v5476 = vadd.f32 %v5387, %v5475
    %v5477 = vpop.f32.mrf.mxu0
    %v5478 = vadd.f32 %v5389, %v5477
    %5479 = vmatmul.bf16.gmra.mxu0 %v1377
    %v5480 = vpop.f32.mrf.mxu0
    %v5481 = vadd.f32 %v5392, %v5480
    %v5482 = vpop.f32.mrf.mxu0
    %v5483 = vadd.f32 %v5394, %v5482
    %5484 = vmatmul.bf16.gmra.mxu0 %v1385
    %v5485 = vpop.f32.mrf.mxu0
    %v5486 = vadd.f32 %v5397, %v5485
    %v5487 = vpop.f32.mrf.mxu0
    %v5488 = vadd.f32 %v5399, %v5487
    %5489 = vmatmul.bf16.gmra.mxu0 %v1393
    %v5490 = vpop.f32.mrf.mxu0
    %v5491 = vadd.f32 %v5402, %v5490
    %v5492 = vpop.f32.mrf.mxu0
    %v5493 = vadd.f32 %v5404, %v5492
    %5494 = vmatmul.bf16.gmra.mxu0 %v1401
    %v5495 = vpop.f32.mrf.mxu0
    %v5496 = vadd.f32 %v5407, %v5495
    %v5497 = vpop.f32.mrf.mxu0
    %v5498 = vadd.f32 %v5409, %v5497
    %5499 = vmatmul.bf16.gmra.mxu0 %v1409
    %v5500 = vpop.f32.mrf.mxu0
    %v5501 = vadd.f32 %v5412, %v5500
    %v5502 = vpop.f32.mrf.mxu0
    %v5503 = vadd.f32 %v5414, %v5502
    %5504 = vmatmul.bf16.gmra.mxu0 %v1417
    %v5505 = vpop.f32.mrf.mxu0
    %v5506 = vadd.f32 %v5417, %v5505
    %v5507 = vpop.f32.mrf.mxu0
    %v5508 = vadd.f32 %v5419, %v5507
    %5509 = vmatmul.bf16.gmra.mxu0 %v1425
    %v5510 = vpop.f32.mrf.mxu0
    %v5511 = vadd.f32 %v5422, %v5510
    %v5512 = vpop.f32.mrf.mxu0
    %v5513 = vadd.f32 %v5424, %v5512
    %5514 = vmatmul.bf16.gmra.mxu0 %v1433
    %v5515 = vpop.f32.mrf.mxu0
    %v5516 = vadd.f32 %v5427, %v5515
    %v5517 = vpop.f32.mrf.mxu0
    %v5518 = vadd.f32 %v5429, %v5517
    %5519 = vmatmul.bf16.gmra.mxu0 %v1441
    %v5520 = vpop.f32.mrf.mxu0
    %v5521 = vadd.f32 %v5432, %v5520
    %v5522 = vpop.f32.mrf.mxu0
    %v5523 = vadd.f32 %v5434, %v5522
    %5524 = vmatmul.bf16.gmra.mxu0 %v1449
    %v5525 = vpop.f32.mrf.mxu0
    %v5526 = vadd.f32 %v5437, %v5525
    %v5527 = vpop.f32.mrf.mxu0
    %v5528 = vadd.f32 %v5439, %v5527
    %5529 = vmatmul.bf16.gmra.mxu0 %v1457
    %v5530 = vpop.f32.mrf.mxu0
    %v5531 = vadd.f32 %v5442, %v5530
    %v5532 = vpop.f32.mrf.mxu0
    %v5533 = vadd.f32 %v5444, %v5532
    %5534 = vmatmul.bf16.gmra.mxu0 %v1465
    %v5535 = vpop.f32.mrf.mxu0
    %v5536 = vadd.f32 %v5447, %v5535
    %v5537 = vpop.f32.mrf.mxu0
    %v5538 = vadd.f32 %v5449, %v5537
    %5539 = vdwg.mxu0
    %5540 = vmatpush.bf16.msra.mxu0 %v3786
    %5541 = vmatpush.bf16.msra.mxu0 %v3778
    %5542 = vmatpush.bf16.msra.mxu0 %v3770
    %5543 = vmatpush.bf16.msra.mxu0 %v3762
    %5544 = vmatpush.bf16.msra.mxu0 %v3754
    %5545 = vmatpush.bf16.msra.mxu0 %v3746
    %5546 = vmatpush.bf16.msra.mxu0 %v3738
    %5547 = vmatpush.bf16.msra.mxu0 %v3730
    %5548 = vmatmul.bf16.gmra.mxu0 %v1346
    %v5549 = vpop.f32.mrf.mxu0
    %v5550 = vadd.f32 %v5461, %v5549
    %v5551 = vpop.f32.mrf.mxu0
    %v5552 = vadd.f32 %v5463, %v5551
    %5553 = vmatmul.bf16.gmra.mxu0 %v1354
    %v5554 = vpop.f32.mrf.mxu0
    %v5555 = vadd.f32 %v5466, %v5554
    %v5556 = vpop.f32.mrf.mxu0
    %v5557 = vadd.f32 %v5468, %v5556
    %5558 = vmatmul.bf16.gmra.mxu0 %v1362
    %v5559 = vpop.f32.mrf.mxu0
    %v5560 = vadd.f32 %v5471, %v5559
    %v5561 = vpop.f32.mrf.mxu0
    %v5562 = vadd.f32 %v5473, %v5561
    %5563 = vmatmul.bf16.gmra.mxu0 %v1370
    %v5564 = vpop.f32.mrf.mxu0
    %v5565 = vadd.f32 %v5476, %v5564
    %v5566 = vpop.f32.mrf.mxu0
    %v5567 = vadd.f32 %v5478, %v5566
    %5568 = vmatmul.bf16.gmra.mxu0 %v1378
    %v5569 = vpop.f32.mrf.mxu0
    %v5570 = vadd.f32 %v5481, %v5569
    %v5571 = vpop.f32.mrf.mxu0
    %v5572 = vadd.f32 %v5483, %v5571
    %5573 = vmatmul.bf16.gmra.mxu0 %v1386
    %v5574 = vpop.f32.mrf.mxu0
    %v5575 = vadd.f32 %v5486, %v5574
    %v5576 = vpop.f32.mrf.mxu0
    %v5577 = vadd.f32 %v5488, %v5576
    %5578 = vmatmul.bf16.gmra.mxu0 %v1394
    %v5579 = vpop.f32.mrf.mxu0
    %v5580 = vadd.f32 %v5491, %v5579
    %v5581 = vpop.f32.mrf.mxu0
    %v5582 = vadd.f32 %v5493, %v5581
    %5583 = vmatmul.bf16.gmra.mxu0 %v1402
    %v5584 = vpop.f32.mrf.mxu0
    %v5585 = vadd.f32 %v5496, %v5584
    %v5586 = vpop.f32.mrf.mxu0
    %v5587 = vadd.f32 %v5498, %v5586
    %5588 = vmatmul.bf16.gmra.mxu0 %v1410
    %v5589 = vpop.f32.mrf.mxu0
    %v5590 = vadd.f32 %v5501, %v5589
    %v5591 = vpop.f32.mrf.mxu0
    %v5592 = vadd.f32 %v5503, %v5591
    %5593 = vmatmul.bf16.gmra.mxu0 %v1418
    %v5594 = vpop.f32.mrf.mxu0
    %v5595 = vadd.f32 %v5506, %v5594
    %v5596 = vpop.f32.mrf.mxu0
    %v5597 = vadd.f32 %v5508, %v5596
    %5598 = vmatmul.bf16.gmra.mxu0 %v1426
    %v5599 = vpop.f32.mrf.mxu0
    %v5600 = vadd.f32 %v5511, %v5599
    %v5601 = vpop.f32.mrf.mxu0
    %v5602 = vadd.f32 %v5513, %v5601
    %5603 = vmatmul.bf16.gmra.mxu0 %v1434
    %v5604 = vpop.f32.mrf.mxu0
    %v5605 = vadd.f32 %v5516, %v5604
    %v5606 = vpop.f32.mrf.mxu0
    %v5607 = vadd.f32 %v5518, %v5606
    %5608 = vmatmul.bf16.gmra.mxu0 %v1442
    %v5609 = vpop.f32.mrf.mxu0
    %v5610 = vadd.f32 %v5521, %v5609
    %v5611 = vpop.f32.mrf.mxu0
    %v5612 = vadd.f32 %v5523, %v5611
    %5613 = vmatmul.bf16.gmra.mxu0 %v1450
    %v5614 = vpop.f32.mrf.mxu0
    %v5615 = vadd.f32 %v5526, %v5614
    %v5616 = vpop.f32.mrf.mxu0
    %v5617 = vadd.f32 %v5528, %v5616
    %5618 = vmatmul.bf16.gmra.mxu0 %v1458
    %v5619 = vpop.f32.mrf.mxu0
    %v5620 = vadd.f32 %v5531, %v5619
    %v5621 = vpop.f32.mrf.mxu0
    %v5622 = vadd.f32 %v5533, %v5621
    %5623 = vmatmul.bf16.gmra.mxu0 %v1466
    %v5624 = vpop.f32.mrf.mxu0
    %v5625 = vadd.f32 %v5536, %v5624
    %v5626 = vpop.f32.mrf.mxu0
    %v5627 = vadd.f32 %v5538, %v5626
    %5628 = vdwg.mxu0
    %5629 = vmatpush.bf16.msra.mxu0 %v3850
    %5630 = vmatpush.bf16.msra.mxu0 %v3842
    %5631 = vmatpush.bf16.msra.mxu0 %v3834
    %5632 = vmatpush.bf16.msra.mxu0 %v3826
    %5633 = vmatpush.bf16.msra.mxu0 %v3818
    %5634 = vmatpush.bf16.msra.mxu0 %v3810
    %5635 = vmatpush.bf16.msra.mxu0 %v3802
    %5636 = vmatpush.bf16.msra.mxu0 %v3794
    %5637 = vmatmul.bf16.gmra.mxu0 %v1347
    %v5638 = vpop.f32.mrf.mxu0
    %v5639 = vadd.f32 %v5550, %v5638
    %v5640 = vpop.f32.mrf.mxu0
    %v5641 = vadd.f32 %v5552, %v5640
    %5642 = vmatmul.bf16.gmra.mxu0 %v1355
    %v5643 = vpop.f32.mrf.mxu0
    %v5644 = vadd.f32 %v5555, %v5643
    %v5645 = vpop.f32.mrf.mxu0
    %v5646 = vadd.f32 %v5557, %v5645
    %5647 = vmatmul.bf16.gmra.mxu0 %v1363
    %v5648 = vpop.f32.mrf.mxu0
    %v5649 = vadd.f32 %v5560, %v5648
    %v5650 = vpop.f32.mrf.mxu0
    %v5651 = vadd.f32 %v5562, %v5650
    %5652 = vmatmul.bf16.gmra.mxu0 %v1371
    %v5653 = vpop.f32.mrf.mxu0
    %v5654 = vadd.f32 %v5565, %v5653
    %v5655 = vpop.f32.mrf.mxu0
    %v5656 = vadd.f32 %v5567, %v5655
    %5657 = vmatmul.bf16.gmra.mxu0 %v1379
    %v5658 = vpop.f32.mrf.mxu0
    %v5659 = vadd.f32 %v5570, %v5658
    %v5660 = vpop.f32.mrf.mxu0
    %v5661 = vadd.f32 %v5572, %v5660
    %5662 = vmatmul.bf16.gmra.mxu0 %v1387
    %v5663 = vpop.f32.mrf.mxu0
    %v5664 = vadd.f32 %v5575, %v5663
    %v5665 = vpop.f32.mrf.mxu0
    %v5666 = vadd.f32 %v5577, %v5665
    %5667 = vmatmul.bf16.gmra.mxu0 %v1395
    %v5668 = vpop.f32.mrf.mxu0
    %v5669 = vadd.f32 %v5580, %v5668
    %v5670 = vpop.f32.mrf.mxu0
    %v5671 = vadd.f32 %v5582, %v5670
    %5672 = vmatmul.bf16.gmra.mxu0 %v1403
    %v5673 = vpop.f32.mrf.mxu0
    %v5674 = vadd.f32 %v5585, %v5673
    %v5675 = vpop.f32.mrf.mxu0
    %v5676 = vadd.f32 %v5587, %v5675
    %5677 = vmatmul.bf16.gmra.mxu0 %v1411
    %v5678 = vpop.f32.mrf.mxu0
    %v5679 = vadd.f32 %v5590, %v5678
    %v5680 = vpop.f32.mrf.mxu0
    %v5681 = vadd.f32 %v5592, %v5680
    %5682 = vmatmul.bf16.gmra.mxu0 %v1419
    %v5683 = vpop.f32.mrf.mxu0
    %v5684 = vadd.f32 %v5595, %v5683
    %v5685 = vpop.f32.mrf.mxu0
    %v5686 = vadd.f32 %v5597, %v5685
    %5687 = vmatmul.bf16.gmra.mxu0 %v1427
    %v5688 = vpop.f32.mrf.mxu0
    %v5689 = vadd.f32 %v5600, %v5688
    %v5690 = vpop.f32.mrf.mxu0
    %v5691 = vadd.f32 %v5602, %v5690
    %5692 = vmatmul.bf16.gmra.mxu0 %v1435
    %v5693 = vpop.f32.mrf.mxu0
    %v5694 = vadd.f32 %v5605, %v5693
    %v5695 = vpop.f32.mrf.mxu0
    %v5696 = vadd.f32 %v5607, %v5695
    %5697 = vmatmul.bf16.gmra.mxu0 %v1443
    %v5698 = vpop.f32.mrf.mxu0
    %v5699 = vadd.f32 %v5610, %v5698
    %v5700 = vpop.f32.mrf.mxu0
    %v5701 = vadd.f32 %v5612, %v5700
    %5702 = vmatmul.bf16.gmra.mxu0 %v1451
    %v5703 = vpop.f32.mrf.mxu0
    %v5704 = vadd.f32 %v5615, %v5703
    %v5705 = vpop.f32.mrf.mxu0
    %v5706 = vadd.f32 %v5617, %v5705
    %5707 = vmatmul.bf16.gmra.mxu0 %v1459
    %v5708 = vpop.f32.mrf.mxu0
    %v5709 = vadd.f32 %v5620, %v5708
    %v5710 = vpop.f32.mrf.mxu0
    %v5711 = vadd.f32 %v5622, %v5710
    %5712 = vmatmul.bf16.gmra.mxu0 %v1467
    %v5713 = vpop.f32.mrf.mxu0
    %v5714 = vadd.f32 %v5625, %v5713
    %v5715 = vpop.f32.mrf.mxu0
    %v5716 = vadd.f32 %v5627, %v5715
    %5717 = vdwg.mxu0
    %5718 = vmatpush.bf16.msra.mxu0 %v3914
    %5719 = vmatpush.bf16.msra.mxu0 %v3906
    %5720 = vmatpush.bf16.msra.mxu0 %v3898
    %5721 = vmatpush.bf16.msra.mxu0 %v3890
    %5722 = vmatpush.bf16.msra.mxu0 %v3882
    %5723 = vmatpush.bf16.msra.mxu0 %v3874
    %5724 = vmatpush.bf16.msra.mxu0 %v3866
    %5725 = vmatpush.bf16.msra.mxu0 %v3858
    %5726 = vmatmul.bf16.gmra.mxu0 %v1348
    %v5727 = vpop.f32.mrf.mxu0
    %v5728 = vadd.f32 %v5639, %v5727
    %v5729 = vpop.f32.mrf.mxu0
    %v5730 = vadd.f32 %v5641, %v5729
    %5731 = vmatmul.bf16.gmra.mxu0 %v1356
    %v5732 = vpop.f32.mrf.mxu0
    %v5733 = vadd.f32 %v5644, %v5732
    %v5734 = vpop.f32.mrf.mxu0
    %v5735 = vadd.f32 %v5646, %v5734
    %5736 = vmatmul.bf16.gmra.mxu0 %v1364
    %v5737 = vpop.f32.mrf.mxu0
    %v5738 = vadd.f32 %v5649, %v5737
    %v5739 = vpop.f32.mrf.mxu0
    %v5740 = vadd.f32 %v5651, %v5739
    %5741 = vmatmul.bf16.gmra.mxu0 %v1372
    %v5742 = vpop.f32.mrf.mxu0
    %v5743 = vadd.f32 %v5654, %v5742
    %v5744 = vpop.f32.mrf.mxu0
    %v5745 = vadd.f32 %v5656, %v5744
    %5746 = vmatmul.bf16.gmra.mxu0 %v1380
    %v5747 = vpop.f32.mrf.mxu0
    %v5748 = vadd.f32 %v5659, %v5747
    %v5749 = vpop.f32.mrf.mxu0
    %v5750 = vadd.f32 %v5661, %v5749
    %5751 = vmatmul.bf16.gmra.mxu0 %v1388
    %v5752 = vpop.f32.mrf.mxu0
    %v5753 = vadd.f32 %v5664, %v5752
    %v5754 = vpop.f32.mrf.mxu0
    %v5755 = vadd.f32 %v5666, %v5754
    %5756 = vmatmul.bf16.gmra.mxu0 %v1396
    %v5757 = vpop.f32.mrf.mxu0
    %v5758 = vadd.f32 %v5669, %v5757
    %v5759 = vpop.f32.mrf.mxu0
    %v5760 = vadd.f32 %v5671, %v5759
    %5761 = vmatmul.bf16.gmra.mxu0 %v1404
    %v5762 = vpop.f32.mrf.mxu0
    %v5763 = vadd.f32 %v5674, %v5762
    %v5764 = vpop.f32.mrf.mxu0
    %v5765 = vadd.f32 %v5676, %v5764
    %5766 = vmatmul.bf16.gmra.mxu0 %v1412
    %v5767 = vpop.f32.mrf.mxu0
    %v5768 = vadd.f32 %v5679, %v5767
    %v5769 = vpop.f32.mrf.mxu0
    %v5770 = vadd.f32 %v5681, %v5769
    %5771 = vmatmul.bf16.gmra.mxu0 %v1420
    %v5772 = vpop.f32.mrf.mxu0
    %v5773 = vadd.f32 %v5684, %v5772
    %v5774 = vpop.f32.mrf.mxu0
    %v5775 = vadd.f32 %v5686, %v5774
    %5776 = vmatmul.bf16.gmra.mxu0 %v1428
    %v5777 = vpop.f32.mrf.mxu0
    %v5778 = vadd.f32 %v5689, %v5777
    %v5779 = vpop.f32.mrf.mxu0
    %v5780 = vadd.f32 %v5691, %v5779
    %5781 = vmatmul.bf16.gmra.mxu0 %v1436
    %v5782 = vpop.f32.mrf.mxu0
    %v5783 = vadd.f32 %v5694, %v5782
    %v5784 = vpop.f32.mrf.mxu0
    %v5785 = vadd.f32 %v5696, %v5784
    %5786 = vmatmul.bf16.gmra.mxu0 %v1444
    %v5787 = vpop.f32.mrf.mxu0
    %v5788 = vadd.f32 %v5699, %v5787
    %v5789 = vpop.f32.mrf.mxu0
    %v5790 = vadd.f32 %v5701, %v5789
    %5791 = vmatmul.bf16.gmra.mxu0 %v1452
    %v5792 = vpop.f32.mrf.mxu0
    %v5793 = vadd.f32 %v5704, %v5792
    %v5794 = vpop.f32.mrf.mxu0
    %v5795 = vadd.f32 %v5706, %v5794
    %5796 = vmatmul.bf16.gmra.mxu0 %v1460
    %v5797 = vpop.f32.mrf.mxu0
    %v5798 = vadd.f32 %v5709, %v5797
    %v5799 = vpop.f32.mrf.mxu0
    %v5800 = vadd.f32 %v5711, %v5799
    %5801 = vmatmul.bf16.gmra.mxu0 %v1468
    %v5802 = vpop.f32.mrf.mxu0
    %v5803 = vadd.f32 %v5714, %v5802
    %v5804 = vpop.f32.mrf.mxu0
    %v5805 = vadd.f32 %v5716, %v5804
    %5806 = vdwg.mxu0
    %5807 = vmatpush.bf16.msra.mxu0 %v3978
    %5808 = vmatpush.bf16.msra.mxu0 %v3970
    %5809 = vmatpush.bf16.msra.mxu0 %v3962
    %5810 = vmatpush.bf16.msra.mxu0 %v3954
    %5811 = vmatpush.bf16.msra.mxu0 %v3946
    %5812 = vmatpush.bf16.msra.mxu0 %v3938
    %5813 = vmatpush.bf16.msra.mxu0 %v3930
    %5814 = vmatpush.bf16.msra.mxu0 %v3922
    %5815 = vmatmul.bf16.gmra.mxu0 %v1349
    %v5816 = vpop.f32.mrf.mxu0
    %v5817 = vadd.f32 %v5728, %v5816
    %v5818 = vpop.f32.mrf.mxu0
    %v5819 = vadd.f32 %v5730, %v5818
    %5820 = vmatmul.bf16.gmra.mxu0 %v1357
    %v5821 = vpop.f32.mrf.mxu0
    %v5822 = vadd.f32 %v5733, %v5821
    %v5823 = vpop.f32.mrf.mxu0
    %v5824 = vadd.f32 %v5735, %v5823
    %5825 = vmatmul.bf16.gmra.mxu0 %v1365
    %v5826 = vpop.f32.mrf.mxu0
    %v5827 = vadd.f32 %v5738, %v5826
    %v5828 = vpop.f32.mrf.mxu0
    %v5829 = vadd.f32 %v5740, %v5828
    %5830 = vmatmul.bf16.gmra.mxu0 %v1373
    %v5831 = vpop.f32.mrf.mxu0
    %v5832 = vadd.f32 %v5743, %v5831
    %v5833 = vpop.f32.mrf.mxu0
    %v5834 = vadd.f32 %v5745, %v5833
    %5835 = vmatmul.bf16.gmra.mxu0 %v1381
    %v5836 = vpop.f32.mrf.mxu0
    %v5837 = vadd.f32 %v5748, %v5836
    %v5838 = vpop.f32.mrf.mxu0
    %v5839 = vadd.f32 %v5750, %v5838
    %5840 = vmatmul.bf16.gmra.mxu0 %v1389
    %v5841 = vpop.f32.mrf.mxu0
    %v5842 = vadd.f32 %v5753, %v5841
    %v5843 = vpop.f32.mrf.mxu0
    %v5844 = vadd.f32 %v5755, %v5843
    %5845 = vmatmul.bf16.gmra.mxu0 %v1397
    %v5846 = vpop.f32.mrf.mxu0
    %v5847 = vadd.f32 %v5758, %v5846
    %v5848 = vpop.f32.mrf.mxu0
    %v5849 = vadd.f32 %v5760, %v5848
    %5850 = vmatmul.bf16.gmra.mxu0 %v1405
    %v5851 = vpop.f32.mrf.mxu0
    %v5852 = vadd.f32 %v5763, %v5851
    %v5853 = vpop.f32.mrf.mxu0
    %v5854 = vadd.f32 %v5765, %v5853
    %5855 = vmatmul.bf16.gmra.mxu0 %v1413
    %v5856 = vpop.f32.mrf.mxu0
    %v5857 = vadd.f32 %v5768, %v5856
    %v5858 = vpop.f32.mrf.mxu0
    %v5859 = vadd.f32 %v5770, %v5858
    %5860 = vmatmul.bf16.gmra.mxu0 %v1421
    %v5861 = vpop.f32.mrf.mxu0
    %v5862 = vadd.f32 %v5773, %v5861
    %v5863 = vpop.f32.mrf.mxu0
    %v5864 = vadd.f32 %v5775, %v5863
    %5865 = vmatmul.bf16.gmra.mxu0 %v1429
    %v5866 = vpop.f32.mrf.mxu0
    %v5867 = vadd.f32 %v5778, %v5866
    %v5868 = vpop.f32.mrf.mxu0
    %v5869 = vadd.f32 %v5780, %v5868
    %5870 = vmatmul.bf16.gmra.mxu0 %v1437
    %v5871 = vpop.f32.mrf.mxu0
    %v5872 = vadd.f32 %v5783, %v5871
    %v5873 = vpop.f32.mrf.mxu0
    %v5874 = vadd.f32 %v5785, %v5873
    %5875 = vmatmul.bf16.gmra.mxu0 %v1445
    %v5876 = vpop.f32.mrf.mxu0
    %v5877 = vadd.f32 %v5788, %v5876
    %v5878 = vpop.f32.mrf.mxu0
    %v5879 = vadd.f32 %v5790, %v5878
    %5880 = vmatmul.bf16.gmra.mxu0 %v1453
    %v5881 = vpop.f32.mrf.mxu0
    %v5882 = vadd.f32 %v5793, %v5881
    %v5883 = vpop.f32.mrf.mxu0
    %v5884 = vadd.f32 %v5795, %v5883
    %5885 = vmatmul.bf16.gmra.mxu0 %v1461
    %v5886 = vpop.f32.mrf.mxu0
    %v5887 = vadd.f32 %v5798, %v5886
    %v5888 = vpop.f32.mrf.mxu0
    %v5889 = vadd.f32 %v5800, %v5888
    %5890 = vmatmul.bf16.gmra.mxu0 %v1469
    %v5891 = vpop.f32.mrf.mxu0
    %v5892 = vadd.f32 %v5803, %v5891
    %v5893 = vpop.f32.mrf.mxu0
    %v5894 = vadd.f32 %v5805, %v5893
    %5895 = vdwg.mxu0
    %5896 = vmatpush.bf16.msra.mxu0 %v4042
    %5897 = vmatpush.bf16.msra.mxu0 %v4034
    %5898 = vmatpush.bf16.msra.mxu0 %v4026
    %5899 = vmatpush.bf16.msra.mxu0 %v4018
    %5900 = vmatpush.bf16.msra.mxu0 %v4010
    %5901 = vmatpush.bf16.msra.mxu0 %v4002
    %5902 = vmatpush.bf16.msra.mxu0 %v3994
    %5903 = vmatpush.bf16.msra.mxu0 %v3986
    %5904 = vmatmul.bf16.gmra.mxu0 %v1350
    %v5905 = vpop.f32.mrf.mxu0
    %v5906 = vadd.f32 %v5817, %v5905
    %v5907 = vpop.f32.mrf.mxu0
    %v5908 = vadd.f32 %v5819, %v5907
    %5909 = vmatmul.bf16.gmra.mxu0 %v1358
    %v5910 = vpop.f32.mrf.mxu0
    %v5911 = vadd.f32 %v5822, %v5910
    %v5912 = vpop.f32.mrf.mxu0
    %v5913 = vadd.f32 %v5824, %v5912
    %5914 = vmatmul.bf16.gmra.mxu0 %v1366
    %v5915 = vpop.f32.mrf.mxu0
    %v5916 = vadd.f32 %v5827, %v5915
    %v5917 = vpop.f32.mrf.mxu0
    %v5918 = vadd.f32 %v5829, %v5917
    %5919 = vmatmul.bf16.gmra.mxu0 %v1374
    %v5920 = vpop.f32.mrf.mxu0
    %v5921 = vadd.f32 %v5832, %v5920
    %v5922 = vpop.f32.mrf.mxu0
    %v5923 = vadd.f32 %v5834, %v5922
    %5924 = vmatmul.bf16.gmra.mxu0 %v1382
    %v5925 = vpop.f32.mrf.mxu0
    %v5926 = vadd.f32 %v5837, %v5925
    %v5927 = vpop.f32.mrf.mxu0
    %v5928 = vadd.f32 %v5839, %v5927
    %5929 = vmatmul.bf16.gmra.mxu0 %v1390
    %v5930 = vpop.f32.mrf.mxu0
    %v5931 = vadd.f32 %v5842, %v5930
    %v5932 = vpop.f32.mrf.mxu0
    %v5933 = vadd.f32 %v5844, %v5932
    %5934 = vmatmul.bf16.gmra.mxu0 %v1398
    %v5935 = vpop.f32.mrf.mxu0
    %v5936 = vadd.f32 %v5847, %v5935
    %v5937 = vpop.f32.mrf.mxu0
    %v5938 = vadd.f32 %v5849, %v5937
    %5939 = vmatmul.bf16.gmra.mxu0 %v1406
    %v5940 = vpop.f32.mrf.mxu0
    %v5941 = vadd.f32 %v5852, %v5940
    %v5942 = vpop.f32.mrf.mxu0
    %v5943 = vadd.f32 %v5854, %v5942
    %5944 = vmatmul.bf16.gmra.mxu0 %v1414
    %v5945 = vpop.f32.mrf.mxu0
    %v5946 = vadd.f32 %v5857, %v5945
    %v5947 = vpop.f32.mrf.mxu0
    %v5948 = vadd.f32 %v5859, %v5947
    %5949 = vmatmul.bf16.gmra.mxu0 %v1422
    %v5950 = vpop.f32.mrf.mxu0
    %v5951 = vadd.f32 %v5862, %v5950
    %v5952 = vpop.f32.mrf.mxu0
    %v5953 = vadd.f32 %v5864, %v5952
    %5954 = vmatmul.bf16.gmra.mxu0 %v1430
    %v5955 = vpop.f32.mrf.mxu0
    %v5956 = vadd.f32 %v5867, %v5955
    %v5957 = vpop.f32.mrf.mxu0
    %v5958 = vadd.f32 %v5869, %v5957
    %5959 = vmatmul.bf16.gmra.mxu0 %v1438
    %v5960 = vpop.f32.mrf.mxu0
    %v5961 = vadd.f32 %v5872, %v5960
    %v5962 = vpop.f32.mrf.mxu0
    %v5963 = vadd.f32 %v5874, %v5962
    %5964 = vmatmul.bf16.gmra.mxu0 %v1446
    %v5965 = vpop.f32.mrf.mxu0
    %v5966 = vadd.f32 %v5877, %v5965
    %v5967 = vpop.f32.mrf.mxu0
    %v5968 = vadd.f32 %v5879, %v5967
    %5969 = vmatmul.bf16.gmra.mxu0 %v1454
    %v5970 = vpop.f32.mrf.mxu0
    %v5971 = vadd.f32 %v5882, %v5970
    %v5972 = vpop.f32.mrf.mxu0
    %v5973 = vadd.f32 %v5884, %v5972
    %5974 = vmatmul.bf16.gmra.mxu0 %v1462
    %v5975 = vpop.f32.mrf.mxu0
    %v5976 = vadd.f32 %v5887, %v5975
    %v5977 = vpop.f32.mrf.mxu0
    %v5978 = vadd.f32 %v5889, %v5977
    %5979 = vmatmul.bf16.gmra.mxu0 %v1470
    %v5980 = vpop.f32.mrf.mxu0
    %v5981 = vadd.f32 %v5892, %v5980
    %v5982 = vpop.f32.mrf.mxu0
    %v5983 = vadd.f32 %v5894, %v5982
    %5984 = vdwg.mxu0
    %5985 = vmatpush.bf16.msra.mxu0 %v3595
    %5986 = vmatpush.bf16.msra.mxu0 %v3587
    %5987 = vmatpush.bf16.msra.mxu0 %v3579
    %5988 = vmatpush.bf16.msra.mxu0 %v3571
    %5989 = vmatpush.bf16.msra.mxu0 %v3563
    %5990 = vmatpush.bf16.msra.mxu0 %v3555
    %5991 = vmatpush.bf16.msra.mxu0 %v3547
    %5992 = vmatpush.bf16.msra.mxu0 %v3539
    %5993 = vmatmul.bf16.gmra.mxu0 %v1343
    %v5994 = vpop.f32.mrf.mxu0
    %v5995 = vadd.f32 %v1987, %v5994
    %v5996 = vpop.f32.mrf.mxu0
    %v5997 = vadd.f32 %v1987, %v5996
    %5998 = vmatmul.bf16.gmra.mxu0 %v1351
    %v5999 = vpop.f32.mrf.mxu0
    %v6000 = vadd.f32 %v1987, %v5999
    %v6001 = vpop.f32.mrf.mxu0
    %v6002 = vadd.f32 %v1987, %v6001
    %6003 = vmatmul.bf16.gmra.mxu0 %v1359
    %v6004 = vpop.f32.mrf.mxu0
    %v6005 = vadd.f32 %v1987, %v6004
    %v6006 = vpop.f32.mrf.mxu0
    %v6007 = vadd.f32 %v1987, %v6006
    %6008 = vmatmul.bf16.gmra.mxu0 %v1367
    %v6009 = vpop.f32.mrf.mxu0
    %v6010 = vadd.f32 %v1987, %v6009
    %v6011 = vpop.f32.mrf.mxu0
    %v6012 = vadd.f32 %v1987, %v6011
    %6013 = vmatmul.bf16.gmra.mxu0 %v1375
    %v6014 = vpop.f32.mrf.mxu0
    %v6015 = vadd.f32 %v1987, %v6014
    %v6016 = vpop.f32.mrf.mxu0
    %v6017 = vadd.f32 %v1987, %v6016
    %6018 = vmatmul.bf16.gmra.mxu0 %v1383
    %v6019 = vpop.f32.mrf.mxu0
    %v6020 = vadd.f32 %v1987, %v6019
    %v6021 = vpop.f32.mrf.mxu0
    %v6022 = vadd.f32 %v1987, %v6021
    %6023 = vmatmul.bf16.gmra.mxu0 %v1391
    %v6024 = vpop.f32.mrf.mxu0
    %v6025 = vadd.f32 %v1987, %v6024
    %v6026 = vpop.f32.mrf.mxu0
    %v6027 = vadd.f32 %v1987, %v6026
    %6028 = vmatmul.bf16.gmra.mxu0 %v1399
    %v6029 = vpop.f32.mrf.mxu0
    %v6030 = vadd.f32 %v1987, %v6029
    %v6031 = vpop.f32.mrf.mxu0
    %v6032 = vadd.f32 %v1987, %v6031
    %6033 = vmatmul.bf16.gmra.mxu0 %v1407
    %v6034 = vpop.f32.mrf.mxu0
    %v6035 = vadd.f32 %v1987, %v6034
    %v6036 = vpop.f32.mrf.mxu0
    %v6037 = vadd.f32 %v1987, %v6036
    %6038 = vmatmul.bf16.gmra.mxu0 %v1415
    %v6039 = vpop.f32.mrf.mxu0
    %v6040 = vadd.f32 %v1987, %v6039
    %v6041 = vpop.f32.mrf.mxu0
    %v6042 = vadd.f32 %v1987, %v6041
    %6043 = vmatmul.bf16.gmra.mxu0 %v1423
    %v6044 = vpop.f32.mrf.mxu0
    %v6045 = vadd.f32 %v1987, %v6044
    %v6046 = vpop.f32.mrf.mxu0
    %v6047 = vadd.f32 %v1987, %v6046
    %6048 = vmatmul.bf16.gmra.mxu0 %v1431
    %v6049 = vpop.f32.mrf.mxu0
    %v6050 = vadd.f32 %v1987, %v6049
    %v6051 = vpop.f32.mrf.mxu0
    %v6052 = vadd.f32 %v1987, %v6051
    %6053 = vmatmul.bf16.gmra.mxu0 %v1439
    %v6054 = vpop.f32.mrf.mxu0
    %v6055 = vadd.f32 %v1987, %v6054
    %v6056 = vpop.f32.mrf.mxu0
    %v6057 = vadd.f32 %v1987, %v6056
    %6058 = vmatmul.bf16.gmra.mxu0 %v1447
    %v6059 = vpop.f32.mrf.mxu0
    %v6060 = vadd.f32 %v1987, %v6059
    %v6061 = vpop.f32.mrf.mxu0
    %v6062 = vadd.f32 %v1987, %v6061
    %6063 = vmatmul.bf16.gmra.mxu0 %v1455
    %v6064 = vpop.f32.mrf.mxu0
    %v6065 = vadd.f32 %v1987, %v6064
    %v6066 = vpop.f32.mrf.mxu0
    %v6067 = vadd.f32 %v1987, %v6066
    %6068 = vmatmul.bf16.gmra.mxu0 %v1463
    %v6069 = vpop.f32.mrf.mxu0
    %v6070 = vadd.f32 %v1987, %v6069
    %v6071 = vpop.f32.mrf.mxu0
    %v6072 = vadd.f32 %v1987, %v6071
    %6073 = vdwg.mxu0
    %6074 = vmatpush.bf16.msra.mxu0 %v3659
    %6075 = vmatpush.bf16.msra.mxu0 %v3651
    %6076 = vmatpush.bf16.msra.mxu0 %v3643
    %6077 = vmatpush.bf16.msra.mxu0 %v3635
    %6078 = vmatpush.bf16.msra.mxu0 %v3627
    %6079 = vmatpush.bf16.msra.mxu0 %v3619
    %6080 = vmatpush.bf16.msra.mxu0 %v3611
    %6081 = vmatpush.bf16.msra.mxu0 %v3603
    %6082 = vmatmul.bf16.gmra.mxu0 %v1344
    %v6083 = vpop.f32.mrf.mxu0
    %v6084 = vadd.f32 %v5995, %v6083
    %v6085 = vpop.f32.mrf.mxu0
    %v6086 = vadd.f32 %v5997, %v6085
    %6087 = vmatmul.bf16.gmra.mxu0 %v1352
    %v6088 = vpop.f32.mrf.mxu0
    %v6089 = vadd.f32 %v6000, %v6088
    %v6090 = vpop.f32.mrf.mxu0
    %v6091 = vadd.f32 %v6002, %v6090
    %6092 = vmatmul.bf16.gmra.mxu0 %v1360
    %v6093 = vpop.f32.mrf.mxu0
    %v6094 = vadd.f32 %v6005, %v6093
    %v6095 = vpop.f32.mrf.mxu0
    %v6096 = vadd.f32 %v6007, %v6095
    %6097 = vmatmul.bf16.gmra.mxu0 %v1368
    %v6098 = vpop.f32.mrf.mxu0
    %v6099 = vadd.f32 %v6010, %v6098
    %v6100 = vpop.f32.mrf.mxu0
    %v6101 = vadd.f32 %v6012, %v6100
    %6102 = vmatmul.bf16.gmra.mxu0 %v1376
    %v6103 = vpop.f32.mrf.mxu0
    %v6104 = vadd.f32 %v6015, %v6103
    %v6105 = vpop.f32.mrf.mxu0
    %v6106 = vadd.f32 %v6017, %v6105
    %6107 = vmatmul.bf16.gmra.mxu0 %v1384
    %v6108 = vpop.f32.mrf.mxu0
    %v6109 = vadd.f32 %v6020, %v6108
    %v6110 = vpop.f32.mrf.mxu0
    %v6111 = vadd.f32 %v6022, %v6110
    %6112 = vmatmul.bf16.gmra.mxu0 %v1392
    %v6113 = vpop.f32.mrf.mxu0
    %v6114 = vadd.f32 %v6025, %v6113
    %v6115 = vpop.f32.mrf.mxu0
    %v6116 = vadd.f32 %v6027, %v6115
    %6117 = vmatmul.bf16.gmra.mxu0 %v1400
    %v6118 = vpop.f32.mrf.mxu0
    %v6119 = vadd.f32 %v6030, %v6118
    %v6120 = vpop.f32.mrf.mxu0
    %v6121 = vadd.f32 %v6032, %v6120
    %6122 = vmatmul.bf16.gmra.mxu0 %v1408
    %v6123 = vpop.f32.mrf.mxu0
    %v6124 = vadd.f32 %v6035, %v6123
    %v6125 = vpop.f32.mrf.mxu0
    %v6126 = vadd.f32 %v6037, %v6125
    %6127 = vmatmul.bf16.gmra.mxu0 %v1416
    %v6128 = vpop.f32.mrf.mxu0
    %v6129 = vadd.f32 %v6040, %v6128
    %v6130 = vpop.f32.mrf.mxu0
    %v6131 = vadd.f32 %v6042, %v6130
    %6132 = vmatmul.bf16.gmra.mxu0 %v1424
    %v6133 = vpop.f32.mrf.mxu0
    %v6134 = vadd.f32 %v6045, %v6133
    %v6135 = vpop.f32.mrf.mxu0
    %v6136 = vadd.f32 %v6047, %v6135
    %6137 = vmatmul.bf16.gmra.mxu0 %v1432
    %v6138 = vpop.f32.mrf.mxu0
    %v6139 = vadd.f32 %v6050, %v6138
    %v6140 = vpop.f32.mrf.mxu0
    %v6141 = vadd.f32 %v6052, %v6140
    %6142 = vmatmul.bf16.gmra.mxu0 %v1440
    %v6143 = vpop.f32.mrf.mxu0
    %v6144 = vadd.f32 %v6055, %v6143
    %v6145 = vpop.f32.mrf.mxu0
    %v6146 = vadd.f32 %v6057, %v6145
    %6147 = vmatmul.bf16.gmra.mxu0 %v1448
    %v6148 = vpop.f32.mrf.mxu0
    %v6149 = vadd.f32 %v6060, %v6148
    %v6150 = vpop.f32.mrf.mxu0
    %v6151 = vadd.f32 %v6062, %v6150
    %6152 = vmatmul.bf16.gmra.mxu0 %v1456
    %v6153 = vpop.f32.mrf.mxu0
    %v6154 = vadd.f32 %v6065, %v6153
    %v6155 = vpop.f32.mrf.mxu0
    %v6156 = vadd.f32 %v6067, %v6155
    %6157 = vmatmul.bf16.gmra.mxu0 %v1464
    %v6158 = vpop.f32.mrf.mxu0
    %v6159 = vadd.f32 %v6070, %v6158
    %v6160 = vpop.f32.mrf.mxu0
    %v6161 = vadd.f32 %v6072, %v6160
    %6162 = vdwg.mxu0
    %6163 = vmatpush.bf16.msra.mxu0 %v3723
    %6164 = vmatpush.bf16.msra.mxu0 %v3715
    %6165 = vmatpush.bf16.msra.mxu0 %v3707
    %6166 = vmatpush.bf16.msra.mxu0 %v3699
    %6167 = vmatpush.bf16.msra.mxu0 %v3691
    %6168 = vmatpush.bf16.msra.mxu0 %v3683
    %6169 = vmatpush.bf16.msra.mxu0 %v3675
    %6170 = vmatpush.bf16.msra.mxu0 %v3667
    %6171 = vmatmul.bf16.gmra.mxu0 %v1345
    %v6172 = vpop.f32.mrf.mxu0
    %v6173 = vadd.f32 %v6084, %v6172
    %v6174 = vpop.f32.mrf.mxu0
    %v6175 = vadd.f32 %v6086, %v6174
    %6176 = vmatmul.bf16.gmra.mxu0 %v1353
    %v6177 = vpop.f32.mrf.mxu0
    %v6178 = vadd.f32 %v6089, %v6177
    %v6179 = vpop.f32.mrf.mxu0
    %v6180 = vadd.f32 %v6091, %v6179
    %6181 = vmatmul.bf16.gmra.mxu0 %v1361
    %v6182 = vpop.f32.mrf.mxu0
    %v6183 = vadd.f32 %v6094, %v6182
    %v6184 = vpop.f32.mrf.mxu0
    %v6185 = vadd.f32 %v6096, %v6184
    %6186 = vmatmul.bf16.gmra.mxu0 %v1369
    %v6187 = vpop.f32.mrf.mxu0
    %v6188 = vadd.f32 %v6099, %v6187
    %v6189 = vpop.f32.mrf.mxu0
    %v6190 = vadd.f32 %v6101, %v6189
    %6191 = vmatmul.bf16.gmra.mxu0 %v1377
    %v6192 = vpop.f32.mrf.mxu0
    %v6193 = vadd.f32 %v6104, %v6192
    %v6194 = vpop.f32.mrf.mxu0
    %v6195 = vadd.f32 %v6106, %v6194
    %6196 = vmatmul.bf16.gmra.mxu0 %v1385
    %v6197 = vpop.f32.mrf.mxu0
    %v6198 = vadd.f32 %v6109, %v6197
    %v6199 = vpop.f32.mrf.mxu0
    %v6200 = vadd.f32 %v6111, %v6199
    %6201 = vmatmul.bf16.gmra.mxu0 %v1393
    %v6202 = vpop.f32.mrf.mxu0
    %v6203 = vadd.f32 %v6114, %v6202
    %v6204 = vpop.f32.mrf.mxu0
    %v6205 = vadd.f32 %v6116, %v6204
    %6206 = vmatmul.bf16.gmra.mxu0 %v1401
    %v6207 = vpop.f32.mrf.mxu0
    %v6208 = vadd.f32 %v6119, %v6207
    %v6209 = vpop.f32.mrf.mxu0
    %v6210 = vadd.f32 %v6121, %v6209
    %6211 = vmatmul.bf16.gmra.mxu0 %v1409
    %v6212 = vpop.f32.mrf.mxu0
    %v6213 = vadd.f32 %v6124, %v6212
    %v6214 = vpop.f32.mrf.mxu0
    %v6215 = vadd.f32 %v6126, %v6214
    %6216 = vmatmul.bf16.gmra.mxu0 %v1417
    %v6217 = vpop.f32.mrf.mxu0
    %v6218 = vadd.f32 %v6129, %v6217
    %v6219 = vpop.f32.mrf.mxu0
    %v6220 = vadd.f32 %v6131, %v6219
    %6221 = vmatmul.bf16.gmra.mxu0 %v1425
    %v6222 = vpop.f32.mrf.mxu0
    %v6223 = vadd.f32 %v6134, %v6222
    %v6224 = vpop.f32.mrf.mxu0
    %v6225 = vadd.f32 %v6136, %v6224
    %6226 = vmatmul.bf16.gmra.mxu0 %v1433
    %v6227 = vpop.f32.mrf.mxu0
    %v6228 = vadd.f32 %v6139, %v6227
    %v6229 = vpop.f32.mrf.mxu0
    %v6230 = vadd.f32 %v6141, %v6229
    %6231 = vmatmul.bf16.gmra.mxu0 %v1441
    %v6232 = vpop.f32.mrf.mxu0
    %v6233 = vadd.f32 %v6144, %v6232
    %v6234 = vpop.f32.mrf.mxu0
    %v6235 = vadd.f32 %v6146, %v6234
    %6236 = vmatmul.bf16.gmra.mxu0 %v1449
    %v6237 = vpop.f32.mrf.mxu0
    %v6238 = vadd.f32 %v6149, %v6237
    %v6239 = vpop.f32.mrf.mxu0
    %v6240 = vadd.f32 %v6151, %v6239
    %6241 = vmatmul.bf16.gmra.mxu0 %v1457
    %v6242 = vpop.f32.mrf.mxu0
    %v6243 = vadd.f32 %v6154, %v6242
    %v6244 = vpop.f32.mrf.mxu0
    %v6245 = vadd.f32 %v6156, %v6244
    %6246 = vmatmul.bf16.gmra.mxu0 %v1465
    %v6247 = vpop.f32.mrf.mxu0
    %v6248 = vadd.f32 %v6159, %v6247
    %v6249 = vpop.f32.mrf.mxu0
    %v6250 = vadd.f32 %v6161, %v6249
    %6251 = vdwg.mxu0
    %6252 = vmatpush.bf16.msra.mxu0 %v3787
    %6253 = vmatpush.bf16.msra.mxu0 %v3779
    %6254 = vmatpush.bf16.msra.mxu0 %v3771
    %6255 = vmatpush.bf16.msra.mxu0 %v3763
    %6256 = vmatpush.bf16.msra.mxu0 %v3755
    %6257 = vmatpush.bf16.msra.mxu0 %v3747
    %6258 = vmatpush.bf16.msra.mxu0 %v3739
    %6259 = vmatpush.bf16.msra.mxu0 %v3731
    %6260 = vmatmul.bf16.gmra.mxu0 %v1346
    %v6261 = vpop.f32.mrf.mxu0
    %v6262 = vadd.f32 %v6173, %v6261
    %v6263 = vpop.f32.mrf.mxu0
    %v6264 = vadd.f32 %v6175, %v6263
    %6265 = vmatmul.bf16.gmra.mxu0 %v1354
    %v6266 = vpop.f32.mrf.mxu0
    %v6267 = vadd.f32 %v6178, %v6266
    %v6268 = vpop.f32.mrf.mxu0
    %v6269 = vadd.f32 %v6180, %v6268
    %6270 = vmatmul.bf16.gmra.mxu0 %v1362
    %v6271 = vpop.f32.mrf.mxu0
    %v6272 = vadd.f32 %v6183, %v6271
    %v6273 = vpop.f32.mrf.mxu0
    %v6274 = vadd.f32 %v6185, %v6273
    %6275 = vmatmul.bf16.gmra.mxu0 %v1370
    %v6276 = vpop.f32.mrf.mxu0
    %v6277 = vadd.f32 %v6188, %v6276
    %v6278 = vpop.f32.mrf.mxu0
    %v6279 = vadd.f32 %v6190, %v6278
    %6280 = vmatmul.bf16.gmra.mxu0 %v1378
    %v6281 = vpop.f32.mrf.mxu0
    %v6282 = vadd.f32 %v6193, %v6281
    %v6283 = vpop.f32.mrf.mxu0
    %v6284 = vadd.f32 %v6195, %v6283
    %6285 = vmatmul.bf16.gmra.mxu0 %v1386
    %v6286 = vpop.f32.mrf.mxu0
    %v6287 = vadd.f32 %v6198, %v6286
    %v6288 = vpop.f32.mrf.mxu0
    %v6289 = vadd.f32 %v6200, %v6288
    %6290 = vmatmul.bf16.gmra.mxu0 %v1394
    %v6291 = vpop.f32.mrf.mxu0
    %v6292 = vadd.f32 %v6203, %v6291
    %v6293 = vpop.f32.mrf.mxu0
    %v6294 = vadd.f32 %v6205, %v6293
    %6295 = vmatmul.bf16.gmra.mxu0 %v1402
    %v6296 = vpop.f32.mrf.mxu0
    %v6297 = vadd.f32 %v6208, %v6296
    %v6298 = vpop.f32.mrf.mxu0
    %v6299 = vadd.f32 %v6210, %v6298
    %6300 = vmatmul.bf16.gmra.mxu0 %v1410
    %v6301 = vpop.f32.mrf.mxu0
    %v6302 = vadd.f32 %v6213, %v6301
    %v6303 = vpop.f32.mrf.mxu0
    %v6304 = vadd.f32 %v6215, %v6303
    %6305 = vmatmul.bf16.gmra.mxu0 %v1418
    %v6306 = vpop.f32.mrf.mxu0
    %v6307 = vadd.f32 %v6218, %v6306
    %v6308 = vpop.f32.mrf.mxu0
    %v6309 = vadd.f32 %v6220, %v6308
    %6310 = vmatmul.bf16.gmra.mxu0 %v1426
    %v6311 = vpop.f32.mrf.mxu0
    %v6312 = vadd.f32 %v6223, %v6311
    %v6313 = vpop.f32.mrf.mxu0
    %v6314 = vadd.f32 %v6225, %v6313
    %6315 = vmatmul.bf16.gmra.mxu0 %v1434
    %v6316 = vpop.f32.mrf.mxu0
    %v6317 = vadd.f32 %v6228, %v6316
    %v6318 = vpop.f32.mrf.mxu0
    %v6319 = vadd.f32 %v6230, %v6318
    %6320 = vmatmul.bf16.gmra.mxu0 %v1442
    %v6321 = vpop.f32.mrf.mxu0
    %v6322 = vadd.f32 %v6233, %v6321
    %v6323 = vpop.f32.mrf.mxu0
    %v6324 = vadd.f32 %v6235, %v6323
    %6325 = vmatmul.bf16.gmra.mxu0 %v1450
    %v6326 = vpop.f32.mrf.mxu0
    %v6327 = vadd.f32 %v6238, %v6326
    %v6328 = vpop.f32.mrf.mxu0
    %v6329 = vadd.f32 %v6240, %v6328
    %6330 = vmatmul.bf16.gmra.mxu0 %v1458
    %v6331 = vpop.f32.mrf.mxu0
    %v6332 = vadd.f32 %v6243, %v6331
    %v6333 = vpop.f32.mrf.mxu0
    %v6334 = vadd.f32 %v6245, %v6333
    %6335 = vmatmul.bf16.gmra.mxu0 %v1466
    %v6336 = vpop.f32.mrf.mxu0
    %v6337 = vadd.f32 %v6248, %v6336
    %v6338 = vpop.f32.mrf.mxu0
    %v6339 = vadd.f32 %v6250, %v6338
    %6340 = vdwg.mxu0
    %6341 = vmatpush.bf16.msra.mxu0 %v3851
    %6342 = vmatpush.bf16.msra.mxu0 %v3843
    %6343 = vmatpush.bf16.msra.mxu0 %v3835
    %6344 = vmatpush.bf16.msra.mxu0 %v3827
    %6345 = vmatpush.bf16.msra.mxu0 %v3819
    %6346 = vmatpush.bf16.msra.mxu0 %v3811
    %6347 = vmatpush.bf16.msra.mxu0 %v3803
    %6348 = vmatpush.bf16.msra.mxu0 %v3795
    %6349 = vmatmul.bf16.gmra.mxu0 %v1347
    %v6350 = vpop.f32.mrf.mxu0
    %v6351 = vadd.f32 %v6262, %v6350
    %v6352 = vpop.f32.mrf.mxu0
    %v6353 = vadd.f32 %v6264, %v6352
    %6354 = vmatmul.bf16.gmra.mxu0 %v1355
    %v6355 = vpop.f32.mrf.mxu0
    %v6356 = vadd.f32 %v6267, %v6355
    %v6357 = vpop.f32.mrf.mxu0
    %v6358 = vadd.f32 %v6269, %v6357
    %6359 = vmatmul.bf16.gmra.mxu0 %v1363
    %v6360 = vpop.f32.mrf.mxu0
    %v6361 = vadd.f32 %v6272, %v6360
    %v6362 = vpop.f32.mrf.mxu0
    %v6363 = vadd.f32 %v6274, %v6362
    %6364 = vmatmul.bf16.gmra.mxu0 %v1371
    %v6365 = vpop.f32.mrf.mxu0
    %v6366 = vadd.f32 %v6277, %v6365
    %v6367 = vpop.f32.mrf.mxu0
    %v6368 = vadd.f32 %v6279, %v6367
    %6369 = vmatmul.bf16.gmra.mxu0 %v1379
    %v6370 = vpop.f32.mrf.mxu0
    %v6371 = vadd.f32 %v6282, %v6370
    %v6372 = vpop.f32.mrf.mxu0
    %v6373 = vadd.f32 %v6284, %v6372
    %6374 = vmatmul.bf16.gmra.mxu0 %v1387
    %v6375 = vpop.f32.mrf.mxu0
    %v6376 = vadd.f32 %v6287, %v6375
    %v6377 = vpop.f32.mrf.mxu0
    %v6378 = vadd.f32 %v6289, %v6377
    %6379 = vmatmul.bf16.gmra.mxu0 %v1395
    %v6380 = vpop.f32.mrf.mxu0
    %v6381 = vadd.f32 %v6292, %v6380
    %v6382 = vpop.f32.mrf.mxu0
    %v6383 = vadd.f32 %v6294, %v6382
    %6384 = vmatmul.bf16.gmra.mxu0 %v1403
    %v6385 = vpop.f32.mrf.mxu0
    %v6386 = vadd.f32 %v6297, %v6385
    %v6387 = vpop.f32.mrf.mxu0
    %v6388 = vadd.f32 %v6299, %v6387
    %6389 = vmatmul.bf16.gmra.mxu0 %v1411
    %v6390 = vpop.f32.mrf.mxu0
    %v6391 = vadd.f32 %v6302, %v6390
    %v6392 = vpop.f32.mrf.mxu0
    %v6393 = vadd.f32 %v6304, %v6392
    %6394 = vmatmul.bf16.gmra.mxu0 %v1419
    %v6395 = vpop.f32.mrf.mxu0
    %v6396 = vadd.f32 %v6307, %v6395
    %v6397 = vpop.f32.mrf.mxu0
    %v6398 = vadd.f32 %v6309, %v6397
    %6399 = vmatmul.bf16.gmra.mxu0 %v1427
    %v6400 = vpop.f32.mrf.mxu0
    %v6401 = vadd.f32 %v6312, %v6400
    %v6402 = vpop.f32.mrf.mxu0
    %v6403 = vadd.f32 %v6314, %v6402
    %6404 = vmatmul.bf16.gmra.mxu0 %v1435
    %v6405 = vpop.f32.mrf.mxu0
    %v6406 = vadd.f32 %v6317, %v6405
    %v6407 = vpop.f32.mrf.mxu0
    %v6408 = vadd.f32 %v6319, %v6407
    %6409 = vmatmul.bf16.gmra.mxu0 %v1443
    %v6410 = vpop.f32.mrf.mxu0
    %v6411 = vadd.f32 %v6322, %v6410
    %v6412 = vpop.f32.mrf.mxu0
    %v6413 = vadd.f32 %v6324, %v6412
    %6414 = vmatmul.bf16.gmra.mxu0 %v1451
    %v6415 = vpop.f32.mrf.mxu0
    %v6416 = vadd.f32 %v6327, %v6415
    %v6417 = vpop.f32.mrf.mxu0
    %v6418 = vadd.f32 %v6329, %v6417
    %6419 = vmatmul.bf16.gmra.mxu0 %v1459
    %v6420 = vpop.f32.mrf.mxu0
    %v6421 = vadd.f32 %v6332, %v6420
    %v6422 = vpop.f32.mrf.mxu0
    %v6423 = vadd.f32 %v6334, %v6422
    %6424 = vmatmul.bf16.gmra.mxu0 %v1467
    %v6425 = vpop.f32.mrf.mxu0
    %v6426 = vadd.f32 %v6337, %v6425
    %v6427 = vpop.f32.mrf.mxu0
    %v6428 = vadd.f32 %v6339, %v6427
    %6429 = vdwg.mxu0
    %6430 = vmatpush.bf16.msra.mxu0 %v3915
    %6431 = vmatpush.bf16.msra.mxu0 %v3907
    %6432 = vmatpush.bf16.msra.mxu0 %v3899
    %6433 = vmatpush.bf16.msra.mxu0 %v3891
    %6434 = vmatpush.bf16.msra.mxu0 %v3883
    %6435 = vmatpush.bf16.msra.mxu0 %v3875
    %6436 = vmatpush.bf16.msra.mxu0 %v3867
    %6437 = vmatpush.bf16.msra.mxu0 %v3859
    %6438 = vmatmul.bf16.gmra.mxu0 %v1348
    %v6439 = vpop.f32.mrf.mxu0
    %v6440 = vadd.f32 %v6351, %v6439
    %v6441 = vpop.f32.mrf.mxu0
    %v6442 = vadd.f32 %v6353, %v6441
    %6443 = vmatmul.bf16.gmra.mxu0 %v1356
    %v6444 = vpop.f32.mrf.mxu0
    %v6445 = vadd.f32 %v6356, %v6444
    %v6446 = vpop.f32.mrf.mxu0
    %v6447 = vadd.f32 %v6358, %v6446
    %6448 = vmatmul.bf16.gmra.mxu0 %v1364
    %v6449 = vpop.f32.mrf.mxu0
    %v6450 = vadd.f32 %v6361, %v6449
    %v6451 = vpop.f32.mrf.mxu0
    %v6452 = vadd.f32 %v6363, %v6451
    %6453 = vmatmul.bf16.gmra.mxu0 %v1372
    %v6454 = vpop.f32.mrf.mxu0
    %v6455 = vadd.f32 %v6366, %v6454
    %v6456 = vpop.f32.mrf.mxu0
    %v6457 = vadd.f32 %v6368, %v6456
    %6458 = vmatmul.bf16.gmra.mxu0 %v1380
    %v6459 = vpop.f32.mrf.mxu0
    %v6460 = vadd.f32 %v6371, %v6459
    %v6461 = vpop.f32.mrf.mxu0
    %v6462 = vadd.f32 %v6373, %v6461
    %6463 = vmatmul.bf16.gmra.mxu0 %v1388
    %v6464 = vpop.f32.mrf.mxu0
    %v6465 = vadd.f32 %v6376, %v6464
    %v6466 = vpop.f32.mrf.mxu0
    %v6467 = vadd.f32 %v6378, %v6466
    %6468 = vmatmul.bf16.gmra.mxu0 %v1396
    %v6469 = vpop.f32.mrf.mxu0
    %v6470 = vadd.f32 %v6381, %v6469
    %v6471 = vpop.f32.mrf.mxu0
    %v6472 = vadd.f32 %v6383, %v6471
    %6473 = vmatmul.bf16.gmra.mxu0 %v1404
    %v6474 = vpop.f32.mrf.mxu0
    %v6475 = vadd.f32 %v6386, %v6474
    %v6476 = vpop.f32.mrf.mxu0
    %v6477 = vadd.f32 %v6388, %v6476
    %6478 = vmatmul.bf16.gmra.mxu0 %v1412
    %v6479 = vpop.f32.mrf.mxu0
    %v6480 = vadd.f32 %v6391, %v6479
    %v6481 = vpop.f32.mrf.mxu0
    %v6482 = vadd.f32 %v6393, %v6481
    %6483 = vmatmul.bf16.gmra.mxu0 %v1420
    %v6484 = vpop.f32.mrf.mxu0
    %v6485 = vadd.f32 %v6396, %v6484
    %v6486 = vpop.f32.mrf.mxu0
    %v6487 = vadd.f32 %v6398, %v6486
    %6488 = vmatmul.bf16.gmra.mxu0 %v1428
    %v6489 = vpop.f32.mrf.mxu0
    %v6490 = vadd.f32 %v6401, %v6489
    %v6491 = vpop.f32.mrf.mxu0
    %v6492 = vadd.f32 %v6403, %v6491
    %6493 = vmatmul.bf16.gmra.mxu0 %v1436
    %v6494 = vpop.f32.mrf.mxu0
    %v6495 = vadd.f32 %v6406, %v6494
    %v6496 = vpop.f32.mrf.mxu0
    %v6497 = vadd.f32 %v6408, %v6496
    %6498 = vmatmul.bf16.gmra.mxu0 %v1444
    %v6499 = vpop.f32.mrf.mxu0
    %v6500 = vadd.f32 %v6411, %v6499
    %v6501 = vpop.f32.mrf.mxu0
    %v6502 = vadd.f32 %v6413, %v6501
    %6503 = vmatmul.bf16.gmra.mxu0 %v1452
    %v6504 = vpop.f32.mrf.mxu0
    %v6505 = vadd.f32 %v6416, %v6504
    %v6506 = vpop.f32.mrf.mxu0
    %v6507 = vadd.f32 %v6418, %v6506
    %6508 = vmatmul.bf16.gmra.mxu0 %v1460
    %v6509 = vpop.f32.mrf.mxu0
    %v6510 = vadd.f32 %v6421, %v6509
    %v6511 = vpop.f32.mrf.mxu0
    %v6512 = vadd.f32 %v6423, %v6511
    %6513 = vmatmul.bf16.gmra.mxu0 %v1468
    %v6514 = vpop.f32.mrf.mxu0
    %v6515 = vadd.f32 %v6426, %v6514
    %v6516 = vpop.f32.mrf.mxu0
    %v6517 = vadd.f32 %v6428, %v6516
    %6518 = vdwg.mxu0
    %6519 = vmatpush.bf16.msra.mxu0 %v3979
    %6520 = vmatpush.bf16.msra.mxu0 %v3971
    %6521 = vmatpush.bf16.msra.mxu0 %v3963
    %6522 = vmatpush.bf16.msra.mxu0 %v3955
    %6523 = vmatpush.bf16.msra.mxu0 %v3947
    %6524 = vmatpush.bf16.msra.mxu0 %v3939
    %6525 = vmatpush.bf16.msra.mxu0 %v3931
    %6526 = vmatpush.bf16.msra.mxu0 %v3923
    %6527 = vmatmul.bf16.gmra.mxu0 %v1349
    %v6528 = vpop.f32.mrf.mxu0
    %v6529 = vadd.f32 %v6440, %v6528
    %v6530 = vpop.f32.mrf.mxu0
    %v6531 = vadd.f32 %v6442, %v6530
    %6532 = vmatmul.bf16.gmra.mxu0 %v1357
    %v6533 = vpop.f32.mrf.mxu0
    %v6534 = vadd.f32 %v6445, %v6533
    %v6535 = vpop.f32.mrf.mxu0
    %v6536 = vadd.f32 %v6447, %v6535
    %6537 = vmatmul.bf16.gmra.mxu0 %v1365
    %v6538 = vpop.f32.mrf.mxu0
    %v6539 = vadd.f32 %v6450, %v6538
    %v6540 = vpop.f32.mrf.mxu0
    %v6541 = vadd.f32 %v6452, %v6540
    %6542 = vmatmul.bf16.gmra.mxu0 %v1373
    %v6543 = vpop.f32.mrf.mxu0
    %v6544 = vadd.f32 %v6455, %v6543
    %v6545 = vpop.f32.mrf.mxu0
    %v6546 = vadd.f32 %v6457, %v6545
    %6547 = vmatmul.bf16.gmra.mxu0 %v1381
    %v6548 = vpop.f32.mrf.mxu0
    %v6549 = vadd.f32 %v6460, %v6548
    %v6550 = vpop.f32.mrf.mxu0
    %v6551 = vadd.f32 %v6462, %v6550
    %6552 = vmatmul.bf16.gmra.mxu0 %v1389
    %v6553 = vpop.f32.mrf.mxu0
    %v6554 = vadd.f32 %v6465, %v6553
    %v6555 = vpop.f32.mrf.mxu0
    %v6556 = vadd.f32 %v6467, %v6555
    %6557 = vmatmul.bf16.gmra.mxu0 %v1397
    %v6558 = vpop.f32.mrf.mxu0
    %v6559 = vadd.f32 %v6470, %v6558
    %v6560 = vpop.f32.mrf.mxu0
    %v6561 = vadd.f32 %v6472, %v6560
    %6562 = vmatmul.bf16.gmra.mxu0 %v1405
    %v6563 = vpop.f32.mrf.mxu0
    %v6564 = vadd.f32 %v6475, %v6563
    %v6565 = vpop.f32.mrf.mxu0
    %v6566 = vadd.f32 %v6477, %v6565
    %6567 = vmatmul.bf16.gmra.mxu0 %v1413
    %v6568 = vpop.f32.mrf.mxu0
    %v6569 = vadd.f32 %v6480, %v6568
    %v6570 = vpop.f32.mrf.mxu0
    %v6571 = vadd.f32 %v6482, %v6570
    %6572 = vmatmul.bf16.gmra.mxu0 %v1421
    %v6573 = vpop.f32.mrf.mxu0
    %v6574 = vadd.f32 %v6485, %v6573
    %v6575 = vpop.f32.mrf.mxu0
    %v6576 = vadd.f32 %v6487, %v6575
    %6577 = vmatmul.bf16.gmra.mxu0 %v1429
    %v6578 = vpop.f32.mrf.mxu0
    %v6579 = vadd.f32 %v6490, %v6578
    %v6580 = vpop.f32.mrf.mxu0
    %v6581 = vadd.f32 %v6492, %v6580
    %6582 = vmatmul.bf16.gmra.mxu0 %v1437
    %v6583 = vpop.f32.mrf.mxu0
    %v6584 = vadd.f32 %v6495, %v6583
    %v6585 = vpop.f32.mrf.mxu0
    %v6586 = vadd.f32 %v6497, %v6585
    %6587 = vmatmul.bf16.gmra.mxu0 %v1445
    %v6588 = vpop.f32.mrf.mxu0
    %v6589 = vadd.f32 %v6500, %v6588
    %v6590 = vpop.f32.mrf.mxu0
    %v6591 = vadd.f32 %v6502, %v6590
    %6592 = vmatmul.bf16.gmra.mxu0 %v1453
    %v6593 = vpop.f32.mrf.mxu0
    %v6594 = vadd.f32 %v6505, %v6593
    %v6595 = vpop.f32.mrf.mxu0
    %v6596 = vadd.f32 %v6507, %v6595
    %6597 = vmatmul.bf16.gmra.mxu0 %v1461
    %v6598 = vpop.f32.mrf.mxu0
    %v6599 = vadd.f32 %v6510, %v6598
    %v6600 = vpop.f32.mrf.mxu0
    %v6601 = vadd.f32 %v6512, %v6600
    %6602 = vmatmul.bf16.gmra.mxu0 %v1469
    %v6603 = vpop.f32.mrf.mxu0
    %v6604 = vadd.f32 %v6515, %v6603
    %v6605 = vpop.f32.mrf.mxu0
    %v6606 = vadd.f32 %v6517, %v6605
    %6607 = vdwg.mxu0
    %6608 = vmatpush.bf16.msra.mxu0 %v4043
    %6609 = vmatpush.bf16.msra.mxu0 %v4035
    %6610 = vmatpush.bf16.msra.mxu0 %v4027
    %6611 = vmatpush.bf16.msra.mxu0 %v4019
    %6612 = vmatpush.bf16.msra.mxu0 %v4011
    %6613 = vmatpush.bf16.msra.mxu0 %v4003
    %6614 = vmatpush.bf16.msra.mxu0 %v3995
    %6615 = vmatpush.bf16.msra.mxu0 %v3987
    %6616 = vmatmul.bf16.gmra.mxu0 %v1350
    %v6617 = vpop.f32.mrf.mxu0
    %v6618 = vadd.f32 %v6529, %v6617
    %v6619 = vpop.f32.mrf.mxu0
    %v6620 = vadd.f32 %v6531, %v6619
    %6621 = vmatmul.bf16.gmra.mxu0 %v1358
    %v6622 = vpop.f32.mrf.mxu0
    %v6623 = vadd.f32 %v6534, %v6622
    %v6624 = vpop.f32.mrf.mxu0
    %v6625 = vadd.f32 %v6536, %v6624
    %6626 = vmatmul.bf16.gmra.mxu0 %v1366
    %v6627 = vpop.f32.mrf.mxu0
    %v6628 = vadd.f32 %v6539, %v6627
    %v6629 = vpop.f32.mrf.mxu0
    %v6630 = vadd.f32 %v6541, %v6629
    %6631 = vmatmul.bf16.gmra.mxu0 %v1374
    %v6632 = vpop.f32.mrf.mxu0
    %v6633 = vadd.f32 %v6544, %v6632
    %v6634 = vpop.f32.mrf.mxu0
    %v6635 = vadd.f32 %v6546, %v6634
    %6636 = vmatmul.bf16.gmra.mxu0 %v1382
    %v6637 = vpop.f32.mrf.mxu0
    %v6638 = vadd.f32 %v6549, %v6637
    %v6639 = vpop.f32.mrf.mxu0
    %v6640 = vadd.f32 %v6551, %v6639
    %6641 = vmatmul.bf16.gmra.mxu0 %v1390
    %v6642 = vpop.f32.mrf.mxu0
    %v6643 = vadd.f32 %v6554, %v6642
    %v6644 = vpop.f32.mrf.mxu0
    %v6645 = vadd.f32 %v6556, %v6644
    %6646 = vmatmul.bf16.gmra.mxu0 %v1398
    %v6647 = vpop.f32.mrf.mxu0
    %v6648 = vadd.f32 %v6559, %v6647
    %v6649 = vpop.f32.mrf.mxu0
    %v6650 = vadd.f32 %v6561, %v6649
    %6651 = vmatmul.bf16.gmra.mxu0 %v1406
    %v6652 = vpop.f32.mrf.mxu0
    %v6653 = vadd.f32 %v6564, %v6652
    %v6654 = vpop.f32.mrf.mxu0
    %v6655 = vadd.f32 %v6566, %v6654
    %6656 = vmatmul.bf16.gmra.mxu0 %v1414
    %v6657 = vpop.f32.mrf.mxu0
    %v6658 = vadd.f32 %v6569, %v6657
    %v6659 = vpop.f32.mrf.mxu0
    %v6660 = vadd.f32 %v6571, %v6659
    %6661 = vmatmul.bf16.gmra.mxu0 %v1422
    %v6662 = vpop.f32.mrf.mxu0
    %v6663 = vadd.f32 %v6574, %v6662
    %v6664 = vpop.f32.mrf.mxu0
    %v6665 = vadd.f32 %v6576, %v6664
    %6666 = vmatmul.bf16.gmra.mxu0 %v1430
    %v6667 = vpop.f32.mrf.mxu0
    %v6668 = vadd.f32 %v6579, %v6667
    %v6669 = vpop.f32.mrf.mxu0
    %v6670 = vadd.f32 %v6581, %v6669
    %6671 = vmatmul.bf16.gmra.mxu0 %v1438
    %v6672 = vpop.f32.mrf.mxu0
    %v6673 = vadd.f32 %v6584, %v6672
    %v6674 = vpop.f32.mrf.mxu0
    %v6675 = vadd.f32 %v6586, %v6674
    %6676 = vmatmul.bf16.gmra.mxu0 %v1446
    %v6677 = vpop.f32.mrf.mxu0
    %v6678 = vadd.f32 %v6589, %v6677
    %v6679 = vpop.f32.mrf.mxu0
    %v6680 = vadd.f32 %v6591, %v6679
    %6681 = vmatmul.bf16.gmra.mxu0 %v1454
    %v6682 = vpop.f32.mrf.mxu0
    %v6683 = vadd.f32 %v6594, %v6682
    %v6684 = vpop.f32.mrf.mxu0
    %v6685 = vadd.f32 %v6596, %v6684
    %6686 = vmatmul.bf16.gmra.mxu0 %v1462
    %v6687 = vpop.f32.mrf.mxu0
    %v6688 = vadd.f32 %v6599, %v6687
    %v6689 = vpop.f32.mrf.mxu0
    %v6690 = vadd.f32 %v6601, %v6689
    %6691 = vmatmul.bf16.gmra.mxu0 %v1470
    %v6692 = vpop.f32.mrf.mxu0
    %v6693 = vadd.f32 %v6604, %v6692
    %v6694 = vpop.f32.mrf.mxu0
    %v6695 = vadd.f32 %v6606, %v6694
    %6696 = vdwg.mxu0
    %6697 = vmatpush.bf16.msra.mxu0 %v3596
    %6698 = vmatpush.bf16.msra.mxu0 %v3588
    %6699 = vmatpush.bf16.msra.mxu0 %v3580
    %6700 = vmatpush.bf16.msra.mxu0 %v3572
    %6701 = vmatpush.bf16.msra.mxu0 %v3564
    %6702 = vmatpush.bf16.msra.mxu0 %v3556
    %6703 = vmatpush.bf16.msra.mxu0 %v3548
    %6704 = vmatpush.bf16.msra.mxu0 %v3540
    %6705 = vmatmul.bf16.gmra.mxu0 %v1343
    %v6706 = vpop.f32.mrf.mxu0
    %v6707 = vadd.f32 %v1988, %v6706
    %v6708 = vpop.f32.mrf.mxu0
    %v6709 = vadd.f32 %v1988, %v6708
    %6710 = vmatmul.bf16.gmra.mxu0 %v1351
    %v6711 = vpop.f32.mrf.mxu0
    %v6712 = vadd.f32 %v1988, %v6711
    %v6713 = vpop.f32.mrf.mxu0
    %v6714 = vadd.f32 %v1988, %v6713
    %6715 = vmatmul.bf16.gmra.mxu0 %v1359
    %v6716 = vpop.f32.mrf.mxu0
    %v6717 = vadd.f32 %v1988, %v6716
    %v6718 = vpop.f32.mrf.mxu0
    %v6719 = vadd.f32 %v1988, %v6718
    %6720 = vmatmul.bf16.gmra.mxu0 %v1367
    %v6721 = vpop.f32.mrf.mxu0
    %v6722 = vadd.f32 %v1988, %v6721
    %v6723 = vpop.f32.mrf.mxu0
    %v6724 = vadd.f32 %v1988, %v6723
    %6725 = vmatmul.bf16.gmra.mxu0 %v1375
    %v6726 = vpop.f32.mrf.mxu0
    %v6727 = vadd.f32 %v1988, %v6726
    %v6728 = vpop.f32.mrf.mxu0
    %v6729 = vadd.f32 %v1988, %v6728
    %6730 = vmatmul.bf16.gmra.mxu0 %v1383
    %v6731 = vpop.f32.mrf.mxu0
    %v6732 = vadd.f32 %v1988, %v6731
    %v6733 = vpop.f32.mrf.mxu0
    %v6734 = vadd.f32 %v1988, %v6733
    %6735 = vmatmul.bf16.gmra.mxu0 %v1391
    %v6736 = vpop.f32.mrf.mxu0
    %v6737 = vadd.f32 %v1988, %v6736
    %v6738 = vpop.f32.mrf.mxu0
    %v6739 = vadd.f32 %v1988, %v6738
    %6740 = vmatmul.bf16.gmra.mxu0 %v1399
    %v6741 = vpop.f32.mrf.mxu0
    %v6742 = vadd.f32 %v1988, %v6741
    %v6743 = vpop.f32.mrf.mxu0
    %v6744 = vadd.f32 %v1988, %v6743
    %6745 = vmatmul.bf16.gmra.mxu0 %v1407
    %v6746 = vpop.f32.mrf.mxu0
    %v6747 = vadd.f32 %v1988, %v6746
    %v6748 = vpop.f32.mrf.mxu0
    %v6749 = vadd.f32 %v1988, %v6748
    %6750 = vmatmul.bf16.gmra.mxu0 %v1415
    %v6751 = vpop.f32.mrf.mxu0
    %v6752 = vadd.f32 %v1988, %v6751
    %v6753 = vpop.f32.mrf.mxu0
    %v6754 = vadd.f32 %v1988, %v6753
    %6755 = vmatmul.bf16.gmra.mxu0 %v1423
    %v6756 = vpop.f32.mrf.mxu0
    %v6757 = vadd.f32 %v1988, %v6756
    %v6758 = vpop.f32.mrf.mxu0
    %v6759 = vadd.f32 %v1988, %v6758
    %6760 = vmatmul.bf16.gmra.mxu0 %v1431
    %v6761 = vpop.f32.mrf.mxu0
    %v6762 = vadd.f32 %v1988, %v6761
    %v6763 = vpop.f32.mrf.mxu0
    %v6764 = vadd.f32 %v1988, %v6763
    %6765 = vmatmul.bf16.gmra.mxu0 %v1439
    %v6766 = vpop.f32.mrf.mxu0
    %v6767 = vadd.f32 %v1988, %v6766
    %v6768 = vpop.f32.mrf.mxu0
    %v6769 = vadd.f32 %v1988, %v6768
    %6770 = vmatmul.bf16.gmra.mxu0 %v1447
    %v6771 = vpop.f32.mrf.mxu0
    %v6772 = vadd.f32 %v1988, %v6771
    %v6773 = vpop.f32.mrf.mxu0
    %v6774 = vadd.f32 %v1988, %v6773
    %6775 = vmatmul.bf16.gmra.mxu0 %v1455
    %v6776 = vpop.f32.mrf.mxu0
    %v6777 = vadd.f32 %v1988, %v6776
    %v6778 = vpop.f32.mrf.mxu0
    %v6779 = vadd.f32 %v1988, %v6778
    %6780 = vmatmul.bf16.gmra.mxu0 %v1463
    %v6781 = vpop.f32.mrf.mxu0
    %v6782 = vadd.f32 %v1988, %v6781
    %v6783 = vpop.f32.mrf.mxu0
    %v6784 = vadd.f32 %v1988, %v6783
    %6785 = vdwg.mxu0
    %6786 = vmatpush.bf16.msra.mxu0 %v3660
    %6787 = vmatpush.bf16.msra.mxu0 %v3652
    %6788 = vmatpush.bf16.msra.mxu0 %v3644
    %6789 = vmatpush.bf16.msra.mxu0 %v3636
    %6790 = vmatpush.bf16.msra.mxu0 %v3628
    %6791 = vmatpush.bf16.msra.mxu0 %v3620
    %6792 = vmatpush.bf16.msra.mxu0 %v3612
    %6793 = vmatpush.bf16.msra.mxu0 %v3604
    %6794 = vmatmul.bf16.gmra.mxu0 %v1344
    %v6795 = vpop.f32.mrf.mxu0
    %v6796 = vadd.f32 %v6707, %v6795
    %v6797 = vpop.f32.mrf.mxu0
    %v6798 = vadd.f32 %v6709, %v6797
    %6799 = vmatmul.bf16.gmra.mxu0 %v1352
    %v6800 = vpop.f32.mrf.mxu0
    %v6801 = vadd.f32 %v6712, %v6800
    %v6802 = vpop.f32.mrf.mxu0
    %v6803 = vadd.f32 %v6714, %v6802
    %6804 = vmatmul.bf16.gmra.mxu0 %v1360
    %v6805 = vpop.f32.mrf.mxu0
    %v6806 = vadd.f32 %v6717, %v6805
    %v6807 = vpop.f32.mrf.mxu0
    %v6808 = vadd.f32 %v6719, %v6807
    %6809 = vmatmul.bf16.gmra.mxu0 %v1368
    %v6810 = vpop.f32.mrf.mxu0
    %v6811 = vadd.f32 %v6722, %v6810
    %v6812 = vpop.f32.mrf.mxu0
    %v6813 = vadd.f32 %v6724, %v6812
    %6814 = vmatmul.bf16.gmra.mxu0 %v1376
    %v6815 = vpop.f32.mrf.mxu0
    %v6816 = vadd.f32 %v6727, %v6815
    %v6817 = vpop.f32.mrf.mxu0
    %v6818 = vadd.f32 %v6729, %v6817
    %6819 = vmatmul.bf16.gmra.mxu0 %v1384
    %v6820 = vpop.f32.mrf.mxu0
    %v6821 = vadd.f32 %v6732, %v6820
    %v6822 = vpop.f32.mrf.mxu0
    %v6823 = vadd.f32 %v6734, %v6822
    %6824 = vmatmul.bf16.gmra.mxu0 %v1392
    %v6825 = vpop.f32.mrf.mxu0
    %v6826 = vadd.f32 %v6737, %v6825
    %v6827 = vpop.f32.mrf.mxu0
    %v6828 = vadd.f32 %v6739, %v6827
    %6829 = vmatmul.bf16.gmra.mxu0 %v1400
    %v6830 = vpop.f32.mrf.mxu0
    %v6831 = vadd.f32 %v6742, %v6830
    %v6832 = vpop.f32.mrf.mxu0
    %v6833 = vadd.f32 %v6744, %v6832
    %6834 = vmatmul.bf16.gmra.mxu0 %v1408
    %v6835 = vpop.f32.mrf.mxu0
    %v6836 = vadd.f32 %v6747, %v6835
    %v6837 = vpop.f32.mrf.mxu0
    %v6838 = vadd.f32 %v6749, %v6837
    %6839 = vmatmul.bf16.gmra.mxu0 %v1416
    %v6840 = vpop.f32.mrf.mxu0
    %v6841 = vadd.f32 %v6752, %v6840
    %v6842 = vpop.f32.mrf.mxu0
    %v6843 = vadd.f32 %v6754, %v6842
    %6844 = vmatmul.bf16.gmra.mxu0 %v1424
    %v6845 = vpop.f32.mrf.mxu0
    %v6846 = vadd.f32 %v6757, %v6845
    %v6847 = vpop.f32.mrf.mxu0
    %v6848 = vadd.f32 %v6759, %v6847
    %6849 = vmatmul.bf16.gmra.mxu0 %v1432
    %v6850 = vpop.f32.mrf.mxu0
    %v6851 = vadd.f32 %v6762, %v6850
    %v6852 = vpop.f32.mrf.mxu0
    %v6853 = vadd.f32 %v6764, %v6852
    %6854 = vmatmul.bf16.gmra.mxu0 %v1440
    %v6855 = vpop.f32.mrf.mxu0
    %v6856 = vadd.f32 %v6767, %v6855
    %v6857 = vpop.f32.mrf.mxu0
    %v6858 = vadd.f32 %v6769, %v6857
    %6859 = vmatmul.bf16.gmra.mxu0 %v1448
    %v6860 = vpop.f32.mrf.mxu0
    %v6861 = vadd.f32 %v6772, %v6860
    %v6862 = vpop.f32.mrf.mxu0
    %v6863 = vadd.f32 %v6774, %v6862
    %6864 = vmatmul.bf16.gmra.mxu0 %v1456
    %v6865 = vpop.f32.mrf.mxu0
    %v6866 = vadd.f32 %v6777, %v6865
    %v6867 = vpop.f32.mrf.mxu0
    %v6868 = vadd.f32 %v6779, %v6867
    %6869 = vmatmul.bf16.gmra.mxu0 %v1464
    %v6870 = vpop.f32.mrf.mxu0
    %v6871 = vadd.f32 %v6782, %v6870
    %v6872 = vpop.f32.mrf.mxu0
    %v6873 = vadd.f32 %v6784, %v6872
    %6874 = vdwg.mxu0
    %6875 = vmatpush.bf16.msra.mxu0 %v3724
    %6876 = vmatpush.bf16.msra.mxu0 %v3716
    %6877 = vmatpush.bf16.msra.mxu0 %v3708
    %6878 = vmatpush.bf16.msra.mxu0 %v3700
    %6879 = vmatpush.bf16.msra.mxu0 %v3692
    %6880 = vmatpush.bf16.msra.mxu0 %v3684
    %6881 = vmatpush.bf16.msra.mxu0 %v3676
    %6882 = vmatpush.bf16.msra.mxu0 %v3668
    %6883 = vmatmul.bf16.gmra.mxu0 %v1345
    %v6884 = vpop.f32.mrf.mxu0
    %v6885 = vadd.f32 %v6796, %v6884
    %v6886 = vpop.f32.mrf.mxu0
    %v6887 = vadd.f32 %v6798, %v6886
    %6888 = vmatmul.bf16.gmra.mxu0 %v1353
    %v6889 = vpop.f32.mrf.mxu0
    %v6890 = vadd.f32 %v6801, %v6889
    %v6891 = vpop.f32.mrf.mxu0
    %v6892 = vadd.f32 %v6803, %v6891
    %6893 = vmatmul.bf16.gmra.mxu0 %v1361
    %v6894 = vpop.f32.mrf.mxu0
    %v6895 = vadd.f32 %v6806, %v6894
    %v6896 = vpop.f32.mrf.mxu0
    %v6897 = vadd.f32 %v6808, %v6896
    %6898 = vmatmul.bf16.gmra.mxu0 %v1369
    %v6899 = vpop.f32.mrf.mxu0
    %v6900 = vadd.f32 %v6811, %v6899
    %v6901 = vpop.f32.mrf.mxu0
    %v6902 = vadd.f32 %v6813, %v6901
    %6903 = vmatmul.bf16.gmra.mxu0 %v1377
    %v6904 = vpop.f32.mrf.mxu0
    %v6905 = vadd.f32 %v6816, %v6904
    %v6906 = vpop.f32.mrf.mxu0
    %v6907 = vadd.f32 %v6818, %v6906
    %6908 = vmatmul.bf16.gmra.mxu0 %v1385
    %v6909 = vpop.f32.mrf.mxu0
    %v6910 = vadd.f32 %v6821, %v6909
    %v6911 = vpop.f32.mrf.mxu0
    %v6912 = vadd.f32 %v6823, %v6911
    %6913 = vmatmul.bf16.gmra.mxu0 %v1393
    %v6914 = vpop.f32.mrf.mxu0
    %v6915 = vadd.f32 %v6826, %v6914
    %v6916 = vpop.f32.mrf.mxu0
    %v6917 = vadd.f32 %v6828, %v6916
    %6918 = vmatmul.bf16.gmra.mxu0 %v1401
    %v6919 = vpop.f32.mrf.mxu0
    %v6920 = vadd.f32 %v6831, %v6919
    %v6921 = vpop.f32.mrf.mxu0
    %v6922 = vadd.f32 %v6833, %v6921
    %6923 = vmatmul.bf16.gmra.mxu0 %v1409
    %v6924 = vpop.f32.mrf.mxu0
    %v6925 = vadd.f32 %v6836, %v6924
    %v6926 = vpop.f32.mrf.mxu0
    %v6927 = vadd.f32 %v6838, %v6926
    %6928 = vmatmul.bf16.gmra.mxu0 %v1417
    %v6929 = vpop.f32.mrf.mxu0
    %v6930 = vadd.f32 %v6841, %v6929
    %v6931 = vpop.f32.mrf.mxu0
    %v6932 = vadd.f32 %v6843, %v6931
    %6933 = vmatmul.bf16.gmra.mxu0 %v1425
    %v6934 = vpop.f32.mrf.mxu0
    %v6935 = vadd.f32 %v6846, %v6934
    %v6936 = vpop.f32.mrf.mxu0
    %v6937 = vadd.f32 %v6848, %v6936
    %6938 = vmatmul.bf16.gmra.mxu0 %v1433
    %v6939 = vpop.f32.mrf.mxu0
    %v6940 = vadd.f32 %v6851, %v6939
    %v6941 = vpop.f32.mrf.mxu0
    %v6942 = vadd.f32 %v6853, %v6941
    %6943 = vmatmul.bf16.gmra.mxu0 %v1441
    %v6944 = vpop.f32.mrf.mxu0
    %v6945 = vadd.f32 %v6856, %v6944
    %v6946 = vpop.f32.mrf.mxu0
    %v6947 = vadd.f32 %v6858, %v6946
    %6948 = vmatmul.bf16.gmra.mxu0 %v1449
    %v6949 = vpop.f32.mrf.mxu0
    %v6950 = vadd.f32 %v6861, %v6949
    %v6951 = vpop.f32.mrf.mxu0
    %v6952 = vadd.f32 %v6863, %v6951
    %6953 = vmatmul.bf16.gmra.mxu0 %v1457
    %v6954 = vpop.f32.mrf.mxu0
    %v6955 = vadd.f32 %v6866, %v6954
    %v6956 = vpop.f32.mrf.mxu0
    %v6957 = vadd.f32 %v6868, %v6956
    %6958 = vmatmul.bf16.gmra.mxu0 %v1465
    %v6959 = vpop.f32.mrf.mxu0
    %v6960 = vadd.f32 %v6871, %v6959
    %v6961 = vpop.f32.mrf.mxu0
    %v6962 = vadd.f32 %v6873, %v6961
    %6963 = vdwg.mxu0
    %6964 = vmatpush.bf16.msra.mxu0 %v3788
    %6965 = vmatpush.bf16.msra.mxu0 %v3780
    %6966 = vmatpush.bf16.msra.mxu0 %v3772
    %6967 = vmatpush.bf16.msra.mxu0 %v3764
    %6968 = vmatpush.bf16.msra.mxu0 %v3756
    %6969 = vmatpush.bf16.msra.mxu0 %v3748
    %6970 = vmatpush.bf16.msra.mxu0 %v3740
    %6971 = vmatpush.bf16.msra.mxu0 %v3732
    %6972 = vmatmul.bf16.gmra.mxu0 %v1346
    %v6973 = vpop.f32.mrf.mxu0
    %v6974 = vadd.f32 %v6885, %v6973
    %v6975 = vpop.f32.mrf.mxu0
    %v6976 = vadd.f32 %v6887, %v6975
    %6977 = vmatmul.bf16.gmra.mxu0 %v1354
    %v6978 = vpop.f32.mrf.mxu0
    %v6979 = vadd.f32 %v6890, %v6978
    %v6980 = vpop.f32.mrf.mxu0
    %v6981 = vadd.f32 %v6892, %v6980
    %6982 = vmatmul.bf16.gmra.mxu0 %v1362
    %v6983 = vpop.f32.mrf.mxu0
    %v6984 = vadd.f32 %v6895, %v6983
    %v6985 = vpop.f32.mrf.mxu0
    %v6986 = vadd.f32 %v6897, %v6985
    %6987 = vmatmul.bf16.gmra.mxu0 %v1370
    %v6988 = vpop.f32.mrf.mxu0
    %v6989 = vadd.f32 %v6900, %v6988
    %v6990 = vpop.f32.mrf.mxu0
    %v6991 = vadd.f32 %v6902, %v6990
    %6992 = vmatmul.bf16.gmra.mxu0 %v1378
    %v6993 = vpop.f32.mrf.mxu0
    %v6994 = vadd.f32 %v6905, %v6993
    %v6995 = vpop.f32.mrf.mxu0
    %v6996 = vadd.f32 %v6907, %v6995
    %6997 = vmatmul.bf16.gmra.mxu0 %v1386
    %v6998 = vpop.f32.mrf.mxu0
    %v6999 = vadd.f32 %v6910, %v6998
    %v7000 = vpop.f32.mrf.mxu0
    %v7001 = vadd.f32 %v6912, %v7000
    %7002 = vmatmul.bf16.gmra.mxu0 %v1394
    %v7003 = vpop.f32.mrf.mxu0
    %v7004 = vadd.f32 %v6915, %v7003
    %v7005 = vpop.f32.mrf.mxu0
    %v7006 = vadd.f32 %v6917, %v7005
    %7007 = vmatmul.bf16.gmra.mxu0 %v1402
    %v7008 = vpop.f32.mrf.mxu0
    %v7009 = vadd.f32 %v6920, %v7008
    %v7010 = vpop.f32.mrf.mxu0
    %v7011 = vadd.f32 %v6922, %v7010
    %7012 = vmatmul.bf16.gmra.mxu0 %v1410
    %v7013 = vpop.f32.mrf.mxu0
    %v7014 = vadd.f32 %v6925, %v7013
    %v7015 = vpop.f32.mrf.mxu0
    %v7016 = vadd.f32 %v6927, %v7015
    %7017 = vmatmul.bf16.gmra.mxu0 %v1418
    %v7018 = vpop.f32.mrf.mxu0
    %v7019 = vadd.f32 %v6930, %v7018
    %v7020 = vpop.f32.mrf.mxu0
    %v7021 = vadd.f32 %v6932, %v7020
    %7022 = vmatmul.bf16.gmra.mxu0 %v1426
    %v7023 = vpop.f32.mrf.mxu0
    %v7024 = vadd.f32 %v6935, %v7023
    %v7025 = vpop.f32.mrf.mxu0
    %v7026 = vadd.f32 %v6937, %v7025
    %7027 = vmatmul.bf16.gmra.mxu0 %v1434
    %v7028 = vpop.f32.mrf.mxu0
    %v7029 = vadd.f32 %v6940, %v7028
    %v7030 = vpop.f32.mrf.mxu0
    %v7031 = vadd.f32 %v6942, %v7030
    %7032 = vmatmul.bf16.gmra.mxu0 %v1442
    %v7033 = vpop.f32.mrf.mxu0
    %v7034 = vadd.f32 %v6945, %v7033
    %v7035 = vpop.f32.mrf.mxu0
    %v7036 = vadd.f32 %v6947, %v7035
    %7037 = vmatmul.bf16.gmra.mxu0 %v1450
    %v7038 = vpop.f32.mrf.mxu0
    %v7039 = vadd.f32 %v6950, %v7038
    %v7040 = vpop.f32.mrf.mxu0
    %v7041 = vadd.f32 %v6952, %v7040
    %7042 = vmatmul.bf16.gmra.mxu0 %v1458
    %v7043 = vpop.f32.mrf.mxu0
    %v7044 = vadd.f32 %v6955, %v7043
    %v7045 = vpop.f32.mrf.mxu0
    %v7046 = vadd.f32 %v6957, %v7045
    %7047 = vmatmul.bf16.gmra.mxu0 %v1466
    %v7048 = vpop.f32.mrf.mxu0
    %v7049 = vadd.f32 %v6960, %v7048
    %v7050 = vpop.f32.mrf.mxu0
    %v7051 = vadd.f32 %v6962, %v7050
    %7052 = vdwg.mxu0
    %7053 = vmatpush.bf16.msra.mxu0 %v3852
    %7054 = vmatpush.bf16.msra.mxu0 %v3844
    %7055 = vmatpush.bf16.msra.mxu0 %v3836
    %7056 = vmatpush.bf16.msra.mxu0 %v3828
    %7057 = vmatpush.bf16.msra.mxu0 %v3820
    %7058 = vmatpush.bf16.msra.mxu0 %v3812
    %7059 = vmatpush.bf16.msra.mxu0 %v3804
    %7060 = vmatpush.bf16.msra.mxu0 %v3796
    %7061 = vmatmul.bf16.gmra.mxu0 %v1347
    %v7062 = vpop.f32.mrf.mxu0
    %v7063 = vadd.f32 %v6974, %v7062
    %v7064 = vpop.f32.mrf.mxu0
    %v7065 = vadd.f32 %v6976, %v7064
    %7066 = vmatmul.bf16.gmra.mxu0 %v1355
    %v7067 = vpop.f32.mrf.mxu0
    %v7068 = vadd.f32 %v6979, %v7067
    %v7069 = vpop.f32.mrf.mxu0
    %v7070 = vadd.f32 %v6981, %v7069
    %7071 = vmatmul.bf16.gmra.mxu0 %v1363
    %v7072 = vpop.f32.mrf.mxu0
    %v7073 = vadd.f32 %v6984, %v7072
    %v7074 = vpop.f32.mrf.mxu0
    %v7075 = vadd.f32 %v6986, %v7074
    %7076 = vmatmul.bf16.gmra.mxu0 %v1371
    %v7077 = vpop.f32.mrf.mxu0
    %v7078 = vadd.f32 %v6989, %v7077
    %v7079 = vpop.f32.mrf.mxu0
    %v7080 = vadd.f32 %v6991, %v7079
    %7081 = vmatmul.bf16.gmra.mxu0 %v1379
    %v7082 = vpop.f32.mrf.mxu0
    %v7083 = vadd.f32 %v6994, %v7082
    %v7084 = vpop.f32.mrf.mxu0
    %v7085 = vadd.f32 %v6996, %v7084
    %7086 = vmatmul.bf16.gmra.mxu0 %v1387
    %v7087 = vpop.f32.mrf.mxu0
    %v7088 = vadd.f32 %v6999, %v7087
    %v7089 = vpop.f32.mrf.mxu0
    %v7090 = vadd.f32 %v7001, %v7089
    %7091 = vmatmul.bf16.gmra.mxu0 %v1395
    %v7092 = vpop.f32.mrf.mxu0
    %v7093 = vadd.f32 %v7004, %v7092
    %v7094 = vpop.f32.mrf.mxu0
    %v7095 = vadd.f32 %v7006, %v7094
    %7096 = vmatmul.bf16.gmra.mxu0 %v1403
    %v7097 = vpop.f32.mrf.mxu0
    %v7098 = vadd.f32 %v7009, %v7097
    %v7099 = vpop.f32.mrf.mxu0
    %v7100 = vadd.f32 %v7011, %v7099
    %7101 = vmatmul.bf16.gmra.mxu0 %v1411
    %v7102 = vpop.f32.mrf.mxu0
    %v7103 = vadd.f32 %v7014, %v7102
    %v7104 = vpop.f32.mrf.mxu0
    %v7105 = vadd.f32 %v7016, %v7104
    %7106 = vmatmul.bf16.gmra.mxu0 %v1419
    %v7107 = vpop.f32.mrf.mxu0
    %v7108 = vadd.f32 %v7019, %v7107
    %v7109 = vpop.f32.mrf.mxu0
    %v7110 = vadd.f32 %v7021, %v7109
    %7111 = vmatmul.bf16.gmra.mxu0 %v1427
    %v7112 = vpop.f32.mrf.mxu0
    %v7113 = vadd.f32 %v7024, %v7112
    %v7114 = vpop.f32.mrf.mxu0
    %v7115 = vadd.f32 %v7026, %v7114
    %7116 = vmatmul.bf16.gmra.mxu0 %v1435
    %v7117 = vpop.f32.mrf.mxu0
    %v7118 = vadd.f32 %v7029, %v7117
    %v7119 = vpop.f32.mrf.mxu0
    %v7120 = vadd.f32 %v7031, %v7119
    %7121 = vmatmul.bf16.gmra.mxu0 %v1443
    %v7122 = vpop.f32.mrf.mxu0
    %v7123 = vadd.f32 %v7034, %v7122
    %v7124 = vpop.f32.mrf.mxu0
    %v7125 = vadd.f32 %v7036, %v7124
    %7126 = vmatmul.bf16.gmra.mxu0 %v1451
    %v7127 = vpop.f32.mrf.mxu0
    %v7128 = vadd.f32 %v7039, %v7127
    %v7129 = vpop.f32.mrf.mxu0
    %v7130 = vadd.f32 %v7041, %v7129
    %7131 = vmatmul.bf16.gmra.mxu0 %v1459
    %v7132 = vpop.f32.mrf.mxu0
    %v7133 = vadd.f32 %v7044, %v7132
    %v7134 = vpop.f32.mrf.mxu0
    %v7135 = vadd.f32 %v7046, %v7134
    %7136 = vmatmul.bf16.gmra.mxu0 %v1467
    %v7137 = vpop.f32.mrf.mxu0
    %v7138 = vadd.f32 %v7049, %v7137
    %v7139 = vpop.f32.mrf.mxu0
    %v7140 = vadd.f32 %v7051, %v7139
    %7141 = vdwg.mxu0
    %7142 = vmatpush.bf16.msra.mxu0 %v3916
    %7143 = vmatpush.bf16.msra.mxu0 %v3908
    %7144 = vmatpush.bf16.msra.mxu0 %v3900
    %7145 = vmatpush.bf16.msra.mxu0 %v3892
    %7146 = vmatpush.bf16.msra.mxu0 %v3884
    %7147 = vmatpush.bf16.msra.mxu0 %v3876
    %7148 = vmatpush.bf16.msra.mxu0 %v3868
    %7149 = vmatpush.bf16.msra.mxu0 %v3860
    %7150 = vmatmul.bf16.gmra.mxu0 %v1348
    %v7151 = vpop.f32.mrf.mxu0
    %v7152 = vadd.f32 %v7063, %v7151
    %v7153 = vpop.f32.mrf.mxu0
    %v7154 = vadd.f32 %v7065, %v7153
    %7155 = vmatmul.bf16.gmra.mxu0 %v1356
    %v7156 = vpop.f32.mrf.mxu0
    %v7157 = vadd.f32 %v7068, %v7156
    %v7158 = vpop.f32.mrf.mxu0
    %v7159 = vadd.f32 %v7070, %v7158
    %7160 = vmatmul.bf16.gmra.mxu0 %v1364
    %v7161 = vpop.f32.mrf.mxu0
    %v7162 = vadd.f32 %v7073, %v7161
    %v7163 = vpop.f32.mrf.mxu0
    %v7164 = vadd.f32 %v7075, %v7163
    %7165 = vmatmul.bf16.gmra.mxu0 %v1372
    %v7166 = vpop.f32.mrf.mxu0
    %v7167 = vadd.f32 %v7078, %v7166
    %v7168 = vpop.f32.mrf.mxu0
    %v7169 = vadd.f32 %v7080, %v7168
    %7170 = vmatmul.bf16.gmra.mxu0 %v1380
    %v7171 = vpop.f32.mrf.mxu0
    %v7172 = vadd.f32 %v7083, %v7171
    %v7173 = vpop.f32.mrf.mxu0
    %v7174 = vadd.f32 %v7085, %v7173
    %7175 = vmatmul.bf16.gmra.mxu0 %v1388
    %v7176 = vpop.f32.mrf.mxu0
    %v7177 = vadd.f32 %v7088, %v7176
    %v7178 = vpop.f32.mrf.mxu0
    %v7179 = vadd.f32 %v7090, %v7178
    %7180 = vmatmul.bf16.gmra.mxu0 %v1396
    %v7181 = vpop.f32.mrf.mxu0
    %v7182 = vadd.f32 %v7093, %v7181
    %v7183 = vpop.f32.mrf.mxu0
    %v7184 = vadd.f32 %v7095, %v7183
    %7185 = vmatmul.bf16.gmra.mxu0 %v1404
    %v7186 = vpop.f32.mrf.mxu0
    %v7187 = vadd.f32 %v7098, %v7186
    %v7188 = vpop.f32.mrf.mxu0
    %v7189 = vadd.f32 %v7100, %v7188
    %7190 = vmatmul.bf16.gmra.mxu0 %v1412
    %v7191 = vpop.f32.mrf.mxu0
    %v7192 = vadd.f32 %v7103, %v7191
    %v7193 = vpop.f32.mrf.mxu0
    %v7194 = vadd.f32 %v7105, %v7193
    %7195 = vmatmul.bf16.gmra.mxu0 %v1420
    %v7196 = vpop.f32.mrf.mxu0
    %v7197 = vadd.f32 %v7108, %v7196
    %v7198 = vpop.f32.mrf.mxu0
    %v7199 = vadd.f32 %v7110, %v7198
    %7200 = vmatmul.bf16.gmra.mxu0 %v1428
    %v7201 = vpop.f32.mrf.mxu0
    %v7202 = vadd.f32 %v7113, %v7201
    %v7203 = vpop.f32.mrf.mxu0
    %v7204 = vadd.f32 %v7115, %v7203
    %7205 = vmatmul.bf16.gmra.mxu0 %v1436
    %v7206 = vpop.f32.mrf.mxu0
    %v7207 = vadd.f32 %v7118, %v7206
    %v7208 = vpop.f32.mrf.mxu0
    %v7209 = vadd.f32 %v7120, %v7208
    %7210 = vmatmul.bf16.gmra.mxu0 %v1444
    %v7211 = vpop.f32.mrf.mxu0
    %v7212 = vadd.f32 %v7123, %v7211
    %v7213 = vpop.f32.mrf.mxu0
    %v7214 = vadd.f32 %v7125, %v7213
    %7215 = vmatmul.bf16.gmra.mxu0 %v1452
    %v7216 = vpop.f32.mrf.mxu0
    %v7217 = vadd.f32 %v7128, %v7216
    %v7218 = vpop.f32.mrf.mxu0
    %v7219 = vadd.f32 %v7130, %v7218
    %7220 = vmatmul.bf16.gmra.mxu0 %v1460
    %v7221 = vpop.f32.mrf.mxu0
    %v7222 = vadd.f32 %v7133, %v7221
    %v7223 = vpop.f32.mrf.mxu0
    %v7224 = vadd.f32 %v7135, %v7223
    %7225 = vmatmul.bf16.gmra.mxu0 %v1468
    %v7226 = vpop.f32.mrf.mxu0
    %v7227 = vadd.f32 %v7138, %v7226
    %v7228 = vpop.f32.mrf.mxu0
    %v7229 = vadd.f32 %v7140, %v7228
    %7230 = vdwg.mxu0
    %7231 = vmatpush.bf16.msra.mxu0 %v3980
    %7232 = vmatpush.bf16.msra.mxu0 %v3972
    %7233 = vmatpush.bf16.msra.mxu0 %v3964
    %7234 = vmatpush.bf16.msra.mxu0 %v3956
    %7235 = vmatpush.bf16.msra.mxu0 %v3948
    %7236 = vmatpush.bf16.msra.mxu0 %v3940
    %7237 = vmatpush.bf16.msra.mxu0 %v3932
    %7238 = vmatpush.bf16.msra.mxu0 %v3924
    %7239 = vmatmul.bf16.gmra.mxu0 %v1349
    %v7240 = vpop.f32.mrf.mxu0
    %v7241 = vadd.f32 %v7152, %v7240
    %v7242 = vpop.f32.mrf.mxu0
    %v7243 = vadd.f32 %v7154, %v7242
    %7244 = vmatmul.bf16.gmra.mxu0 %v1357
    %v7245 = vpop.f32.mrf.mxu0
    %v7246 = vadd.f32 %v7157, %v7245
    %v7247 = vpop.f32.mrf.mxu0
    %v7248 = vadd.f32 %v7159, %v7247
    %7249 = vmatmul.bf16.gmra.mxu0 %v1365
    %v7250 = vpop.f32.mrf.mxu0
    %v7251 = vadd.f32 %v7162, %v7250
    %v7252 = vpop.f32.mrf.mxu0
    %v7253 = vadd.f32 %v7164, %v7252
    %7254 = vmatmul.bf16.gmra.mxu0 %v1373
    %v7255 = vpop.f32.mrf.mxu0
    %v7256 = vadd.f32 %v7167, %v7255
    %v7257 = vpop.f32.mrf.mxu0
    %v7258 = vadd.f32 %v7169, %v7257
    %7259 = vmatmul.bf16.gmra.mxu0 %v1381
    %v7260 = vpop.f32.mrf.mxu0
    %v7261 = vadd.f32 %v7172, %v7260
    %v7262 = vpop.f32.mrf.mxu0
    %v7263 = vadd.f32 %v7174, %v7262
    %7264 = vmatmul.bf16.gmra.mxu0 %v1389
    %v7265 = vpop.f32.mrf.mxu0
    %v7266 = vadd.f32 %v7177, %v7265
    %v7267 = vpop.f32.mrf.mxu0
    %v7268 = vadd.f32 %v7179, %v7267
    %7269 = vmatmul.bf16.gmra.mxu0 %v1397
    %v7270 = vpop.f32.mrf.mxu0
    %v7271 = vadd.f32 %v7182, %v7270
    %v7272 = vpop.f32.mrf.mxu0
    %v7273 = vadd.f32 %v7184, %v7272
    %7274 = vmatmul.bf16.gmra.mxu0 %v1405
    %v7275 = vpop.f32.mrf.mxu0
    %v7276 = vadd.f32 %v7187, %v7275
    %v7277 = vpop.f32.mrf.mxu0
    %v7278 = vadd.f32 %v7189, %v7277
    %7279 = vmatmul.bf16.gmra.mxu0 %v1413
    %v7280 = vpop.f32.mrf.mxu0
    %v7281 = vadd.f32 %v7192, %v7280
    %v7282 = vpop.f32.mrf.mxu0
    %v7283 = vadd.f32 %v7194, %v7282
    %7284 = vmatmul.bf16.gmra.mxu0 %v1421
    %v7285 = vpop.f32.mrf.mxu0
    %v7286 = vadd.f32 %v7197, %v7285
    %v7287 = vpop.f32.mrf.mxu0
    %v7288 = vadd.f32 %v7199, %v7287
    %7289 = vmatmul.bf16.gmra.mxu0 %v1429
    %v7290 = vpop.f32.mrf.mxu0
    %v7291 = vadd.f32 %v7202, %v7290
    %v7292 = vpop.f32.mrf.mxu0
    %v7293 = vadd.f32 %v7204, %v7292
    %7294 = vmatmul.bf16.gmra.mxu0 %v1437
    %v7295 = vpop.f32.mrf.mxu0
    %v7296 = vadd.f32 %v7207, %v7295
    %v7297 = vpop.f32.mrf.mxu0
    %v7298 = vadd.f32 %v7209, %v7297
    %7299 = vmatmul.bf16.gmra.mxu0 %v1445
    %v7300 = vpop.f32.mrf.mxu0
    %v7301 = vadd.f32 %v7212, %v7300
    %v7302 = vpop.f32.mrf.mxu0
    %v7303 = vadd.f32 %v7214, %v7302
    %7304 = vmatmul.bf16.gmra.mxu0 %v1453
    %v7305 = vpop.f32.mrf.mxu0
    %v7306 = vadd.f32 %v7217, %v7305
    %v7307 = vpop.f32.mrf.mxu0
    %v7308 = vadd.f32 %v7219, %v7307
    %7309 = vmatmul.bf16.gmra.mxu0 %v1461
    %v7310 = vpop.f32.mrf.mxu0
    %v7311 = vadd.f32 %v7222, %v7310
    %v7312 = vpop.f32.mrf.mxu0
    %v7313 = vadd.f32 %v7224, %v7312
    %7314 = vmatmul.bf16.gmra.mxu0 %v1469
    %v7315 = vpop.f32.mrf.mxu0
    %v7316 = vadd.f32 %v7227, %v7315
    %v7317 = vpop.f32.mrf.mxu0
    %v7318 = vadd.f32 %v7229, %v7317
    %7319 = vdwg.mxu0
    %7320 = vmatpush.bf16.msra.mxu0 %v4044
    %7321 = vmatpush.bf16.msra.mxu0 %v4036
    %7322 = vmatpush.bf16.msra.mxu0 %v4028
    %7323 = vmatpush.bf16.msra.mxu0 %v4020
    %7324 = vmatpush.bf16.msra.mxu0 %v4012
    %7325 = vmatpush.bf16.msra.mxu0 %v4004
    %7326 = vmatpush.bf16.msra.mxu0 %v3996
    %7327 = vmatpush.bf16.msra.mxu0 %v3988
    %7328 = vmatmul.bf16.gmra.mxu0 %v1350
    %v7329 = vpop.f32.mrf.mxu0
    %v7330 = vadd.f32 %v7241, %v7329
    %v7331 = vpop.f32.mrf.mxu0
    %v7332 = vadd.f32 %v7243, %v7331
    %7333 = vmatmul.bf16.gmra.mxu0 %v1358
    %v7334 = vpop.f32.mrf.mxu0
    %v7335 = vadd.f32 %v7246, %v7334
    %v7336 = vpop.f32.mrf.mxu0
    %v7337 = vadd.f32 %v7248, %v7336
    %7338 = vmatmul.bf16.gmra.mxu0 %v1366
    %v7339 = vpop.f32.mrf.mxu0
    %v7340 = vadd.f32 %v7251, %v7339
    %v7341 = vpop.f32.mrf.mxu0
    %v7342 = vadd.f32 %v7253, %v7341
    %7343 = vmatmul.bf16.gmra.mxu0 %v1374
    %v7344 = vpop.f32.mrf.mxu0
    %v7345 = vadd.f32 %v7256, %v7344
    %v7346 = vpop.f32.mrf.mxu0
    %v7347 = vadd.f32 %v7258, %v7346
    %7348 = vmatmul.bf16.gmra.mxu0 %v1382
    %v7349 = vpop.f32.mrf.mxu0
    %v7350 = vadd.f32 %v7261, %v7349
    %v7351 = vpop.f32.mrf.mxu0
    %v7352 = vadd.f32 %v7263, %v7351
    %7353 = vmatmul.bf16.gmra.mxu0 %v1390
    %v7354 = vpop.f32.mrf.mxu0
    %v7355 = vadd.f32 %v7266, %v7354
    %v7356 = vpop.f32.mrf.mxu0
    %v7357 = vadd.f32 %v7268, %v7356
    %7358 = vmatmul.bf16.gmra.mxu0 %v1398
    %v7359 = vpop.f32.mrf.mxu0
    %v7360 = vadd.f32 %v7271, %v7359
    %v7361 = vpop.f32.mrf.mxu0
    %v7362 = vadd.f32 %v7273, %v7361
    %7363 = vmatmul.bf16.gmra.mxu0 %v1406
    %v7364 = vpop.f32.mrf.mxu0
    %v7365 = vadd.f32 %v7276, %v7364
    %v7366 = vpop.f32.mrf.mxu0
    %v7367 = vadd.f32 %v7278, %v7366
    %7368 = vmatmul.bf16.gmra.mxu0 %v1414
    %v7369 = vpop.f32.mrf.mxu0
    %v7370 = vadd.f32 %v7281, %v7369
    %v7371 = vpop.f32.mrf.mxu0
    %v7372 = vadd.f32 %v7283, %v7371
    %7373 = vmatmul.bf16.gmra.mxu0 %v1422
    %v7374 = vpop.f32.mrf.mxu0
    %v7375 = vadd.f32 %v7286, %v7374
    %v7376 = vpop.f32.mrf.mxu0
    %v7377 = vadd.f32 %v7288, %v7376
    %7378 = vmatmul.bf16.gmra.mxu0 %v1430
    %v7379 = vpop.f32.mrf.mxu0
    %v7380 = vadd.f32 %v7291, %v7379
    %v7381 = vpop.f32.mrf.mxu0
    %v7382 = vadd.f32 %v7293, %v7381
    %7383 = vmatmul.bf16.gmra.mxu0 %v1438
    %v7384 = vpop.f32.mrf.mxu0
    %v7385 = vadd.f32 %v7296, %v7384
    %v7386 = vpop.f32.mrf.mxu0
    %v7387 = vadd.f32 %v7298, %v7386
    %7388 = vmatmul.bf16.gmra.mxu0 %v1446
    %v7389 = vpop.f32.mrf.mxu0
    %v7390 = vadd.f32 %v7301, %v7389
    %v7391 = vpop.f32.mrf.mxu0
    %v7392 = vadd.f32 %v7303, %v7391
    %7393 = vmatmul.bf16.gmra.mxu0 %v1454
    %v7394 = vpop.f32.mrf.mxu0
    %v7395 = vadd.f32 %v7306, %v7394
    %v7396 = vpop.f32.mrf.mxu0
    %v7397 = vadd.f32 %v7308, %v7396
    %7398 = vmatmul.bf16.gmra.mxu0 %v1462
    %v7399 = vpop.f32.mrf.mxu0
    %v7400 = vadd.f32 %v7311, %v7399
    %v7401 = vpop.f32.mrf.mxu0
    %v7402 = vadd.f32 %v7313, %v7401
    %7403 = vmatmul.bf16.gmra.mxu0 %v1470
    %v7404 = vpop.f32.mrf.mxu0
    %v7405 = vadd.f32 %v7316, %v7404
    %v7406 = vpop.f32.mrf.mxu0
    %v7407 = vadd.f32 %v7318, %v7406
    %7408 = vdwg.mxu0
    %7409 = vmatpush.bf16.msra.mxu0 %v3597
    %7410 = vmatpush.bf16.msra.mxu0 %v3589
    %7411 = vmatpush.bf16.msra.mxu0 %v3581
    %7412 = vmatpush.bf16.msra.mxu0 %v3573
    %7413 = vmatpush.bf16.msra.mxu0 %v3565
    %7414 = vmatpush.bf16.msra.mxu0 %v3557
    %7415 = vmatpush.bf16.msra.mxu0 %v3549
    %7416 = vmatpush.bf16.msra.mxu0 %v3541
    %7417 = vmatmul.bf16.gmra.mxu0 %v1343
    %v7418 = vpop.f32.mrf.mxu0
    %v7419 = vadd.f32 %v1989, %v7418
    %v7420 = vpop.f32.mrf.mxu0
    %v7421 = vadd.f32 %v1989, %v7420
    %7422 = vmatmul.bf16.gmra.mxu0 %v1351
    %v7423 = vpop.f32.mrf.mxu0
    %v7424 = vadd.f32 %v1989, %v7423
    %v7425 = vpop.f32.mrf.mxu0
    %v7426 = vadd.f32 %v1989, %v7425
    %7427 = vmatmul.bf16.gmra.mxu0 %v1359
    %v7428 = vpop.f32.mrf.mxu0
    %v7429 = vadd.f32 %v1989, %v7428
    %v7430 = vpop.f32.mrf.mxu0
    %v7431 = vadd.f32 %v1989, %v7430
    %7432 = vmatmul.bf16.gmra.mxu0 %v1367
    %v7433 = vpop.f32.mrf.mxu0
    %v7434 = vadd.f32 %v1989, %v7433
    %v7435 = vpop.f32.mrf.mxu0
    %v7436 = vadd.f32 %v1989, %v7435
    %7437 = vmatmul.bf16.gmra.mxu0 %v1375
    %v7438 = vpop.f32.mrf.mxu0
    %v7439 = vadd.f32 %v1989, %v7438
    %v7440 = vpop.f32.mrf.mxu0
    %v7441 = vadd.f32 %v1989, %v7440
    %7442 = vmatmul.bf16.gmra.mxu0 %v1383
    %v7443 = vpop.f32.mrf.mxu0
    %v7444 = vadd.f32 %v1989, %v7443
    %v7445 = vpop.f32.mrf.mxu0
    %v7446 = vadd.f32 %v1989, %v7445
    %7447 = vmatmul.bf16.gmra.mxu0 %v1391
    %v7448 = vpop.f32.mrf.mxu0
    %v7449 = vadd.f32 %v1989, %v7448
    %v7450 = vpop.f32.mrf.mxu0
    %v7451 = vadd.f32 %v1989, %v7450
    %7452 = vmatmul.bf16.gmra.mxu0 %v1399
    %v7453 = vpop.f32.mrf.mxu0
    %v7454 = vadd.f32 %v1989, %v7453
    %v7455 = vpop.f32.mrf.mxu0
    %v7456 = vadd.f32 %v1989, %v7455
    %7457 = vmatmul.bf16.gmra.mxu0 %v1407
    %v7458 = vpop.f32.mrf.mxu0
    %v7459 = vadd.f32 %v1989, %v7458
    %v7460 = vpop.f32.mrf.mxu0
    %v7461 = vadd.f32 %v1989, %v7460
    %7462 = vmatmul.bf16.gmra.mxu0 %v1415
    %v7463 = vpop.f32.mrf.mxu0
    %v7464 = vadd.f32 %v1989, %v7463
    %v7465 = vpop.f32.mrf.mxu0
    %v7466 = vadd.f32 %v1989, %v7465
    %7467 = vmatmul.bf16.gmra.mxu0 %v1423
    %v7468 = vpop.f32.mrf.mxu0
    %v7469 = vadd.f32 %v1989, %v7468
    %v7470 = vpop.f32.mrf.mxu0
    %v7471 = vadd.f32 %v1989, %v7470
    %7472 = vmatmul.bf16.gmra.mxu0 %v1431
    %v7473 = vpop.f32.mrf.mxu0
    %v7474 = vadd.f32 %v1989, %v7473
    %v7475 = vpop.f32.mrf.mxu0
    %v7476 = vadd.f32 %v1989, %v7475
    %7477 = vmatmul.bf16.gmra.mxu0 %v1439
    %v7478 = vpop.f32.mrf.mxu0
    %v7479 = vadd.f32 %v1989, %v7478
    %v7480 = vpop.f32.mrf.mxu0
    %v7481 = vadd.f32 %v1989, %v7480
    %7482 = vmatmul.bf16.gmra.mxu0 %v1447
    %v7483 = vpop.f32.mrf.mxu0
    %v7484 = vadd.f32 %v1989, %v7483
    %v7485 = vpop.f32.mrf.mxu0
    %v7486 = vadd.f32 %v1989, %v7485
    %7487 = vmatmul.bf16.gmra.mxu0 %v1455
    %v7488 = vpop.f32.mrf.mxu0
    %v7489 = vadd.f32 %v1989, %v7488
    %v7490 = vpop.f32.mrf.mxu0
    %v7491 = vadd.f32 %v1989, %v7490
    %7492 = vmatmul.bf16.gmra.mxu0 %v1463
    %v7493 = vpop.f32.mrf.mxu0
    %v7494 = vadd.f32 %v1989, %v7493
    %v7495 = vpop.f32.mrf.mxu0
    %v7496 = vadd.f32 %v1989, %v7495
    %7497 = vdwg.mxu0
    %7498 = vmatpush.bf16.msra.mxu0 %v3661
    %7499 = vmatpush.bf16.msra.mxu0 %v3653
    %7500 = vmatpush.bf16.msra.mxu0 %v3645
    %7501 = vmatpush.bf16.msra.mxu0 %v3637
    %7502 = vmatpush.bf16.msra.mxu0 %v3629
    %7503 = vmatpush.bf16.msra.mxu0 %v3621
    %7504 = vmatpush.bf16.msra.mxu0 %v3613
    %7505 = vmatpush.bf16.msra.mxu0 %v3605
    %7506 = vmatmul.bf16.gmra.mxu0 %v1344
    %v7507 = vpop.f32.mrf.mxu0
    %v7508 = vadd.f32 %v7419, %v7507
    %v7509 = vpop.f32.mrf.mxu0
    %v7510 = vadd.f32 %v7421, %v7509
    %7511 = vmatmul.bf16.gmra.mxu0 %v1352
    %v7512 = vpop.f32.mrf.mxu0
    %v7513 = vadd.f32 %v7424, %v7512
    %v7514 = vpop.f32.mrf.mxu0
    %v7515 = vadd.f32 %v7426, %v7514
    %7516 = vmatmul.bf16.gmra.mxu0 %v1360
    %v7517 = vpop.f32.mrf.mxu0
    %v7518 = vadd.f32 %v7429, %v7517
    %v7519 = vpop.f32.mrf.mxu0
    %v7520 = vadd.f32 %v7431, %v7519
    %7521 = vmatmul.bf16.gmra.mxu0 %v1368
    %v7522 = vpop.f32.mrf.mxu0
    %v7523 = vadd.f32 %v7434, %v7522
    %v7524 = vpop.f32.mrf.mxu0
    %v7525 = vadd.f32 %v7436, %v7524
    %7526 = vmatmul.bf16.gmra.mxu0 %v1376
    %v7527 = vpop.f32.mrf.mxu0
    %v7528 = vadd.f32 %v7439, %v7527
    %v7529 = vpop.f32.mrf.mxu0
    %v7530 = vadd.f32 %v7441, %v7529
    %7531 = vmatmul.bf16.gmra.mxu0 %v1384
    %v7532 = vpop.f32.mrf.mxu0
    %v7533 = vadd.f32 %v7444, %v7532
    %v7534 = vpop.f32.mrf.mxu0
    %v7535 = vadd.f32 %v7446, %v7534
    %7536 = vmatmul.bf16.gmra.mxu0 %v1392
    %v7537 = vpop.f32.mrf.mxu0
    %v7538 = vadd.f32 %v7449, %v7537
    %v7539 = vpop.f32.mrf.mxu0
    %v7540 = vadd.f32 %v7451, %v7539
    %7541 = vmatmul.bf16.gmra.mxu0 %v1400
    %v7542 = vpop.f32.mrf.mxu0
    %v7543 = vadd.f32 %v7454, %v7542
    %v7544 = vpop.f32.mrf.mxu0
    %v7545 = vadd.f32 %v7456, %v7544
    %7546 = vmatmul.bf16.gmra.mxu0 %v1408
    %v7547 = vpop.f32.mrf.mxu0
    %v7548 = vadd.f32 %v7459, %v7547
    %v7549 = vpop.f32.mrf.mxu0
    %v7550 = vadd.f32 %v7461, %v7549
    %7551 = vmatmul.bf16.gmra.mxu0 %v1416
    %v7552 = vpop.f32.mrf.mxu0
    %v7553 = vadd.f32 %v7464, %v7552
    %v7554 = vpop.f32.mrf.mxu0
    %v7555 = vadd.f32 %v7466, %v7554
    %7556 = vmatmul.bf16.gmra.mxu0 %v1424
    %v7557 = vpop.f32.mrf.mxu0
    %v7558 = vadd.f32 %v7469, %v7557
    %v7559 = vpop.f32.mrf.mxu0
    %v7560 = vadd.f32 %v7471, %v7559
    %7561 = vmatmul.bf16.gmra.mxu0 %v1432
    %v7562 = vpop.f32.mrf.mxu0
    %v7563 = vadd.f32 %v7474, %v7562
    %v7564 = vpop.f32.mrf.mxu0
    %v7565 = vadd.f32 %v7476, %v7564
    %7566 = vmatmul.bf16.gmra.mxu0 %v1440
    %v7567 = vpop.f32.mrf.mxu0
    %v7568 = vadd.f32 %v7479, %v7567
    %v7569 = vpop.f32.mrf.mxu0
    %v7570 = vadd.f32 %v7481, %v7569
    %7571 = vmatmul.bf16.gmra.mxu0 %v1448
    %v7572 = vpop.f32.mrf.mxu0
    %v7573 = vadd.f32 %v7484, %v7572
    %v7574 = vpop.f32.mrf.mxu0
    %v7575 = vadd.f32 %v7486, %v7574
    %7576 = vmatmul.bf16.gmra.mxu0 %v1456
    %v7577 = vpop.f32.mrf.mxu0
    %v7578 = vadd.f32 %v7489, %v7577
    %v7579 = vpop.f32.mrf.mxu0
    %v7580 = vadd.f32 %v7491, %v7579
    %7581 = vmatmul.bf16.gmra.mxu0 %v1464
    %v7582 = vpop.f32.mrf.mxu0
    %v7583 = vadd.f32 %v7494, %v7582
    %v7584 = vpop.f32.mrf.mxu0
    %v7585 = vadd.f32 %v7496, %v7584
    %7586 = vdwg.mxu0
    %7587 = vmatpush.bf16.msra.mxu0 %v3725
    %7588 = vmatpush.bf16.msra.mxu0 %v3717
    %7589 = vmatpush.bf16.msra.mxu0 %v3709
    %7590 = vmatpush.bf16.msra.mxu0 %v3701
    %7591 = vmatpush.bf16.msra.mxu0 %v3693
    %7592 = vmatpush.bf16.msra.mxu0 %v3685
    %7593 = vmatpush.bf16.msra.mxu0 %v3677
    %7594 = vmatpush.bf16.msra.mxu0 %v3669
    %7595 = vmatmul.bf16.gmra.mxu0 %v1345
    %v7596 = vpop.f32.mrf.mxu0
    %v7597 = vadd.f32 %v7508, %v7596
    %v7598 = vpop.f32.mrf.mxu0
    %v7599 = vadd.f32 %v7510, %v7598
    %7600 = vmatmul.bf16.gmra.mxu0 %v1353
    %v7601 = vpop.f32.mrf.mxu0
    %v7602 = vadd.f32 %v7513, %v7601
    %v7603 = vpop.f32.mrf.mxu0
    %v7604 = vadd.f32 %v7515, %v7603
    %7605 = vmatmul.bf16.gmra.mxu0 %v1361
    %v7606 = vpop.f32.mrf.mxu0
    %v7607 = vadd.f32 %v7518, %v7606
    %v7608 = vpop.f32.mrf.mxu0
    %v7609 = vadd.f32 %v7520, %v7608
    %7610 = vmatmul.bf16.gmra.mxu0 %v1369
    %v7611 = vpop.f32.mrf.mxu0
    %v7612 = vadd.f32 %v7523, %v7611
    %v7613 = vpop.f32.mrf.mxu0
    %v7614 = vadd.f32 %v7525, %v7613
    %7615 = vmatmul.bf16.gmra.mxu0 %v1377
    %v7616 = vpop.f32.mrf.mxu0
    %v7617 = vadd.f32 %v7528, %v7616
    %v7618 = vpop.f32.mrf.mxu0
    %v7619 = vadd.f32 %v7530, %v7618
    %7620 = vmatmul.bf16.gmra.mxu0 %v1385
    %v7621 = vpop.f32.mrf.mxu0
    %v7622 = vadd.f32 %v7533, %v7621
    %v7623 = vpop.f32.mrf.mxu0
    %v7624 = vadd.f32 %v7535, %v7623
    %7625 = vmatmul.bf16.gmra.mxu0 %v1393
    %v7626 = vpop.f32.mrf.mxu0
    %v7627 = vadd.f32 %v7538, %v7626
    %v7628 = vpop.f32.mrf.mxu0
    %v7629 = vadd.f32 %v7540, %v7628
    %7630 = vmatmul.bf16.gmra.mxu0 %v1401
    %v7631 = vpop.f32.mrf.mxu0
    %v7632 = vadd.f32 %v7543, %v7631
    %v7633 = vpop.f32.mrf.mxu0
    %v7634 = vadd.f32 %v7545, %v7633
    %7635 = vmatmul.bf16.gmra.mxu0 %v1409
    %v7636 = vpop.f32.mrf.mxu0
    %v7637 = vadd.f32 %v7548, %v7636
    %v7638 = vpop.f32.mrf.mxu0
    %v7639 = vadd.f32 %v7550, %v7638
    %7640 = vmatmul.bf16.gmra.mxu0 %v1417
    %v7641 = vpop.f32.mrf.mxu0
    %v7642 = vadd.f32 %v7553, %v7641
    %v7643 = vpop.f32.mrf.mxu0
    %v7644 = vadd.f32 %v7555, %v7643
    %7645 = vmatmul.bf16.gmra.mxu0 %v1425
    %v7646 = vpop.f32.mrf.mxu0
    %v7647 = vadd.f32 %v7558, %v7646
    %v7648 = vpop.f32.mrf.mxu0
    %v7649 = vadd.f32 %v7560, %v7648
    %7650 = vmatmul.bf16.gmra.mxu0 %v1433
    %v7651 = vpop.f32.mrf.mxu0
    %v7652 = vadd.f32 %v7563, %v7651
    %v7653 = vpop.f32.mrf.mxu0
    %v7654 = vadd.f32 %v7565, %v7653
    %7655 = vmatmul.bf16.gmra.mxu0 %v1441
    %v7656 = vpop.f32.mrf.mxu0
    %v7657 = vadd.f32 %v7568, %v7656
    %v7658 = vpop.f32.mrf.mxu0
    %v7659 = vadd.f32 %v7570, %v7658
    %7660 = vmatmul.bf16.gmra.mxu0 %v1449
    %v7661 = vpop.f32.mrf.mxu0
    %v7662 = vadd.f32 %v7573, %v7661
    %v7663 = vpop.f32.mrf.mxu0
    %v7664 = vadd.f32 %v7575, %v7663
    %7665 = vmatmul.bf16.gmra.mxu0 %v1457
    %v7666 = vpop.f32.mrf.mxu0
    %v7667 = vadd.f32 %v7578, %v7666
    %v7668 = vpop.f32.mrf.mxu0
    %v7669 = vadd.f32 %v7580, %v7668
    %7670 = vmatmul.bf16.gmra.mxu0 %v1465
    %v7671 = vpop.f32.mrf.mxu0
    %v7672 = vadd.f32 %v7583, %v7671
    %v7673 = vpop.f32.mrf.mxu0
    %v7674 = vadd.f32 %v7585, %v7673
    %7675 = vdwg.mxu0
    %7676 = vmatpush.bf16.msra.mxu0 %v3789
    %7677 = vmatpush.bf16.msra.mxu0 %v3781
    %7678 = vmatpush.bf16.msra.mxu0 %v3773
    %7679 = vmatpush.bf16.msra.mxu0 %v3765
    %7680 = vmatpush.bf16.msra.mxu0 %v3757
    %7681 = vmatpush.bf16.msra.mxu0 %v3749
    %7682 = vmatpush.bf16.msra.mxu0 %v3741
    %7683 = vmatpush.bf16.msra.mxu0 %v3733
    %7684 = vmatmul.bf16.gmra.mxu0 %v1346
    %v7685 = vpop.f32.mrf.mxu0
    %v7686 = vadd.f32 %v7597, %v7685
    %v7687 = vpop.f32.mrf.mxu0
    %v7688 = vadd.f32 %v7599, %v7687
    %7689 = vmatmul.bf16.gmra.mxu0 %v1354
    %v7690 = vpop.f32.mrf.mxu0
    %v7691 = vadd.f32 %v7602, %v7690
    %v7692 = vpop.f32.mrf.mxu0
    %v7693 = vadd.f32 %v7604, %v7692
    %7694 = vmatmul.bf16.gmra.mxu0 %v1362
    %v7695 = vpop.f32.mrf.mxu0
    %v7696 = vadd.f32 %v7607, %v7695
    %v7697 = vpop.f32.mrf.mxu0
    %v7698 = vadd.f32 %v7609, %v7697
    %7699 = vmatmul.bf16.gmra.mxu0 %v1370
    %v7700 = vpop.f32.mrf.mxu0
    %v7701 = vadd.f32 %v7612, %v7700
    %v7702 = vpop.f32.mrf.mxu0
    %v7703 = vadd.f32 %v7614, %v7702
    %7704 = vmatmul.bf16.gmra.mxu0 %v1378
    %v7705 = vpop.f32.mrf.mxu0
    %v7706 = vadd.f32 %v7617, %v7705
    %v7707 = vpop.f32.mrf.mxu0
    %v7708 = vadd.f32 %v7619, %v7707
    %7709 = vmatmul.bf16.gmra.mxu0 %v1386
    %v7710 = vpop.f32.mrf.mxu0
    %v7711 = vadd.f32 %v7622, %v7710
    %v7712 = vpop.f32.mrf.mxu0
    %v7713 = vadd.f32 %v7624, %v7712
    %7714 = vmatmul.bf16.gmra.mxu0 %v1394
    %v7715 = vpop.f32.mrf.mxu0
    %v7716 = vadd.f32 %v7627, %v7715
    %v7717 = vpop.f32.mrf.mxu0
    %v7718 = vadd.f32 %v7629, %v7717
    %7719 = vmatmul.bf16.gmra.mxu0 %v1402
    %v7720 = vpop.f32.mrf.mxu0
    %v7721 = vadd.f32 %v7632, %v7720
    %v7722 = vpop.f32.mrf.mxu0
    %v7723 = vadd.f32 %v7634, %v7722
    %7724 = vmatmul.bf16.gmra.mxu0 %v1410
    %v7725 = vpop.f32.mrf.mxu0
    %v7726 = vadd.f32 %v7637, %v7725
    %v7727 = vpop.f32.mrf.mxu0
    %v7728 = vadd.f32 %v7639, %v7727
    %7729 = vmatmul.bf16.gmra.mxu0 %v1418
    %v7730 = vpop.f32.mrf.mxu0
    %v7731 = vadd.f32 %v7642, %v7730
    %v7732 = vpop.f32.mrf.mxu0
    %v7733 = vadd.f32 %v7644, %v7732
    %7734 = vmatmul.bf16.gmra.mxu0 %v1426
    %v7735 = vpop.f32.mrf.mxu0
    %v7736 = vadd.f32 %v7647, %v7735
    %v7737 = vpop.f32.mrf.mxu0
    %v7738 = vadd.f32 %v7649, %v7737
    %7739 = vmatmul.bf16.gmra.mxu0 %v1434
    %v7740 = vpop.f32.mrf.mxu0
    %v7741 = vadd.f32 %v7652, %v7740
    %v7742 = vpop.f32.mrf.mxu0
    %v7743 = vadd.f32 %v7654, %v7742
    %7744 = vmatmul.bf16.gmra.mxu0 %v1442
    %v7745 = vpop.f32.mrf.mxu0
    %v7746 = vadd.f32 %v7657, %v7745
    %v7747 = vpop.f32.mrf.mxu0
    %v7748 = vadd.f32 %v7659, %v7747
    %7749 = vmatmul.bf16.gmra.mxu0 %v1450
    %v7750 = vpop.f32.mrf.mxu0
    %v7751 = vadd.f32 %v7662, %v7750
    %v7752 = vpop.f32.mrf.mxu0
    %v7753 = vadd.f32 %v7664, %v7752
    %7754 = vmatmul.bf16.gmra.mxu0 %v1458
    %v7755 = vpop.f32.mrf.mxu0
    %v7756 = vadd.f32 %v7667, %v7755
    %v7757 = vpop.f32.mrf.mxu0
    %v7758 = vadd.f32 %v7669, %v7757
    %7759 = vmatmul.bf16.gmra.mxu0 %v1466
    %v7760 = vpop.f32.mrf.mxu0
    %v7761 = vadd.f32 %v7672, %v7760
    %v7762 = vpop.f32.mrf.mxu0
    %v7763 = vadd.f32 %v7674, %v7762
    %7764 = vdwg.mxu0
    %7765 = vmatpush.bf16.msra.mxu0 %v3853
    %7766 = vmatpush.bf16.msra.mxu0 %v3845
    %7767 = vmatpush.bf16.msra.mxu0 %v3837
    %7768 = vmatpush.bf16.msra.mxu0 %v3829
    %7769 = vmatpush.bf16.msra.mxu0 %v3821
    %7770 = vmatpush.bf16.msra.mxu0 %v3813
    %7771 = vmatpush.bf16.msra.mxu0 %v3805
    %7772 = vmatpush.bf16.msra.mxu0 %v3797
    %7773 = vmatmul.bf16.gmra.mxu0 %v1347
    %v7774 = vpop.f32.mrf.mxu0
    %v7775 = vadd.f32 %v7686, %v7774
    %v7776 = vpop.f32.mrf.mxu0
    %v7777 = vadd.f32 %v7688, %v7776
    %7778 = vmatmul.bf16.gmra.mxu0 %v1355
    %v7779 = vpop.f32.mrf.mxu0
    %v7780 = vadd.f32 %v7691, %v7779
    %v7781 = vpop.f32.mrf.mxu0
    %v7782 = vadd.f32 %v7693, %v7781
    %7783 = vmatmul.bf16.gmra.mxu0 %v1363
    %v7784 = vpop.f32.mrf.mxu0
    %v7785 = vadd.f32 %v7696, %v7784
    %v7786 = vpop.f32.mrf.mxu0
    %v7787 = vadd.f32 %v7698, %v7786
    %7788 = vmatmul.bf16.gmra.mxu0 %v1371
    %v7789 = vpop.f32.mrf.mxu0
    %v7790 = vadd.f32 %v7701, %v7789
    %v7791 = vpop.f32.mrf.mxu0
    %v7792 = vadd.f32 %v7703, %v7791
    %7793 = vmatmul.bf16.gmra.mxu0 %v1379
    %v7794 = vpop.f32.mrf.mxu0
    %v7795 = vadd.f32 %v7706, %v7794
    %v7796 = vpop.f32.mrf.mxu0
    %v7797 = vadd.f32 %v7708, %v7796
    %7798 = vmatmul.bf16.gmra.mxu0 %v1387
    %v7799 = vpop.f32.mrf.mxu0
    %v7800 = vadd.f32 %v7711, %v7799
    %v7801 = vpop.f32.mrf.mxu0
    %v7802 = vadd.f32 %v7713, %v7801
    %7803 = vmatmul.bf16.gmra.mxu0 %v1395
    %v7804 = vpop.f32.mrf.mxu0
    %v7805 = vadd.f32 %v7716, %v7804
    %v7806 = vpop.f32.mrf.mxu0
    %v7807 = vadd.f32 %v7718, %v7806
    %7808 = vmatmul.bf16.gmra.mxu0 %v1403
    %v7809 = vpop.f32.mrf.mxu0
    %v7810 = vadd.f32 %v7721, %v7809
    %v7811 = vpop.f32.mrf.mxu0
    %v7812 = vadd.f32 %v7723, %v7811
    %7813 = vmatmul.bf16.gmra.mxu0 %v1411
    %v7814 = vpop.f32.mrf.mxu0
    %v7815 = vadd.f32 %v7726, %v7814
    %v7816 = vpop.f32.mrf.mxu0
    %v7817 = vadd.f32 %v7728, %v7816
    %7818 = vmatmul.bf16.gmra.mxu0 %v1419
    %v7819 = vpop.f32.mrf.mxu0
    %v7820 = vadd.f32 %v7731, %v7819
    %v7821 = vpop.f32.mrf.mxu0
    %v7822 = vadd.f32 %v7733, %v7821
    %7823 = vmatmul.bf16.gmra.mxu0 %v1427
    %v7824 = vpop.f32.mrf.mxu0
    %v7825 = vadd.f32 %v7736, %v7824
    %v7826 = vpop.f32.mrf.mxu0
    %v7827 = vadd.f32 %v7738, %v7826
    %7828 = vmatmul.bf16.gmra.mxu0 %v1435
    %v7829 = vpop.f32.mrf.mxu0
    %v7830 = vadd.f32 %v7741, %v7829
    %v7831 = vpop.f32.mrf.mxu0
    %v7832 = vadd.f32 %v7743, %v7831
    %7833 = vmatmul.bf16.gmra.mxu0 %v1443
    %v7834 = vpop.f32.mrf.mxu0
    %v7835 = vadd.f32 %v7746, %v7834
    %v7836 = vpop.f32.mrf.mxu0
    %v7837 = vadd.f32 %v7748, %v7836
    %7838 = vmatmul.bf16.gmra.mxu0 %v1451
    %v7839 = vpop.f32.mrf.mxu0
    %v7840 = vadd.f32 %v7751, %v7839
    %v7841 = vpop.f32.mrf.mxu0
    %v7842 = vadd.f32 %v7753, %v7841
    %7843 = vmatmul.bf16.gmra.mxu0 %v1459
    %v7844 = vpop.f32.mrf.mxu0
    %v7845 = vadd.f32 %v7756, %v7844
    %v7846 = vpop.f32.mrf.mxu0
    %v7847 = vadd.f32 %v7758, %v7846
    %7848 = vmatmul.bf16.gmra.mxu0 %v1467
    %v7849 = vpop.f32.mrf.mxu0
    %v7850 = vadd.f32 %v7761, %v7849
    %v7851 = vpop.f32.mrf.mxu0
    %v7852 = vadd.f32 %v7763, %v7851
    %7853 = vdwg.mxu0
    %7854 = vmatpush.bf16.msra.mxu0 %v3917
    %7855 = vmatpush.bf16.msra.mxu0 %v3909
    %7856 = vmatpush.bf16.msra.mxu0 %v3901
    %7857 = vmatpush.bf16.msra.mxu0 %v3893
    %7858 = vmatpush.bf16.msra.mxu0 %v3885
    %7859 = vmatpush.bf16.msra.mxu0 %v3877
    %7860 = vmatpush.bf16.msra.mxu0 %v3869
    %7861 = vmatpush.bf16.msra.mxu0 %v3861
    %7862 = vmatmul.bf16.gmra.mxu0 %v1348
    %v7863 = vpop.f32.mrf.mxu0
    %v7864 = vadd.f32 %v7775, %v7863
    %v7865 = vpop.f32.mrf.mxu0
    %v7866 = vadd.f32 %v7777, %v7865
    %7867 = vmatmul.bf16.gmra.mxu0 %v1356
    %v7868 = vpop.f32.mrf.mxu0
    %v7869 = vadd.f32 %v7780, %v7868
    %v7870 = vpop.f32.mrf.mxu0
    %v7871 = vadd.f32 %v7782, %v7870
    %7872 = vmatmul.bf16.gmra.mxu0 %v1364
    %v7873 = vpop.f32.mrf.mxu0
    %v7874 = vadd.f32 %v7785, %v7873
    %v7875 = vpop.f32.mrf.mxu0
    %v7876 = vadd.f32 %v7787, %v7875
    %7877 = vmatmul.bf16.gmra.mxu0 %v1372
    %v7878 = vpop.f32.mrf.mxu0
    %v7879 = vadd.f32 %v7790, %v7878
    %v7880 = vpop.f32.mrf.mxu0
    %v7881 = vadd.f32 %v7792, %v7880
    %7882 = vmatmul.bf16.gmra.mxu0 %v1380
    %v7883 = vpop.f32.mrf.mxu0
    %v7884 = vadd.f32 %v7795, %v7883
    %v7885 = vpop.f32.mrf.mxu0
    %v7886 = vadd.f32 %v7797, %v7885
    %7887 = vmatmul.bf16.gmra.mxu0 %v1388
    %v7888 = vpop.f32.mrf.mxu0
    %v7889 = vadd.f32 %v7800, %v7888
    %v7890 = vpop.f32.mrf.mxu0
    %v7891 = vadd.f32 %v7802, %v7890
    %7892 = vmatmul.bf16.gmra.mxu0 %v1396
    %v7893 = vpop.f32.mrf.mxu0
    %v7894 = vadd.f32 %v7805, %v7893
    %v7895 = vpop.f32.mrf.mxu0
    %v7896 = vadd.f32 %v7807, %v7895
    %7897 = vmatmul.bf16.gmra.mxu0 %v1404
    %v7898 = vpop.f32.mrf.mxu0
    %v7899 = vadd.f32 %v7810, %v7898
    %v7900 = vpop.f32.mrf.mxu0
    %v7901 = vadd.f32 %v7812, %v7900
    %7902 = vmatmul.bf16.gmra.mxu0 %v1412
    %v7903 = vpop.f32.mrf.mxu0
    %v7904 = vadd.f32 %v7815, %v7903
    %v7905 = vpop.f32.mrf.mxu0
    %v7906 = vadd.f32 %v7817, %v7905
    %7907 = vmatmul.bf16.gmra.mxu0 %v1420
    %v7908 = vpop.f32.mrf.mxu0
    %v7909 = vadd.f32 %v7820, %v7908
    %v7910 = vpop.f32.mrf.mxu0
    %v7911 = vadd.f32 %v7822, %v7910
    %7912 = vmatmul.bf16.gmra.mxu0 %v1428
    %v7913 = vpop.f32.mrf.mxu0
    %v7914 = vadd.f32 %v7825, %v7913
    %v7915 = vpop.f32.mrf.mxu0
    %v7916 = vadd.f32 %v7827, %v7915
    %7917 = vmatmul.bf16.gmra.mxu0 %v1436
    %v7918 = vpop.f32.mrf.mxu0
    %v7919 = vadd.f32 %v7830, %v7918
    %v7920 = vpop.f32.mrf.mxu0
    %v7921 = vadd.f32 %v7832, %v7920
    %7922 = vmatmul.bf16.gmra.mxu0 %v1444
    %v7923 = vpop.f32.mrf.mxu0
    %v7924 = vadd.f32 %v7835, %v7923
    %v7925 = vpop.f32.mrf.mxu0
    %v7926 = vadd.f32 %v7837, %v7925
    %7927 = vmatmul.bf16.gmra.mxu0 %v1452
    %v7928 = vpop.f32.mrf.mxu0
    %v7929 = vadd.f32 %v7840, %v7928
    %v7930 = vpop.f32.mrf.mxu0
    %v7931 = vadd.f32 %v7842, %v7930
    %7932 = vmatmul.bf16.gmra.mxu0 %v1460
    %v7933 = vpop.f32.mrf.mxu0
    %v7934 = vadd.f32 %v7845, %v7933
    %v7935 = vpop.f32.mrf.mxu0
    %v7936 = vadd.f32 %v7847, %v7935
    %7937 = vmatmul.bf16.gmra.mxu0 %v1468
    %v7938 = vpop.f32.mrf.mxu0
    %v7939 = vadd.f32 %v7850, %v7938
    %v7940 = vpop.f32.mrf.mxu0
    %v7941 = vadd.f32 %v7852, %v7940
    %7942 = vdwg.mxu0
    %7943 = vmatpush.bf16.msra.mxu0 %v3981
    %7944 = vmatpush.bf16.msra.mxu0 %v3973
    %7945 = vmatpush.bf16.msra.mxu0 %v3965
    %7946 = vmatpush.bf16.msra.mxu0 %v3957
    %7947 = vmatpush.bf16.msra.mxu0 %v3949
    %7948 = vmatpush.bf16.msra.mxu0 %v3941
    %7949 = vmatpush.bf16.msra.mxu0 %v3933
    %7950 = vmatpush.bf16.msra.mxu0 %v3925
    %7951 = vmatmul.bf16.gmra.mxu0 %v1349
    %v7952 = vpop.f32.mrf.mxu0
    %v7953 = vadd.f32 %v7864, %v7952
    %v7954 = vpop.f32.mrf.mxu0
    %v7955 = vadd.f32 %v7866, %v7954
    %7956 = vmatmul.bf16.gmra.mxu0 %v1357
    %v7957 = vpop.f32.mrf.mxu0
    %v7958 = vadd.f32 %v7869, %v7957
    %v7959 = vpop.f32.mrf.mxu0
    %v7960 = vadd.f32 %v7871, %v7959
    %7961 = vmatmul.bf16.gmra.mxu0 %v1365
    %v7962 = vpop.f32.mrf.mxu0
    %v7963 = vadd.f32 %v7874, %v7962
    %v7964 = vpop.f32.mrf.mxu0
    %v7965 = vadd.f32 %v7876, %v7964
    %7966 = vmatmul.bf16.gmra.mxu0 %v1373
    %v7967 = vpop.f32.mrf.mxu0
    %v7968 = vadd.f32 %v7879, %v7967
    %v7969 = vpop.f32.mrf.mxu0
    %v7970 = vadd.f32 %v7881, %v7969
    %7971 = vmatmul.bf16.gmra.mxu0 %v1381
    %v7972 = vpop.f32.mrf.mxu0
    %v7973 = vadd.f32 %v7884, %v7972
    %v7974 = vpop.f32.mrf.mxu0
    %v7975 = vadd.f32 %v7886, %v7974
    %7976 = vmatmul.bf16.gmra.mxu0 %v1389
    %v7977 = vpop.f32.mrf.mxu0
    %v7978 = vadd.f32 %v7889, %v7977
    %v7979 = vpop.f32.mrf.mxu0
    %v7980 = vadd.f32 %v7891, %v7979
    %7981 = vmatmul.bf16.gmra.mxu0 %v1397
    %v7982 = vpop.f32.mrf.mxu0
    %v7983 = vadd.f32 %v7894, %v7982
    %v7984 = vpop.f32.mrf.mxu0
    %v7985 = vadd.f32 %v7896, %v7984
    %7986 = vmatmul.bf16.gmra.mxu0 %v1405
    %v7987 = vpop.f32.mrf.mxu0
    %v7988 = vadd.f32 %v7899, %v7987
    %v7989 = vpop.f32.mrf.mxu0
    %v7990 = vadd.f32 %v7901, %v7989
    %7991 = vmatmul.bf16.gmra.mxu0 %v1413
    %v7992 = vpop.f32.mrf.mxu0
    %v7993 = vadd.f32 %v7904, %v7992
    %v7994 = vpop.f32.mrf.mxu0
    %v7995 = vadd.f32 %v7906, %v7994
    %7996 = vmatmul.bf16.gmra.mxu0 %v1421
    %v7997 = vpop.f32.mrf.mxu0
    %v7998 = vadd.f32 %v7909, %v7997
    %v7999 = vpop.f32.mrf.mxu0
    %v8000 = vadd.f32 %v7911, %v7999
    %8001 = vmatmul.bf16.gmra.mxu0 %v1429
    %v8002 = vpop.f32.mrf.mxu0
    %v8003 = vadd.f32 %v7914, %v8002
    %v8004 = vpop.f32.mrf.mxu0
    %v8005 = vadd.f32 %v7916, %v8004
    %8006 = vmatmul.bf16.gmra.mxu0 %v1437
    %v8007 = vpop.f32.mrf.mxu0
    %v8008 = vadd.f32 %v7919, %v8007
    %v8009 = vpop.f32.mrf.mxu0
    %v8010 = vadd.f32 %v7921, %v8009
    %8011 = vmatmul.bf16.gmra.mxu0 %v1445
    %v8012 = vpop.f32.mrf.mxu0
    %v8013 = vadd.f32 %v7924, %v8012
    %v8014 = vpop.f32.mrf.mxu0
    %v8015 = vadd.f32 %v7926, %v8014
    %8016 = vmatmul.bf16.gmra.mxu0 %v1453
    %v8017 = vpop.f32.mrf.mxu0
    %v8018 = vadd.f32 %v7929, %v8017
    %v8019 = vpop.f32.mrf.mxu0
    %v8020 = vadd.f32 %v7931, %v8019
    %8021 = vmatmul.bf16.gmra.mxu0 %v1461
    %v8022 = vpop.f32.mrf.mxu0
    %v8023 = vadd.f32 %v7934, %v8022
    %v8024 = vpop.f32.mrf.mxu0
    %v8025 = vadd.f32 %v7936, %v8024
    %8026 = vmatmul.bf16.gmra.mxu0 %v1469
    %v8027 = vpop.f32.mrf.mxu0
    %v8028 = vadd.f32 %v7939, %v8027
    %v8029 = vpop.f32.mrf.mxu0
    %v8030 = vadd.f32 %v7941, %v8029
    %8031 = vdwg.mxu0
    %8032 = vmatpush.bf16.msra.mxu0 %v4045
    %8033 = vmatpush.bf16.msra.mxu0 %v4037
    %8034 = vmatpush.bf16.msra.mxu0 %v4029
    %8035 = vmatpush.bf16.msra.mxu0 %v4021
    %8036 = vmatpush.bf16.msra.mxu0 %v4013
    %8037 = vmatpush.bf16.msra.mxu0 %v4005
    %8038 = vmatpush.bf16.msra.mxu0 %v3997
    %8039 = vmatpush.bf16.msra.mxu0 %v3989
    %8040 = vmatmul.bf16.gmra.mxu0 %v1350
    %v8041 = vpop.f32.mrf.mxu0
    %v8042 = vadd.f32 %v7953, %v8041
    %v8043 = vpop.f32.mrf.mxu0
    %v8044 = vadd.f32 %v7955, %v8043
    %8045 = vmatmul.bf16.gmra.mxu0 %v1358
    %v8046 = vpop.f32.mrf.mxu0
    %v8047 = vadd.f32 %v7958, %v8046
    %v8048 = vpop.f32.mrf.mxu0
    %v8049 = vadd.f32 %v7960, %v8048
    %8050 = vmatmul.bf16.gmra.mxu0 %v1366
    %v8051 = vpop.f32.mrf.mxu0
    %v8052 = vadd.f32 %v7963, %v8051
    %v8053 = vpop.f32.mrf.mxu0
    %v8054 = vadd.f32 %v7965, %v8053
    %8055 = vmatmul.bf16.gmra.mxu0 %v1374
    %v8056 = vpop.f32.mrf.mxu0
    %v8057 = vadd.f32 %v7968, %v8056
    %v8058 = vpop.f32.mrf.mxu0
    %v8059 = vadd.f32 %v7970, %v8058
    %8060 = vmatmul.bf16.gmra.mxu0 %v1382
    %v8061 = vpop.f32.mrf.mxu0
    %v8062 = vadd.f32 %v7973, %v8061
    %v8063 = vpop.f32.mrf.mxu0
    %v8064 = vadd.f32 %v7975, %v8063
    %8065 = vmatmul.bf16.gmra.mxu0 %v1390
    %v8066 = vpop.f32.mrf.mxu0
    %v8067 = vadd.f32 %v7978, %v8066
    %v8068 = vpop.f32.mrf.mxu0
    %v8069 = vadd.f32 %v7980, %v8068
    %8070 = vmatmul.bf16.gmra.mxu0 %v1398
    %v8071 = vpop.f32.mrf.mxu0
    %v8072 = vadd.f32 %v7983, %v8071
    %v8073 = vpop.f32.mrf.mxu0
    %v8074 = vadd.f32 %v7985, %v8073
    %8075 = vmatmul.bf16.gmra.mxu0 %v1406
    %v8076 = vpop.f32.mrf.mxu0
    %v8077 = vadd.f32 %v7988, %v8076
    %v8078 = vpop.f32.mrf.mxu0
    %v8079 = vadd.f32 %v7990, %v8078
    %8080 = vmatmul.bf16.gmra.mxu0 %v1414
    %v8081 = vpop.f32.mrf.mxu0
    %v8082 = vadd.f32 %v7993, %v8081
    %v8083 = vpop.f32.mrf.mxu0
    %v8084 = vadd.f32 %v7995, %v8083
    %8085 = vmatmul.bf16.gmra.mxu0 %v1422
    %v8086 = vpop.f32.mrf.mxu0
    %v8087 = vadd.f32 %v7998, %v8086
    %v8088 = vpop.f32.mrf.mxu0
    %v8089 = vadd.f32 %v8000, %v8088
    %8090 = vmatmul.bf16.gmra.mxu0 %v1430
    %v8091 = vpop.f32.mrf.mxu0
    %v8092 = vadd.f32 %v8003, %v8091
    %v8093 = vpop.f32.mrf.mxu0
    %v8094 = vadd.f32 %v8005, %v8093
    %8095 = vmatmul.bf16.gmra.mxu0 %v1438
    %v8096 = vpop.f32.mrf.mxu0
    %v8097 = vadd.f32 %v8008, %v8096
    %v8098 = vpop.f32.mrf.mxu0
    %v8099 = vadd.f32 %v8010, %v8098
    %8100 = vmatmul.bf16.gmra.mxu0 %v1446
    %v8101 = vpop.f32.mrf.mxu0
    %v8102 = vadd.f32 %v8013, %v8101
    %v8103 = vpop.f32.mrf.mxu0
    %v8104 = vadd.f32 %v8015, %v8103
    %8105 = vmatmul.bf16.gmra.mxu0 %v1454
    %v8106 = vpop.f32.mrf.mxu0
    %v8107 = vadd.f32 %v8018, %v8106
    %v8108 = vpop.f32.mrf.mxu0
    %v8109 = vadd.f32 %v8020, %v8108
    %8110 = vmatmul.bf16.gmra.mxu0 %v1462
    %v8111 = vpop.f32.mrf.mxu0
    %v8112 = vadd.f32 %v8023, %v8111
    %v8113 = vpop.f32.mrf.mxu0
    %v8114 = vadd.f32 %v8025, %v8113
    %8115 = vmatmul.bf16.gmra.mxu0 %v1470
    %v8116 = vpop.f32.mrf.mxu0
    %v8117 = vadd.f32 %v8028, %v8116
    %v8118 = vpop.f32.mrf.mxu0
    %v8119 = vadd.f32 %v8030, %v8118
    %8120 = vdwg.mxu0
    %8121 = vmatpush.bf16.msra.mxu0 %v3598
    %8122 = vmatpush.bf16.msra.mxu0 %v3590
    %8123 = vmatpush.bf16.msra.mxu0 %v3582
    %8124 = vmatpush.bf16.msra.mxu0 %v3574
    %8125 = vmatpush.bf16.msra.mxu0 %v3566
    %8126 = vmatpush.bf16.msra.mxu0 %v3558
    %8127 = vmatpush.bf16.msra.mxu0 %v3550
    %8128 = vmatpush.bf16.msra.mxu0 %v3542
    %8129 = vmatmul.bf16.gmra.mxu0 %v1343
    %v8130 = vpop.f32.mrf.mxu0
    %v8131 = vadd.f32 %v1990, %v8130
    %v8132 = vpop.f32.mrf.mxu0
    %v8133 = vadd.f32 %v1990, %v8132
    %8134 = vmatmul.bf16.gmra.mxu0 %v1351
    %v8135 = vpop.f32.mrf.mxu0
    %v8136 = vadd.f32 %v1990, %v8135
    %v8137 = vpop.f32.mrf.mxu0
    %v8138 = vadd.f32 %v1990, %v8137
    %8139 = vmatmul.bf16.gmra.mxu0 %v1359
    %v8140 = vpop.f32.mrf.mxu0
    %v8141 = vadd.f32 %v1990, %v8140
    %v8142 = vpop.f32.mrf.mxu0
    %v8143 = vadd.f32 %v1990, %v8142
    %8144 = vmatmul.bf16.gmra.mxu0 %v1367
    %v8145 = vpop.f32.mrf.mxu0
    %v8146 = vadd.f32 %v1990, %v8145
    %v8147 = vpop.f32.mrf.mxu0
    %v8148 = vadd.f32 %v1990, %v8147
    %8149 = vmatmul.bf16.gmra.mxu0 %v1375
    %v8150 = vpop.f32.mrf.mxu0
    %v8151 = vadd.f32 %v1990, %v8150
    %v8152 = vpop.f32.mrf.mxu0
    %v8153 = vadd.f32 %v1990, %v8152
    %8154 = vmatmul.bf16.gmra.mxu0 %v1383
    %v8155 = vpop.f32.mrf.mxu0
    %v8156 = vadd.f32 %v1990, %v8155
    %v8157 = vpop.f32.mrf.mxu0
    %v8158 = vadd.f32 %v1990, %v8157
    %8159 = vmatmul.bf16.gmra.mxu0 %v1391
    %v8160 = vpop.f32.mrf.mxu0
    %v8161 = vadd.f32 %v1990, %v8160
    %v8162 = vpop.f32.mrf.mxu0
    %v8163 = vadd.f32 %v1990, %v8162
    %8164 = vmatmul.bf16.gmra.mxu0 %v1399
    %v8165 = vpop.f32.mrf.mxu0
    %v8166 = vadd.f32 %v1990, %v8165
    %v8167 = vpop.f32.mrf.mxu0
    %v8168 = vadd.f32 %v1990, %v8167
    %8169 = vmatmul.bf16.gmra.mxu0 %v1407
    %v8170 = vpop.f32.mrf.mxu0
    %v8171 = vadd.f32 %v1990, %v8170
    %v8172 = vpop.f32.mrf.mxu0
    %v8173 = vadd.f32 %v1990, %v8172
    %8174 = vmatmul.bf16.gmra.mxu0 %v1415
    %v8175 = vpop.f32.mrf.mxu0
    %v8176 = vadd.f32 %v1990, %v8175
    %v8177 = vpop.f32.mrf.mxu0
    %v8178 = vadd.f32 %v1990, %v8177
    %8179 = vmatmul.bf16.gmra.mxu0 %v1423
    %v8180 = vpop.f32.mrf.mxu0
    %v8181 = vadd.f32 %v1990, %v8180
    %v8182 = vpop.f32.mrf.mxu0
    %v8183 = vadd.f32 %v1990, %v8182
    %8184 = vmatmul.bf16.gmra.mxu0 %v1431
    %v8185 = vpop.f32.mrf.mxu0
    %v8186 = vadd.f32 %v1990, %v8185
    %v8187 = vpop.f32.mrf.mxu0
    %v8188 = vadd.f32 %v1990, %v8187
    %8189 = vmatmul.bf16.gmra.mxu0 %v1439
    %v8190 = vpop.f32.mrf.mxu0
    %v8191 = vadd.f32 %v1990, %v8190
    %v8192 = vpop.f32.mrf.mxu0
    %v8193 = vadd.f32 %v1990, %v8192
    %8194 = vmatmul.bf16.gmra.mxu0 %v1447
    %v8195 = vpop.f32.mrf.mxu0
    %v8196 = vadd.f32 %v1990, %v8195
    %v8197 = vpop.f32.mrf.mxu0
    %v8198 = vadd.f32 %v1990, %v8197
    %8199 = vmatmul.bf16.gmra.mxu0 %v1455
    %v8200 = vpop.f32.mrf.mxu0
    %v8201 = vadd.f32 %v1990, %v8200
    %v8202 = vpop.f32.mrf.mxu0
    %v8203 = vadd.f32 %v1990, %v8202
    %8204 = vmatmul.bf16.gmra.mxu0 %v1463
    %v8205 = vpop.f32.mrf.mxu0
    %v8206 = vadd.f32 %v1990, %v8205
    %v8207 = vpop.f32.mrf.mxu0
    %v8208 = vadd.f32 %v1990, %v8207
    %8209 = vdwg.mxu0
    %8210 = vmatpush.bf16.msra.mxu0 %v3662
    %8211 = vmatpush.bf16.msra.mxu0 %v3654
    %8212 = vmatpush.bf16.msra.mxu0 %v3646
    %8213 = vmatpush.bf16.msra.mxu0 %v3638
    %8214 = vmatpush.bf16.msra.mxu0 %v3630
    %8215 = vmatpush.bf16.msra.mxu0 %v3622
    %8216 = vmatpush.bf16.msra.mxu0 %v3614
    %8217 = vmatpush.bf16.msra.mxu0 %v3606
    %8218 = vmatmul.bf16.gmra.mxu0 %v1344
    %v8219 = vpop.f32.mrf.mxu0
    %v8220 = vadd.f32 %v8131, %v8219
    %v8221 = vpop.f32.mrf.mxu0
    %v8222 = vadd.f32 %v8133, %v8221
    %8223 = vmatmul.bf16.gmra.mxu0 %v1352
    %v8224 = vpop.f32.mrf.mxu0
    %v8225 = vadd.f32 %v8136, %v8224
    %v8226 = vpop.f32.mrf.mxu0
    %v8227 = vadd.f32 %v8138, %v8226
    %8228 = vmatmul.bf16.gmra.mxu0 %v1360
    %v8229 = vpop.f32.mrf.mxu0
    %v8230 = vadd.f32 %v8141, %v8229
    %v8231 = vpop.f32.mrf.mxu0
    %v8232 = vadd.f32 %v8143, %v8231
    %8233 = vmatmul.bf16.gmra.mxu0 %v1368
    %v8234 = vpop.f32.mrf.mxu0
    %v8235 = vadd.f32 %v8146, %v8234
    %v8236 = vpop.f32.mrf.mxu0
    %v8237 = vadd.f32 %v8148, %v8236
    %8238 = vmatmul.bf16.gmra.mxu0 %v1376
    %v8239 = vpop.f32.mrf.mxu0
    %v8240 = vadd.f32 %v8151, %v8239
    %v8241 = vpop.f32.mrf.mxu0
    %v8242 = vadd.f32 %v8153, %v8241
    %8243 = vmatmul.bf16.gmra.mxu0 %v1384
    %v8244 = vpop.f32.mrf.mxu0
    %v8245 = vadd.f32 %v8156, %v8244
    %v8246 = vpop.f32.mrf.mxu0
    %v8247 = vadd.f32 %v8158, %v8246
    %8248 = vmatmul.bf16.gmra.mxu0 %v1392
    %v8249 = vpop.f32.mrf.mxu0
    %v8250 = vadd.f32 %v8161, %v8249
    %v8251 = vpop.f32.mrf.mxu0
    %v8252 = vadd.f32 %v8163, %v8251
    %8253 = vmatmul.bf16.gmra.mxu0 %v1400
    %v8254 = vpop.f32.mrf.mxu0
    %v8255 = vadd.f32 %v8166, %v8254
    %v8256 = vpop.f32.mrf.mxu0
    %v8257 = vadd.f32 %v8168, %v8256
    %8258 = vmatmul.bf16.gmra.mxu0 %v1408
    %v8259 = vpop.f32.mrf.mxu0
    %v8260 = vadd.f32 %v8171, %v8259
    %v8261 = vpop.f32.mrf.mxu0
    %v8262 = vadd.f32 %v8173, %v8261
    %8263 = vmatmul.bf16.gmra.mxu0 %v1416
    %v8264 = vpop.f32.mrf.mxu0
    %v8265 = vadd.f32 %v8176, %v8264
    %v8266 = vpop.f32.mrf.mxu0
    %v8267 = vadd.f32 %v8178, %v8266
    %8268 = vmatmul.bf16.gmra.mxu0 %v1424
    %v8269 = vpop.f32.mrf.mxu0
    %v8270 = vadd.f32 %v8181, %v8269
    %v8271 = vpop.f32.mrf.mxu0
    %v8272 = vadd.f32 %v8183, %v8271
    %8273 = vmatmul.bf16.gmra.mxu0 %v1432
    %v8274 = vpop.f32.mrf.mxu0
    %v8275 = vadd.f32 %v8186, %v8274
    %v8276 = vpop.f32.mrf.mxu0
    %v8277 = vadd.f32 %v8188, %v8276
    %8278 = vmatmul.bf16.gmra.mxu0 %v1440
    %v8279 = vpop.f32.mrf.mxu0
    %v8280 = vadd.f32 %v8191, %v8279
    %v8281 = vpop.f32.mrf.mxu0
    %v8282 = vadd.f32 %v8193, %v8281
    %8283 = vmatmul.bf16.gmra.mxu0 %v1448
    %v8284 = vpop.f32.mrf.mxu0
    %v8285 = vadd.f32 %v8196, %v8284
    %v8286 = vpop.f32.mrf.mxu0
    %v8287 = vadd.f32 %v8198, %v8286
    %8288 = vmatmul.bf16.gmra.mxu0 %v1456
    %v8289 = vpop.f32.mrf.mxu0
    %v8290 = vadd.f32 %v8201, %v8289
    %v8291 = vpop.f32.mrf.mxu0
    %v8292 = vadd.f32 %v8203, %v8291
    %8293 = vmatmul.bf16.gmra.mxu0 %v1464
    %v8294 = vpop.f32.mrf.mxu0
    %v8295 = vadd.f32 %v8206, %v8294
    %v8296 = vpop.f32.mrf.mxu0
    %v8297 = vadd.f32 %v8208, %v8296
    %8298 = vdwg.mxu0
    %8299 = vmatpush.bf16.msra.mxu0 %v3726
    %8300 = vmatpush.bf16.msra.mxu0 %v3718
    %8301 = vmatpush.bf16.msra.mxu0 %v3710
    %8302 = vmatpush.bf16.msra.mxu0 %v3702
    %8303 = vmatpush.bf16.msra.mxu0 %v3694
    %8304 = vmatpush.bf16.msra.mxu0 %v3686
    %8305 = vmatpush.bf16.msra.mxu0 %v3678
    %8306 = vmatpush.bf16.msra.mxu0 %v3670
    %8307 = vmatmul.bf16.gmra.mxu0 %v1345
    %v8308 = vpop.f32.mrf.mxu0
    %v8309 = vadd.f32 %v8220, %v8308
    %v8310 = vpop.f32.mrf.mxu0
    %v8311 = vadd.f32 %v8222, %v8310
    %8312 = vmatmul.bf16.gmra.mxu0 %v1353
    %v8313 = vpop.f32.mrf.mxu0
    %v8314 = vadd.f32 %v8225, %v8313
    %v8315 = vpop.f32.mrf.mxu0
    %v8316 = vadd.f32 %v8227, %v8315
    %8317 = vmatmul.bf16.gmra.mxu0 %v1361
    %v8318 = vpop.f32.mrf.mxu0
    %v8319 = vadd.f32 %v8230, %v8318
    %v8320 = vpop.f32.mrf.mxu0
    %v8321 = vadd.f32 %v8232, %v8320
    %8322 = vmatmul.bf16.gmra.mxu0 %v1369
    %v8323 = vpop.f32.mrf.mxu0
    %v8324 = vadd.f32 %v8235, %v8323
    %v8325 = vpop.f32.mrf.mxu0
    %v8326 = vadd.f32 %v8237, %v8325
    %8327 = vmatmul.bf16.gmra.mxu0 %v1377
    %v8328 = vpop.f32.mrf.mxu0
    %v8329 = vadd.f32 %v8240, %v8328
    %v8330 = vpop.f32.mrf.mxu0
    %v8331 = vadd.f32 %v8242, %v8330
    %8332 = vmatmul.bf16.gmra.mxu0 %v1385
    %v8333 = vpop.f32.mrf.mxu0
    %v8334 = vadd.f32 %v8245, %v8333
    %v8335 = vpop.f32.mrf.mxu0
    %v8336 = vadd.f32 %v8247, %v8335
    %8337 = vmatmul.bf16.gmra.mxu0 %v1393
    %v8338 = vpop.f32.mrf.mxu0
    %v8339 = vadd.f32 %v8250, %v8338
    %v8340 = vpop.f32.mrf.mxu0
    %v8341 = vadd.f32 %v8252, %v8340
    %8342 = vmatmul.bf16.gmra.mxu0 %v1401
    %v8343 = vpop.f32.mrf.mxu0
    %v8344 = vadd.f32 %v8255, %v8343
    %v8345 = vpop.f32.mrf.mxu0
    %v8346 = vadd.f32 %v8257, %v8345
    %8347 = vmatmul.bf16.gmra.mxu0 %v1409
    %v8348 = vpop.f32.mrf.mxu0
    %v8349 = vadd.f32 %v8260, %v8348
    %v8350 = vpop.f32.mrf.mxu0
    %v8351 = vadd.f32 %v8262, %v8350
    %8352 = vmatmul.bf16.gmra.mxu0 %v1417
    %v8353 = vpop.f32.mrf.mxu0
    %v8354 = vadd.f32 %v8265, %v8353
    %v8355 = vpop.f32.mrf.mxu0
    %v8356 = vadd.f32 %v8267, %v8355
    %8357 = vmatmul.bf16.gmra.mxu0 %v1425
    %v8358 = vpop.f32.mrf.mxu0
    %v8359 = vadd.f32 %v8270, %v8358
    %v8360 = vpop.f32.mrf.mxu0
    %v8361 = vadd.f32 %v8272, %v8360
    %8362 = vmatmul.bf16.gmra.mxu0 %v1433
    %v8363 = vpop.f32.mrf.mxu0
    %v8364 = vadd.f32 %v8275, %v8363
    %v8365 = vpop.f32.mrf.mxu0
    %v8366 = vadd.f32 %v8277, %v8365
    %8367 = vmatmul.bf16.gmra.mxu0 %v1441
    %v8368 = vpop.f32.mrf.mxu0
    %v8369 = vadd.f32 %v8280, %v8368
    %v8370 = vpop.f32.mrf.mxu0
    %v8371 = vadd.f32 %v8282, %v8370
    %8372 = vmatmul.bf16.gmra.mxu0 %v1449
    %v8373 = vpop.f32.mrf.mxu0
    %v8374 = vadd.f32 %v8285, %v8373
    %v8375 = vpop.f32.mrf.mxu0
    %v8376 = vadd.f32 %v8287, %v8375
    %8377 = vmatmul.bf16.gmra.mxu0 %v1457
    %v8378 = vpop.f32.mrf.mxu0
    %v8379 = vadd.f32 %v8290, %v8378
    %v8380 = vpop.f32.mrf.mxu0
    %v8381 = vadd.f32 %v8292, %v8380
    %8382 = vmatmul.bf16.gmra.mxu0 %v1465
    %v8383 = vpop.f32.mrf.mxu0
    %v8384 = vadd.f32 %v8295, %v8383
    %v8385 = vpop.f32.mrf.mxu0
    %v8386 = vadd.f32 %v8297, %v8385
    %8387 = vdwg.mxu0
    %8388 = vmatpush.bf16.msra.mxu0 %v3790
    %8389 = vmatpush.bf16.msra.mxu0 %v3782
    %8390 = vmatpush.bf16.msra.mxu0 %v3774
    %8391 = vmatpush.bf16.msra.mxu0 %v3766
    %8392 = vmatpush.bf16.msra.mxu0 %v3758
    %8393 = vmatpush.bf16.msra.mxu0 %v3750
    %8394 = vmatpush.bf16.msra.mxu0 %v3742
    %8395 = vmatpush.bf16.msra.mxu0 %v3734
    %8396 = vmatmul.bf16.gmra.mxu0 %v1346
    %v8397 = vpop.f32.mrf.mxu0
    %v8398 = vadd.f32 %v8309, %v8397
    %v8399 = vpop.f32.mrf.mxu0
    %v8400 = vadd.f32 %v8311, %v8399
    %8401 = vmatmul.bf16.gmra.mxu0 %v1354
    %v8402 = vpop.f32.mrf.mxu0
    %v8403 = vadd.f32 %v8314, %v8402
    %v8404 = vpop.f32.mrf.mxu0
    %v8405 = vadd.f32 %v8316, %v8404
    %8406 = vmatmul.bf16.gmra.mxu0 %v1362
    %v8407 = vpop.f32.mrf.mxu0
    %v8408 = vadd.f32 %v8319, %v8407
    %v8409 = vpop.f32.mrf.mxu0
    %v8410 = vadd.f32 %v8321, %v8409
    %8411 = vmatmul.bf16.gmra.mxu0 %v1370
    %v8412 = vpop.f32.mrf.mxu0
    %v8413 = vadd.f32 %v8324, %v8412
    %v8414 = vpop.f32.mrf.mxu0
    %v8415 = vadd.f32 %v8326, %v8414
    %8416 = vmatmul.bf16.gmra.mxu0 %v1378
    %v8417 = vpop.f32.mrf.mxu0
    %v8418 = vadd.f32 %v8329, %v8417
    %v8419 = vpop.f32.mrf.mxu0
    %v8420 = vadd.f32 %v8331, %v8419
    %8421 = vmatmul.bf16.gmra.mxu0 %v1386
    %v8422 = vpop.f32.mrf.mxu0
    %v8423 = vadd.f32 %v8334, %v8422
    %v8424 = vpop.f32.mrf.mxu0
    %v8425 = vadd.f32 %v8336, %v8424
    %8426 = vmatmul.bf16.gmra.mxu0 %v1394
    %v8427 = vpop.f32.mrf.mxu0
    %v8428 = vadd.f32 %v8339, %v8427
    %v8429 = vpop.f32.mrf.mxu0
    %v8430 = vadd.f32 %v8341, %v8429
    %8431 = vmatmul.bf16.gmra.mxu0 %v1402
    %v8432 = vpop.f32.mrf.mxu0
    %v8433 = vadd.f32 %v8344, %v8432
    %v8434 = vpop.f32.mrf.mxu0
    %v8435 = vadd.f32 %v8346, %v8434
    %8436 = vmatmul.bf16.gmra.mxu0 %v1410
    %v8437 = vpop.f32.mrf.mxu0
    %v8438 = vadd.f32 %v8349, %v8437
    %v8439 = vpop.f32.mrf.mxu0
    %v8440 = vadd.f32 %v8351, %v8439
    %8441 = vmatmul.bf16.gmra.mxu0 %v1418
    %v8442 = vpop.f32.mrf.mxu0
    %v8443 = vadd.f32 %v8354, %v8442
    %v8444 = vpop.f32.mrf.mxu0
    %v8445 = vadd.f32 %v8356, %v8444
    %8446 = vmatmul.bf16.gmra.mxu0 %v1426
    %v8447 = vpop.f32.mrf.mxu0
    %v8448 = vadd.f32 %v8359, %v8447
    %v8449 = vpop.f32.mrf.mxu0
    %v8450 = vadd.f32 %v8361, %v8449
    %8451 = vmatmul.bf16.gmra.mxu0 %v1434
    %v8452 = vpop.f32.mrf.mxu0
    %v8453 = vadd.f32 %v8364, %v8452
    %v8454 = vpop.f32.mrf.mxu0
    %v8455 = vadd.f32 %v8366, %v8454
    %8456 = vmatmul.bf16.gmra.mxu0 %v1442
    %v8457 = vpop.f32.mrf.mxu0
    %v8458 = vadd.f32 %v8369, %v8457
    %v8459 = vpop.f32.mrf.mxu0
    %v8460 = vadd.f32 %v8371, %v8459
    %8461 = vmatmul.bf16.gmra.mxu0 %v1450
    %v8462 = vpop.f32.mrf.mxu0
    %v8463 = vadd.f32 %v8374, %v8462
    %v8464 = vpop.f32.mrf.mxu0
    %v8465 = vadd.f32 %v8376, %v8464
    %8466 = vmatmul.bf16.gmra.mxu0 %v1458
    %v8467 = vpop.f32.mrf.mxu0
    %v8468 = vadd.f32 %v8379, %v8467
    %v8469 = vpop.f32.mrf.mxu0
    %v8470 = vadd.f32 %v8381, %v8469
    %8471 = vmatmul.bf16.gmra.mxu0 %v1466
    %v8472 = vpop.f32.mrf.mxu0
    %v8473 = vadd.f32 %v8384, %v8472
    %v8474 = vpop.f32.mrf.mxu0
    %v8475 = vadd.f32 %v8386, %v8474
    %8476 = vdwg.mxu0
    %8477 = vmatpush.bf16.msra.mxu0 %v3854
    %8478 = vmatpush.bf16.msra.mxu0 %v3846
    %8479 = vmatpush.bf16.msra.mxu0 %v3838
    %8480 = vmatpush.bf16.msra.mxu0 %v3830
    %8481 = vmatpush.bf16.msra.mxu0 %v3822
    %8482 = vmatpush.bf16.msra.mxu0 %v3814
    %8483 = vmatpush.bf16.msra.mxu0 %v3806
    %8484 = vmatpush.bf16.msra.mxu0 %v3798
    %8485 = vmatmul.bf16.gmra.mxu0 %v1347
    %v8486 = vpop.f32.mrf.mxu0
    %v8487 = vadd.f32 %v8398, %v8486
    %v8488 = vpop.f32.mrf.mxu0
    %v8489 = vadd.f32 %v8400, %v8488
    %8490 = vmatmul.bf16.gmra.mxu0 %v1355
    %v8491 = vpop.f32.mrf.mxu0
    %v8492 = vadd.f32 %v8403, %v8491
    %v8493 = vpop.f32.mrf.mxu0
    %v8494 = vadd.f32 %v8405, %v8493
    %8495 = vmatmul.bf16.gmra.mxu0 %v1363
    %v8496 = vpop.f32.mrf.mxu0
    %v8497 = vadd.f32 %v8408, %v8496
    %v8498 = vpop.f32.mrf.mxu0
    %v8499 = vadd.f32 %v8410, %v8498
    %8500 = vmatmul.bf16.gmra.mxu0 %v1371
    %v8501 = vpop.f32.mrf.mxu0
    %v8502 = vadd.f32 %v8413, %v8501
    %v8503 = vpop.f32.mrf.mxu0
    %v8504 = vadd.f32 %v8415, %v8503
    %8505 = vmatmul.bf16.gmra.mxu0 %v1379
    %v8506 = vpop.f32.mrf.mxu0
    %v8507 = vadd.f32 %v8418, %v8506
    %v8508 = vpop.f32.mrf.mxu0
    %v8509 = vadd.f32 %v8420, %v8508
    %8510 = vmatmul.bf16.gmra.mxu0 %v1387
    %v8511 = vpop.f32.mrf.mxu0
    %v8512 = vadd.f32 %v8423, %v8511
    %v8513 = vpop.f32.mrf.mxu0
    %v8514 = vadd.f32 %v8425, %v8513
    %8515 = vmatmul.bf16.gmra.mxu0 %v1395
    %v8516 = vpop.f32.mrf.mxu0
    %v8517 = vadd.f32 %v8428, %v8516
    %v8518 = vpop.f32.mrf.mxu0
    %v8519 = vadd.f32 %v8430, %v8518
    %8520 = vmatmul.bf16.gmra.mxu0 %v1403
    %v8521 = vpop.f32.mrf.mxu0
    %v8522 = vadd.f32 %v8433, %v8521
    %v8523 = vpop.f32.mrf.mxu0
    %v8524 = vadd.f32 %v8435, %v8523
    %8525 = vmatmul.bf16.gmra.mxu0 %v1411
    %v8526 = vpop.f32.mrf.mxu0
    %v8527 = vadd.f32 %v8438, %v8526
    %v8528 = vpop.f32.mrf.mxu0
    %v8529 = vadd.f32 %v8440, %v8528
    %8530 = vmatmul.bf16.gmra.mxu0 %v1419
    %v8531 = vpop.f32.mrf.mxu0
    %v8532 = vadd.f32 %v8443, %v8531
    %v8533 = vpop.f32.mrf.mxu0
    %v8534 = vadd.f32 %v8445, %v8533
    %8535 = vmatmul.bf16.gmra.mxu0 %v1427
    %v8536 = vpop.f32.mrf.mxu0
    %v8537 = vadd.f32 %v8448, %v8536
    %v8538 = vpop.f32.mrf.mxu0
    %v8539 = vadd.f32 %v8450, %v8538
    %8540 = vmatmul.bf16.gmra.mxu0 %v1435
    %v8541 = vpop.f32.mrf.mxu0
    %v8542 = vadd.f32 %v8453, %v8541
    %v8543 = vpop.f32.mrf.mxu0
    %v8544 = vadd.f32 %v8455, %v8543
    %8545 = vmatmul.bf16.gmra.mxu0 %v1443
    %v8546 = vpop.f32.mrf.mxu0
    %v8547 = vadd.f32 %v8458, %v8546
    %v8548 = vpop.f32.mrf.mxu0
    %v8549 = vadd.f32 %v8460, %v8548
    %8550 = vmatmul.bf16.gmra.mxu0 %v1451
    %v8551 = vpop.f32.mrf.mxu0
    %v8552 = vadd.f32 %v8463, %v8551
    %v8553 = vpop.f32.mrf.mxu0
    %v8554 = vadd.f32 %v8465, %v8553
    %8555 = vmatmul.bf16.gmra.mxu0 %v1459
    %v8556 = vpop.f32.mrf.mxu0
    %v8557 = vadd.f32 %v8468, %v8556
    %v8558 = vpop.f32.mrf.mxu0
    %v8559 = vadd.f32 %v8470, %v8558
    %8560 = vmatmul.bf16.gmra.mxu0 %v1467
    %v8561 = vpop.f32.mrf.mxu0
    %v8562 = vadd.f32 %v8473, %v8561
    %v8563 = vpop.f32.mrf.mxu0
    %v8564 = vadd.f32 %v8475, %v8563
    %8565 = vdwg.mxu0
    %8566 = vmatpush.bf16.msra.mxu0 %v3918
    %8567 = vmatpush.bf16.msra.mxu0 %v3910
    %8568 = vmatpush.bf16.msra.mxu0 %v3902
    %8569 = vmatpush.bf16.msra.mxu0 %v3894
    %8570 = vmatpush.bf16.msra.mxu0 %v3886
    %8571 = vmatpush.bf16.msra.mxu0 %v3878
    %8572 = vmatpush.bf16.msra.mxu0 %v3870
    %8573 = vmatpush.bf16.msra.mxu0 %v3862
    %8574 = vmatmul.bf16.gmra.mxu0 %v1348
    %v8575 = vpop.f32.mrf.mxu0
    %v8576 = vadd.f32 %v8487, %v8575
    %v8577 = vpop.f32.mrf.mxu0
    %v8578 = vadd.f32 %v8489, %v8577
    %8579 = vmatmul.bf16.gmra.mxu0 %v1356
    %v8580 = vpop.f32.mrf.mxu0
    %v8581 = vadd.f32 %v8492, %v8580
    %v8582 = vpop.f32.mrf.mxu0
    %v8583 = vadd.f32 %v8494, %v8582
    %8584 = vmatmul.bf16.gmra.mxu0 %v1364
    %v8585 = vpop.f32.mrf.mxu0
    %v8586 = vadd.f32 %v8497, %v8585
    %v8587 = vpop.f32.mrf.mxu0
    %v8588 = vadd.f32 %v8499, %v8587
    %8589 = vmatmul.bf16.gmra.mxu0 %v1372
    %v8590 = vpop.f32.mrf.mxu0
    %v8591 = vadd.f32 %v8502, %v8590
    %v8592 = vpop.f32.mrf.mxu0
    %v8593 = vadd.f32 %v8504, %v8592
    %8594 = vmatmul.bf16.gmra.mxu0 %v1380
    %v8595 = vpop.f32.mrf.mxu0
    %v8596 = vadd.f32 %v8507, %v8595
    %v8597 = vpop.f32.mrf.mxu0
    %v8598 = vadd.f32 %v8509, %v8597
    %8599 = vmatmul.bf16.gmra.mxu0 %v1388
    %v8600 = vpop.f32.mrf.mxu0
    %v8601 = vadd.f32 %v8512, %v8600
    %v8602 = vpop.f32.mrf.mxu0
    %v8603 = vadd.f32 %v8514, %v8602
    %8604 = vmatmul.bf16.gmra.mxu0 %v1396
    %v8605 = vpop.f32.mrf.mxu0
    %v8606 = vadd.f32 %v8517, %v8605
    %v8607 = vpop.f32.mrf.mxu0
    %v8608 = vadd.f32 %v8519, %v8607
    %8609 = vmatmul.bf16.gmra.mxu0 %v1404
    %v8610 = vpop.f32.mrf.mxu0
    %v8611 = vadd.f32 %v8522, %v8610
    %v8612 = vpop.f32.mrf.mxu0
    %v8613 = vadd.f32 %v8524, %v8612
    %8614 = vmatmul.bf16.gmra.mxu0 %v1412
    %v8615 = vpop.f32.mrf.mxu0
    %v8616 = vadd.f32 %v8527, %v8615
    %v8617 = vpop.f32.mrf.mxu0
    %v8618 = vadd.f32 %v8529, %v8617
    %8619 = vmatmul.bf16.gmra.mxu0 %v1420
    %v8620 = vpop.f32.mrf.mxu0
    %v8621 = vadd.f32 %v8532, %v8620
    %v8622 = vpop.f32.mrf.mxu0
    %v8623 = vadd.f32 %v8534, %v8622
    %8624 = vmatmul.bf16.gmra.mxu0 %v1428
    %v8625 = vpop.f32.mrf.mxu0
    %v8626 = vadd.f32 %v8537, %v8625
    %v8627 = vpop.f32.mrf.mxu0
    %v8628 = vadd.f32 %v8539, %v8627
    %8629 = vmatmul.bf16.gmra.mxu0 %v1436
    %v8630 = vpop.f32.mrf.mxu0
    %v8631 = vadd.f32 %v8542, %v8630
    %v8632 = vpop.f32.mrf.mxu0
    %v8633 = vadd.f32 %v8544, %v8632
    %8634 = vmatmul.bf16.gmra.mxu0 %v1444
    %v8635 = vpop.f32.mrf.mxu0
    %v8636 = vadd.f32 %v8547, %v8635
    %v8637 = vpop.f32.mrf.mxu0
    %v8638 = vadd.f32 %v8549, %v8637
    %8639 = vmatmul.bf16.gmra.mxu0 %v1452
    %v8640 = vpop.f32.mrf.mxu0
    %v8641 = vadd.f32 %v8552, %v8640
    %v8642 = vpop.f32.mrf.mxu0
    %v8643 = vadd.f32 %v8554, %v8642
    %8644 = vmatmul.bf16.gmra.mxu0 %v1460
    %v8645 = vpop.f32.mrf.mxu0
    %v8646 = vadd.f32 %v8557, %v8645
    %v8647 = vpop.f32.mrf.mxu0
    %v8648 = vadd.f32 %v8559, %v8647
    %8649 = vmatmul.bf16.gmra.mxu0 %v1468
    %v8650 = vpop.f32.mrf.mxu0
    %v8651 = vadd.f32 %v8562, %v8650
    %v8652 = vpop.f32.mrf.mxu0
    %v8653 = vadd.f32 %v8564, %v8652
    %8654 = vdwg.mxu0
    %8655 = vmatpush.bf16.msra.mxu0 %v3982
    %8656 = vmatpush.bf16.msra.mxu0 %v3974
    %8657 = vmatpush.bf16.msra.mxu0 %v3966
    %8658 = vmatpush.bf16.msra.mxu0 %v3958
    %8659 = vmatpush.bf16.msra.mxu0 %v3950
    %8660 = vmatpush.bf16.msra.mxu0 %v3942
    %8661 = vmatpush.bf16.msra.mxu0 %v3934
    %8662 = vmatpush.bf16.msra.mxu0 %v3926
    %8663 = vmatmul.bf16.gmra.mxu0 %v1349
    %v8664 = vpop.f32.mrf.mxu0
    %v8665 = vadd.f32 %v8576, %v8664
    %v8666 = vpop.f32.mrf.mxu0
    %v8667 = vadd.f32 %v8578, %v8666
    %8668 = vmatmul.bf16.gmra.mxu0 %v1357
    %v8669 = vpop.f32.mrf.mxu0
    %v8670 = vadd.f32 %v8581, %v8669
    %v8671 = vpop.f32.mrf.mxu0
    %v8672 = vadd.f32 %v8583, %v8671
    %8673 = vmatmul.bf16.gmra.mxu0 %v1365
    %v8674 = vpop.f32.mrf.mxu0
    %v8675 = vadd.f32 %v8586, %v8674
    %v8676 = vpop.f32.mrf.mxu0
    %v8677 = vadd.f32 %v8588, %v8676
    %8678 = vmatmul.bf16.gmra.mxu0 %v1373
    %v8679 = vpop.f32.mrf.mxu0
    %v8680 = vadd.f32 %v8591, %v8679
    %v8681 = vpop.f32.mrf.mxu0
    %v8682 = vadd.f32 %v8593, %v8681
    %8683 = vmatmul.bf16.gmra.mxu0 %v1381
    %v8684 = vpop.f32.mrf.mxu0
    %v8685 = vadd.f32 %v8596, %v8684
    %v8686 = vpop.f32.mrf.mxu0
    %v8687 = vadd.f32 %v8598, %v8686
    %8688 = vmatmul.bf16.gmra.mxu0 %v1389
    %v8689 = vpop.f32.mrf.mxu0
    %v8690 = vadd.f32 %v8601, %v8689
    %v8691 = vpop.f32.mrf.mxu0
    %v8692 = vadd.f32 %v8603, %v8691
    %8693 = vmatmul.bf16.gmra.mxu0 %v1397
    %v8694 = vpop.f32.mrf.mxu0
    %v8695 = vadd.f32 %v8606, %v8694
    %v8696 = vpop.f32.mrf.mxu0
    %v8697 = vadd.f32 %v8608, %v8696
    %8698 = vmatmul.bf16.gmra.mxu0 %v1405
    %v8699 = vpop.f32.mrf.mxu0
    %v8700 = vadd.f32 %v8611, %v8699
    %v8701 = vpop.f32.mrf.mxu0
    %v8702 = vadd.f32 %v8613, %v8701
    %8703 = vmatmul.bf16.gmra.mxu0 %v1413
    %v8704 = vpop.f32.mrf.mxu0
    %v8705 = vadd.f32 %v8616, %v8704
    %v8706 = vpop.f32.mrf.mxu0
    %v8707 = vadd.f32 %v8618, %v8706
    %8708 = vmatmul.bf16.gmra.mxu0 %v1421
    %v8709 = vpop.f32.mrf.mxu0
    %v8710 = vadd.f32 %v8621, %v8709
    %v8711 = vpop.f32.mrf.mxu0
    %v8712 = vadd.f32 %v8623, %v8711
    %8713 = vmatmul.bf16.gmra.mxu0 %v1429
    %v8714 = vpop.f32.mrf.mxu0
    %v8715 = vadd.f32 %v8626, %v8714
    %v8716 = vpop.f32.mrf.mxu0
    %v8717 = vadd.f32 %v8628, %v8716
    %8718 = vmatmul.bf16.gmra.mxu0 %v1437
    %v8719 = vpop.f32.mrf.mxu0
    %v8720 = vadd.f32 %v8631, %v8719
    %v8721 = vpop.f32.mrf.mxu0
    %v8722 = vadd.f32 %v8633, %v8721
    %8723 = vmatmul.bf16.gmra.mxu0 %v1445
    %v8724 = vpop.f32.mrf.mxu0
    %v8725 = vadd.f32 %v8636, %v8724
    %v8726 = vpop.f32.mrf.mxu0
    %v8727 = vadd.f32 %v8638, %v8726
    %8728 = vmatmul.bf16.gmra.mxu0 %v1453
    %v8729 = vpop.f32.mrf.mxu0
    %v8730 = vadd.f32 %v8641, %v8729
    %v8731 = vpop.f32.mrf.mxu0
    %v8732 = vadd.f32 %v8643, %v8731
    %8733 = vmatmul.bf16.gmra.mxu0 %v1461
    %v8734 = vpop.f32.mrf.mxu0
    %v8735 = vadd.f32 %v8646, %v8734
    %v8736 = vpop.f32.mrf.mxu0
    %v8737 = vadd.f32 %v8648, %v8736
    %8738 = vmatmul.bf16.gmra.mxu0 %v1469
    %v8739 = vpop.f32.mrf.mxu0
    %v8740 = vadd.f32 %v8651, %v8739
    %v8741 = vpop.f32.mrf.mxu0
    %v8742 = vadd.f32 %v8653, %v8741
    %8743 = vdwg.mxu0
    %8744 = vmatpush.bf16.msra.mxu0 %v4046
    %8745 = vmatpush.bf16.msra.mxu0 %v4038
    %8746 = vmatpush.bf16.msra.mxu0 %v4030
    %8747 = vmatpush.bf16.msra.mxu0 %v4022
    %8748 = vmatpush.bf16.msra.mxu0 %v4014
    %8749 = vmatpush.bf16.msra.mxu0 %v4006
    %8750 = vmatpush.bf16.msra.mxu0 %v3998
    %8751 = vmatpush.bf16.msra.mxu0 %v3990
    %8752 = vmatmul.bf16.gmra.mxu0 %v1350
    %v8753 = vpop.f32.mrf.mxu0
    %v8754 = vadd.f32 %v8665, %v8753
    %v8755 = vpop.f32.mrf.mxu0
    %v8756 = vadd.f32 %v8667, %v8755
    %8757 = vmatmul.bf16.gmra.mxu0 %v1358
    %v8758 = vpop.f32.mrf.mxu0
    %v8759 = vadd.f32 %v8670, %v8758
    %v8760 = vpop.f32.mrf.mxu0
    %v8761 = vadd.f32 %v8672, %v8760
    %8762 = vmatmul.bf16.gmra.mxu0 %v1366
    %v8763 = vpop.f32.mrf.mxu0
    %v8764 = vadd.f32 %v8675, %v8763
    %v8765 = vpop.f32.mrf.mxu0
    %v8766 = vadd.f32 %v8677, %v8765
    %8767 = vmatmul.bf16.gmra.mxu0 %v1374
    %v8768 = vpop.f32.mrf.mxu0
    %v8769 = vadd.f32 %v8680, %v8768
    %v8770 = vpop.f32.mrf.mxu0
    %v8771 = vadd.f32 %v8682, %v8770
    %8772 = vmatmul.bf16.gmra.mxu0 %v1382
    %v8773 = vpop.f32.mrf.mxu0
    %v8774 = vadd.f32 %v8685, %v8773
    %v8775 = vpop.f32.mrf.mxu0
    %v8776 = vadd.f32 %v8687, %v8775
    %8777 = vmatmul.bf16.gmra.mxu0 %v1390
    %v8778 = vpop.f32.mrf.mxu0
    %v8779 = vadd.f32 %v8690, %v8778
    %v8780 = vpop.f32.mrf.mxu0
    %v8781 = vadd.f32 %v8692, %v8780
    %8782 = vmatmul.bf16.gmra.mxu0 %v1398
    %v8783 = vpop.f32.mrf.mxu0
    %v8784 = vadd.f32 %v8695, %v8783
    %v8785 = vpop.f32.mrf.mxu0
    %v8786 = vadd.f32 %v8697, %v8785
    %8787 = vmatmul.bf16.gmra.mxu0 %v1406
    %v8788 = vpop.f32.mrf.mxu0
    %v8789 = vadd.f32 %v8700, %v8788
    %v8790 = vpop.f32.mrf.mxu0
    %v8791 = vadd.f32 %v8702, %v8790
    %8792 = vmatmul.bf16.gmra.mxu0 %v1414
    %v8793 = vpop.f32.mrf.mxu0
    %v8794 = vadd.f32 %v8705, %v8793
    %v8795 = vpop.f32.mrf.mxu0
    %v8796 = vadd.f32 %v8707, %v8795
    %8797 = vmatmul.bf16.gmra.mxu0 %v1422
    %v8798 = vpop.f32.mrf.mxu0
    %v8799 = vadd.f32 %v8710, %v8798
    %v8800 = vpop.f32.mrf.mxu0
    %v8801 = vadd.f32 %v8712, %v8800
    %8802 = vmatmul.bf16.gmra.mxu0 %v1430
    %v8803 = vpop.f32.mrf.mxu0
    %v8804 = vadd.f32 %v8715, %v8803
    %v8805 = vpop.f32.mrf.mxu0
    %v8806 = vadd.f32 %v8717, %v8805
    %8807 = vmatmul.bf16.gmra.mxu0 %v1438
    %v8808 = vpop.f32.mrf.mxu0
    %v8809 = vadd.f32 %v8720, %v8808
    %v8810 = vpop.f32.mrf.mxu0
    %v8811 = vadd.f32 %v8722, %v8810
    %8812 = vmatmul.bf16.gmra.mxu0 %v1446
    %v8813 = vpop.f32.mrf.mxu0
    %v8814 = vadd.f32 %v8725, %v8813
    %v8815 = vpop.f32.mrf.mxu0
    %v8816 = vadd.f32 %v8727, %v8815
    %8817 = vmatmul.bf16.gmra.mxu0 %v1454
    %v8818 = vpop.f32.mrf.mxu0
    %v8819 = vadd.f32 %v8730, %v8818
    %v8820 = vpop.f32.mrf.mxu0
    %v8821 = vadd.f32 %v8732, %v8820
    %8822 = vmatmul.bf16.gmra.mxu0 %v1462
    %v8823 = vpop.f32.mrf.mxu0
    %v8824 = vadd.f32 %v8735, %v8823
    %v8825 = vpop.f32.mrf.mxu0
    %v8826 = vadd.f32 %v8737, %v8825
    %8827 = vmatmul.bf16.gmra.mxu0 %v1470
    %v8828 = vpop.f32.mrf.mxu0
    %v8829 = vadd.f32 %v8740, %v8828
    %v8830 = vpop.f32.mrf.mxu0
    %v8831 = vadd.f32 %v8742, %v8830
    %8832 = vdwg.mxu0
    %8833 = vmatpush.bf16.msra.mxu0 %v3599
    %8834 = vmatpush.bf16.msra.mxu0 %v3591
    %8835 = vmatpush.bf16.msra.mxu0 %v3583
    %8836 = vmatpush.bf16.msra.mxu0 %v3575
    %8837 = vmatpush.bf16.msra.mxu0 %v3567
    %8838 = vmatpush.bf16.msra.mxu0 %v3559
    %8839 = vmatpush.bf16.msra.mxu0 %v3551
    %8840 = vmatpush.bf16.msra.mxu0 %v3543
    %8841 = vmatmul.bf16.gmra.mxu0 %v1343
    %v8842 = vpop.f32.mrf.mxu0
    %v8843 = vadd.f32 %v1991, %v8842
    %v8844 = vpop.f32.mrf.mxu0
    %v8845 = vadd.f32 %v1991, %v8844
    %8846 = vmatmul.bf16.gmra.mxu0 %v1351
    %v8847 = vpop.f32.mrf.mxu0
    %v8848 = vadd.f32 %v1991, %v8847
    %v8849 = vpop.f32.mrf.mxu0
    %v8850 = vadd.f32 %v1991, %v8849
    %8851 = vmatmul.bf16.gmra.mxu0 %v1359
    %v8852 = vpop.f32.mrf.mxu0
    %v8853 = vadd.f32 %v1991, %v8852
    %v8854 = vpop.f32.mrf.mxu0
    %v8855 = vadd.f32 %v1991, %v8854
    %8856 = vmatmul.bf16.gmra.mxu0 %v1367
    %v8857 = vpop.f32.mrf.mxu0
    %v8858 = vadd.f32 %v1991, %v8857
    %v8859 = vpop.f32.mrf.mxu0
    %v8860 = vadd.f32 %v1991, %v8859
    %8861 = vmatmul.bf16.gmra.mxu0 %v1375
    %v8862 = vpop.f32.mrf.mxu0
    %v8863 = vadd.f32 %v1991, %v8862
    %v8864 = vpop.f32.mrf.mxu0
    %v8865 = vadd.f32 %v1991, %v8864
    %8866 = vmatmul.bf16.gmra.mxu0 %v1383
    %v8867 = vpop.f32.mrf.mxu0
    %v8868 = vadd.f32 %v1991, %v8867
    %v8869 = vpop.f32.mrf.mxu0
    %v8870 = vadd.f32 %v1991, %v8869
    %8871 = vmatmul.bf16.gmra.mxu0 %v1391
    %v8872 = vpop.f32.mrf.mxu0
    %v8873 = vadd.f32 %v1991, %v8872
    %v8874 = vpop.f32.mrf.mxu0
    %v8875 = vadd.f32 %v1991, %v8874
    %8876 = vmatmul.bf16.gmra.mxu0 %v1399
    %v8877 = vpop.f32.mrf.mxu0
    %v8878 = vadd.f32 %v1991, %v8877
    %v8879 = vpop.f32.mrf.mxu0
    %v8880 = vadd.f32 %v1991, %v8879
    %8881 = vmatmul.bf16.gmra.mxu0 %v1407
    %v8882 = vpop.f32.mrf.mxu0
    %v8883 = vadd.f32 %v1991, %v8882
    %v8884 = vpop.f32.mrf.mxu0
    %v8885 = vadd.f32 %v1991, %v8884
    %8886 = vmatmul.bf16.gmra.mxu0 %v1415
    %v8887 = vpop.f32.mrf.mxu0
    %v8888 = vadd.f32 %v1991, %v8887
    %v8889 = vpop.f32.mrf.mxu0
    %v8890 = vadd.f32 %v1991, %v8889
    %8891 = vmatmul.bf16.gmra.mxu0 %v1423
    %v8892 = vpop.f32.mrf.mxu0
    %v8893 = vadd.f32 %v1991, %v8892
    %v8894 = vpop.f32.mrf.mxu0
    %v8895 = vadd.f32 %v1991, %v8894
    %8896 = vmatmul.bf16.gmra.mxu0 %v1431
    %v8897 = vpop.f32.mrf.mxu0
    %v8898 = vadd.f32 %v1991, %v8897
    %v8899 = vpop.f32.mrf.mxu0
    %v8900 = vadd.f32 %v1991, %v8899
    %8901 = vmatmul.bf16.gmra.mxu0 %v1439
    %v8902 = vpop.f32.mrf.mxu0
    %v8903 = vadd.f32 %v1991, %v8902
    %v8904 = vpop.f32.mrf.mxu0
    %v8905 = vadd.f32 %v1991, %v8904
    %8906 = vmatmul.bf16.gmra.mxu0 %v1447
    %v8907 = vpop.f32.mrf.mxu0
    %v8908 = vadd.f32 %v1991, %v8907
    %v8909 = vpop.f32.mrf.mxu0
    %v8910 = vadd.f32 %v1991, %v8909
    %8911 = vmatmul.bf16.gmra.mxu0 %v1455
    %v8912 = vpop.f32.mrf.mxu0
    %v8913 = vadd.f32 %v1991, %v8912
    %v8914 = vpop.f32.mrf.mxu0
    %v8915 = vadd.f32 %v1991, %v8914
    %8916 = vmatmul.bf16.gmra.mxu0 %v1463
    %v8917 = vpop.f32.mrf.mxu0
    %v8918 = vadd.f32 %v1991, %v8917
    %v8919 = vpop.f32.mrf.mxu0
    %v8920 = vadd.f32 %v1991, %v8919
    %8921 = vdwg.mxu0
    %8922 = vmatpush.bf16.msra.mxu0 %v3663
    %8923 = vmatpush.bf16.msra.mxu0 %v3655
    %8924 = vmatpush.bf16.msra.mxu0 %v3647
    %8925 = vmatpush.bf16.msra.mxu0 %v3639
    %8926 = vmatpush.bf16.msra.mxu0 %v3631
    %8927 = vmatpush.bf16.msra.mxu0 %v3623
    %8928 = vmatpush.bf16.msra.mxu0 %v3615
    %8929 = vmatpush.bf16.msra.mxu0 %v3607
    %8930 = vmatmul.bf16.gmra.mxu0 %v1344
    %v8931 = vpop.f32.mrf.mxu0
    %v8932 = vadd.f32 %v8843, %v8931
    %v8933 = vpop.f32.mrf.mxu0
    %v8934 = vadd.f32 %v8845, %v8933
    %8935 = vmatmul.bf16.gmra.mxu0 %v1352
    %v8936 = vpop.f32.mrf.mxu0
    %v8937 = vadd.f32 %v8848, %v8936
    %v8938 = vpop.f32.mrf.mxu0
    %v8939 = vadd.f32 %v8850, %v8938
    %8940 = vmatmul.bf16.gmra.mxu0 %v1360
    %v8941 = vpop.f32.mrf.mxu0
    %v8942 = vadd.f32 %v8853, %v8941
    %v8943 = vpop.f32.mrf.mxu0
    %v8944 = vadd.f32 %v8855, %v8943
    %8945 = vmatmul.bf16.gmra.mxu0 %v1368
    %v8946 = vpop.f32.mrf.mxu0
    %v8947 = vadd.f32 %v8858, %v8946
    %v8948 = vpop.f32.mrf.mxu0
    %v8949 = vadd.f32 %v8860, %v8948
    %8950 = vmatmul.bf16.gmra.mxu0 %v1376
    %v8951 = vpop.f32.mrf.mxu0
    %v8952 = vadd.f32 %v8863, %v8951
    %v8953 = vpop.f32.mrf.mxu0
    %v8954 = vadd.f32 %v8865, %v8953
    %8955 = vmatmul.bf16.gmra.mxu0 %v1384
    %v8956 = vpop.f32.mrf.mxu0
    %v8957 = vadd.f32 %v8868, %v8956
    %v8958 = vpop.f32.mrf.mxu0
    %v8959 = vadd.f32 %v8870, %v8958
    %8960 = vmatmul.bf16.gmra.mxu0 %v1392
    %v8961 = vpop.f32.mrf.mxu0
    %v8962 = vadd.f32 %v8873, %v8961
    %v8963 = vpop.f32.mrf.mxu0
    %v8964 = vadd.f32 %v8875, %v8963
    %8965 = vmatmul.bf16.gmra.mxu0 %v1400
    %v8966 = vpop.f32.mrf.mxu0
    %v8967 = vadd.f32 %v8878, %v8966
    %v8968 = vpop.f32.mrf.mxu0
    %v8969 = vadd.f32 %v8880, %v8968
    %8970 = vmatmul.bf16.gmra.mxu0 %v1408
    %v8971 = vpop.f32.mrf.mxu0
    %v8972 = vadd.f32 %v8883, %v8971
    %v8973 = vpop.f32.mrf.mxu0
    %v8974 = vadd.f32 %v8885, %v8973
    %8975 = vmatmul.bf16.gmra.mxu0 %v1416
    %v8976 = vpop.f32.mrf.mxu0
    %v8977 = vadd.f32 %v8888, %v8976
    %v8978 = vpop.f32.mrf.mxu0
    %v8979 = vadd.f32 %v8890, %v8978
    %8980 = vmatmul.bf16.gmra.mxu0 %v1424
    %v8981 = vpop.f32.mrf.mxu0
    %v8982 = vadd.f32 %v8893, %v8981
    %v8983 = vpop.f32.mrf.mxu0
    %v8984 = vadd.f32 %v8895, %v8983
    %8985 = vmatmul.bf16.gmra.mxu0 %v1432
    %v8986 = vpop.f32.mrf.mxu0
    %v8987 = vadd.f32 %v8898, %v8986
    %v8988 = vpop.f32.mrf.mxu0
    %v8989 = vadd.f32 %v8900, %v8988
    %8990 = vmatmul.bf16.gmra.mxu0 %v1440
    %v8991 = vpop.f32.mrf.mxu0
    %v8992 = vadd.f32 %v8903, %v8991
    %v8993 = vpop.f32.mrf.mxu0
    %v8994 = vadd.f32 %v8905, %v8993
    %8995 = vmatmul.bf16.gmra.mxu0 %v1448
    %v8996 = vpop.f32.mrf.mxu0
    %v8997 = vadd.f32 %v8908, %v8996
    %v8998 = vpop.f32.mrf.mxu0
    %v8999 = vadd.f32 %v8910, %v8998
    %9000 = vmatmul.bf16.gmra.mxu0 %v1456
    %v9001 = vpop.f32.mrf.mxu0
    %v9002 = vadd.f32 %v8913, %v9001
    %v9003 = vpop.f32.mrf.mxu0
    %v9004 = vadd.f32 %v8915, %v9003
    %9005 = vmatmul.bf16.gmra.mxu0 %v1464
    %v9006 = vpop.f32.mrf.mxu0
    %v9007 = vadd.f32 %v8918, %v9006
    %v9008 = vpop.f32.mrf.mxu0
    %v9009 = vadd.f32 %v8920, %v9008
    %9010 = vdwg.mxu0
    %9011 = vmatpush.bf16.msra.mxu0 %v3727
    %9012 = vmatpush.bf16.msra.mxu0 %v3719
    %9013 = vmatpush.bf16.msra.mxu0 %v3711
    %9014 = vmatpush.bf16.msra.mxu0 %v3703
    %9015 = vmatpush.bf16.msra.mxu0 %v3695
    %9016 = vmatpush.bf16.msra.mxu0 %v3687
    %9017 = vmatpush.bf16.msra.mxu0 %v3679
    %9018 = vmatpush.bf16.msra.mxu0 %v3671
    %9019 = vmatmul.bf16.gmra.mxu0 %v1345
    %v9020 = vpop.f32.mrf.mxu0
    %v9021 = vadd.f32 %v8932, %v9020
    %v9022 = vpop.f32.mrf.mxu0
    %v9023 = vadd.f32 %v8934, %v9022
    %9024 = vmatmul.bf16.gmra.mxu0 %v1353
    %v9025 = vpop.f32.mrf.mxu0
    %v9026 = vadd.f32 %v8937, %v9025
    %v9027 = vpop.f32.mrf.mxu0
    %v9028 = vadd.f32 %v8939, %v9027
    %9029 = vmatmul.bf16.gmra.mxu0 %v1361
    %v9030 = vpop.f32.mrf.mxu0
    %v9031 = vadd.f32 %v8942, %v9030
    %v9032 = vpop.f32.mrf.mxu0
    %v9033 = vadd.f32 %v8944, %v9032
    %9034 = vmatmul.bf16.gmra.mxu0 %v1369
    %v9035 = vpop.f32.mrf.mxu0
    %v9036 = vadd.f32 %v8947, %v9035
    %v9037 = vpop.f32.mrf.mxu0
    %v9038 = vadd.f32 %v8949, %v9037
    %9039 = vmatmul.bf16.gmra.mxu0 %v1377
    %v9040 = vpop.f32.mrf.mxu0
    %v9041 = vadd.f32 %v8952, %v9040
    %v9042 = vpop.f32.mrf.mxu0
    %v9043 = vadd.f32 %v8954, %v9042
    %9044 = vmatmul.bf16.gmra.mxu0 %v1385
    %v9045 = vpop.f32.mrf.mxu0
    %v9046 = vadd.f32 %v8957, %v9045
    %v9047 = vpop.f32.mrf.mxu0
    %v9048 = vadd.f32 %v8959, %v9047
    %9049 = vmatmul.bf16.gmra.mxu0 %v1393
    %v9050 = vpop.f32.mrf.mxu0
    %v9051 = vadd.f32 %v8962, %v9050
    %v9052 = vpop.f32.mrf.mxu0
    %v9053 = vadd.f32 %v8964, %v9052
    %9054 = vmatmul.bf16.gmra.mxu0 %v1401
    %v9055 = vpop.f32.mrf.mxu0
    %v9056 = vadd.f32 %v8967, %v9055
    %v9057 = vpop.f32.mrf.mxu0
    %v9058 = vadd.f32 %v8969, %v9057
    %9059 = vmatmul.bf16.gmra.mxu0 %v1409
    %v9060 = vpop.f32.mrf.mxu0
    %v9061 = vadd.f32 %v8972, %v9060
    %v9062 = vpop.f32.mrf.mxu0
    %v9063 = vadd.f32 %v8974, %v9062
    %9064 = vmatmul.bf16.gmra.mxu0 %v1417
    %v9065 = vpop.f32.mrf.mxu0
    %v9066 = vadd.f32 %v8977, %v9065
    %v9067 = vpop.f32.mrf.mxu0
    %v9068 = vadd.f32 %v8979, %v9067
    %9069 = vmatmul.bf16.gmra.mxu0 %v1425
    %v9070 = vpop.f32.mrf.mxu0
    %v9071 = vadd.f32 %v8982, %v9070
    %v9072 = vpop.f32.mrf.mxu0
    %v9073 = vadd.f32 %v8984, %v9072
    %9074 = vmatmul.bf16.gmra.mxu0 %v1433
    %v9075 = vpop.f32.mrf.mxu0
    %v9076 = vadd.f32 %v8987, %v9075
    %v9077 = vpop.f32.mrf.mxu0
    %v9078 = vadd.f32 %v8989, %v9077
    %9079 = vmatmul.bf16.gmra.mxu0 %v1441
    %v9080 = vpop.f32.mrf.mxu0
    %v9081 = vadd.f32 %v8992, %v9080
    %v9082 = vpop.f32.mrf.mxu0
    %v9083 = vadd.f32 %v8994, %v9082
    %9084 = vmatmul.bf16.gmra.mxu0 %v1449
    %v9085 = vpop.f32.mrf.mxu0
    %v9086 = vadd.f32 %v8997, %v9085
    %v9087 = vpop.f32.mrf.mxu0
    %v9088 = vadd.f32 %v8999, %v9087
    %9089 = vmatmul.bf16.gmra.mxu0 %v1457
    %v9090 = vpop.f32.mrf.mxu0
    %v9091 = vadd.f32 %v9002, %v9090
    %v9092 = vpop.f32.mrf.mxu0
    %v9093 = vadd.f32 %v9004, %v9092
    %9094 = vmatmul.bf16.gmra.mxu0 %v1465
    %v9095 = vpop.f32.mrf.mxu0
    %v9096 = vadd.f32 %v9007, %v9095
    %v9097 = vpop.f32.mrf.mxu0
    %v9098 = vadd.f32 %v9009, %v9097
    %9099 = vdwg.mxu0
    %9100 = vmatpush.bf16.msra.mxu0 %v3791
    %9101 = vmatpush.bf16.msra.mxu0 %v3783
    %9102 = vmatpush.bf16.msra.mxu0 %v3775
    %9103 = vmatpush.bf16.msra.mxu0 %v3767
    %9104 = vmatpush.bf16.msra.mxu0 %v3759
    %9105 = vmatpush.bf16.msra.mxu0 %v3751
    %9106 = vmatpush.bf16.msra.mxu0 %v3743
    %9107 = vmatpush.bf16.msra.mxu0 %v3735
    %9108 = vmatmul.bf16.gmra.mxu0 %v1346
    %v9109 = vpop.f32.mrf.mxu0
    %v9110 = vadd.f32 %v9021, %v9109
    %v9111 = vpop.f32.mrf.mxu0
    %v9112 = vadd.f32 %v9023, %v9111
    %9113 = vmatmul.bf16.gmra.mxu0 %v1354
    %v9114 = vpop.f32.mrf.mxu0
    %v9115 = vadd.f32 %v9026, %v9114
    %v9116 = vpop.f32.mrf.mxu0
    %v9117 = vadd.f32 %v9028, %v9116
    %9118 = vmatmul.bf16.gmra.mxu0 %v1362
    %v9119 = vpop.f32.mrf.mxu0
    %v9120 = vadd.f32 %v9031, %v9119
    %v9121 = vpop.f32.mrf.mxu0
    %v9122 = vadd.f32 %v9033, %v9121
    %9123 = vmatmul.bf16.gmra.mxu0 %v1370
    %v9124 = vpop.f32.mrf.mxu0
    %v9125 = vadd.f32 %v9036, %v9124
    %v9126 = vpop.f32.mrf.mxu0
    %v9127 = vadd.f32 %v9038, %v9126
    %9128 = vmatmul.bf16.gmra.mxu0 %v1378
    %v9129 = vpop.f32.mrf.mxu0
    %v9130 = vadd.f32 %v9041, %v9129
    %v9131 = vpop.f32.mrf.mxu0
    %v9132 = vadd.f32 %v9043, %v9131
    %9133 = vmatmul.bf16.gmra.mxu0 %v1386
    %v9134 = vpop.f32.mrf.mxu0
    %v9135 = vadd.f32 %v9046, %v9134
    %v9136 = vpop.f32.mrf.mxu0
    %v9137 = vadd.f32 %v9048, %v9136
    %9138 = vmatmul.bf16.gmra.mxu0 %v1394
    %v9139 = vpop.f32.mrf.mxu0
    %v9140 = vadd.f32 %v9051, %v9139
    %v9141 = vpop.f32.mrf.mxu0
    %v9142 = vadd.f32 %v9053, %v9141
    %9143 = vmatmul.bf16.gmra.mxu0 %v1402
    %v9144 = vpop.f32.mrf.mxu0
    %v9145 = vadd.f32 %v9056, %v9144
    %v9146 = vpop.f32.mrf.mxu0
    %v9147 = vadd.f32 %v9058, %v9146
    %9148 = vmatmul.bf16.gmra.mxu0 %v1410
    %v9149 = vpop.f32.mrf.mxu0
    %v9150 = vadd.f32 %v9061, %v9149
    %v9151 = vpop.f32.mrf.mxu0
    %v9152 = vadd.f32 %v9063, %v9151
    %9153 = vmatmul.bf16.gmra.mxu0 %v1418
    %v9154 = vpop.f32.mrf.mxu0
    %v9155 = vadd.f32 %v9066, %v9154
    %v9156 = vpop.f32.mrf.mxu0
    %v9157 = vadd.f32 %v9068, %v9156
    %9158 = vmatmul.bf16.gmra.mxu0 %v1426
    %v9159 = vpop.f32.mrf.mxu0
    %v9160 = vadd.f32 %v9071, %v9159
    %v9161 = vpop.f32.mrf.mxu0
    %v9162 = vadd.f32 %v9073, %v9161
    %9163 = vmatmul.bf16.gmra.mxu0 %v1434
    %v9164 = vpop.f32.mrf.mxu0
    %v9165 = vadd.f32 %v9076, %v9164
    %v9166 = vpop.f32.mrf.mxu0
    %v9167 = vadd.f32 %v9078, %v9166
    %9168 = vmatmul.bf16.gmra.mxu0 %v1442
    %v9169 = vpop.f32.mrf.mxu0
    %v9170 = vadd.f32 %v9081, %v9169
    %v9171 = vpop.f32.mrf.mxu0
    %v9172 = vadd.f32 %v9083, %v9171
    %9173 = vmatmul.bf16.gmra.mxu0 %v1450
    %v9174 = vpop.f32.mrf.mxu0
    %v9175 = vadd.f32 %v9086, %v9174
    %v9176 = vpop.f32.mrf.mxu0
    %v9177 = vadd.f32 %v9088, %v9176
    %9178 = vmatmul.bf16.gmra.mxu0 %v1458
    %v9179 = vpop.f32.mrf.mxu0
    %v9180 = vadd.f32 %v9091, %v9179
    %v9181 = vpop.f32.mrf.mxu0
    %v9182 = vadd.f32 %v9093, %v9181
    %9183 = vmatmul.bf16.gmra.mxu0 %v1466
    %v9184 = vpop.f32.mrf.mxu0
    %v9185 = vadd.f32 %v9096, %v9184
    %v9186 = vpop.f32.mrf.mxu0
    %v9187 = vadd.f32 %v9098, %v9186
    %9188 = vdwg.mxu0
    %9189 = vmatpush.bf16.msra.mxu0 %v3855
    %9190 = vmatpush.bf16.msra.mxu0 %v3847
    %9191 = vmatpush.bf16.msra.mxu0 %v3839
    %9192 = vmatpush.bf16.msra.mxu0 %v3831
    %9193 = vmatpush.bf16.msra.mxu0 %v3823
    %9194 = vmatpush.bf16.msra.mxu0 %v3815
    %9195 = vmatpush.bf16.msra.mxu0 %v3807
    %9196 = vmatpush.bf16.msra.mxu0 %v3799
    %9197 = vmatmul.bf16.gmra.mxu0 %v1347
    %v9198 = vpop.f32.mrf.mxu0
    %v9199 = vadd.f32 %v9110, %v9198
    %v9200 = vpop.f32.mrf.mxu0
    %v9201 = vadd.f32 %v9112, %v9200
    %9202 = vmatmul.bf16.gmra.mxu0 %v1355
    %v9203 = vpop.f32.mrf.mxu0
    %v9204 = vadd.f32 %v9115, %v9203
    %v9205 = vpop.f32.mrf.mxu0
    %v9206 = vadd.f32 %v9117, %v9205
    %9207 = vmatmul.bf16.gmra.mxu0 %v1363
    %v9208 = vpop.f32.mrf.mxu0
    %v9209 = vadd.f32 %v9120, %v9208
    %v9210 = vpop.f32.mrf.mxu0
    %v9211 = vadd.f32 %v9122, %v9210
    %9212 = vmatmul.bf16.gmra.mxu0 %v1371
    %v9213 = vpop.f32.mrf.mxu0
    %v9214 = vadd.f32 %v9125, %v9213
    %v9215 = vpop.f32.mrf.mxu0
    %v9216 = vadd.f32 %v9127, %v9215
    %9217 = vmatmul.bf16.gmra.mxu0 %v1379
    %v9218 = vpop.f32.mrf.mxu0
    %v9219 = vadd.f32 %v9130, %v9218
    %v9220 = vpop.f32.mrf.mxu0
    %v9221 = vadd.f32 %v9132, %v9220
    %9222 = vmatmul.bf16.gmra.mxu0 %v1387
    %v9223 = vpop.f32.mrf.mxu0
    %v9224 = vadd.f32 %v9135, %v9223
    %v9225 = vpop.f32.mrf.mxu0
    %v9226 = vadd.f32 %v9137, %v9225
    %9227 = vmatmul.bf16.gmra.mxu0 %v1395
    %v9228 = vpop.f32.mrf.mxu0
    %v9229 = vadd.f32 %v9140, %v9228
    %v9230 = vpop.f32.mrf.mxu0
    %v9231 = vadd.f32 %v9142, %v9230
    %9232 = vmatmul.bf16.gmra.mxu0 %v1403
    %v9233 = vpop.f32.mrf.mxu0
    %v9234 = vadd.f32 %v9145, %v9233
    %v9235 = vpop.f32.mrf.mxu0
    %v9236 = vadd.f32 %v9147, %v9235
    %9237 = vmatmul.bf16.gmra.mxu0 %v1411
    %v9238 = vpop.f32.mrf.mxu0
    %v9239 = vadd.f32 %v9150, %v9238
    %v9240 = vpop.f32.mrf.mxu0
    %v9241 = vadd.f32 %v9152, %v9240
    %9242 = vmatmul.bf16.gmra.mxu0 %v1419
    %v9243 = vpop.f32.mrf.mxu0
    %v9244 = vadd.f32 %v9155, %v9243
    %v9245 = vpop.f32.mrf.mxu0
    %v9246 = vadd.f32 %v9157, %v9245
    %9247 = vmatmul.bf16.gmra.mxu0 %v1427
    %v9248 = vpop.f32.mrf.mxu0
    %v9249 = vadd.f32 %v9160, %v9248
    %v9250 = vpop.f32.mrf.mxu0
    %v9251 = vadd.f32 %v9162, %v9250
    %9252 = vmatmul.bf16.gmra.mxu0 %v1435
    %v9253 = vpop.f32.mrf.mxu0
    %v9254 = vadd.f32 %v9165, %v9253
    %v9255 = vpop.f32.mrf.mxu0
    %v9256 = vadd.f32 %v9167, %v9255
    %9257 = vmatmul.bf16.gmra.mxu0 %v1443
    %v9258 = vpop.f32.mrf.mxu0
    %v9259 = vadd.f32 %v9170, %v9258
    %v9260 = vpop.f32.mrf.mxu0
    %v9261 = vadd.f32 %v9172, %v9260
    %9262 = vmatmul.bf16.gmra.mxu0 %v1451
    %v9263 = vpop.f32.mrf.mxu0
    %v9264 = vadd.f32 %v9175, %v9263
    %v9265 = vpop.f32.mrf.mxu0
    %v9266 = vadd.f32 %v9177, %v9265
    %9267 = vmatmul.bf16.gmra.mxu0 %v1459
    %v9268 = vpop.f32.mrf.mxu0
    %v9269 = vadd.f32 %v9180, %v9268
    %v9270 = vpop.f32.mrf.mxu0
    %v9271 = vadd.f32 %v9182, %v9270
    %9272 = vmatmul.bf16.gmra.mxu0 %v1467
    %v9273 = vpop.f32.mrf.mxu0
    %v9274 = vadd.f32 %v9185, %v9273
    %v9275 = vpop.f32.mrf.mxu0
    %v9276 = vadd.f32 %v9187, %v9275
    %9277 = vdwg.mxu0
    %9278 = vmatpush.bf16.msra.mxu0 %v3919
    %9279 = vmatpush.bf16.msra.mxu0 %v3911
    %9280 = vmatpush.bf16.msra.mxu0 %v3903
    %9281 = vmatpush.bf16.msra.mxu0 %v3895
    %9282 = vmatpush.bf16.msra.mxu0 %v3887
    %9283 = vmatpush.bf16.msra.mxu0 %v3879
    %9284 = vmatpush.bf16.msra.mxu0 %v3871
    %9285 = vmatpush.bf16.msra.mxu0 %v3863
    %9286 = vmatmul.bf16.gmra.mxu0 %v1348
    %v9287 = vpop.f32.mrf.mxu0
    %v9288 = vadd.f32 %v9199, %v9287
    %v9289 = vpop.f32.mrf.mxu0
    %v9290 = vadd.f32 %v9201, %v9289
    %9291 = vmatmul.bf16.gmra.mxu0 %v1356
    %v9292 = vpop.f32.mrf.mxu0
    %v9293 = vadd.f32 %v9204, %v9292
    %v9294 = vpop.f32.mrf.mxu0
    %v9295 = vadd.f32 %v9206, %v9294
    %9296 = vmatmul.bf16.gmra.mxu0 %v1364
    %v9297 = vpop.f32.mrf.mxu0
    %v9298 = vadd.f32 %v9209, %v9297
    %v9299 = vpop.f32.mrf.mxu0
    %v9300 = vadd.f32 %v9211, %v9299
    %9301 = vmatmul.bf16.gmra.mxu0 %v1372
    %v9302 = vpop.f32.mrf.mxu0
    %v9303 = vadd.f32 %v9214, %v9302
    %v9304 = vpop.f32.mrf.mxu0
    %v9305 = vadd.f32 %v9216, %v9304
    %9306 = vmatmul.bf16.gmra.mxu0 %v1380
    %v9307 = vpop.f32.mrf.mxu0
    %v9308 = vadd.f32 %v9219, %v9307
    %v9309 = vpop.f32.mrf.mxu0
    %v9310 = vadd.f32 %v9221, %v9309
    %9311 = vmatmul.bf16.gmra.mxu0 %v1388
    %v9312 = vpop.f32.mrf.mxu0
    %v9313 = vadd.f32 %v9224, %v9312
    %v9314 = vpop.f32.mrf.mxu0
    %v9315 = vadd.f32 %v9226, %v9314
    %9316 = vmatmul.bf16.gmra.mxu0 %v1396
    %v9317 = vpop.f32.mrf.mxu0
    %v9318 = vadd.f32 %v9229, %v9317
    %v9319 = vpop.f32.mrf.mxu0
    %v9320 = vadd.f32 %v9231, %v9319
    %9321 = vmatmul.bf16.gmra.mxu0 %v1404
    %v9322 = vpop.f32.mrf.mxu0
    %v9323 = vadd.f32 %v9234, %v9322
    %v9324 = vpop.f32.mrf.mxu0
    %v9325 = vadd.f32 %v9236, %v9324
    %9326 = vmatmul.bf16.gmra.mxu0 %v1412
    %v9327 = vpop.f32.mrf.mxu0
    %v9328 = vadd.f32 %v9239, %v9327
    %v9329 = vpop.f32.mrf.mxu0
    %v9330 = vadd.f32 %v9241, %v9329
    %9331 = vmatmul.bf16.gmra.mxu0 %v1420
    %v9332 = vpop.f32.mrf.mxu0
    %v9333 = vadd.f32 %v9244, %v9332
    %v9334 = vpop.f32.mrf.mxu0
    %v9335 = vadd.f32 %v9246, %v9334
    %9336 = vmatmul.bf16.gmra.mxu0 %v1428
    %v9337 = vpop.f32.mrf.mxu0
    %v9338 = vadd.f32 %v9249, %v9337
    %v9339 = vpop.f32.mrf.mxu0
    %v9340 = vadd.f32 %v9251, %v9339
    %9341 = vmatmul.bf16.gmra.mxu0 %v1436
    %v9342 = vpop.f32.mrf.mxu0
    %v9343 = vadd.f32 %v9254, %v9342
    %v9344 = vpop.f32.mrf.mxu0
    %v9345 = vadd.f32 %v9256, %v9344
    %9346 = vmatmul.bf16.gmra.mxu0 %v1444
    %v9347 = vpop.f32.mrf.mxu0
    %v9348 = vadd.f32 %v9259, %v9347
    %v9349 = vpop.f32.mrf.mxu0
    %v9350 = vadd.f32 %v9261, %v9349
    %9351 = vmatmul.bf16.gmra.mxu0 %v1452
    %v9352 = vpop.f32.mrf.mxu0
    %v9353 = vadd.f32 %v9264, %v9352
    %v9354 = vpop.f32.mrf.mxu0
    %v9355 = vadd.f32 %v9266, %v9354
    %9356 = vmatmul.bf16.gmra.mxu0 %v1460
    %v9357 = vpop.f32.mrf.mxu0
    %v9358 = vadd.f32 %v9269, %v9357
    %v9359 = vpop.f32.mrf.mxu0
    %v9360 = vadd.f32 %v9271, %v9359
    %9361 = vmatmul.bf16.gmra.mxu0 %v1468
    %v9362 = vpop.f32.mrf.mxu0
    %v9363 = vadd.f32 %v9274, %v9362
    %v9364 = vpop.f32.mrf.mxu0
    %v9365 = vadd.f32 %v9276, %v9364
    %9366 = vdwg.mxu0
    %9367 = vmatpush.bf16.msra.mxu0 %v3983
    %9368 = vmatpush.bf16.msra.mxu0 %v3975
    %9369 = vmatpush.bf16.msra.mxu0 %v3967
    %9370 = vmatpush.bf16.msra.mxu0 %v3959
    %9371 = vmatpush.bf16.msra.mxu0 %v3951
    %9372 = vmatpush.bf16.msra.mxu0 %v3943
    %9373 = vmatpush.bf16.msra.mxu0 %v3935
    %9374 = vmatpush.bf16.msra.mxu0 %v3927
    %9375 = vmatmul.bf16.gmra.mxu0 %v1349
    %v9376 = vpop.f32.mrf.mxu0
    %v9377 = vadd.f32 %v9288, %v9376
    %v9378 = vpop.f32.mrf.mxu0
    %v9379 = vadd.f32 %v9290, %v9378
    %9380 = vmatmul.bf16.gmra.mxu0 %v1357
    %v9381 = vpop.f32.mrf.mxu0
    %v9382 = vadd.f32 %v9293, %v9381
    %v9383 = vpop.f32.mrf.mxu0
    %v9384 = vadd.f32 %v9295, %v9383
    %9385 = vmatmul.bf16.gmra.mxu0 %v1365
    %v9386 = vpop.f32.mrf.mxu0
    %v9387 = vadd.f32 %v9298, %v9386
    %v9388 = vpop.f32.mrf.mxu0
    %v9389 = vadd.f32 %v9300, %v9388
    %9390 = vmatmul.bf16.gmra.mxu0 %v1373
    %v9391 = vpop.f32.mrf.mxu0
    %v9392 = vadd.f32 %v9303, %v9391
    %v9393 = vpop.f32.mrf.mxu0
    %v9394 = vadd.f32 %v9305, %v9393
    %9395 = vmatmul.bf16.gmra.mxu0 %v1381
    %v9396 = vpop.f32.mrf.mxu0
    %v9397 = vadd.f32 %v9308, %v9396
    %v9398 = vpop.f32.mrf.mxu0
    %v9399 = vadd.f32 %v9310, %v9398
    %9400 = vmatmul.bf16.gmra.mxu0 %v1389
    %v9401 = vpop.f32.mrf.mxu0
    %v9402 = vadd.f32 %v9313, %v9401
    %v9403 = vpop.f32.mrf.mxu0
    %v9404 = vadd.f32 %v9315, %v9403
    %9405 = vmatmul.bf16.gmra.mxu0 %v1397
    %v9406 = vpop.f32.mrf.mxu0
    %v9407 = vadd.f32 %v9318, %v9406
    %v9408 = vpop.f32.mrf.mxu0
    %v9409 = vadd.f32 %v9320, %v9408
    %9410 = vmatmul.bf16.gmra.mxu0 %v1405
    %v9411 = vpop.f32.mrf.mxu0
    %v9412 = vadd.f32 %v9323, %v9411
    %v9413 = vpop.f32.mrf.mxu0
    %v9414 = vadd.f32 %v9325, %v9413
    %9415 = vmatmul.bf16.gmra.mxu0 %v1413
    %v9416 = vpop.f32.mrf.mxu0
    %v9417 = vadd.f32 %v9328, %v9416
    %v9418 = vpop.f32.mrf.mxu0
    %v9419 = vadd.f32 %v9330, %v9418
    %9420 = vmatmul.bf16.gmra.mxu0 %v1421
    %v9421 = vpop.f32.mrf.mxu0
    %v9422 = vadd.f32 %v9333, %v9421
    %v9423 = vpop.f32.mrf.mxu0
    %v9424 = vadd.f32 %v9335, %v9423
    %9425 = vmatmul.bf16.gmra.mxu0 %v1429
    %v9426 = vpop.f32.mrf.mxu0
    %v9427 = vadd.f32 %v9338, %v9426
    %v9428 = vpop.f32.mrf.mxu0
    %v9429 = vadd.f32 %v9340, %v9428
    %9430 = vmatmul.bf16.gmra.mxu0 %v1437
    %v9431 = vpop.f32.mrf.mxu0
    %v9432 = vadd.f32 %v9343, %v9431
    %v9433 = vpop.f32.mrf.mxu0
    %v9434 = vadd.f32 %v9345, %v9433
    %9435 = vmatmul.bf16.gmra.mxu0 %v1445
    %v9436 = vpop.f32.mrf.mxu0
    %v9437 = vadd.f32 %v9348, %v9436
    %v9438 = vpop.f32.mrf.mxu0
    %v9439 = vadd.f32 %v9350, %v9438
    %9440 = vmatmul.bf16.gmra.mxu0 %v1453
    %v9441 = vpop.f32.mrf.mxu0
    %v9442 = vadd.f32 %v9353, %v9441
    %v9443 = vpop.f32.mrf.mxu0
    %v9444 = vadd.f32 %v9355, %v9443
    %9445 = vmatmul.bf16.gmra.mxu0 %v1461
    %v9446 = vpop.f32.mrf.mxu0
    %v9447 = vadd.f32 %v9358, %v9446
    %v9448 = vpop.f32.mrf.mxu0
    %v9449 = vadd.f32 %v9360, %v9448
    %9450 = vmatmul.bf16.gmra.mxu0 %v1469
    %v9451 = vpop.f32.mrf.mxu0
    %v9452 = vadd.f32 %v9363, %v9451
    %v9453 = vpop.f32.mrf.mxu0
    %v9454 = vadd.f32 %v9365, %v9453
    %9455 = vdwg.mxu0
    %9456 = vmatpush.bf16.msra.mxu0 %v4047
    %9457 = vmatpush.bf16.msra.mxu0 %v4039
    %9458 = vmatpush.bf16.msra.mxu0 %v4031
    %9459 = vmatpush.bf16.msra.mxu0 %v4023
    %9460 = vmatpush.bf16.msra.mxu0 %v4015
    %9461 = vmatpush.bf16.msra.mxu0 %v4007
    %9462 = vmatpush.bf16.msra.mxu0 %v3999
    %9463 = vmatpush.bf16.msra.mxu0 %v3991
    %9464 = vmatmul.bf16.gmra.mxu0 %v1350
    %v9465 = vpop.f32.mrf.mxu0
    %v9466 = vadd.f32 %v9377, %v9465
    %v9467 = vpop.f32.mrf.mxu0
    %v9468 = vadd.f32 %v9379, %v9467
    %9469 = vmatmul.bf16.gmra.mxu0 %v1358
    %v9470 = vpop.f32.mrf.mxu0
    %v9471 = vadd.f32 %v9382, %v9470
    %v9472 = vpop.f32.mrf.mxu0
    %v9473 = vadd.f32 %v9384, %v9472
    %9474 = vmatmul.bf16.gmra.mxu0 %v1366
    %v9475 = vpop.f32.mrf.mxu0
    %v9476 = vadd.f32 %v9387, %v9475
    %v9477 = vpop.f32.mrf.mxu0
    %v9478 = vadd.f32 %v9389, %v9477
    %9479 = vmatmul.bf16.gmra.mxu0 %v1374
    %v9480 = vpop.f32.mrf.mxu0
    %v9481 = vadd.f32 %v9392, %v9480
    %v9482 = vpop.f32.mrf.mxu0
    %v9483 = vadd.f32 %v9394, %v9482
    %9484 = vmatmul.bf16.gmra.mxu0 %v1382
    %v9485 = vpop.f32.mrf.mxu0
    %v9486 = vadd.f32 %v9397, %v9485
    %v9487 = vpop.f32.mrf.mxu0
    %v9488 = vadd.f32 %v9399, %v9487
    %9489 = vmatmul.bf16.gmra.mxu0 %v1390
    %v9490 = vpop.f32.mrf.mxu0
    %v9491 = vadd.f32 %v9402, %v9490
    %v9492 = vpop.f32.mrf.mxu0
    %v9493 = vadd.f32 %v9404, %v9492
    %9494 = vmatmul.bf16.gmra.mxu0 %v1398
    %v9495 = vpop.f32.mrf.mxu0
    %v9496 = vadd.f32 %v9407, %v9495
    %v9497 = vpop.f32.mrf.mxu0
    %v9498 = vadd.f32 %v9409, %v9497
    %9499 = vmatmul.bf16.gmra.mxu0 %v1406
    %v9500 = vpop.f32.mrf.mxu0
    %v9501 = vadd.f32 %v9412, %v9500
    %v9502 = vpop.f32.mrf.mxu0
    %v9503 = vadd.f32 %v9414, %v9502
    %9504 = vmatmul.bf16.gmra.mxu0 %v1414
    %v9505 = vpop.f32.mrf.mxu0
    %v9506 = vadd.f32 %v9417, %v9505
    %v9507 = vpop.f32.mrf.mxu0
    %v9508 = vadd.f32 %v9419, %v9507
    %9509 = vmatmul.bf16.gmra.mxu0 %v1422
    %v9510 = vpop.f32.mrf.mxu0
    %v9511 = vadd.f32 %v9422, %v9510
    %v9512 = vpop.f32.mrf.mxu0
    %v9513 = vadd.f32 %v9424, %v9512
    %9514 = vmatmul.bf16.gmra.mxu0 %v1430
    %v9515 = vpop.f32.mrf.mxu0
    %v9516 = vadd.f32 %v9427, %v9515
    %v9517 = vpop.f32.mrf.mxu0
    %v9518 = vadd.f32 %v9429, %v9517
    %9519 = vmatmul.bf16.gmra.mxu0 %v1438
    %v9520 = vpop.f32.mrf.mxu0
    %v9521 = vadd.f32 %v9432, %v9520
    %v9522 = vpop.f32.mrf.mxu0
    %v9523 = vadd.f32 %v9434, %v9522
    %9524 = vmatmul.bf16.gmra.mxu0 %v1446
    %v9525 = vpop.f32.mrf.mxu0
    %v9526 = vadd.f32 %v9437, %v9525
    %v9527 = vpop.f32.mrf.mxu0
    %v9528 = vadd.f32 %v9439, %v9527
    %9529 = vmatmul.bf16.gmra.mxu0 %v1454
    %v9530 = vpop.f32.mrf.mxu0
    %v9531 = vadd.f32 %v9442, %v9530
    %v9532 = vpop.f32.mrf.mxu0
    %v9533 = vadd.f32 %v9444, %v9532
    %9534 = vmatmul.bf16.gmra.mxu0 %v1462
    %v9535 = vpop.f32.mrf.mxu0
    %v9536 = vadd.f32 %v9447, %v9535
    %v9537 = vpop.f32.mrf.mxu0
    %v9538 = vadd.f32 %v9449, %v9537
    %9539 = vmatmul.bf16.gmra.mxu0 %v1470
    %v9540 = vpop.f32.mrf.mxu0
    %v9541 = vadd.f32 %v9452, %v9540
    %v9542 = vpop.f32.mrf.mxu0
    %v9543 = vadd.f32 %v9454, %v9542
    %9544 = vdwg.mxu0
    %9545 = vmatpush.bf16.msra.mxu0 %v3600
    %9546 = vmatpush.bf16.msra.mxu0 %v3592
    %9547 = vmatpush.bf16.msra.mxu0 %v3584
    %9548 = vmatpush.bf16.msra.mxu0 %v3576
    %9549 = vmatpush.bf16.msra.mxu0 %v3568
    %9550 = vmatpush.bf16.msra.mxu0 %v3560
    %9551 = vmatpush.bf16.msra.mxu0 %v3552
    %9552 = vmatpush.bf16.msra.mxu0 %v3544
    %9553 = vmatmul.bf16.gmra.mxu0 %v1343
    %v9554 = vpop.f32.mrf.mxu0
    %v9555 = vadd.f32 %v1992, %v9554
    %v9556 = vpop.f32.mrf.mxu0
    %v9557 = vadd.f32 %v1992, %v9556
    %9558 = vmatmul.bf16.gmra.mxu0 %v1351
    %v9559 = vpop.f32.mrf.mxu0
    %v9560 = vadd.f32 %v1992, %v9559
    %v9561 = vpop.f32.mrf.mxu0
    %v9562 = vadd.f32 %v1992, %v9561
    %9563 = vmatmul.bf16.gmra.mxu0 %v1359
    %v9564 = vpop.f32.mrf.mxu0
    %v9565 = vadd.f32 %v1992, %v9564
    %v9566 = vpop.f32.mrf.mxu0
    %v9567 = vadd.f32 %v1992, %v9566
    %9568 = vmatmul.bf16.gmra.mxu0 %v1367
    %v9569 = vpop.f32.mrf.mxu0
    %v9570 = vadd.f32 %v1992, %v9569
    %v9571 = vpop.f32.mrf.mxu0
    %v9572 = vadd.f32 %v1992, %v9571
    %9573 = vmatmul.bf16.gmra.mxu0 %v1375
    %v9574 = vpop.f32.mrf.mxu0
    %v9575 = vadd.f32 %v1992, %v9574
    %v9576 = vpop.f32.mrf.mxu0
    %v9577 = vadd.f32 %v1992, %v9576
    %9578 = vmatmul.bf16.gmra.mxu0 %v1383
    %v9579 = vpop.f32.mrf.mxu0
    %v9580 = vadd.f32 %v1992, %v9579
    %v9581 = vpop.f32.mrf.mxu0
    %v9582 = vadd.f32 %v1992, %v9581
    %9583 = vmatmul.bf16.gmra.mxu0 %v1391
    %v9584 = vpop.f32.mrf.mxu0
    %v9585 = vadd.f32 %v1992, %v9584
    %v9586 = vpop.f32.mrf.mxu0
    %v9587 = vadd.f32 %v1992, %v9586
    %9588 = vmatmul.bf16.gmra.mxu0 %v1399
    %v9589 = vpop.f32.mrf.mxu0
    %v9590 = vadd.f32 %v1992, %v9589
    %v9591 = vpop.f32.mrf.mxu0
    %v9592 = vadd.f32 %v1992, %v9591
    %9593 = vmatmul.bf16.gmra.mxu0 %v1407
    %v9594 = vpop.f32.mrf.mxu0
    %v9595 = vadd.f32 %v1992, %v9594
    %v9596 = vpop.f32.mrf.mxu0
    %v9597 = vadd.f32 %v1992, %v9596
    %9598 = vmatmul.bf16.gmra.mxu0 %v1415
    %v9599 = vpop.f32.mrf.mxu0
    %v9600 = vadd.f32 %v1992, %v9599
    %v9601 = vpop.f32.mrf.mxu0
    %v9602 = vadd.f32 %v1992, %v9601
    %9603 = vmatmul.bf16.gmra.mxu0 %v1423
    %v9604 = vpop.f32.mrf.mxu0
    %v9605 = vadd.f32 %v1992, %v9604
    %v9606 = vpop.f32.mrf.mxu0
    %v9607 = vadd.f32 %v1992, %v9606
    %9608 = vmatmul.bf16.gmra.mxu0 %v1431
    %v9609 = vpop.f32.mrf.mxu0
    %v9610 = vadd.f32 %v1992, %v9609
    %v9611 = vpop.f32.mrf.mxu0
    %v9612 = vadd.f32 %v1992, %v9611
    %9613 = vmatmul.bf16.gmra.mxu0 %v1439
    %v9614 = vpop.f32.mrf.mxu0
    %v9615 = vadd.f32 %v1992, %v9614
    %v9616 = vpop.f32.mrf.mxu0
    %v9617 = vadd.f32 %v1992, %v9616
    %9618 = vmatmul.bf16.gmra.mxu0 %v1447
    %v9619 = vpop.f32.mrf.mxu0
    %v9620 = vadd.f32 %v1992, %v9619
    %v9621 = vpop.f32.mrf.mxu0
    %v9622 = vadd.f32 %v1992, %v9621
    %9623 = vmatmul.bf16.gmra.mxu0 %v1455
    %v9624 = vpop.f32.mrf.mxu0
    %v9625 = vadd.f32 %v1992, %v9624
    %v9626 = vpop.f32.mrf.mxu0
    %v9627 = vadd.f32 %v1992, %v9626
    %9628 = vmatmul.bf16.gmra.mxu0 %v1463
    %v9629 = vpop.f32.mrf.mxu0
    %v9630 = vadd.f32 %v1992, %v9629
    %v9631 = vpop.f32.mrf.mxu0
    %v9632 = vadd.f32 %v1992, %v9631
    %9633 = vdwg.mxu0
    %9634 = vmatpush.bf16.msra.mxu0 %v3664
    %9635 = vmatpush.bf16.msra.mxu0 %v3656
    %9636 = vmatpush.bf16.msra.mxu0 %v3648
    %9637 = vmatpush.bf16.msra.mxu0 %v3640
    %9638 = vmatpush.bf16.msra.mxu0 %v3632
    %9639 = vmatpush.bf16.msra.mxu0 %v3624
    %9640 = vmatpush.bf16.msra.mxu0 %v3616
    %9641 = vmatpush.bf16.msra.mxu0 %v3608
    %9642 = vmatmul.bf16.gmra.mxu0 %v1344
    %v9643 = vpop.f32.mrf.mxu0
    %v9644 = vadd.f32 %v9555, %v9643
    %v9645 = vpop.f32.mrf.mxu0
    %v9646 = vadd.f32 %v9557, %v9645
    %9647 = vmatmul.bf16.gmra.mxu0 %v1352
    %v9648 = vpop.f32.mrf.mxu0
    %v9649 = vadd.f32 %v9560, %v9648
    %v9650 = vpop.f32.mrf.mxu0
    %v9651 = vadd.f32 %v9562, %v9650
    %9652 = vmatmul.bf16.gmra.mxu0 %v1360
    %v9653 = vpop.f32.mrf.mxu0
    %v9654 = vadd.f32 %v9565, %v9653
    %v9655 = vpop.f32.mrf.mxu0
    %v9656 = vadd.f32 %v9567, %v9655
    %9657 = vmatmul.bf16.gmra.mxu0 %v1368
    %v9658 = vpop.f32.mrf.mxu0
    %v9659 = vadd.f32 %v9570, %v9658
    %v9660 = vpop.f32.mrf.mxu0
    %v9661 = vadd.f32 %v9572, %v9660
    %9662 = vmatmul.bf16.gmra.mxu0 %v1376
    %v9663 = vpop.f32.mrf.mxu0
    %v9664 = vadd.f32 %v9575, %v9663
    %v9665 = vpop.f32.mrf.mxu0
    %v9666 = vadd.f32 %v9577, %v9665
    %9667 = vmatmul.bf16.gmra.mxu0 %v1384
    %v9668 = vpop.f32.mrf.mxu0
    %v9669 = vadd.f32 %v9580, %v9668
    %v9670 = vpop.f32.mrf.mxu0
    %v9671 = vadd.f32 %v9582, %v9670
    %9672 = vmatmul.bf16.gmra.mxu0 %v1392
    %v9673 = vpop.f32.mrf.mxu0
    %v9674 = vadd.f32 %v9585, %v9673
    %v9675 = vpop.f32.mrf.mxu0
    %v9676 = vadd.f32 %v9587, %v9675
    %9677 = vmatmul.bf16.gmra.mxu0 %v1400
    %v9678 = vpop.f32.mrf.mxu0
    %v9679 = vadd.f32 %v9590, %v9678
    %v9680 = vpop.f32.mrf.mxu0
    %v9681 = vadd.f32 %v9592, %v9680
    %9682 = vmatmul.bf16.gmra.mxu0 %v1408
    %v9683 = vpop.f32.mrf.mxu0
    %v9684 = vadd.f32 %v9595, %v9683
    %v9685 = vpop.f32.mrf.mxu0
    %v9686 = vadd.f32 %v9597, %v9685
    %9687 = vmatmul.bf16.gmra.mxu0 %v1416
    %v9688 = vpop.f32.mrf.mxu0
    %v9689 = vadd.f32 %v9600, %v9688
    %v9690 = vpop.f32.mrf.mxu0
    %v9691 = vadd.f32 %v9602, %v9690
    %9692 = vmatmul.bf16.gmra.mxu0 %v1424
    %v9693 = vpop.f32.mrf.mxu0
    %v9694 = vadd.f32 %v9605, %v9693
    %v9695 = vpop.f32.mrf.mxu0
    %v9696 = vadd.f32 %v9607, %v9695
    %9697 = vmatmul.bf16.gmra.mxu0 %v1432
    %v9698 = vpop.f32.mrf.mxu0
    %v9699 = vadd.f32 %v9610, %v9698
    %v9700 = vpop.f32.mrf.mxu0
    %v9701 = vadd.f32 %v9612, %v9700
    %9702 = vmatmul.bf16.gmra.mxu0 %v1440
    %v9703 = vpop.f32.mrf.mxu0
    %v9704 = vadd.f32 %v9615, %v9703
    %v9705 = vpop.f32.mrf.mxu0
    %v9706 = vadd.f32 %v9617, %v9705
    %9707 = vmatmul.bf16.gmra.mxu0 %v1448
    %v9708 = vpop.f32.mrf.mxu0
    %v9709 = vadd.f32 %v9620, %v9708
    %v9710 = vpop.f32.mrf.mxu0
    %v9711 = vadd.f32 %v9622, %v9710
    %9712 = vmatmul.bf16.gmra.mxu0 %v1456
    %v9713 = vpop.f32.mrf.mxu0
    %v9714 = vadd.f32 %v9625, %v9713
    %v9715 = vpop.f32.mrf.mxu0
    %v9716 = vadd.f32 %v9627, %v9715
    %9717 = vmatmul.bf16.gmra.mxu0 %v1464
    %v9718 = vpop.f32.mrf.mxu0
    %v9719 = vadd.f32 %v9630, %v9718
    %v9720 = vpop.f32.mrf.mxu0
    %v9721 = vadd.f32 %v9632, %v9720
    %9722 = vdwg.mxu0
    %9723 = vmatpush.bf16.msra.mxu0 %v3728
    %9724 = vmatpush.bf16.msra.mxu0 %v3720
    %9725 = vmatpush.bf16.msra.mxu0 %v3712
    %9726 = vmatpush.bf16.msra.mxu0 %v3704
    %9727 = vmatpush.bf16.msra.mxu0 %v3696
    %9728 = vmatpush.bf16.msra.mxu0 %v3688
    %9729 = vmatpush.bf16.msra.mxu0 %v3680
    %9730 = vmatpush.bf16.msra.mxu0 %v3672
    %9731 = vmatmul.bf16.gmra.mxu0 %v1345
    %v9732 = vpop.f32.mrf.mxu0
    %v9733 = vadd.f32 %v9644, %v9732
    %v9734 = vpop.f32.mrf.mxu0
    %v9735 = vadd.f32 %v9646, %v9734
    %9736 = vmatmul.bf16.gmra.mxu0 %v1353
    %v9737 = vpop.f32.mrf.mxu0
    %v9738 = vadd.f32 %v9649, %v9737
    %v9739 = vpop.f32.mrf.mxu0
    %v9740 = vadd.f32 %v9651, %v9739
    %9741 = vmatmul.bf16.gmra.mxu0 %v1361
    %v9742 = vpop.f32.mrf.mxu0
    %v9743 = vadd.f32 %v9654, %v9742
    %v9744 = vpop.f32.mrf.mxu0
    %v9745 = vadd.f32 %v9656, %v9744
    %9746 = vmatmul.bf16.gmra.mxu0 %v1369
    %v9747 = vpop.f32.mrf.mxu0
    %v9748 = vadd.f32 %v9659, %v9747
    %v9749 = vpop.f32.mrf.mxu0
    %v9750 = vadd.f32 %v9661, %v9749
    %9751 = vmatmul.bf16.gmra.mxu0 %v1377
    %v9752 = vpop.f32.mrf.mxu0
    %v9753 = vadd.f32 %v9664, %v9752
    %v9754 = vpop.f32.mrf.mxu0
    %v9755 = vadd.f32 %v9666, %v9754
    %9756 = vmatmul.bf16.gmra.mxu0 %v1385
    %v9757 = vpop.f32.mrf.mxu0
    %v9758 = vadd.f32 %v9669, %v9757
    %v9759 = vpop.f32.mrf.mxu0
    %v9760 = vadd.f32 %v9671, %v9759
    %9761 = vmatmul.bf16.gmra.mxu0 %v1393
    %v9762 = vpop.f32.mrf.mxu0
    %v9763 = vadd.f32 %v9674, %v9762
    %v9764 = vpop.f32.mrf.mxu0
    %v9765 = vadd.f32 %v9676, %v9764
    %9766 = vmatmul.bf16.gmra.mxu0 %v1401
    %v9767 = vpop.f32.mrf.mxu0
    %v9768 = vadd.f32 %v9679, %v9767
    %v9769 = vpop.f32.mrf.mxu0
    %v9770 = vadd.f32 %v9681, %v9769
    %9771 = vmatmul.bf16.gmra.mxu0 %v1409
    %v9772 = vpop.f32.mrf.mxu0
    %v9773 = vadd.f32 %v9684, %v9772
    %v9774 = vpop.f32.mrf.mxu0
    %v9775 = vadd.f32 %v9686, %v9774
    %9776 = vmatmul.bf16.gmra.mxu0 %v1417
    %v9777 = vpop.f32.mrf.mxu0
    %v9778 = vadd.f32 %v9689, %v9777
    %v9779 = vpop.f32.mrf.mxu0
    %v9780 = vadd.f32 %v9691, %v9779
    %9781 = vmatmul.bf16.gmra.mxu0 %v1425
    %v9782 = vpop.f32.mrf.mxu0
    %v9783 = vadd.f32 %v9694, %v9782
    %v9784 = vpop.f32.mrf.mxu0
    %v9785 = vadd.f32 %v9696, %v9784
    %9786 = vmatmul.bf16.gmra.mxu0 %v1433
    %v9787 = vpop.f32.mrf.mxu0
    %v9788 = vadd.f32 %v9699, %v9787
    %v9789 = vpop.f32.mrf.mxu0
    %v9790 = vadd.f32 %v9701, %v9789
    %9791 = vmatmul.bf16.gmra.mxu0 %v1441
    %v9792 = vpop.f32.mrf.mxu0
    %v9793 = vadd.f32 %v9704, %v9792
    %v9794 = vpop.f32.mrf.mxu0
    %v9795 = vadd.f32 %v9706, %v9794
    %9796 = vmatmul.bf16.gmra.mxu0 %v1449
    %v9797 = vpop.f32.mrf.mxu0
    %v9798 = vadd.f32 %v9709, %v9797
    %v9799 = vpop.f32.mrf.mxu0
    %v9800 = vadd.f32 %v9711, %v9799
    %9801 = vmatmul.bf16.gmra.mxu0 %v1457
    %v9802 = vpop.f32.mrf.mxu0
    %v9803 = vadd.f32 %v9714, %v9802
    %v9804 = vpop.f32.mrf.mxu0
    %v9805 = vadd.f32 %v9716, %v9804
    %9806 = vmatmul.bf16.gmra.mxu0 %v1465
    %v9807 = vpop.f32.mrf.mxu0
    %v9808 = vadd.f32 %v9719, %v9807
    %v9809 = vpop.f32.mrf.mxu0
    %v9810 = vadd.f32 %v9721, %v9809
    %9811 = vdwg.mxu0
    %9812 = vmatpush.bf16.msra.mxu0 %v3792
    %9813 = vmatpush.bf16.msra.mxu0 %v3784
    %9814 = vmatpush.bf16.msra.mxu0 %v3776
    %9815 = vmatpush.bf16.msra.mxu0 %v3768
    %9816 = vmatpush.bf16.msra.mxu0 %v3760
    %9817 = vmatpush.bf16.msra.mxu0 %v3752
    %9818 = vmatpush.bf16.msra.mxu0 %v3744
    %9819 = vmatpush.bf16.msra.mxu0 %v3736
    %9820 = vmatmul.bf16.gmra.mxu0 %v1346
    %v9821 = vpop.f32.mrf.mxu0
    %v9822 = vadd.f32 %v9733, %v9821
    %v9823 = vpop.f32.mrf.mxu0
    %v9824 = vadd.f32 %v9735, %v9823
    %9825 = vmatmul.bf16.gmra.mxu0 %v1354
    %v9826 = vpop.f32.mrf.mxu0
    %v9827 = vadd.f32 %v9738, %v9826
    %v9828 = vpop.f32.mrf.mxu0
    %v9829 = vadd.f32 %v9740, %v9828
    %9830 = vmatmul.bf16.gmra.mxu0 %v1362
    %v9831 = vpop.f32.mrf.mxu0
    %v9832 = vadd.f32 %v9743, %v9831
    %v9833 = vpop.f32.mrf.mxu0
    %v9834 = vadd.f32 %v9745, %v9833
    %9835 = vmatmul.bf16.gmra.mxu0 %v1370
    %v9836 = vpop.f32.mrf.mxu0
    %v9837 = vadd.f32 %v9748, %v9836
    %v9838 = vpop.f32.mrf.mxu0
    %v9839 = vadd.f32 %v9750, %v9838
    %9840 = vmatmul.bf16.gmra.mxu0 %v1378
    %v9841 = vpop.f32.mrf.mxu0
    %v9842 = vadd.f32 %v9753, %v9841
    %v9843 = vpop.f32.mrf.mxu0
    %v9844 = vadd.f32 %v9755, %v9843
    %9845 = vmatmul.bf16.gmra.mxu0 %v1386
    %v9846 = vpop.f32.mrf.mxu0
    %v9847 = vadd.f32 %v9758, %v9846
    %v9848 = vpop.f32.mrf.mxu0
    %v9849 = vadd.f32 %v9760, %v9848
    %9850 = vmatmul.bf16.gmra.mxu0 %v1394
    %v9851 = vpop.f32.mrf.mxu0
    %v9852 = vadd.f32 %v9763, %v9851
    %v9853 = vpop.f32.mrf.mxu0
    %v9854 = vadd.f32 %v9765, %v9853
    %9855 = vmatmul.bf16.gmra.mxu0 %v1402
    %v9856 = vpop.f32.mrf.mxu0
    %v9857 = vadd.f32 %v9768, %v9856
    %v9858 = vpop.f32.mrf.mxu0
    %v9859 = vadd.f32 %v9770, %v9858
    %9860 = vmatmul.bf16.gmra.mxu0 %v1410
    %v9861 = vpop.f32.mrf.mxu0
    %v9862 = vadd.f32 %v9773, %v9861
    %v9863 = vpop.f32.mrf.mxu0
    %v9864 = vadd.f32 %v9775, %v9863
    %9865 = vmatmul.bf16.gmra.mxu0 %v1418
    %v9866 = vpop.f32.mrf.mxu0
    %v9867 = vadd.f32 %v9778, %v9866
    %v9868 = vpop.f32.mrf.mxu0
    %v9869 = vadd.f32 %v9780, %v9868
    %9870 = vmatmul.bf16.gmra.mxu0 %v1426
    %v9871 = vpop.f32.mrf.mxu0
    %v9872 = vadd.f32 %v9783, %v9871
    %v9873 = vpop.f32.mrf.mxu0
    %v9874 = vadd.f32 %v9785, %v9873
    %9875 = vmatmul.bf16.gmra.mxu0 %v1434
    %v9876 = vpop.f32.mrf.mxu0
    %v9877 = vadd.f32 %v9788, %v9876
    %v9878 = vpop.f32.mrf.mxu0
    %v9879 = vadd.f32 %v9790, %v9878
    %9880 = vmatmul.bf16.gmra.mxu0 %v1442
    %v9881 = vpop.f32.mrf.mxu0
    %v9882 = vadd.f32 %v9793, %v9881
    %v9883 = vpop.f32.mrf.mxu0
    %v9884 = vadd.f32 %v9795, %v9883
    %9885 = vmatmul.bf16.gmra.mxu0 %v1450
    %v9886 = vpop.f32.mrf.mxu0
    %v9887 = vadd.f32 %v9798, %v9886
    %v9888 = vpop.f32.mrf.mxu0
    %v9889 = vadd.f32 %v9800, %v9888
    %9890 = vmatmul.bf16.gmra.mxu0 %v1458
    %v9891 = vpop.f32.mrf.mxu0
    %v9892 = vadd.f32 %v9803, %v9891
    %v9893 = vpop.f32.mrf.mxu0
    %v9894 = vadd.f32 %v9805, %v9893
    %9895 = vmatmul.bf16.gmra.mxu0 %v1466
    %v9896 = vpop.f32.mrf.mxu0
    %v9897 = vadd.f32 %v9808, %v9896
    %v9898 = vpop.f32.mrf.mxu0
    %v9899 = vadd.f32 %v9810, %v9898
    %9900 = vdwg.mxu0
    %9901 = vmatpush.bf16.msra.mxu0 %v3856
    %9902 = vmatpush.bf16.msra.mxu0 %v3848
    %9903 = vmatpush.bf16.msra.mxu0 %v3840
    %9904 = vmatpush.bf16.msra.mxu0 %v3832
    %9905 = vmatpush.bf16.msra.mxu0 %v3824
    %9906 = vmatpush.bf16.msra.mxu0 %v3816
    %9907 = vmatpush.bf16.msra.mxu0 %v3808
    %9908 = vmatpush.bf16.msra.mxu0 %v3800
    %9909 = vmatmul.bf16.gmra.mxu0 %v1347
    %v9910 = vpop.f32.mrf.mxu0
    %v9911 = vadd.f32 %v9822, %v9910
    %v9912 = vpop.f32.mrf.mxu0
    %v9913 = vadd.f32 %v9824, %v9912
    %9914 = vmatmul.bf16.gmra.mxu0 %v1355
    %v9915 = vpop.f32.mrf.mxu0
    %v9916 = vadd.f32 %v9827, %v9915
    %v9917 = vpop.f32.mrf.mxu0
    %v9918 = vadd.f32 %v9829, %v9917
    %9919 = vmatmul.bf16.gmra.mxu0 %v1363
    %v9920 = vpop.f32.mrf.mxu0
    %v9921 = vadd.f32 %v9832, %v9920
    %v9922 = vpop.f32.mrf.mxu0
    %v9923 = vadd.f32 %v9834, %v9922
    %9924 = vmatmul.bf16.gmra.mxu0 %v1371
    %v9925 = vpop.f32.mrf.mxu0
    %v9926 = vadd.f32 %v9837, %v9925
    %v9927 = vpop.f32.mrf.mxu0
    %v9928 = vadd.f32 %v9839, %v9927
    %9929 = vmatmul.bf16.gmra.mxu0 %v1379
    %v9930 = vpop.f32.mrf.mxu0
    %v9931 = vadd.f32 %v9842, %v9930
    %v9932 = vpop.f32.mrf.mxu0
    %v9933 = vadd.f32 %v9844, %v9932
    %9934 = vmatmul.bf16.gmra.mxu0 %v1387
    %v9935 = vpop.f32.mrf.mxu0
    %v9936 = vadd.f32 %v9847, %v9935
    %v9937 = vpop.f32.mrf.mxu0
    %v9938 = vadd.f32 %v9849, %v9937
    %9939 = vmatmul.bf16.gmra.mxu0 %v1395
    %v9940 = vpop.f32.mrf.mxu0
    %v9941 = vadd.f32 %v9852, %v9940
    %v9942 = vpop.f32.mrf.mxu0
    %v9943 = vadd.f32 %v9854, %v9942
    %9944 = vmatmul.bf16.gmra.mxu0 %v1403
    %v9945 = vpop.f32.mrf.mxu0
    %v9946 = vadd.f32 %v9857, %v9945
    %v9947 = vpop.f32.mrf.mxu0
    %v9948 = vadd.f32 %v9859, %v9947
    %9949 = vmatmul.bf16.gmra.mxu0 %v1411
    %v9950 = vpop.f32.mrf.mxu0
    %v9951 = vadd.f32 %v9862, %v9950
    %v9952 = vpop.f32.mrf.mxu0
    %v9953 = vadd.f32 %v9864, %v9952
    %9954 = vmatmul.bf16.gmra.mxu0 %v1419
    %v9955 = vpop.f32.mrf.mxu0
    %v9956 = vadd.f32 %v9867, %v9955
    %v9957 = vpop.f32.mrf.mxu0
    %v9958 = vadd.f32 %v9869, %v9957
    %9959 = vmatmul.bf16.gmra.mxu0 %v1427
    %v9960 = vpop.f32.mrf.mxu0
    %v9961 = vadd.f32 %v9872, %v9960
    %v9962 = vpop.f32.mrf.mxu0
    %v9963 = vadd.f32 %v9874, %v9962
    %9964 = vmatmul.bf16.gmra.mxu0 %v1435
    %v9965 = vpop.f32.mrf.mxu0
    %v9966 = vadd.f32 %v9877, %v9965
    %v9967 = vpop.f32.mrf.mxu0
    %v9968 = vadd.f32 %v9879, %v9967
    %9969 = vmatmul.bf16.gmra.mxu0 %v1443
    %v9970 = vpop.f32.mrf.mxu0
    %v9971 = vadd.f32 %v9882, %v9970
    %v9972 = vpop.f32.mrf.mxu0
    %v9973 = vadd.f32 %v9884, %v9972
    %9974 = vmatmul.bf16.gmra.mxu0 %v1451
    %v9975 = vpop.f32.mrf.mxu0
    %v9976 = vadd.f32 %v9887, %v9975
    %v9977 = vpop.f32.mrf.mxu0
    %v9978 = vadd.f32 %v9889, %v9977
    %9979 = vmatmul.bf16.gmra.mxu0 %v1459
    %v9980 = vpop.f32.mrf.mxu0
    %v9981 = vadd.f32 %v9892, %v9980
    %v9982 = vpop.f32.mrf.mxu0
    %v9983 = vadd.f32 %v9894, %v9982
    %9984 = vmatmul.bf16.gmra.mxu0 %v1467
    %v9985 = vpop.f32.mrf.mxu0
    %v9986 = vadd.f32 %v9897, %v9985
    %v9987 = vpop.f32.mrf.mxu0
    %v9988 = vadd.f32 %v9899, %v9987
    %9989 = vdwg.mxu0
    %9990 = vmatpush.bf16.msra.mxu0 %v3920
    %9991 = vmatpush.bf16.msra.mxu0 %v3912
    %9992 = vmatpush.bf16.msra.mxu0 %v3904
    %9993 = vmatpush.bf16.msra.mxu0 %v3896
    %9994 = vmatpush.bf16.msra.mxu0 %v3888
    %9995 = vmatpush.bf16.msra.mxu0 %v3880
    %9996 = vmatpush.bf16.msra.mxu0 %v3872
    %9997 = vmatpush.bf16.msra.mxu0 %v3864
    %9998 = vmatmul.bf16.gmra.mxu0 %v1348
    %v9999 = vpop.f32.mrf.mxu0
    %v10000 = vadd.f32 %v9911, %v9999
    %v10001 = vpop.f32.mrf.mxu0
    %v10002 = vadd.f32 %v9913, %v10001
    %10003 = vmatmul.bf16.gmra.mxu0 %v1356
    %v10004 = vpop.f32.mrf.mxu0
    %v10005 = vadd.f32 %v9916, %v10004
    %v10006 = vpop.f32.mrf.mxu0
    %v10007 = vadd.f32 %v9918, %v10006
    %10008 = vmatmul.bf16.gmra.mxu0 %v1364
    %v10009 = vpop.f32.mrf.mxu0
    %v10010 = vadd.f32 %v9921, %v10009
    %v10011 = vpop.f32.mrf.mxu0
    %v10012 = vadd.f32 %v9923, %v10011
    %10013 = vmatmul.bf16.gmra.mxu0 %v1372
    %v10014 = vpop.f32.mrf.mxu0
    %v10015 = vadd.f32 %v9926, %v10014
    %v10016 = vpop.f32.mrf.mxu0
    %v10017 = vadd.f32 %v9928, %v10016
    %10018 = vmatmul.bf16.gmra.mxu0 %v1380
    %v10019 = vpop.f32.mrf.mxu0
    %v10020 = vadd.f32 %v9931, %v10019
    %v10021 = vpop.f32.mrf.mxu0
    %v10022 = vadd.f32 %v9933, %v10021
    %10023 = vmatmul.bf16.gmra.mxu0 %v1388
    %v10024 = vpop.f32.mrf.mxu0
    %v10025 = vadd.f32 %v9936, %v10024
    %v10026 = vpop.f32.mrf.mxu0
    %v10027 = vadd.f32 %v9938, %v10026
    %10028 = vmatmul.bf16.gmra.mxu0 %v1396
    %v10029 = vpop.f32.mrf.mxu0
    %v10030 = vadd.f32 %v9941, %v10029
    %v10031 = vpop.f32.mrf.mxu0
    %v10032 = vadd.f32 %v9943, %v10031
    %10033 = vmatmul.bf16.gmra.mxu0 %v1404
    %v10034 = vpop.f32.mrf.mxu0
    %v10035 = vadd.f32 %v9946, %v10034
    %v10036 = vpop.f32.mrf.mxu0
    %v10037 = vadd.f32 %v9948, %v10036
    %10038 = vmatmul.bf16.gmra.mxu0 %v1412
    %v10039 = vpop.f32.mrf.mxu0
    %v10040 = vadd.f32 %v9951, %v10039
    %v10041 = vpop.f32.mrf.mxu0
    %v10042 = vadd.f32 %v9953, %v10041
    %10043 = vmatmul.bf16.gmra.mxu0 %v1420
    %v10044 = vpop.f32.mrf.mxu0
    %v10045 = vadd.f32 %v9956, %v10044
    %v10046 = vpop.f32.mrf.mxu0
    %v10047 = vadd.f32 %v9958, %v10046
    %10048 = vmatmul.bf16.gmra.mxu0 %v1428
    %v10049 = vpop.f32.mrf.mxu0
    %v10050 = vadd.f32 %v9961, %v10049
    %v10051 = vpop.f32.mrf.mxu0
    %v10052 = vadd.f32 %v9963, %v10051
    %10053 = vmatmul.bf16.gmra.mxu0 %v1436
    %v10054 = vpop.f32.mrf.mxu0
    %v10055 = vadd.f32 %v9966, %v10054
    %v10056 = vpop.f32.mrf.mxu0
    %v10057 = vadd.f32 %v9968, %v10056
    %10058 = vmatmul.bf16.gmra.mxu0 %v1444
    %v10059 = vpop.f32.mrf.mxu0
    %v10060 = vadd.f32 %v9971, %v10059
    %v10061 = vpop.f32.mrf.mxu0
    %v10062 = vadd.f32 %v9973, %v10061
    %10063 = vmatmul.bf16.gmra.mxu0 %v1452
    %v10064 = vpop.f32.mrf.mxu0
    %v10065 = vadd.f32 %v9976, %v10064
    %v10066 = vpop.f32.mrf.mxu0
    %v10067 = vadd.f32 %v9978, %v10066
    %10068 = vmatmul.bf16.gmra.mxu0 %v1460
    %v10069 = vpop.f32.mrf.mxu0
    %v10070 = vadd.f32 %v9981, %v10069
    %v10071 = vpop.f32.mrf.mxu0
    %v10072 = vadd.f32 %v9983, %v10071
    %10073 = vmatmul.bf16.gmra.mxu0 %v1468
    %v10074 = vpop.f32.mrf.mxu0
    %v10075 = vadd.f32 %v9986, %v10074
    %v10076 = vpop.f32.mrf.mxu0
    %v10077 = vadd.f32 %v9988, %v10076
    %10078 = vdwg.mxu0
    %10079 = vmatpush.bf16.msra.mxu0 %v3984
    %10080 = vmatpush.bf16.msra.mxu0 %v3976
    %10081 = vmatpush.bf16.msra.mxu0 %v3968
    %10082 = vmatpush.bf16.msra.mxu0 %v3960
    %10083 = vmatpush.bf16.msra.mxu0 %v3952
    %10084 = vmatpush.bf16.msra.mxu0 %v3944
    %10085 = vmatpush.bf16.msra.mxu0 %v3936
    %10086 = vmatpush.bf16.msra.mxu0 %v3928
    %10087 = vmatmul.bf16.gmra.mxu0 %v1349
    %v10088 = vpop.f32.mrf.mxu0
    %v10089 = vadd.f32 %v10000, %v10088
    %v10090 = vpop.f32.mrf.mxu0
    %v10091 = vadd.f32 %v10002, %v10090
    %10092 = vmatmul.bf16.gmra.mxu0 %v1357
    %v10093 = vpop.f32.mrf.mxu0
    %v10094 = vadd.f32 %v10005, %v10093
    %v10095 = vpop.f32.mrf.mxu0
    %v10096 = vadd.f32 %v10007, %v10095
    %10097 = vmatmul.bf16.gmra.mxu0 %v1365
    %v10098 = vpop.f32.mrf.mxu0
    %v10099 = vadd.f32 %v10010, %v10098
    %v10100 = vpop.f32.mrf.mxu0
    %v10101 = vadd.f32 %v10012, %v10100
    %10102 = vmatmul.bf16.gmra.mxu0 %v1373
    %v10103 = vpop.f32.mrf.mxu0
    %v10104 = vadd.f32 %v10015, %v10103
    %v10105 = vpop.f32.mrf.mxu0
    %v10106 = vadd.f32 %v10017, %v10105
    %10107 = vmatmul.bf16.gmra.mxu0 %v1381
    %v10108 = vpop.f32.mrf.mxu0
    %v10109 = vadd.f32 %v10020, %v10108
    %v10110 = vpop.f32.mrf.mxu0
    %v10111 = vadd.f32 %v10022, %v10110
    %10112 = vmatmul.bf16.gmra.mxu0 %v1389
    %v10113 = vpop.f32.mrf.mxu0
    %v10114 = vadd.f32 %v10025, %v10113
    %v10115 = vpop.f32.mrf.mxu0
    %v10116 = vadd.f32 %v10027, %v10115
    %10117 = vmatmul.bf16.gmra.mxu0 %v1397
    %v10118 = vpop.f32.mrf.mxu0
    %v10119 = vadd.f32 %v10030, %v10118
    %v10120 = vpop.f32.mrf.mxu0
    %v10121 = vadd.f32 %v10032, %v10120
    %10122 = vmatmul.bf16.gmra.mxu0 %v1405
    %v10123 = vpop.f32.mrf.mxu0
    %v10124 = vadd.f32 %v10035, %v10123
    %v10125 = vpop.f32.mrf.mxu0
    %v10126 = vadd.f32 %v10037, %v10125
    %10127 = vmatmul.bf16.gmra.mxu0 %v1413
    %v10128 = vpop.f32.mrf.mxu0
    %v10129 = vadd.f32 %v10040, %v10128
    %v10130 = vpop.f32.mrf.mxu0
    %v10131 = vadd.f32 %v10042, %v10130
    %10132 = vmatmul.bf16.gmra.mxu0 %v1421
    %v10133 = vpop.f32.mrf.mxu0
    %v10134 = vadd.f32 %v10045, %v10133
    %v10135 = vpop.f32.mrf.mxu0
    %v10136 = vadd.f32 %v10047, %v10135
    %10137 = vmatmul.bf16.gmra.mxu0 %v1429
    %v10138 = vpop.f32.mrf.mxu0
    %v10139 = vadd.f32 %v10050, %v10138
    %v10140 = vpop.f32.mrf.mxu0
    %v10141 = vadd.f32 %v10052, %v10140
    %10142 = vmatmul.bf16.gmra.mxu0 %v1437
    %v10143 = vpop.f32.mrf.mxu0
    %v10144 = vadd.f32 %v10055, %v10143
    %v10145 = vpop.f32.mrf.mxu0
    %v10146 = vadd.f32 %v10057, %v10145
    %10147 = vmatmul.bf16.gmra.mxu0 %v1445
    %v10148 = vpop.f32.mrf.mxu0
    %v10149 = vadd.f32 %v10060, %v10148
    %v10150 = vpop.f32.mrf.mxu0
    %v10151 = vadd.f32 %v10062, %v10150
    %10152 = vmatmul.bf16.gmra.mxu0 %v1453
    %v10153 = vpop.f32.mrf.mxu0
    %v10154 = vadd.f32 %v10065, %v10153
    %v10155 = vpop.f32.mrf.mxu0
    %v10156 = vadd.f32 %v10067, %v10155
    %10157 = vmatmul.bf16.gmra.mxu0 %v1461
    %v10158 = vpop.f32.mrf.mxu0
    %v10159 = vadd.f32 %v10070, %v10158
    %v10160 = vpop.f32.mrf.mxu0
    %v10161 = vadd.f32 %v10072, %v10160
    %10162 = vmatmul.bf16.gmra.mxu0 %v1469
    %v10163 = vpop.f32.mrf.mxu0
    %v10164 = vadd.f32 %v10075, %v10163
    %v10165 = vpop.f32.mrf.mxu0
    %v10166 = vadd.f32 %v10077, %v10165
    %10167 = vdwg.mxu0
    %10168 = vmatpush.bf16.msra.mxu0 %v4048
    %10169 = vmatpush.bf16.msra.mxu0 %v4040
    %10170 = vmatpush.bf16.msra.mxu0 %v4032
    %10171 = vmatpush.bf16.msra.mxu0 %v4024
    %10172 = vmatpush.bf16.msra.mxu0 %v4016
    %10173 = vmatpush.bf16.msra.mxu0 %v4008
    %10174 = vmatpush.bf16.msra.mxu0 %v4000
    %10175 = vmatpush.bf16.msra.mxu0 %v3992
    %10176 = vmatmul.bf16.gmra.mxu0 %v1350
    %v10177 = vpop.f32.mrf.mxu0
    %v10178 = vadd.f32 %v10089, %v10177
    %v10179 = vpop.f32.mrf.mxu0
    %v10180 = vadd.f32 %v10091, %v10179
    %10181 = vmatmul.bf16.gmra.mxu0 %v1358
    %v10182 = vpop.f32.mrf.mxu0
    %v10183 = vadd.f32 %v10094, %v10182
    %v10184 = vpop.f32.mrf.mxu0
    %v10185 = vadd.f32 %v10096, %v10184
    %10186 = vmatmul.bf16.gmra.mxu0 %v1366
    %v10187 = vpop.f32.mrf.mxu0
    %v10188 = vadd.f32 %v10099, %v10187
    %v10189 = vpop.f32.mrf.mxu0
    %v10190 = vadd.f32 %v10101, %v10189
    %10191 = vmatmul.bf16.gmra.mxu0 %v1374
    %v10192 = vpop.f32.mrf.mxu0
    %v10193 = vadd.f32 %v10104, %v10192
    %v10194 = vpop.f32.mrf.mxu0
    %v10195 = vadd.f32 %v10106, %v10194
    %10196 = vmatmul.bf16.gmra.mxu0 %v1382
    %v10197 = vpop.f32.mrf.mxu0
    %v10198 = vadd.f32 %v10109, %v10197
    %v10199 = vpop.f32.mrf.mxu0
    %v10200 = vadd.f32 %v10111, %v10199
    %10201 = vmatmul.bf16.gmra.mxu0 %v1390
    %v10202 = vpop.f32.mrf.mxu0
    %v10203 = vadd.f32 %v10114, %v10202
    %v10204 = vpop.f32.mrf.mxu0
    %v10205 = vadd.f32 %v10116, %v10204
    %10206 = vmatmul.bf16.gmra.mxu0 %v1398
    %v10207 = vpop.f32.mrf.mxu0
    %v10208 = vadd.f32 %v10119, %v10207
    %v10209 = vpop.f32.mrf.mxu0
    %v10210 = vadd.f32 %v10121, %v10209
    %10211 = vmatmul.bf16.gmra.mxu0 %v1406
    %v10212 = vpop.f32.mrf.mxu0
    %v10213 = vadd.f32 %v10124, %v10212
    %v10214 = vpop.f32.mrf.mxu0
    %v10215 = vadd.f32 %v10126, %v10214
    %10216 = vmatmul.bf16.gmra.mxu0 %v1414
    %v10217 = vpop.f32.mrf.mxu0
    %v10218 = vadd.f32 %v10129, %v10217
    %v10219 = vpop.f32.mrf.mxu0
    %v10220 = vadd.f32 %v10131, %v10219
    %10221 = vmatmul.bf16.gmra.mxu0 %v1422
    %v10222 = vpop.f32.mrf.mxu0
    %v10223 = vadd.f32 %v10134, %v10222
    %v10224 = vpop.f32.mrf.mxu0
    %v10225 = vadd.f32 %v10136, %v10224
    %10226 = vmatmul.bf16.gmra.mxu0 %v1430
    %v10227 = vpop.f32.mrf.mxu0
    %v10228 = vadd.f32 %v10139, %v10227
    %v10229 = vpop.f32.mrf.mxu0
    %v10230 = vadd.f32 %v10141, %v10229
    %10231 = vmatmul.bf16.gmra.mxu0 %v1438
    %v10232 = vpop.f32.mrf.mxu0
    %v10233 = vadd.f32 %v10144, %v10232
    %v10234 = vpop.f32.mrf.mxu0
    %v10235 = vadd.f32 %v10146, %v10234
    %10236 = vmatmul.bf16.gmra.mxu0 %v1446
    %v10237 = vpop.f32.mrf.mxu0
    %v10238 = vadd.f32 %v10149, %v10237
    %v10239 = vpop.f32.mrf.mxu0
    %v10240 = vadd.f32 %v10151, %v10239
    %10241 = vmatmul.bf16.gmra.mxu0 %v1454
    %v10242 = vpop.f32.mrf.mxu0
    %v10243 = vadd.f32 %v10154, %v10242
    %v10244 = vpop.f32.mrf.mxu0
    %v10245 = vadd.f32 %v10156, %v10244
    %10246 = vmatmul.bf16.gmra.mxu0 %v1462
    %v10247 = vpop.f32.mrf.mxu0
    %v10248 = vadd.f32 %v10159, %v10247
    %v10249 = vpop.f32.mrf.mxu0
    %v10250 = vadd.f32 %v10161, %v10249
    %10251 = vmatmul.bf16.gmra.mxu0 %v1470
    %v10252 = vpop.f32.mrf.mxu0
    %v10253 = vadd.f32 %v10164, %v10252
    %v10254 = vpop.f32.mrf.mxu0
    %v10255 = vadd.f32 %v10166, %v10254
    %10256 = vdwg.mxu0
    %v10257 = vmax.f32 %v5194, 0.0
    %v10258 = vmax.f32 %v5906, 0.0
    %v10259 = vmax.f32 %v6618, 0.0
    %v10260 = vmax.f32 %v7330, 0.0
    %v10261 = vmax.f32 %v8042, 0.0
    %v10262 = vmax.f32 %v8754, 0.0
    %v10263 = vmax.f32 %v9466, 0.0
    %v10264 = vmax.f32 %v10178, 0.0
    %v10265 = vmax.f32 %v5196, 0.0
    %v10266 = vmax.f32 %v5908, 0.0
    %v10267 = vmax.f32 %v6620, 0.0
    %v10268 = vmax.f32 %v7332, 0.0
    %v10269 = vmax.f32 %v8044, 0.0
    %v10270 = vmax.f32 %v8756, 0.0
    %v10271 = vmax.f32 %v9468, 0.0
    %v10272 = vmax.f32 %v10180, 0.0
    %v10273 = vmax.f32 %v5199, 0.0
    %v10274 = vmax.f32 %v5911, 0.0
    %v10275 = vmax.f32 %v6623, 0.0
    %v10276 = vmax.f32 %v7335, 0.0
    %v10277 = vmax.f32 %v8047, 0.0
    %v10278 = vmax.f32 %v8759, 0.0
    %v10279 = vmax.f32 %v9471, 0.0
    %v10280 = vmax.f32 %v10183, 0.0
    %v10281 = vmax.f32 %v5201, 0.0
    %v10282 = vmax.f32 %v5913, 0.0
    %v10283 = vmax.f32 %v6625, 0.0
    %v10284 = vmax.f32 %v7337, 0.0
    %v10285 = vmax.f32 %v8049, 0.0
    %v10286 = vmax.f32 %v8761, 0.0
    %v10287 = vmax.f32 %v9473, 0.0
    %v10288 = vmax.f32 %v10185, 0.0
    %v10289 = vmax.f32 %v5204, 0.0
    %v10290 = vmax.f32 %v5916, 0.0
    %v10291 = vmax.f32 %v6628, 0.0
    %v10292 = vmax.f32 %v7340, 0.0
    %v10293 = vmax.f32 %v8052, 0.0
    %v10294 = vmax.f32 %v8764, 0.0
    %v10295 = vmax.f32 %v9476, 0.0
    %v10296 = vmax.f32 %v10188, 0.0
    %v10297 = vmax.f32 %v5206, 0.0
    %v10298 = vmax.f32 %v5918, 0.0
    %v10299 = vmax.f32 %v6630, 0.0
    %v10300 = vmax.f32 %v7342, 0.0
    %v10301 = vmax.f32 %v8054, 0.0
    %v10302 = vmax.f32 %v8766, 0.0
    %v10303 = vmax.f32 %v9478, 0.0
    %v10304 = vmax.f32 %v10190, 0.0
    %v10305 = vmax.f32 %v5209, 0.0
    %v10306 = vmax.f32 %v5921, 0.0
    %v10307 = vmax.f32 %v6633, 0.0
    %v10308 = vmax.f32 %v7345, 0.0
    %v10309 = vmax.f32 %v8057, 0.0
    %v10310 = vmax.f32 %v8769, 0.0
    %v10311 = vmax.f32 %v9481, 0.0
    %v10312 = vmax.f32 %v10193, 0.0
    %v10313 = vmax.f32 %v5211, 0.0
    %v10314 = vmax.f32 %v5923, 0.0
    %v10315 = vmax.f32 %v6635, 0.0
    %v10316 = vmax.f32 %v7347, 0.0
    %v10317 = vmax.f32 %v8059, 0.0
    %v10318 = vmax.f32 %v8771, 0.0
    %v10319 = vmax.f32 %v9483, 0.0
    %v10320 = vmax.f32 %v10195, 0.0
    %v10321 = vmax.f32 %v5214, 0.0
    %v10322 = vmax.f32 %v5926, 0.0
    %v10323 = vmax.f32 %v6638, 0.0
    %v10324 = vmax.f32 %v7350, 0.0
    %v10325 = vmax.f32 %v8062, 0.0
    %v10326 = vmax.f32 %v8774, 0.0
    %v10327 = vmax.f32 %v9486, 0.0
    %v10328 = vmax.f32 %v10198, 0.0
    %v10329 = vmax.f32 %v5216, 0.0
    %v10330 = vmax.f32 %v5928, 0.0
    %v10331 = vmax.f32 %v6640, 0.0
    %v10332 = vmax.f32 %v7352, 0.0
    %v10333 = vmax.f32 %v8064, 0.0
    %v10334 = vmax.f32 %v8776, 0.0
    %v10335 = vmax.f32 %v9488, 0.0
    %v10336 = vmax.f32 %v10200, 0.0
    %v10337 = vmax.f32 %v5219, 0.0
    %v10338 = vmax.f32 %v5931, 0.0
    %v10339 = vmax.f32 %v6643, 0.0
    %v10340 = vmax.f32 %v7355, 0.0
    %v10341 = vmax.f32 %v8067, 0.0
    %v10342 = vmax.f32 %v8779, 0.0
    %v10343 = vmax.f32 %v9491, 0.0
    %v10344 = vmax.f32 %v10203, 0.0
    %v10345 = vmax.f32 %v5221, 0.0
    %v10346 = vmax.f32 %v5933, 0.0
    %v10347 = vmax.f32 %v6645, 0.0
    %v10348 = vmax.f32 %v7357, 0.0
    %v10349 = vmax.f32 %v8069, 0.0
    %v10350 = vmax.f32 %v8781, 0.0
    %v10351 = vmax.f32 %v9493, 0.0
    %v10352 = vmax.f32 %v10205, 0.0
    %v10353 = vmax.f32 %v5224, 0.0
    %v10354 = vmax.f32 %v5936, 0.0
    %v10355 = vmax.f32 %v6648, 0.0
    %v10356 = vmax.f32 %v7360, 0.0
    %v10357 = vmax.f32 %v8072, 0.0
    %v10358 = vmax.f32 %v8784, 0.0
    %v10359 = vmax.f32 %v9496, 0.0
    %v10360 = vmax.f32 %v10208, 0.0
    %v10361 = vmax.f32 %v5226, 0.0
    %v10362 = vmax.f32 %v5938, 0.0
    %v10363 = vmax.f32 %v6650, 0.0
    %v10364 = vmax.f32 %v7362, 0.0
    %v10365 = vmax.f32 %v8074, 0.0
    %v10366 = vmax.f32 %v8786, 0.0
    %v10367 = vmax.f32 %v9498, 0.0
    %v10368 = vmax.f32 %v10210, 0.0
    %v10369 = vmax.f32 %v5229, 0.0
    %v10370 = vmax.f32 %v5941, 0.0
    %v10371 = vmax.f32 %v6653, 0.0
    %v10372 = vmax.f32 %v7365, 0.0
    %v10373 = vmax.f32 %v8077, 0.0
    %v10374 = vmax.f32 %v8789, 0.0
    %v10375 = vmax.f32 %v9501, 0.0
    %v10376 = vmax.f32 %v10213, 0.0
    %v10377 = vmax.f32 %v5231, 0.0
    %v10378 = vmax.f32 %v5943, 0.0
    %v10379 = vmax.f32 %v6655, 0.0
    %v10380 = vmax.f32 %v7367, 0.0
    %v10381 = vmax.f32 %v8079, 0.0
    %v10382 = vmax.f32 %v8791, 0.0
    %v10383 = vmax.f32 %v9503, 0.0
    %v10384 = vmax.f32 %v10215, 0.0
    %v10385 = vmax.f32 %v5234, 0.0
    %v10386 = vmax.f32 %v5946, 0.0
    %v10387 = vmax.f32 %v6658, 0.0
    %v10388 = vmax.f32 %v7370, 0.0
    %v10389 = vmax.f32 %v8082, 0.0
    %v10390 = vmax.f32 %v8794, 0.0
    %v10391 = vmax.f32 %v9506, 0.0
    %v10392 = vmax.f32 %v10218, 0.0
    %v10393 = vmax.f32 %v5236, 0.0
    %v10394 = vmax.f32 %v5948, 0.0
    %v10395 = vmax.f32 %v6660, 0.0
    %v10396 = vmax.f32 %v7372, 0.0
    %v10397 = vmax.f32 %v8084, 0.0
    %v10398 = vmax.f32 %v8796, 0.0
    %v10399 = vmax.f32 %v9508, 0.0
    %v10400 = vmax.f32 %v10220, 0.0
    %v10401 = vmax.f32 %v5239, 0.0
    %v10402 = vmax.f32 %v5951, 0.0
    %v10403 = vmax.f32 %v6663, 0.0
    %v10404 = vmax.f32 %v7375, 0.0
    %v10405 = vmax.f32 %v8087, 0.0
    %v10406 = vmax.f32 %v8799, 0.0
    %v10407 = vmax.f32 %v9511, 0.0
    %v10408 = vmax.f32 %v10223, 0.0
    %v10409 = vmax.f32 %v5241, 0.0
    %v10410 = vmax.f32 %v5953, 0.0
    %v10411 = vmax.f32 %v6665, 0.0
    %v10412 = vmax.f32 %v7377, 0.0
    %v10413 = vmax.f32 %v8089, 0.0
    %v10414 = vmax.f32 %v8801, 0.0
    %v10415 = vmax.f32 %v9513, 0.0
    %v10416 = vmax.f32 %v10225, 0.0
    %v10417 = vmax.f32 %v5244, 0.0
    %v10418 = vmax.f32 %v5956, 0.0
    %v10419 = vmax.f32 %v6668, 0.0
    %v10420 = vmax.f32 %v7380, 0.0
    %v10421 = vmax.f32 %v8092, 0.0
    %v10422 = vmax.f32 %v8804, 0.0
    %v10423 = vmax.f32 %v9516, 0.0
    %v10424 = vmax.f32 %v10228, 0.0
    %v10425 = vmax.f32 %v5246, 0.0
    %v10426 = vmax.f32 %v5958, 0.0
    %v10427 = vmax.f32 %v6670, 0.0
    %v10428 = vmax.f32 %v7382, 0.0
    %v10429 = vmax.f32 %v8094, 0.0
    %v10430 = vmax.f32 %v8806, 0.0
    %v10431 = vmax.f32 %v9518, 0.0
    %v10432 = vmax.f32 %v10230, 0.0
    %v10433 = vmax.f32 %v5249, 0.0
    %v10434 = vmax.f32 %v5961, 0.0
    %v10435 = vmax.f32 %v6673, 0.0
    %v10436 = vmax.f32 %v7385, 0.0
    %v10437 = vmax.f32 %v8097, 0.0
    %v10438 = vmax.f32 %v8809, 0.0
    %v10439 = vmax.f32 %v9521, 0.0
    %v10440 = vmax.f32 %v10233, 0.0
    %v10441 = vmax.f32 %v5251, 0.0
    %v10442 = vmax.f32 %v5963, 0.0
    %v10443 = vmax.f32 %v6675, 0.0
    %v10444 = vmax.f32 %v7387, 0.0
    %v10445 = vmax.f32 %v8099, 0.0
    %v10446 = vmax.f32 %v8811, 0.0
    %v10447 = vmax.f32 %v9523, 0.0
    %v10448 = vmax.f32 %v10235, 0.0
    %v10449 = vmax.f32 %v5254, 0.0
    %v10450 = vmax.f32 %v5966, 0.0
    %v10451 = vmax.f32 %v6678, 0.0
    %v10452 = vmax.f32 %v7390, 0.0
    %v10453 = vmax.f32 %v8102, 0.0
    %v10454 = vmax.f32 %v8814, 0.0
    %v10455 = vmax.f32 %v9526, 0.0
    %v10456 = vmax.f32 %v10238, 0.0
    %v10457 = vmax.f32 %v5256, 0.0
    %v10458 = vmax.f32 %v5968, 0.0
    %v10459 = vmax.f32 %v6680, 0.0
    %v10460 = vmax.f32 %v7392, 0.0
    %v10461 = vmax.f32 %v8104, 0.0
    %v10462 = vmax.f32 %v8816, 0.0
    %v10463 = vmax.f32 %v9528, 0.0
    %v10464 = vmax.f32 %v10240, 0.0
    %v10465 = vmax.f32 %v5259, 0.0
    %v10466 = vmax.f32 %v5971, 0.0
    %v10467 = vmax.f32 %v6683, 0.0
    %v10468 = vmax.f32 %v7395, 0.0
    %v10469 = vmax.f32 %v8107, 0.0
    %v10470 = vmax.f32 %v8819, 0.0
    %v10471 = vmax.f32 %v9531, 0.0
    %v10472 = vmax.f32 %v10243, 0.0
    %v10473 = vmax.f32 %v5261, 0.0
    %v10474 = vmax.f32 %v5973, 0.0
    %v10475 = vmax.f32 %v6685, 0.0
    %v10476 = vmax.f32 %v7397, 0.0
    %v10477 = vmax.f32 %v8109, 0.0
    %v10478 = vmax.f32 %v8821, 0.0
    %v10479 = vmax.f32 %v9533, 0.0
    %v10480 = vmax.f32 %v10245, 0.0
    %v10481 = vmax.f32 %v5264, 0.0
    %v10482 = vmax.f32 %v5976, 0.0
    %v10483 = vmax.f32 %v6688, 0.0
    %v10484 = vmax.f32 %v7400, 0.0
    %v10485 = vmax.f32 %v8112, 0.0
    %v10486 = vmax.f32 %v8824, 0.0
    %v10487 = vmax.f32 %v9536, 0.0
    %v10488 = vmax.f32 %v10248, 0.0
    %v10489 = vmax.f32 %v5266, 0.0
    %v10490 = vmax.f32 %v5978, 0.0
    %v10491 = vmax.f32 %v6690, 0.0
    %v10492 = vmax.f32 %v7402, 0.0
    %v10493 = vmax.f32 %v8114, 0.0
    %v10494 = vmax.f32 %v8826, 0.0
    %v10495 = vmax.f32 %v9538, 0.0
    %v10496 = vmax.f32 %v10250, 0.0
    %v10497 = vmax.f32 %v5269, 0.0
    %v10498 = vmax.f32 %v5981, 0.0
    %v10499 = vmax.f32 %v6693, 0.0
    %v10500 = vmax.f32 %v7405, 0.0
    %v10501 = vmax.f32 %v8117, 0.0
    %v10502 = vmax.f32 %v8829, 0.0
    %v10503 = vmax.f32 %v9541, 0.0
    %v10504 = vmax.f32 %v10253, 0.0
    %v10505 = vmax.f32 %v5271, 0.0
    %v10506 = vmax.f32 %v5983, 0.0
    %v10507 = vmax.f32 %v6695, 0.0
    %v10508 = vmax.f32 %v7407, 0.0
    %v10509 = vmax.f32 %v8119, 0.0
    %v10510 = vmax.f32 %v8831, 0.0
    %v10511 = vmax.f32 %v9543, 0.0
    %v10512 = vmax.f32 %v10255, 0.0
    %v10513 = vld [vmem:[#allocation10] sm:$0xff]
    %v10514 = vunpack.c.l.bf16 %v10513
    %v10515 = vunpack.c.h.bf16 %v10513
    %v10518 = vperm.slane %v10514, 0
    %v10519 = vperm.slane %v10514, 2
    %v10520 = vperm.slane %v10514, 4
    %v10521 = vperm.slane %v10514, 6
    %v10522 = vperm.slane %v10515, 0
    %v10523 = vperm.slane %v10515, 2
    %v10524 = vperm.slane %v10515, 4
    %v10525 = vperm.slane %v10515, 6
    %v10534 = vperm.slane %v10518, 0
    %v10535 = vperm.slane %v10519, 0
    %v10536 = vperm.slane %v10520, 0
    %v10537 = vperm.slane %v10521, 0
    %v10538 = vperm.slane %v10522, 0
    %v10539 = vperm.slane %v10523, 0
    %v10540 = vperm.slane %v10524, 0
    %v10541 = vperm.slane %v10525, 0
    %v10542 = vmul.f32 %v10257, %v10534
    %v10543 = vmul.f32 %v10258, %v10535
    %v10544 = vmul.f32 %v10259, %v10536
    %v10545 = vmul.f32 %v10260, %v10537
    %v10546 = vmul.f32 %v10261, %v10538
    %v10547 = vmul.f32 %v10262, %v10539
    %v10548 = vmul.f32 %v10263, %v10540
    %v10549 = vmul.f32 %v10264, %v10541
    %v10550 = vmul.f32 %v10265, %v10534
    %v10551 = vmul.f32 %v10266, %v10535
    %v10552 = vmul.f32 %v10267, %v10536
    %v10553 = vmul.f32 %v10268, %v10537
    %v10554 = vmul.f32 %v10269, %v10538
    %v10555 = vmul.f32 %v10270, %v10539
    %v10556 = vmul.f32 %v10271, %v10540
    %v10557 = vmul.f32 %v10272, %v10541
    %v10558 = vmul.f32 %v10273, %v10534
    %v10559 = vmul.f32 %v10274, %v10535
    %v10560 = vmul.f32 %v10275, %v10536
    %v10561 = vmul.f32 %v10276, %v10537
    %v10562 = vmul.f32 %v10277, %v10538
    %v10563 = vmul.f32 %v10278, %v10539
    %v10564 = vmul.f32 %v10279, %v10540
    %v10565 = vmul.f32 %v10280, %v10541
    %v10566 = vmul.f32 %v10281, %v10534
    %v10567 = vmul.f32 %v10282, %v10535
    %v10568 = vmul.f32 %v10283, %v10536
    %v10569 = vmul.f32 %v10284, %v10537
    %v10570 = vmul.f32 %v10285, %v10538
    %v10571 = vmul.f32 %v10286, %v10539
    %v10572 = vmul.f32 %v10287, %v10540
    %v10573 = vmul.f32 %v10288, %v10541
    %v10574 = vmul.f32 %v10289, %v10534
    %v10575 = vmul.f32 %v10290, %v10535
    %v10576 = vmul.f32 %v10291, %v10536
    %v10577 = vmul.f32 %v10292, %v10537
    %v10578 = vmul.f32 %v10293, %v10538
    %v10579 = vmul.f32 %v10294, %v10539
    %v10580 = vmul.f32 %v10295, %v10540
    %v10581 = vmul.f32 %v10296, %v10541
    %v10582 = vmul.f32 %v10297, %v10534
    %v10583 = vmul.f32 %v10298, %v10535
    %v10584 = vmul.f32 %v10299, %v10536
    %v10585 = vmul.f32 %v10300, %v10537
    %v10586 = vmul.f32 %v10301, %v10538
    %v10587 = vmul.f32 %v10302, %v10539
    %v10588 = vmul.f32 %v10303, %v10540
    %v10589 = vmul.f32 %v10304, %v10541
    %v10590 = vmul.f32 %v10305, %v10534
    %v10591 = vmul.f32 %v10306, %v10535
    %v10592 = vmul.f32 %v10307, %v10536
    %v10593 = vmul.f32 %v10308, %v10537
    %v10594 = vmul.f32 %v10309, %v10538
    %v10595 = vmul.f32 %v10310, %v10539
    %v10596 = vmul.f32 %v10311, %v10540
    %v10597 = vmul.f32 %v10312, %v10541
    %v10598 = vmul.f32 %v10313, %v10534
    %v10599 = vmul.f32 %v10314, %v10535
    %v10600 = vmul.f32 %v10315, %v10536
    %v10601 = vmul.f32 %v10316, %v10537
    %v10602 = vmul.f32 %v10317, %v10538
    %v10603 = vmul.f32 %v10318, %v10539
    %v10604 = vmul.f32 %v10319, %v10540
    %v10605 = vmul.f32 %v10320, %v10541
    %v10606 = vmul.f32 %v10321, %v10534
    %v10607 = vmul.f32 %v10322, %v10535
    %v10608 = vmul.f32 %v10323, %v10536
    %v10609 = vmul.f32 %v10324, %v10537
    %v10610 = vmul.f32 %v10325, %v10538
    %v10611 = vmul.f32 %v10326, %v10539
    %v10612 = vmul.f32 %v10327, %v10540
    %v10613 = vmul.f32 %v10328, %v10541
    %v10614 = vmul.f32 %v10329, %v10534
    %v10615 = vmul.f32 %v10330, %v10535
    %v10616 = vmul.f32 %v10331, %v10536
    %v10617 = vmul.f32 %v10332, %v10537
    %v10618 = vmul.f32 %v10333, %v10538
    %v10619 = vmul.f32 %v10334, %v10539
    %v10620 = vmul.f32 %v10335, %v10540
    %v10621 = vmul.f32 %v10336, %v10541
    %v10622 = vmul.f32 %v10337, %v10534
    %v10623 = vmul.f32 %v10338, %v10535
    %v10624 = vmul.f32 %v10339, %v10536
    %v10625 = vmul.f32 %v10340, %v10537
    %v10626 = vmul.f32 %v10341, %v10538
    %v10627 = vmul.f32 %v10342, %v10539
    %v10628 = vmul.f32 %v10343, %v10540
    %v10629 = vmul.f32 %v10344, %v10541
    %v10630 = vmul.f32 %v10345, %v10534
    %v10631 = vmul.f32 %v10346, %v10535
    %v10632 = vmul.f32 %v10347, %v10536
    %v10633 = vmul.f32 %v10348, %v10537
    %v10634 = vmul.f32 %v10349, %v10538
    %v10635 = vmul.f32 %v10350, %v10539
    %v10636 = vmul.f32 %v10351, %v10540
    %v10637 = vmul.f32 %v10352, %v10541
    %v10638 = vmul.f32 %v10353, %v10534
    %v10639 = vmul.f32 %v10354, %v10535
    %v10640 = vmul.f32 %v10355, %v10536
    %v10641 = vmul.f32 %v10356, %v10537
    %v10642 = vmul.f32 %v10357, %v10538
    %v10643 = vmul.f32 %v10358, %v10539
    %v10644 = vmul.f32 %v10359, %v10540
    %v10645 = vmul.f32 %v10360, %v10541
    %v10646 = vmul.f32 %v10361, %v10534
    %v10647 = vmul.f32 %v10362, %v10535
    %v10648 = vmul.f32 %v10363, %v10536
    %v10649 = vmul.f32 %v10364, %v10537
    %v10650 = vmul.f32 %v10365, %v10538
    %v10651 = vmul.f32 %v10366, %v10539
    %v10652 = vmul.f32 %v10367, %v10540
    %v10653 = vmul.f32 %v10368, %v10541
    %v10654 = vmul.f32 %v10369, %v10534
    %v10655 = vmul.f32 %v10370, %v10535
    %v10656 = vmul.f32 %v10371, %v10536
    %v10657 = vmul.f32 %v10372, %v10537
    %v10658 = vmul.f32 %v10373, %v10538
    %v10659 = vmul.f32 %v10374, %v10539
    %v10660 = vmul.f32 %v10375, %v10540
    %v10661 = vmul.f32 %v10376, %v10541
    %v10662 = vmul.f32 %v10377, %v10534
    %v10663 = vmul.f32 %v10378, %v10535
    %v10664 = vmul.f32 %v10379, %v10536
    %v10665 = vmul.f32 %v10380, %v10537
    %v10666 = vmul.f32 %v10381, %v10538
    %v10667 = vmul.f32 %v10382, %v10539
    %v10668 = vmul.f32 %v10383, %v10540
    %v10669 = vmul.f32 %v10384, %v10541
    %v10670 = vmul.f32 %v10385, %v10534
    %v10671 = vmul.f32 %v10386, %v10535
    %v10672 = vmul.f32 %v10387, %v10536
    %v10673 = vmul.f32 %v10388, %v10537
    %v10674 = vmul.f32 %v10389, %v10538
    %v10675 = vmul.f32 %v10390, %v10539
    %v10676 = vmul.f32 %v10391, %v10540
    %v10677 = vmul.f32 %v10392, %v10541
    %v10678 = vmul.f32 %v10393, %v10534
    %v10679 = vmul.f32 %v10394, %v10535
    %v10680 = vmul.f32 %v10395, %v10536
    %v10681 = vmul.f32 %v10396, %v10537
    %v10682 = vmul.f32 %v10397, %v10538
    %v10683 = vmul.f32 %v10398, %v10539
    %v10684 = vmul.f32 %v10399, %v10540
    %v10685 = vmul.f32 %v10400, %v10541
    %v10686 = vmul.f32 %v10401, %v10534
    %v10687 = vmul.f32 %v10402, %v10535
    %v10688 = vmul.f32 %v10403, %v10536
    %v10689 = vmul.f32 %v10404, %v10537
    %v10690 = vmul.f32 %v10405, %v10538
    %v10691 = vmul.f32 %v10406, %v10539
    %v10692 = vmul.f32 %v10407, %v10540
    %v10693 = vmul.f32 %v10408, %v10541
    %v10694 = vmul.f32 %v10409, %v10534
    %v10695 = vmul.f32 %v10410, %v10535
    %v10696 = vmul.f32 %v10411, %v10536
    %v10697 = vmul.f32 %v10412, %v10537
    %v10698 = vmul.f32 %v10413, %v10538
    %v10699 = vmul.f32 %v10414, %v10539
    %v10700 = vmul.f32 %v10415, %v10540
    %v10701 = vmul.f32 %v10416, %v10541
    %v10702 = vmul.f32 %v10417, %v10534
    %v10703 = vmul.f32 %v10418, %v10535
    %v10704 = vmul.f32 %v10419, %v10536
    %v10705 = vmul.f32 %v10420, %v10537
    %v10706 = vmul.f32 %v10421, %v10538
    %v10707 = vmul.f32 %v10422, %v10539
    %v10708 = vmul.f32 %v10423, %v10540
    %v10709 = vmul.f32 %v10424, %v10541
    %v10710 = vmul.f32 %v10425, %v10534
    %v10711 = vmul.f32 %v10426, %v10535
    %v10712 = vmul.f32 %v10427, %v10536
    %v10713 = vmul.f32 %v10428, %v10537
    %v10714 = vmul.f32 %v10429, %v10538
    %v10715 = vmul.f32 %v10430, %v10539
    %v10716 = vmul.f32 %v10431, %v10540
    %v10717 = vmul.f32 %v10432, %v10541
    %v10718 = vmul.f32 %v10433, %v10534
    %v10719 = vmul.f32 %v10434, %v10535
    %v10720 = vmul.f32 %v10435, %v10536
    %v10721 = vmul.f32 %v10436, %v10537
    %v10722 = vmul.f32 %v10437, %v10538
    %v10723 = vmul.f32 %v10438, %v10539
    %v10724 = vmul.f32 %v10439, %v10540
    %v10725 = vmul.f32 %v10440, %v10541
    %v10726 = vmul.f32 %v10441, %v10534
    %v10727 = vmul.f32 %v10442, %v10535
    %v10728 = vmul.f32 %v10443, %v10536
    %v10729 = vmul.f32 %v10444, %v10537
    %v10730 = vmul.f32 %v10445, %v10538
    %v10731 = vmul.f32 %v10446, %v10539
    %v10732 = vmul.f32 %v10447, %v10540
    %v10733 = vmul.f32 %v10448, %v10541
    %v10734 = vmul.f32 %v10449, %v10534
    %v10735 = vmul.f32 %v10450, %v10535
    %v10736 = vmul.f32 %v10451, %v10536
    %v10737 = vmul.f32 %v10452, %v10537
    %v10738 = vmul.f32 %v10453, %v10538
    %v10739 = vmul.f32 %v10454, %v10539
    %v10740 = vmul.f32 %v10455, %v10540
    %v10741 = vmul.f32 %v10456, %v10541
    %v10742 = vmul.f32 %v10457, %v10534
    %v10743 = vmul.f32 %v10458, %v10535
    %v10744 = vmul.f32 %v10459, %v10536
    %v10745 = vmul.f32 %v10460, %v10537
    %v10746 = vmul.f32 %v10461, %v10538
    %v10747 = vmul.f32 %v10462, %v10539
    %v10748 = vmul.f32 %v10463, %v10540
    %v10749 = vmul.f32 %v10464, %v10541
    %v10750 = vmul.f32 %v10465, %v10534
    %v10751 = vmul.f32 %v10466, %v10535
    %v10752 = vmul.f32 %v10467, %v10536
    %v10753 = vmul.f32 %v10468, %v10537
    %v10754 = vmul.f32 %v10469, %v10538
    %v10755 = vmul.f32 %v10470, %v10539
    %v10756 = vmul.f32 %v10471, %v10540
    %v10757 = vmul.f32 %v10472, %v10541
    %v10758 = vmul.f32 %v10473, %v10534
    %v10759 = vmul.f32 %v10474, %v10535
    %v10760 = vmul.f32 %v10475, %v10536
    %v10761 = vmul.f32 %v10476, %v10537
    %v10762 = vmul.f32 %v10477, %v10538
    %v10763 = vmul.f32 %v10478, %v10539
    %v10764 = vmul.f32 %v10479, %v10540
    %v10765 = vmul.f32 %v10480, %v10541
    %v10766 = vmul.f32 %v10481, %v10534
    %v10767 = vmul.f32 %v10482, %v10535
    %v10768 = vmul.f32 %v10483, %v10536
    %v10769 = vmul.f32 %v10484, %v10537
    %v10770 = vmul.f32 %v10485, %v10538
    %v10771 = vmul.f32 %v10486, %v10539
    %v10772 = vmul.f32 %v10487, %v10540
    %v10773 = vmul.f32 %v10488, %v10541
    %v10774 = vmul.f32 %v10489, %v10534
    %v10775 = vmul.f32 %v10490, %v10535
    %v10776 = vmul.f32 %v10491, %v10536
    %v10777 = vmul.f32 %v10492, %v10537
    %v10778 = vmul.f32 %v10493, %v10538
    %v10779 = vmul.f32 %v10494, %v10539
    %v10780 = vmul.f32 %v10495, %v10540
    %v10781 = vmul.f32 %v10496, %v10541
    %v10782 = vmul.f32 %v10497, %v10534
    %v10783 = vmul.f32 %v10498, %v10535
    %v10784 = vmul.f32 %v10499, %v10536
    %v10785 = vmul.f32 %v10500, %v10537
    %v10786 = vmul.f32 %v10501, %v10538
    %v10787 = vmul.f32 %v10502, %v10539
    %v10788 = vmul.f32 %v10503, %v10540
    %v10789 = vmul.f32 %v10504, %v10541
    %v10790 = vmul.f32 %v10505, %v10534
    %v10791 = vmul.f32 %v10506, %v10535
    %v10792 = vmul.f32 %v10507, %v10536
    %v10793 = vmul.f32 %v10508, %v10537
    %v10794 = vmul.f32 %v10509, %v10538
    %v10795 = vmul.f32 %v10510, %v10539
    %v10796 = vmul.f32 %v10511, %v10540
    %v10797 = vmul.f32 %v10512, %v10541
    %v10798 = vadd.f32 %v10542, %v10543
    %v10799 = vadd.f32 %v10798, %v10544
    %v10800 = vadd.f32 %v10799, %v10545
    %v10801 = vadd.f32 %v10800, %v10546
    %v10802 = vadd.f32 %v10801, %v10547
    %v10803 = vadd.f32 %v10802, %v10548
    %v10804 = vadd.f32 %v10803, %v10549
    %10805 = vadd.xlane.f32.xlu0 %v10804
    %v10806 = vpop.xlane.xlu0 %10805
    %v10807 = vadd.f32 %v10550, %v10551
    %v10808 = vadd.f32 %v10807, %v10552
    %v10809 = vadd.f32 %v10808, %v10553
    %v10810 = vadd.f32 %v10809, %v10554
    %v10811 = vadd.f32 %v10810, %v10555
    %v10812 = vadd.f32 %v10811, %v10556
    %v10813 = vadd.f32 %v10812, %v10557
    %10814 = vadd.xlane.f32.xlu0 %v10813
    %v10815 = vpop.xlane.xlu0 %10814
    %v10816 = vadd.f32 %v10558, %v10559
    %v10817 = vadd.f32 %v10816, %v10560
    %v10818 = vadd.f32 %v10817, %v10561
    %v10819 = vadd.f32 %v10818, %v10562
    %v10820 = vadd.f32 %v10819, %v10563
    %v10821 = vadd.f32 %v10820, %v10564
    %v10822 = vadd.f32 %v10821, %v10565
    %10823 = vadd.xlane.f32.xlu0 %v10822
    %v10824 = vpop.xlane.xlu0 %10823
    %v10825 = vadd.f32 %v10566, %v10567
    %v10826 = vadd.f32 %v10825, %v10568
    %v10827 = vadd.f32 %v10826, %v10569
    %v10828 = vadd.f32 %v10827, %v10570
    %v10829 = vadd.f32 %v10828, %v10571
    %v10830 = vadd.f32 %v10829, %v10572
    %v10831 = vadd.f32 %v10830, %v10573
    %10832 = vadd.xlane.f32.xlu0 %v10831
    %v10833 = vpop.xlane.xlu0 %10832
    %v10834 = vadd.f32 %v10574, %v10575
    %v10835 = vadd.f32 %v10834, %v10576
    %v10836 = vadd.f32 %v10835, %v10577
    %v10837 = vadd.f32 %v10836, %v10578
    %v10838 = vadd.f32 %v10837, %v10579
    %v10839 = vadd.f32 %v10838, %v10580
    %v10840 = vadd.f32 %v10839, %v10581
    %10841 = vadd.xlane.f32.xlu0 %v10840
    %v10842 = vpop.xlane.xlu0 %10841
    %v10843 = vadd.f32 %v10582, %v10583
    %v10844 = vadd.f32 %v10843, %v10584
    %v10845 = vadd.f32 %v10844, %v10585
    %v10846 = vadd.f32 %v10845, %v10586
    %v10847 = vadd.f32 %v10846, %v10587
    %v10848 = vadd.f32 %v10847, %v10588
    %v10849 = vadd.f32 %v10848, %v10589
    %10850 = vadd.xlane.f32.xlu0 %v10849
    %v10851 = vpop.xlane.xlu0 %10850
    %v10852 = vadd.f32 %v10590, %v10591
    %v10853 = vadd.f32 %v10852, %v10592
    %v10854 = vadd.f32 %v10853, %v10593
    %v10855 = vadd.f32 %v10854, %v10594
    %v10856 = vadd.f32 %v10855, %v10595
    %v10857 = vadd.f32 %v10856, %v10596
    %v10858 = vadd.f32 %v10857, %v10597
    %10859 = vadd.xlane.f32.xlu0 %v10858
    %v10860 = vpop.xlane.xlu0 %10859
    %v10861 = vadd.f32 %v10598, %v10599
    %v10862 = vadd.f32 %v10861, %v10600
    %v10863 = vadd.f32 %v10862, %v10601
    %v10864 = vadd.f32 %v10863, %v10602
    %v10865 = vadd.f32 %v10864, %v10603
    %v10866 = vadd.f32 %v10865, %v10604
    %v10867 = vadd.f32 %v10866, %v10605
    %10868 = vadd.xlane.f32.xlu0 %v10867
    %v10869 = vpop.xlane.xlu0 %10868
    %v10870 = vadd.f32 %v10606, %v10607
    %v10871 = vadd.f32 %v10870, %v10608
    %v10872 = vadd.f32 %v10871, %v10609
    %v10873 = vadd.f32 %v10872, %v10610
    %v10874 = vadd.f32 %v10873, %v10611
    %v10875 = vadd.f32 %v10874, %v10612
    %v10876 = vadd.f32 %v10875, %v10613
    %10877 = vadd.xlane.f32.xlu0 %v10876
    %v10878 = vpop.xlane.xlu0 %10877
    %v10879 = vadd.f32 %v10614, %v10615
    %v10880 = vadd.f32 %v10879, %v10616
    %v10881 = vadd.f32 %v10880, %v10617
    %v10882 = vadd.f32 %v10881, %v10618
    %v10883 = vadd.f32 %v10882, %v10619
    %v10884 = vadd.f32 %v10883, %v10620
    %v10885 = vadd.f32 %v10884, %v10621
    %10886 = vadd.xlane.f32.xlu0 %v10885
    %v10887 = vpop.xlane.xlu0 %10886
    %v10888 = vadd.f32 %v10622, %v10623
    %v10889 = vadd.f32 %v10888, %v10624
    %v10890 = vadd.f32 %v10889, %v10625
    %v10891 = vadd.f32 %v10890, %v10626
    %v10892 = vadd.f32 %v10891, %v10627
    %v10893 = vadd.f32 %v10892, %v10628
    %v10894 = vadd.f32 %v10893, %v10629
    %10895 = vadd.xlane.f32.xlu0 %v10894
    %v10896 = vpop.xlane.xlu0 %10895
    %v10897 = vadd.f32 %v10630, %v10631
    %v10898 = vadd.f32 %v10897, %v10632
    %v10899 = vadd.f32 %v10898, %v10633
    %v10900 = vadd.f32 %v10899, %v10634
    %v10901 = vadd.f32 %v10900, %v10635
    %v10902 = vadd.f32 %v10901, %v10636
    %v10903 = vadd.f32 %v10902, %v10637
    %10904 = vadd.xlane.f32.xlu0 %v10903
    %v10905 = vpop.xlane.xlu0 %10904
    %v10906 = vadd.f32 %v10638, %v10639
    %v10907 = vadd.f32 %v10906, %v10640
    %v10908 = vadd.f32 %v10907, %v10641
    %v10909 = vadd.f32 %v10908, %v10642
    %v10910 = vadd.f32 %v10909, %v10643
    %v10911 = vadd.f32 %v10910, %v10644
    %v10912 = vadd.f32 %v10911, %v10645
    %10913 = vadd.xlane.f32.xlu0 %v10912
    %v10914 = vpop.xlane.xlu0 %10913
    %v10915 = vadd.f32 %v10646, %v10647
    %v10916 = vadd.f32 %v10915, %v10648
    %v10917 = vadd.f32 %v10916, %v10649
    %v10918 = vadd.f32 %v10917, %v10650
    %v10919 = vadd.f32 %v10918, %v10651
    %v10920 = vadd.f32 %v10919, %v10652
    %v10921 = vadd.f32 %v10920, %v10653
    %10922 = vadd.xlane.f32.xlu0 %v10921
    %v10923 = vpop.xlane.xlu0 %10922
    %v10924 = vadd.f32 %v10654, %v10655
    %v10925 = vadd.f32 %v10924, %v10656
    %v10926 = vadd.f32 %v10925, %v10657
    %v10927 = vadd.f32 %v10926, %v10658
    %v10928 = vadd.f32 %v10927, %v10659
    %v10929 = vadd.f32 %v10928, %v10660
    %v10930 = vadd.f32 %v10929, %v10661
    %10931 = vadd.xlane.f32.xlu0 %v10930
    %v10932 = vpop.xlane.xlu0 %10931
    %v10933 = vadd.f32 %v10662, %v10663
    %v10934 = vadd.f32 %v10933, %v10664
    %v10935 = vadd.f32 %v10934, %v10665
    %v10936 = vadd.f32 %v10935, %v10666
    %v10937 = vadd.f32 %v10936, %v10667
    %v10938 = vadd.f32 %v10937, %v10668
    %v10939 = vadd.f32 %v10938, %v10669
    %10940 = vadd.xlane.f32.xlu0 %v10939
    %v10941 = vpop.xlane.xlu0 %10940
    %v10942 = vadd.f32 %v10670, %v10671
    %v10943 = vadd.f32 %v10942, %v10672
    %v10944 = vadd.f32 %v10943, %v10673
    %v10945 = vadd.f32 %v10944, %v10674
    %v10946 = vadd.f32 %v10945, %v10675
    %v10947 = vadd.f32 %v10946, %v10676
    %v10948 = vadd.f32 %v10947, %v10677
    %10949 = vadd.xlane.f32.xlu0 %v10948
    %v10950 = vpop.xlane.xlu0 %10949
    %v10951 = vadd.f32 %v10678, %v10679
    %v10952 = vadd.f32 %v10951, %v10680
    %v10953 = vadd.f32 %v10952, %v10681
    %v10954 = vadd.f32 %v10953, %v10682
    %v10955 = vadd.f32 %v10954, %v10683
    %v10956 = vadd.f32 %v10955, %v10684
    %v10957 = vadd.f32 %v10956, %v10685
    %10958 = vadd.xlane.f32.xlu0 %v10957
    %v10959 = vpop.xlane.xlu0 %10958
    %v10960 = vadd.f32 %v10686, %v10687
    %v10961 = vadd.f32 %v10960, %v10688
    %v10962 = vadd.f32 %v10961, %v10689
    %v10963 = vadd.f32 %v10962, %v10690
    %v10964 = vadd.f32 %v10963, %v10691
    %v10965 = vadd.f32 %v10964, %v10692
    %v10966 = vadd.f32 %v10965, %v10693
    %10967 = vadd.xlane.f32.xlu0 %v10966
    %v10968 = vpop.xlane.xlu0 %10967
    %v10969 = vadd.f32 %v10694, %v10695
    %v10970 = vadd.f32 %v10969, %v10696
    %v10971 = vadd.f32 %v10970, %v10697
    %v10972 = vadd.f32 %v10971, %v10698
    %v10973 = vadd.f32 %v10972, %v10699
    %v10974 = vadd.f32 %v10973, %v10700
    %v10975 = vadd.f32 %v10974, %v10701
    %10976 = vadd.xlane.f32.xlu0 %v10975
    %v10977 = vpop.xlane.xlu0 %10976
    %v10978 = vadd.f32 %v10702, %v10703
    %v10979 = vadd.f32 %v10978, %v10704
    %v10980 = vadd.f32 %v10979, %v10705
    %v10981 = vadd.f32 %v10980, %v10706
    %v10982 = vadd.f32 %v10981, %v10707
    %v10983 = vadd.f32 %v10982, %v10708
    %v10984 = vadd.f32 %v10983, %v10709
    %10985 = vadd.xlane.f32.xlu0 %v10984
    %v10986 = vpop.xlane.xlu0 %10985
    %v10987 = vadd.f32 %v10710, %v10711
    %v10988 = vadd.f32 %v10987, %v10712
    %v10989 = vadd.f32 %v10988, %v10713
    %v10990 = vadd.f32 %v10989, %v10714
    %v10991 = vadd.f32 %v10990, %v10715
    %v10992 = vadd.f32 %v10991, %v10716
    %v10993 = vadd.f32 %v10992, %v10717
    %10994 = vadd.xlane.f32.xlu0 %v10993
    %v10995 = vpop.xlane.xlu0 %10994
    %v10996 = vadd.f32 %v10718, %v10719
    %v10997 = vadd.f32 %v10996, %v10720
    %v10998 = vadd.f32 %v10997, %v10721
    %v10999 = vadd.f32 %v10998, %v10722
    %v11000 = vadd.f32 %v10999, %v10723
    %v11001 = vadd.f32 %v11000, %v10724
    %v11002 = vadd.f32 %v11001, %v10725
    %11003 = vadd.xlane.f32.xlu0 %v11002
    %v11004 = vpop.xlane.xlu0 %11003
    %v11005 = vadd.f32 %v10726, %v10727
    %v11006 = vadd.f32 %v11005, %v10728
    %v11007 = vadd.f32 %v11006, %v10729
    %v11008 = vadd.f32 %v11007, %v10730
    %v11009 = vadd.f32 %v11008, %v10731
    %v11010 = vadd.f32 %v11009, %v10732
    %v11011 = vadd.f32 %v11010, %v10733
    %11012 = vadd.xlane.f32.xlu0 %v11011
    %v11013 = vpop.xlane.xlu0 %11012
    %v11014 = vadd.f32 %v10734, %v10735
    %v11015 = vadd.f32 %v11014, %v10736
    %v11016 = vadd.f32 %v11015, %v10737
    %v11017 = vadd.f32 %v11016, %v10738
    %v11018 = vadd.f32 %v11017, %v10739
    %v11019 = vadd.f32 %v11018, %v10740
    %v11020 = vadd.f32 %v11019, %v10741
    %11021 = vadd.xlane.f32.xlu0 %v11020
    %v11022 = vpop.xlane.xlu0 %11021
    %v11023 = vadd.f32 %v10742, %v10743
    %v11024 = vadd.f32 %v11023, %v10744
    %v11025 = vadd.f32 %v11024, %v10745
    %v11026 = vadd.f32 %v11025, %v10746
    %v11027 = vadd.f32 %v11026, %v10747
    %v11028 = vadd.f32 %v11027, %v10748
    %v11029 = vadd.f32 %v11028, %v10749
    %11030 = vadd.xlane.f32.xlu0 %v11029
    %v11031 = vpop.xlane.xlu0 %11030
    %v11032 = vadd.f32 %v10750, %v10751
    %v11033 = vadd.f32 %v11032, %v10752
    %v11034 = vadd.f32 %v11033, %v10753
    %v11035 = vadd.f32 %v11034, %v10754
    %v11036 = vadd.f32 %v11035, %v10755
    %v11037 = vadd.f32 %v11036, %v10756
    %v11038 = vadd.f32 %v11037, %v10757
    %11039 = vadd.xlane.f32.xlu0 %v11038
    %v11040 = vpop.xlane.xlu0 %11039
    %v11041 = vadd.f32 %v10758, %v10759
    %v11042 = vadd.f32 %v11041, %v10760
    %v11043 = vadd.f32 %v11042, %v10761
    %v11044 = vadd.f32 %v11043, %v10762
    %v11045 = vadd.f32 %v11044, %v10763
    %v11046 = vadd.f32 %v11045, %v10764
    %v11047 = vadd.f32 %v11046, %v10765
    %11048 = vadd.xlane.f32.xlu0 %v11047
    %v11049 = vpop.xlane.xlu0 %11048
    %v11050 = vadd.f32 %v10766, %v10767
    %v11051 = vadd.f32 %v11050, %v10768
    %v11052 = vadd.f32 %v11051, %v10769
    %v11053 = vadd.f32 %v11052, %v10770
    %v11054 = vadd.f32 %v11053, %v10771
    %v11055 = vadd.f32 %v11054, %v10772
    %v11056 = vadd.f32 %v11055, %v10773
    %11057 = vadd.xlane.f32.xlu0 %v11056
    %v11058 = vpop.xlane.xlu0 %11057
    %v11059 = vadd.f32 %v10774, %v10775
    %v11060 = vadd.f32 %v11059, %v10776
    %v11061 = vadd.f32 %v11060, %v10777
    %v11062 = vadd.f32 %v11061, %v10778
    %v11063 = vadd.f32 %v11062, %v10779
    %v11064 = vadd.f32 %v11063, %v10780
    %v11065 = vadd.f32 %v11064, %v10781
    %11066 = vadd.xlane.f32.xlu0 %v11065
    %v11067 = vpop.xlane.xlu0 %11066
    %v11068 = vadd.f32 %v10782, %v10783
    %v11069 = vadd.f32 %v11068, %v10784
    %v11070 = vadd.f32 %v11069, %v10785
    %v11071 = vadd.f32 %v11070, %v10786
    %v11072 = vadd.f32 %v11071, %v10787
    %v11073 = vadd.f32 %v11072, %v10788
    %v11074 = vadd.f32 %v11073, %v10789
    %11075 = vadd.xlane.f32.xlu0 %v11074
    %v11076 = vpop.xlane.xlu0 %11075
    %v11077 = vadd.f32 %v10790, %v10791
    %v11078 = vadd.f32 %v11077, %v10792
    %v11079 = vadd.f32 %v11078, %v10793
    %v11080 = vadd.f32 %v11079, %v10794
    %v11081 = vadd.f32 %v11080, %v10795
    %v11082 = vadd.f32 %v11081, %v10796
    %v11083 = vadd.f32 %v11082, %v10797
    %11084 = vadd.xlane.f32.xlu0 %v11083
    %v11085 = vpop.xlane.xlu0 %11084
    %s11086 = sld [smem:[#allocation2]]
    %v11087 = vstv %s11086
    %v11088 = vadd.f32 %v10806, %v11087
    %v11089 = vadd.f32 %v10815, %v11087
    %v11090 = vadd.f32 %v10824, %v11087
    %v11091 = vadd.f32 %v10833, %v11087
    %v11092 = vadd.f32 %v10842, %v11087
    %v11093 = vadd.f32 %v10851, %v11087
    %v11094 = vadd.f32 %v10860, %v11087
    %v11095 = vadd.f32 %v10869, %v11087
    %v11096 = vadd.f32 %v10878, %v11087
    %v11097 = vadd.f32 %v10887, %v11087
    %v11098 = vadd.f32 %v10896, %v11087
    %v11099 = vadd.f32 %v10905, %v11087
    %v11100 = vadd.f32 %v10914, %v11087
    %v11101 = vadd.f32 %v10923, %v11087
    %v11102 = vadd.f32 %v10932, %v11087
    %v11103 = vadd.f32 %v10941, %v11087
    %v11104 = vadd.f32 %v10950, %v11087
    %v11105 = vadd.f32 %v10959, %v11087
    %v11106 = vadd.f32 %v10968, %v11087
    %v11107 = vadd.f32 %v10977, %v11087
    %v11108 = vadd.f32 %v10986, %v11087
    %v11109 = vadd.f32 %v10995, %v11087
    %v11110 = vadd.f32 %v11004, %v11087
    %v11111 = vadd.f32 %v11013, %v11087
    %v11112 = vadd.f32 %v11022, %v11087
    %v11113 = vadd.f32 %v11031, %v11087
    %v11114 = vadd.f32 %v11040, %v11087
    %v11115 = vadd.f32 %v11049, %v11087
    %v11116 = vadd.f32 %v11058, %v11087
    %v11117 = vadd.f32 %v11067, %v11087
    %v11118 = vadd.f32 %v11076, %v11087
    %v11119 = vadd.f32 %v11085, %v11087
    %v11120 = vxor.u32 %v11088, 2147483648
    %v11121 = vxor.u32 %v11089, 2147483648
    %v11122 = vxor.u32 %v11090, 2147483648
    %v11123 = vxor.u32 %v11091, 2147483648
    %v11124 = vxor.u32 %v11092, 2147483648
    %v11125 = vxor.u32 %v11093, 2147483648
    %v11126 = vxor.u32 %v11094, 2147483648
    %v11127 = vxor.u32 %v11095, 2147483648
    %v11128 = vxor.u32 %v11096, 2147483648
    %v11129 = vxor.u32 %v11097, 2147483648
    %v11130 = vxor.u32 %v11098, 2147483648
    %v11131 = vxor.u32 %v11099, 2147483648
    %v11132 = vxor.u32 %v11100, 2147483648
    %v11133 = vxor.u32 %v11101, 2147483648
    %v11134 = vxor.u32 %v11102, 2147483648
    %v11135 = vxor.u32 %v11103, 2147483648
    %v11136 = vxor.u32 %v11104, 2147483648
    %v11137 = vxor.u32 %v11105, 2147483648
    %v11138 = vxor.u32 %v11106, 2147483648
    %v11139 = vxor.u32 %v11107, 2147483648
    %v11140 = vxor.u32 %v11108, 2147483648
    %v11141 = vxor.u32 %v11109, 2147483648
    %v11142 = vxor.u32 %v11110, 2147483648
    %v11143 = vxor.u32 %v11111, 2147483648
    %v11144 = vxor.u32 %v11112, 2147483648
    %v11145 = vxor.u32 %v11113, 2147483648
    %v11146 = vxor.u32 %v11114, 2147483648
    %v11147 = vxor.u32 %v11115, 2147483648
    %v11148 = vxor.u32 %v11116, 2147483648
    %v11149 = vxor.u32 %v11117, 2147483648
    %v11150 = vxor.u32 %v11118, 2147483648
    %v11151 = vxor.u32 %v11119, 2147483648
    %v11152 = vmul.f32 %v11120, 1.442695
    %v11153 = vpow.pop %v11152
    %v11154 = vmul.f32 %v11121, 1.442695
    %v11155 = vpow.pop %v11154
    %v11156 = vmul.f32 %v11122, 1.442695
    %v11157 = vpow.pop %v11156
    %v11158 = vmul.f32 %v11123, 1.442695
    %v11159 = vpow.pop %v11158
    %v11160 = vmul.f32 %v11124, 1.442695
    %v11161 = vpow.pop %v11160
    %v11162 = vmul.f32 %v11125, 1.442695
    %v11163 = vpow.pop %v11162
    %v11164 = vmul.f32 %v11126, 1.442695
    %v11165 = vpow.pop %v11164
    %v11166 = vmul.f32 %v11127, 1.442695
    %v11167 = vpow.pop %v11166
    %v11168 = vmul.f32 %v11128, 1.442695
    %v11169 = vpow.pop %v11168
    %v11170 = vmul.f32 %v11129, 1.442695
    %v11171 = vpow.pop %v11170
    %v11172 = vmul.f32 %v11130, 1.442695
    %v11173 = vpow.pop %v11172
    %v11174 = vmul.f32 %v11131, 1.442695
    %v11175 = vpow.pop %v11174
    %v11176 = vmul.f32 %v11132, 1.442695
    %v11177 = vpow.pop %v11176
    %v11178 = vmul.f32 %v11133, 1.442695
    %v11179 = vpow.pop %v11178
    %v11180 = vmul.f32 %v11134, 1.442695
    %v11181 = vpow.pop %v11180
    %v11182 = vmul.f32 %v11135, 1.442695
    %v11183 = vpow.pop %v11182
    %v11184 = vmul.f32 %v11136, 1.442695
    %v11185 = vpow.pop %v11184
    %v11186 = vmul.f32 %v11137, 1.442695
    %v11187 = vpow.pop %v11186
    %v11188 = vmul.f32 %v11138, 1.442695
    %v11189 = vpow.pop %v11188
    %v11190 = vmul.f32 %v11139, 1.442695
    %v11191 = vpow.pop %v11190
    %v11192 = vmul.f32 %v11140, 1.442695
    %v11193 = vpow.pop %v11192
    %v11194 = vmul.f32 %v11141, 1.442695
    %v11195 = vpow.pop %v11194
    %v11196 = vmul.f32 %v11142, 1.442695
    %v11197 = vpow.pop %v11196
    %v11198 = vmul.f32 %v11143, 1.442695
    %v11199 = vpow.pop %v11198
    %v11200 = vmul.f32 %v11144, 1.442695
    %v11201 = vpow.pop %v11200
    %v11202 = vmul.f32 %v11145, 1.442695
    %v11203 = vpow.pop %v11202
    %v11204 = vmul.f32 %v11146, 1.442695
    %v11205 = vpow.pop %v11204
    %v11206 = vmul.f32 %v11147, 1.442695
    %v11207 = vpow.pop %v11206
    %v11208 = vmul.f32 %v11148, 1.442695
    %v11209 = vpow.pop %v11208
    %v11210 = vmul.f32 %v11149, 1.442695
    %v11211 = vpow.pop %v11210
    %v11212 = vmul.f32 %v11150, 1.442695
    %v11213 = vpow.pop %v11212
    %v11214 = vmul.f32 %v11151, 1.442695
    %v11215 = vpow.pop %v11214
    %v11216 = vadd.f32 %v11153, 1.0
    %v11217 = vadd.f32 %v11155, 1.0
    %v11218 = vadd.f32 %v11157, 1.0
    %v11219 = vadd.f32 %v11159, 1.0
    %v11220 = vadd.f32 %v11161, 1.0
    %v11221 = vadd.f32 %v11163, 1.0
    %v11222 = vadd.f32 %v11165, 1.0
    %v11223 = vadd.f32 %v11167, 1.0
    %v11224 = vadd.f32 %v11169, 1.0
    %v11225 = vadd.f32 %v11171, 1.0
    %v11226 = vadd.f32 %v11173, 1.0
    %v11227 = vadd.f32 %v11175, 1.0
    %v11228 = vadd.f32 %v11177, 1.0
    %v11229 = vadd.f32 %v11179, 1.0
    %v11230 = vadd.f32 %v11181, 1.0
    %v11231 = vadd.f32 %v11183, 1.0
    %v11232 = vadd.f32 %v11185, 1.0
    %v11233 = vadd.f32 %v11187, 1.0
    %v11234 = vadd.f32 %v11189, 1.0
    %v11235 = vadd.f32 %v11191, 1.0
    %v11236 = vadd.f32 %v11193, 1.0
    %v11237 = vadd.f32 %v11195, 1.0
    %v11238 = vadd.f32 %v11197, 1.0
    %v11239 = vadd.f32 %v11199, 1.0
    %v11240 = vadd.f32 %v11201, 1.0
    %v11241 = vadd.f32 %v11203, 1.0
    %v11242 = vadd.f32 %v11205, 1.0
    %v11243 = vadd.f32 %v11207, 1.0
    %v11244 = vadd.f32 %v11209, 1.0
    %v11245 = vadd.f32 %v11211, 1.0
    %v11246 = vadd.f32 %v11213, 1.0
    %v11247 = vadd.f32 %v11215, 1.0
    %v11248 = vrcp.pop %v11216
    %v11249 = vmul.f32 %v11216, %v11248
    %v11250 = vsub.f32 1.0, %v11249
    %v11251 = vmul.f32 %v11248, %v11250
    %v11252 = vadd.f32 %v11248, %v11251
    %vm11253 = vweird.f32 %v11216
    %vm11254 = vweird.f32 %v11248
    %vm11255 = vmor %vm11253, %vm11254
    %v11256 = vsel %vm11255, %v11248, %v11252
    %v11257 = vand.u32 2147483647, %v11216
    %vm11258 = vcmp.eq.f32.partialorder %v11257, 8.507059e+37
    %v11259 = vand.u32 %v11216, 2147483648
    %v11260 = vor.u32 1.1754944e-38, %v11259
    %v11261 = vsel %vm11258, %v11260, %v11256
    %v11262 = vmul.f32 1.0, %v11261
    %v11263 = vrcp.pop %v11217
    %v11264 = vmul.f32 %v11217, %v11263
    %v11265 = vsub.f32 1.0, %v11264
    %v11266 = vmul.f32 %v11263, %v11265
    %v11267 = vadd.f32 %v11263, %v11266
    %vm11268 = vweird.f32 %v11217
    %vm11269 = vweird.f32 %v11263
    %vm11270 = vmor %vm11268, %vm11269
    %v11271 = vsel %vm11270, %v11263, %v11267
    %v11272 = vand.u32 2147483647, %v11217
    %vm11273 = vcmp.eq.f32.partialorder %v11272, 8.507059e+37
    %v11274 = vand.u32 %v11217, 2147483648
    %v11275 = vor.u32 1.1754944e-38, %v11274
    %v11276 = vsel %vm11273, %v11275, %v11271
    %v11277 = vmul.f32 1.0, %v11276
    %v11278 = vrcp.pop %v11218
    %v11279 = vmul.f32 %v11218, %v11278
    %v11280 = vsub.f32 1.0, %v11279
    %v11281 = vmul.f32 %v11278, %v11280
    %v11282 = vadd.f32 %v11278, %v11281
    %vm11283 = vweird.f32 %v11218
    %vm11284 = vweird.f32 %v11278
    %vm11285 = vmor %vm11283, %vm11284
    %v11286 = vsel %vm11285, %v11278, %v11282
    %v11287 = vand.u32 2147483647, %v11218
    %vm11288 = vcmp.eq.f32.partialorder %v11287, 8.507059e+37
    %v11289 = vand.u32 %v11218, 2147483648
    %v11290 = vor.u32 1.1754944e-38, %v11289
    %v11291 = vsel %vm11288, %v11290, %v11286
    %v11292 = vmul.f32 1.0, %v11291
    %v11293 = vrcp.pop %v11219
    %v11294 = vmul.f32 %v11219, %v11293
    %v11295 = vsub.f32 1.0, %v11294
    %v11296 = vmul.f32 %v11293, %v11295
    %v11297 = vadd.f32 %v11293, %v11296
    %vm11298 = vweird.f32 %v11219
    %vm11299 = vweird.f32 %v11293
    %vm11300 = vmor %vm11298, %vm11299
    %v11301 = vsel %vm11300, %v11293, %v11297
    %v11302 = vand.u32 2147483647, %v11219
    %vm11303 = vcmp.eq.f32.partialorder %v11302, 8.507059e+37
    %v11304 = vand.u32 %v11219, 2147483648
    %v11305 = vor.u32 1.1754944e-38, %v11304
    %v11306 = vsel %vm11303, %v11305, %v11301
    %v11307 = vmul.f32 1.0, %v11306
    %v11308 = vrcp.pop %v11220
    %v11309 = vmul.f32 %v11220, %v11308
    %v11310 = vsub.f32 1.0, %v11309
    %v11311 = vmul.f32 %v11308, %v11310
    %v11312 = vadd.f32 %v11308, %v11311
    %vm11313 = vweird.f32 %v11220
    %vm11314 = vweird.f32 %v11308
    %vm11315 = vmor %vm11313, %vm11314
    %v11316 = vsel %vm11315, %v11308, %v11312
    %v11317 = vand.u32 2147483647, %v11220
    %vm11318 = vcmp.eq.f32.partialorder %v11317, 8.507059e+37
    %v11319 = vand.u32 %v11220, 2147483648
    %v11320 = vor.u32 1.1754944e-38, %v11319
    %v11321 = vsel %vm11318, %v11320, %v11316
    %v11322 = vmul.f32 1.0, %v11321
    %v11323 = vrcp.pop %v11221
    %v11324 = vmul.f32 %v11221, %v11323
    %v11325 = vsub.f32 1.0, %v11324
    %v11326 = vmul.f32 %v11323, %v11325
    %v11327 = vadd.f32 %v11323, %v11326
    %vm11328 = vweird.f32 %v11221
    %vm11329 = vweird.f32 %v11323
    %vm11330 = vmor %vm11328, %vm11329
    %v11331 = vsel %vm11330, %v11323, %v11327
    %v11332 = vand.u32 2147483647, %v11221
    %vm11333 = vcmp.eq.f32.partialorder %v11332, 8.507059e+37
    %v11334 = vand.u32 %v11221, 2147483648
    %v11335 = vor.u32 1.1754944e-38, %v11334
    %v11336 = vsel %vm11333, %v11335, %v11331
    %v11337 = vmul.f32 1.0, %v11336
    %v11338 = vrcp.pop %v11222
    %v11339 = vmul.f32 %v11222, %v11338
    %v11340 = vsub.f32 1.0, %v11339
    %v11341 = vmul.f32 %v11338, %v11340
    %v11342 = vadd.f32 %v11338, %v11341
    %vm11343 = vweird.f32 %v11222
    %vm11344 = vweird.f32 %v11338
    %vm11345 = vmor %vm11343, %vm11344
    %v11346 = vsel %vm11345, %v11338, %v11342
    %v11347 = vand.u32 2147483647, %v11222
    %vm11348 = vcmp.eq.f32.partialorder %v11347, 8.507059e+37
    %v11349 = vand.u32 %v11222, 2147483648
    %v11350 = vor.u32 1.1754944e-38, %v11349
    %v11351 = vsel %vm11348, %v11350, %v11346
    %v11352 = vmul.f32 1.0, %v11351
    %v11353 = vrcp.pop %v11223
    %v11354 = vmul.f32 %v11223, %v11353
    %v11355 = vsub.f32 1.0, %v11354
    %v11356 = vmul.f32 %v11353, %v11355
    %v11357 = vadd.f32 %v11353, %v11356
    %vm11358 = vweird.f32 %v11223
    %vm11359 = vweird.f32 %v11353
    %vm11360 = vmor %vm11358, %vm11359
    %v11361 = vsel %vm11360, %v11353, %v11357
    %v11362 = vand.u32 2147483647, %v11223
    %vm11363 = vcmp.eq.f32.partialorder %v11362, 8.507059e+37
    %v11364 = vand.u32 %v11223, 2147483648
    %v11365 = vor.u32 1.1754944e-38, %v11364
    %v11366 = vsel %vm11363, %v11365, %v11361
    %v11367 = vmul.f32 1.0, %v11366
    %v11368 = vrcp.pop %v11224
    %v11369 = vmul.f32 %v11224, %v11368
    %v11370 = vsub.f32 1.0, %v11369
    %v11371 = vmul.f32 %v11368, %v11370
    %v11372 = vadd.f32 %v11368, %v11371
    %vm11373 = vweird.f32 %v11224
    %vm11374 = vweird.f32 %v11368
    %vm11375 = vmor %vm11373, %vm11374
    %v11376 = vsel %vm11375, %v11368, %v11372
    %v11377 = vand.u32 2147483647, %v11224
    %vm11378 = vcmp.eq.f32.partialorder %v11377, 8.507059e+37
    %v11379 = vand.u32 %v11224, 2147483648
    %v11380 = vor.u32 1.1754944e-38, %v11379
    %v11381 = vsel %vm11378, %v11380, %v11376
    %v11382 = vmul.f32 1.0, %v11381
    %v11383 = vrcp.pop %v11225
    %v11384 = vmul.f32 %v11225, %v11383
    %v11385 = vsub.f32 1.0, %v11384
    %v11386 = vmul.f32 %v11383, %v11385
    %v11387 = vadd.f32 %v11383, %v11386
    %vm11388 = vweird.f32 %v11225
    %vm11389 = vweird.f32 %v11383
    %vm11390 = vmor %vm11388, %vm11389
    %v11391 = vsel %vm11390, %v11383, %v11387
    %v11392 = vand.u32 2147483647, %v11225
    %vm11393 = vcmp.eq.f32.partialorder %v11392, 8.507059e+37
    %v11394 = vand.u32 %v11225, 2147483648
    %v11395 = vor.u32 1.1754944e-38, %v11394
    %v11396 = vsel %vm11393, %v11395, %v11391
    %v11397 = vmul.f32 1.0, %v11396
    %v11398 = vrcp.pop %v11226
    %v11399 = vmul.f32 %v11226, %v11398
    %v11400 = vsub.f32 1.0, %v11399
    %v11401 = vmul.f32 %v11398, %v11400
    %v11402 = vadd.f32 %v11398, %v11401
    %vm11403 = vweird.f32 %v11226
    %vm11404 = vweird.f32 %v11398
    %vm11405 = vmor %vm11403, %vm11404
    %v11406 = vsel %vm11405, %v11398, %v11402
    %v11407 = vand.u32 2147483647, %v11226
    %vm11408 = vcmp.eq.f32.partialorder %v11407, 8.507059e+37
    %v11409 = vand.u32 %v11226, 2147483648
    %v11410 = vor.u32 1.1754944e-38, %v11409
    %v11411 = vsel %vm11408, %v11410, %v11406
    %v11412 = vmul.f32 1.0, %v11411
    %v11413 = vrcp.pop %v11227
    %v11414 = vmul.f32 %v11227, %v11413
    %v11415 = vsub.f32 1.0, %v11414
    %v11416 = vmul.f32 %v11413, %v11415
    %v11417 = vadd.f32 %v11413, %v11416
    %vm11418 = vweird.f32 %v11227
    %vm11419 = vweird.f32 %v11413
    %vm11420 = vmor %vm11418, %vm11419
    %v11421 = vsel %vm11420, %v11413, %v11417
    %v11422 = vand.u32 2147483647, %v11227
    %vm11423 = vcmp.eq.f32.partialorder %v11422, 8.507059e+37
    %v11424 = vand.u32 %v11227, 2147483648
    %v11425 = vor.u32 1.1754944e-38, %v11424
    %v11426 = vsel %vm11423, %v11425, %v11421
    %v11427 = vmul.f32 1.0, %v11426
    %v11428 = vrcp.pop %v11228
    %v11429 = vmul.f32 %v11228, %v11428
    %v11430 = vsub.f32 1.0, %v11429
    %v11431 = vmul.f32 %v11428, %v11430
    %v11432 = vadd.f32 %v11428, %v11431
    %vm11433 = vweird.f32 %v11228
    %vm11434 = vweird.f32 %v11428
    %vm11435 = vmor %vm11433, %vm11434
    %v11436 = vsel %vm11435, %v11428, %v11432
    %v11437 = vand.u32 2147483647, %v11228
    %vm11438 = vcmp.eq.f32.partialorder %v11437, 8.507059e+37
    %v11439 = vand.u32 %v11228, 2147483648
    %v11440 = vor.u32 1.1754944e-38, %v11439
    %v11441 = vsel %vm11438, %v11440, %v11436
    %v11442 = vmul.f32 1.0, %v11441
    %v11443 = vrcp.pop %v11229
    %v11444 = vmul.f32 %v11229, %v11443
    %v11445 = vsub.f32 1.0, %v11444
    %v11446 = vmul.f32 %v11443, %v11445
    %v11447 = vadd.f32 %v11443, %v11446
    %vm11448 = vweird.f32 %v11229
    %vm11449 = vweird.f32 %v11443
    %vm11450 = vmor %vm11448, %vm11449
    %v11451 = vsel %vm11450, %v11443, %v11447
    %v11452 = vand.u32 2147483647, %v11229
    %vm11453 = vcmp.eq.f32.partialorder %v11452, 8.507059e+37
    %v11454 = vand.u32 %v11229, 2147483648
    %v11455 = vor.u32 1.1754944e-38, %v11454
    %v11456 = vsel %vm11453, %v11455, %v11451
    %v11457 = vmul.f32 1.0, %v11456
    %v11458 = vrcp.pop %v11230
    %v11459 = vmul.f32 %v11230, %v11458
    %v11460 = vsub.f32 1.0, %v11459
    %v11461 = vmul.f32 %v11458, %v11460
    %v11462 = vadd.f32 %v11458, %v11461
    %vm11463 = vweird.f32 %v11230
    %vm11464 = vweird.f32 %v11458
    %vm11465 = vmor %vm11463, %vm11464
    %v11466 = vsel %vm11465, %v11458, %v11462
    %v11467 = vand.u32 2147483647, %v11230
    %vm11468 = vcmp.eq.f32.partialorder %v11467, 8.507059e+37
    %v11469 = vand.u32 %v11230, 2147483648
    %v11470 = vor.u32 1.1754944e-38, %v11469
    %v11471 = vsel %vm11468, %v11470, %v11466
    %v11472 = vmul.f32 1.0, %v11471
    %v11473 = vrcp.pop %v11231
    %v11474 = vmul.f32 %v11231, %v11473
    %v11475 = vsub.f32 1.0, %v11474
    %v11476 = vmul.f32 %v11473, %v11475
    %v11477 = vadd.f32 %v11473, %v11476
    %vm11478 = vweird.f32 %v11231
    %vm11479 = vweird.f32 %v11473
    %vm11480 = vmor %vm11478, %vm11479
    %v11481 = vsel %vm11480, %v11473, %v11477
    %v11482 = vand.u32 2147483647, %v11231
    %vm11483 = vcmp.eq.f32.partialorder %v11482, 8.507059e+37
    %v11484 = vand.u32 %v11231, 2147483648
    %v11485 = vor.u32 1.1754944e-38, %v11484
    %v11486 = vsel %vm11483, %v11485, %v11481
    %v11487 = vmul.f32 1.0, %v11486
    %v11488 = vrcp.pop %v11232
    %v11489 = vmul.f32 %v11232, %v11488
    %v11490 = vsub.f32 1.0, %v11489
    %v11491 = vmul.f32 %v11488, %v11490
    %v11492 = vadd.f32 %v11488, %v11491
    %vm11493 = vweird.f32 %v11232
    %vm11494 = vweird.f32 %v11488
    %vm11495 = vmor %vm11493, %vm11494
    %v11496 = vsel %vm11495, %v11488, %v11492
    %v11497 = vand.u32 2147483647, %v11232
    %vm11498 = vcmp.eq.f32.partialorder %v11497, 8.507059e+37
    %v11499 = vand.u32 %v11232, 2147483648
    %v11500 = vor.u32 1.1754944e-38, %v11499
    %v11501 = vsel %vm11498, %v11500, %v11496
    %v11502 = vmul.f32 1.0, %v11501
    %v11503 = vrcp.pop %v11233
    %v11504 = vmul.f32 %v11233, %v11503
    %v11505 = vsub.f32 1.0, %v11504
    %v11506 = vmul.f32 %v11503, %v11505
    %v11507 = vadd.f32 %v11503, %v11506
    %vm11508 = vweird.f32 %v11233
    %vm11509 = vweird.f32 %v11503
    %vm11510 = vmor %vm11508, %vm11509
    %v11511 = vsel %vm11510, %v11503, %v11507
    %v11512 = vand.u32 2147483647, %v11233
    %vm11513 = vcmp.eq.f32.partialorder %v11512, 8.507059e+37
    %v11514 = vand.u32 %v11233, 2147483648
    %v11515 = vor.u32 1.1754944e-38, %v11514
    %v11516 = vsel %vm11513, %v11515, %v11511
    %v11517 = vmul.f32 1.0, %v11516
    %v11518 = vrcp.pop %v11234
    %v11519 = vmul.f32 %v11234, %v11518
    %v11520 = vsub.f32 1.0, %v11519
    %v11521 = vmul.f32 %v11518, %v11520
    %v11522 = vadd.f32 %v11518, %v11521
    %vm11523 = vweird.f32 %v11234
    %vm11524 = vweird.f32 %v11518
    %vm11525 = vmor %vm11523, %vm11524
    %v11526 = vsel %vm11525, %v11518, %v11522
    %v11527 = vand.u32 2147483647, %v11234
    %vm11528 = vcmp.eq.f32.partialorder %v11527, 8.507059e+37
    %v11529 = vand.u32 %v11234, 2147483648
    %v11530 = vor.u32 1.1754944e-38, %v11529
    %v11531 = vsel %vm11528, %v11530, %v11526
    %v11532 = vmul.f32 1.0, %v11531
    %v11533 = vrcp.pop %v11235
    %v11534 = vmul.f32 %v11235, %v11533
    %v11535 = vsub.f32 1.0, %v11534
    %v11536 = vmul.f32 %v11533, %v11535
    %v11537 = vadd.f32 %v11533, %v11536
    %vm11538 = vweird.f32 %v11235
    %vm11539 = vweird.f32 %v11533
    %vm11540 = vmor %vm11538, %vm11539
    %v11541 = vsel %vm11540, %v11533, %v11537
    %v11542 = vand.u32 2147483647, %v11235
    %vm11543 = vcmp.eq.f32.partialorder %v11542, 8.507059e+37
    %v11544 = vand.u32 %v11235, 2147483648
    %v11545 = vor.u32 1.1754944e-38, %v11544
    %v11546 = vsel %vm11543, %v11545, %v11541
    %v11547 = vmul.f32 1.0, %v11546
    %v11548 = vrcp.pop %v11236
    %v11549 = vmul.f32 %v11236, %v11548
    %v11550 = vsub.f32 1.0, %v11549
    %v11551 = vmul.f32 %v11548, %v11550
    %v11552 = vadd.f32 %v11548, %v11551
    %vm11553 = vweird.f32 %v11236
    %vm11554 = vweird.f32 %v11548
    %vm11555 = vmor %vm11553, %vm11554
    %v11556 = vsel %vm11555, %v11548, %v11552
    %v11557 = vand.u32 2147483647, %v11236
    %vm11558 = vcmp.eq.f32.partialorder %v11557, 8.507059e+37
    %v11559 = vand.u32 %v11236, 2147483648
    %v11560 = vor.u32 1.1754944e-38, %v11559
    %v11561 = vsel %vm11558, %v11560, %v11556
    %v11562 = vmul.f32 1.0, %v11561
    %v11563 = vrcp.pop %v11237
    %v11564 = vmul.f32 %v11237, %v11563
    %v11565 = vsub.f32 1.0, %v11564
    %v11566 = vmul.f32 %v11563, %v11565
    %v11567 = vadd.f32 %v11563, %v11566
    %vm11568 = vweird.f32 %v11237
    %vm11569 = vweird.f32 %v11563
    %vm11570 = vmor %vm11568, %vm11569
    %v11571 = vsel %vm11570, %v11563, %v11567
    %v11572 = vand.u32 2147483647, %v11237
    %vm11573 = vcmp.eq.f32.partialorder %v11572, 8.507059e+37
    %v11574 = vand.u32 %v11237, 2147483648
    %v11575 = vor.u32 1.1754944e-38, %v11574
    %v11576 = vsel %vm11573, %v11575, %v11571
    %v11577 = vmul.f32 1.0, %v11576
    %v11578 = vrcp.pop %v11238
    %v11579 = vmul.f32 %v11238, %v11578
    %v11580 = vsub.f32 1.0, %v11579
    %v11581 = vmul.f32 %v11578, %v11580
    %v11582 = vadd.f32 %v11578, %v11581
    %vm11583 = vweird.f32 %v11238
    %vm11584 = vweird.f32 %v11578
    %vm11585 = vmor %vm11583, %vm11584
    %v11586 = vsel %vm11585, %v11578, %v11582
    %v11587 = vand.u32 2147483647, %v11238
    %vm11588 = vcmp.eq.f32.partialorder %v11587, 8.507059e+37
    %v11589 = vand.u32 %v11238, 2147483648
    %v11590 = vor.u32 1.1754944e-38, %v11589
    %v11591 = vsel %vm11588, %v11590, %v11586
    %v11592 = vmul.f32 1.0, %v11591
    %v11593 = vrcp.pop %v11239
    %v11594 = vmul.f32 %v11239, %v11593
    %v11595 = vsub.f32 1.0, %v11594
    %v11596 = vmul.f32 %v11593, %v11595
    %v11597 = vadd.f32 %v11593, %v11596
    %vm11598 = vweird.f32 %v11239
    %vm11599 = vweird.f32 %v11593
    %vm11600 = vmor %vm11598, %vm11599
    %v11601 = vsel %vm11600, %v11593, %v11597
    %v11602 = vand.u32 2147483647, %v11239
    %vm11603 = vcmp.eq.f32.partialorder %v11602, 8.507059e+37
    %v11604 = vand.u32 %v11239, 2147483648
    %v11605 = vor.u32 1.1754944e-38, %v11604
    %v11606 = vsel %vm11603, %v11605, %v11601
    %v11607 = vmul.f32 1.0, %v11606
    %v11608 = vrcp.pop %v11240
    %v11609 = vmul.f32 %v11240, %v11608
    %v11610 = vsub.f32 1.0, %v11609
    %v11611 = vmul.f32 %v11608, %v11610
    %v11612 = vadd.f32 %v11608, %v11611
    %vm11613 = vweird.f32 %v11240
    %vm11614 = vweird.f32 %v11608
    %vm11615 = vmor %vm11613, %vm11614
    %v11616 = vsel %vm11615, %v11608, %v11612
    %v11617 = vand.u32 2147483647, %v11240
    %vm11618 = vcmp.eq.f32.partialorder %v11617, 8.507059e+37
    %v11619 = vand.u32 %v11240, 2147483648
    %v11620 = vor.u32 1.1754944e-38, %v11619
    %v11621 = vsel %vm11618, %v11620, %v11616
    %v11622 = vmul.f32 1.0, %v11621
    %v11623 = vrcp.pop %v11241
    %v11624 = vmul.f32 %v11241, %v11623
    %v11625 = vsub.f32 1.0, %v11624
    %v11626 = vmul.f32 %v11623, %v11625
    %v11627 = vadd.f32 %v11623, %v11626
    %vm11628 = vweird.f32 %v11241
    %vm11629 = vweird.f32 %v11623
    %vm11630 = vmor %vm11628, %vm11629
    %v11631 = vsel %vm11630, %v11623, %v11627
    %v11632 = vand.u32 2147483647, %v11241
    %vm11633 = vcmp.eq.f32.partialorder %v11632, 8.507059e+37
    %v11634 = vand.u32 %v11241, 2147483648
    %v11635 = vor.u32 1.1754944e-38, %v11634
    %v11636 = vsel %vm11633, %v11635, %v11631
    %v11637 = vmul.f32 1.0, %v11636
    %v11638 = vrcp.pop %v11242
    %v11639 = vmul.f32 %v11242, %v11638
    %v11640 = vsub.f32 1.0, %v11639
    %v11641 = vmul.f32 %v11638, %v11640
    %v11642 = vadd.f32 %v11638, %v11641
    %vm11643 = vweird.f32 %v11242
    %vm11644 = vweird.f32 %v11638
    %vm11645 = vmor %vm11643, %vm11644
    %v11646 = vsel %vm11645, %v11638, %v11642
    %v11647 = vand.u32 2147483647, %v11242
    %vm11648 = vcmp.eq.f32.partialorder %v11647, 8.507059e+37
    %v11649 = vand.u32 %v11242, 2147483648
    %v11650 = vor.u32 1.1754944e-38, %v11649
    %v11651 = vsel %vm11648, %v11650, %v11646
    %v11652 = vmul.f32 1.0, %v11651
    %v11653 = vrcp.pop %v11243
    %v11654 = vmul.f32 %v11243, %v11653
    %v11655 = vsub.f32 1.0, %v11654
    %v11656 = vmul.f32 %v11653, %v11655
    %v11657 = vadd.f32 %v11653, %v11656
    %vm11658 = vweird.f32 %v11243
    %vm11659 = vweird.f32 %v11653
    %vm11660 = vmor %vm11658, %vm11659
    %v11661 = vsel %vm11660, %v11653, %v11657
    %v11662 = vand.u32 2147483647, %v11243
    %vm11663 = vcmp.eq.f32.partialorder %v11662, 8.507059e+37
    %v11664 = vand.u32 %v11243, 2147483648
    %v11665 = vor.u32 1.1754944e-38, %v11664
    %v11666 = vsel %vm11663, %v11665, %v11661
    %v11667 = vmul.f32 1.0, %v11666
    %v11668 = vrcp.pop %v11244
    %v11669 = vmul.f32 %v11244, %v11668
    %v11670 = vsub.f32 1.0, %v11669
    %v11671 = vmul.f32 %v11668, %v11670
    %v11672 = vadd.f32 %v11668, %v11671
    %vm11673 = vweird.f32 %v11244
    %vm11674 = vweird.f32 %v11668
    %vm11675 = vmor %vm11673, %vm11674
    %v11676 = vsel %vm11675, %v11668, %v11672
    %v11677 = vand.u32 2147483647, %v11244
    %vm11678 = vcmp.eq.f32.partialorder %v11677, 8.507059e+37
    %v11679 = vand.u32 %v11244, 2147483648
    %v11680 = vor.u32 1.1754944e-38, %v11679
    %v11681 = vsel %vm11678, %v11680, %v11676
    %v11682 = vmul.f32 1.0, %v11681
    %v11683 = vrcp.pop %v11245
    %v11684 = vmul.f32 %v11245, %v11683
    %v11685 = vsub.f32 1.0, %v11684
    %v11686 = vmul.f32 %v11683, %v11685
    %v11687 = vadd.f32 %v11683, %v11686
    %vm11688 = vweird.f32 %v11245
    %vm11689 = vweird.f32 %v11683
    %vm11690 = vmor %vm11688, %vm11689
    %v11691 = vsel %vm11690, %v11683, %v11687
    %v11692 = vand.u32 2147483647, %v11245
    %vm11693 = vcmp.eq.f32.partialorder %v11692, 8.507059e+37
    %v11694 = vand.u32 %v11245, 2147483648
    %v11695 = vor.u32 1.1754944e-38, %v11694
    %v11696 = vsel %vm11693, %v11695, %v11691
    %v11697 = vmul.f32 1.0, %v11696
    %v11698 = vrcp.pop %v11246
    %v11699 = vmul.f32 %v11246, %v11698
    %v11700 = vsub.f32 1.0, %v11699
    %v11701 = vmul.f32 %v11698, %v11700
    %v11702 = vadd.f32 %v11698, %v11701
    %vm11703 = vweird.f32 %v11246
    %vm11704 = vweird.f32 %v11698
    %vm11705 = vmor %vm11703, %vm11704
    %v11706 = vsel %vm11705, %v11698, %v11702
    %v11707 = vand.u32 2147483647, %v11246
    %vm11708 = vcmp.eq.f32.partialorder %v11707, 8.507059e+37
    %v11709 = vand.u32 %v11246, 2147483648
    %v11710 = vor.u32 1.1754944e-38, %v11709
    %v11711 = vsel %vm11708, %v11710, %v11706
    %v11712 = vmul.f32 1.0, %v11711
    %v11713 = vrcp.pop %v11247
    %v11714 = vmul.f32 %v11247, %v11713
    %v11715 = vsub.f32 1.0, %v11714
    %v11716 = vmul.f32 %v11713, %v11715
    %v11717 = vadd.f32 %v11713, %v11716
    %vm11718 = vweird.f32 %v11247
    %vm11719 = vweird.f32 %v11713
    %vm11720 = vmor %vm11718, %vm11719
    %v11721 = vsel %vm11720, %v11713, %v11717
    %v11722 = vand.u32 2147483647, %v11247
    %vm11723 = vcmp.eq.f32.partialorder %v11722, 8.507059e+37
    %v11724 = vand.u32 %v11247, 2147483648
    %v11725 = vor.u32 1.1754944e-38, %v11724
    %v11726 = vsel %vm11723, %v11725, %v11721
    %v11727 = vmul.f32 1.0, %v11726
    %vm11728 = vcmask 7168
    %11729 = vst.msk [vmem:[%s7] sm:$0xff] %vm11728, %v11262
    %11730 = vst.msk [vmem:[%s7 + $0x8] sm:$0xff] %vm11728, %v11277
    %11731 = vst.msk [vmem:[%s7 + $0x10] sm:$0xff] %vm11728, %v11292
    %11732 = vst.msk [vmem:[%s7 + $0x18] sm:$0xff] %vm11728, %v11307
    %11733 = vst.msk [vmem:[%s7 + $0x20] sm:$0xff] %vm11728, %v11322
    %11734 = vst.msk [vmem:[%s7 + $0x28] sm:$0xff] %vm11728, %v11337
    %11735 = vst.msk [vmem:[%s7 + $0x30] sm:$0xff] %vm11728, %v11352
    %11736 = vst.msk [vmem:[%s7 + $0x38] sm:$0xff] %vm11728, %v11367
    %11737 = vst.msk [vmem:[%s7 + $0x40] sm:$0xff] %vm11728, %v11382
    %11738 = vst.msk [vmem:[%s7 + $0x48] sm:$0xff] %vm11728, %v11397
    %11739 = vst.msk [vmem:[%s7 + $0x50] sm:$0xff] %vm11728, %v11412
    %11740 = vst.msk [vmem:[%s7 + $0x58] sm:$0xff] %vm11728, %v11427
    %11741 = vst.msk [vmem:[%s7 + $0x60] sm:$0xff] %vm11728, %v11442
    %11742 = vst.msk [vmem:[%s7 + $0x68] sm:$0xff] %vm11728, %v11457
    %11743 = vst.msk [vmem:[%s7 + $0x70] sm:$0xff] %vm11728, %v11472
    %11744 = vst.msk [vmem:[%s7 + $0x78] sm:$0xff] %vm11728, %v11487
    %11745 = vst.msk [vmem:[%s7 + $0x80] sm:$0xff] %vm11728, %v11502
    %11746 = vst.msk [vmem:[%s7 + $0x88] sm:$0xff] %vm11728, %v11517
    %11747 = vst.msk [vmem:[%s7 + $0x90] sm:$0xff] %vm11728, %v11532
    %11748 = vst.msk [vmem:[%s7 + $0x98] sm:$0xff] %vm11728, %v11547
    %11749 = vst.msk [vmem:[%s7 + $0xa0] sm:$0xff] %vm11728, %v11562
    %11750 = vst.msk [vmem:[%s7 + $0xa8] sm:$0xff] %vm11728, %v11577
    %11751 = vst.msk [vmem:[%s7 + $0xb0] sm:$0xff] %vm11728, %v11592
    %11752 = vst.msk [vmem:[%s7 + $0xb8] sm:$0xff] %vm11728, %v11607
    %11753 = vst.msk [vmem:[%s7 + $0xc0] sm:$0xff] %vm11728, %v11622
    %11754 = vst.msk [vmem:[%s7 + $0xc8] sm:$0xff] %vm11728, %v11637
    %11755 = vst.msk [vmem:[%s7 + $0xd0] sm:$0xff] %vm11728, %v11652
    %11756 = vst.msk [vmem:[%s7 + $0xd8] sm:$0xff] %vm11728, %v11667
    %11757 = vst.msk [vmem:[%s7 + $0xe0] sm:$0xff] %vm11728, %v11682
    %11758 = vst.msk [vmem:[%s7 + $0xe8] sm:$0xff] %vm11728, %v11697
    %11759 = vst.msk [vmem:[%s7 + $0xf0] sm:$0xff] %vm11728, %v11712
    %11760 = vst.msk [vmem:[%s7 + $0xf8] sm:$0xff] %vm11728, %v11727
    // Predicated region
    $region50: #{tpu_custom_call.1} parent=1 // pred_check
      _
    $region51: #{tpu_custom_call.1} parent=1 // pred_check_branch
      %11762 = sbr.rel (0) target = $region53
    $region52: #{tpu_custom_call.1} parent=1 // pred_region
      _
    $region53: #{tpu_custom_call.1} parent=1 // pred_fallthru
      _
    // Predicated region
    $region54: #{tpu_custom_call.1} parent=1 // pred_check
      _
    $region55: #{tpu_custom_call.1} parent=1 // pred_check_branch
      %11764 = sbr.rel (0) target = $region57
    $region56: #{tpu_custom_call.1} parent=1 // pred_region
      _
    $region57: #{tpu_custom_call.1} parent=1 // pred_fallthru
      _
    %11765 = vsyncpa [#allocation4], 1
    %11766 = vsyncpa [#allocation6], 1
    %11767 = vsyncpa [#allocation9], 1

</llo_original>
